<compile_context>
chip_gen: v5e
topology: v5e:2x2
jax: 0.10.0
libtpu: 0.0.40
codegen_flags: <defaults>
</compile_context>

<pallas_src>
import functools

import jax
import jax.numpy as jnp
from jax.experimental import pallas as pl
from jax.experimental.pallas import tpu as pltpu


def _tree_sum(vals):
    """Pairwise (tree) sum of a list of arrays."""
    while len(vals) > 1:
        nxt = [vals[i] + vals[i + 1] for i in range(0, len(vals) - 1, 2)]
        if len(vals) % 2:
            nxt.append(vals[-1])
        vals = nxt
    return vals[0]


# ----------------------------------------------------------------------------
# Fused kernel:  BN1 -> ReLU -> 1x1 conv (BN2-scale folded) -> +shift2 -> ReLU
#                -> 3x3 conv (pad=1) -> concat([x, y], channel)
# Single grid step; all intermediates stay in VMEM.
# ----------------------------------------------------------------------------
def _dense_layer_kernel(x_ref, s1_ref, b1_ref, w1_ref, b2_ref, wall_ref,
                        o_ref, zpad_ref, *, N, H, W, Cin, Cb, G):
    # ---- BN1 -> ReLU -> 1x1 conv -> (+ BN2 shift) -> ReLU -----------------
    xf = x_ref[...].reshape(N * H * W, Cin).astype(jnp.float32)   # exact reshape (W % 8 == 0)
    a = jnp.maximum(xf * s1_ref[...] + b1_ref[...], 0.0)          # BN1 + ReLU
    b = jnp.dot(a, w1_ref[...], preferred_element_type=jnp.float32)  # 1x1 conv (BN2 scale folded)
    c = jnp.maximum(b + b2_ref[...], 0.0)                         # BN2 shift + ReLU

    # ---- 3x3 conv, step 1: one lane-dense matmul on the UNPADDED activation
    #      z[r, (dy*3+dx)*G + g] = sum_c c[r, c] * w2[dy, dx, c, g]
    z = jnp.dot(c, wall_ref[...], preferred_element_type=jnp.float32)   # (N*H*W, 9G)

    # ---- step 2: scatter z into a zero-halo'd scratch (one dense zero store,
    #      then the interior) and sum the 9 shifted full windows (tree sum).
    zpad_ref[...] = jnp.zeros(zpad_ref.shape, zpad_ref.dtype)
    zpad_ref[:, 1:H + 1, 1:W + 1, :] = z.reshape(N, H, W, 9 * G)

    taps = []
    for dy in range(3):
        for dx in range(3):
            t = dy * 3 + dx
            taps.append(zpad_ref[:, dy:dy + H, dx:dx + W, t * G:(t + 1) * G])
    y = _tree_sum(taps)                                            # (N, H, W, G)

    # ---- concat([x, y], channel) written as a single full-block store -----
    o_ref[...] = jnp.concatenate(
        [x_ref[...].astype(o_ref.dtype), y.astype(o_ref.dtype)], axis=-1)


def dense_layer_forward(x, params):
    """x: (N, H, W, Cin) float32 -> (N, H, W, Cin + growth_rate)."""
    N, H, W, Cin = x.shape
    s1, b1, w1, s2, b2, w2 = (params[k] for k in
                              ("scale1", "shift1", "w1", "scale2", "shift2", "w2"))
    Cb = w1.shape[1]
    G = w2.shape[-1]
    Cout = Cin + G
    assert W % 8 == 0, "kernel assumes spatial width is a multiple of 8"

    # Fold BN2 per-output-channel scale into the 1x1 conv weight (host-side).
    w1s = w1 * s2.reshape(1, Cb)
    # Fold the (3,3,Cb,G) conv weight into one (Cb, 9*G) matrix:
    # column index = (dy*3 + dx)*G + g.
    w_all = jnp.transpose(w2, (2, 0, 1, 3)).reshape(Cb, 9 * G)

    kern = functools.partial(_dense_layer_kernel,
                             N=N, H=H, W=W, Cin=Cin, Cb=Cb, G=G)
    return pl.pallas_call(
        kern,
        out_shape=jax.ShapeDtypeStruct((N, H, W, Cout), x.dtype),
        grid_spec=pltpu.PrefetchScalarGridSpec(
            num_scalar_prefetch=0,
            grid=(1,),                               # single step: no per-step overhead
            in_specs=[
                pl.BlockSpec((N, H, W, Cin), lambda i: (0, 0, 0, 0)),
                pl.BlockSpec((1, Cin), lambda i: (0, 0)),
                pl.BlockSpec((1, Cin), lambda i: (0, 0)),
                pl.BlockSpec((Cin, Cb), lambda i: (0, 0)),
                pl.BlockSpec((1, Cb), lambda i: (0, 0)),
                pl.BlockSpec((Cb, 9 * G), lambda i: (0, 0)),
            ],
            out_specs=pl.BlockSpec((N, H, W, Cout), lambda i: (0, 0, 0, 0)),
            scratch_shapes=[pltpu.VMEM((N, H + 2, W + 2, 9 * G), jnp.float32)],
        ),
        compiler_params=pltpu.CompilerParams(
            dimension_semantics=("arbitrary",),
        ),
    )(x, s1, b1, w1s, b2, w_all)


def make_params(key, in_channels, expand_factor=4, growth_rate=32, eps=1e-5):
    """Deterministic parameter init; BN folded into scale/shift (eval mode)."""
    Cb = expand_factor * growth_rate
    ks = jax.random.split(key, 10)
    # BN1
    g1 = jax.random.normal(ks[0], (in_channels,), jnp.float32) * 0.1 + 1.0
    be1 = jax.random.normal(ks[1], (in_channels,), jnp.float32) * 0.1
    m1 = jax.random.normal(ks[2], (in_channels,), jnp.float32) * 0.1
    v1 = jax.random.uniform(ks[3], (in_channels,), jnp.float32, 0.5, 1.5)
    # BN2
    g2 = jax.random.normal(ks[4], (Cb,), jnp.float32) * 0.1 + 1.0
    be2 = jax.random.normal(ks[5], (Cb,), jnp.float32) * 0.1
    m2 = jax.random.normal(ks[6], (Cb,), jnp.float32) * 0.1
    v2 = jax.random.uniform(ks[7], (Cb,), jnp.float32, 0.5, 1.5)
    # conv weights (kaiming-ish scale)
    w1 = jax.random.normal(ks[8], (in_channels, Cb), jnp.float32) * (1.0 / in_channels) ** 0.5
    w2 = jax.random.normal(ks[9], (3, 3, Cb, growth_rate), jnp.float32) * (1.0 / (9 * Cb)) ** 0.5

    scale1 = (g1 / jnp.sqrt(v1 + eps)).reshape(1, -1)
    shift1 = (be1 - m1 * g1 / jnp.sqrt(v1 + eps)).reshape(1, -1)
    scale2 = (g2 / jnp.sqrt(v2 + eps)).reshape(1, -1)
    shift2 = (be2 - m2 * g2 / jnp.sqrt(v2 + eps)).reshape(1, -1)
    return dict(scale1=scale1, shift1=shift1, w1=w1,
                scale2=scale2, shift2=shift2, w2=w2)


def dense_layer_reference(x, params):
    """Pure-JAX reference (full f32 precision) for correctness checking."""
    s1, b1, w1, s2, b2, w2 = (params[k] for k in
                              ("scale1", "shift1", "w1", "scale2", "shift2", "w2"))
    a = jnp.maximum(x * s1[0] + b1[0], 0.0)
    a = jnp.einsum("nhwc,cb->nhwb", a, w1, precision=jax.lax.Precision.HIGHEST)
    a = jnp.maximum(a * s2[0] + b2[0], 0.0)
    y = jax.lax.conv_general_dilated(
        a, w2, window_strides=(1, 1), padding="SAME",
        dimension_numbers=("NHWC", "HWIO", "NHWC"),
        precision=jax.lax.Precision.HIGHEST)
    return jnp.concatenate([x, y], axis=-1)


if __name__ == "__main__":
    # PyTorch-equivalent input: NCHW (2, 64, 16, 16)  ->  NHWC (2, 16, 16, 64)
    N, H, W, Cin = 2, 16, 16, 64
    growth_rate, expand_factor = 32, 4

    key = jax.random.PRNGKey(0)
    kx, kp = jax.random.split(key)
    x = jax.random.normal(kx, (N, H, W, Cin), jnp.float32)
    params = make_params(kp, Cin, expand_factor, growth_rate)

    out = jax.jit(dense_layer_forward)(x, params)
    out = jax.block_until_ready(out)

    assert out.shape == (N, H, W, Cin + growth_rate), out.shape

    ref = dense_layer_reference(x, params)
    err = float(jnp.max(jnp.abs(out - ref)))
    assert jnp.allclose(out, ref, atol=5e-4, rtol=5e-4), err

    print("KERNEL_OK")
</pallas_src>

<mosaic_0001>
module attributes {stable_mosaic.version = 11 : i64} {
  func.func @_dense_layer_kernel(%arg0: i32, %arg1: memref<2x16x16x64xf32, #tpu.memory_space<vmem>>, %arg2: memref<1x64xf32, #tpu.memory_space<vmem>>, %arg3: memref<1x64xf32, #tpu.memory_space<vmem>>, %arg4: memref<64x128xf32, #tpu.memory_space<vmem>>, %arg5: memref<1x128xf32, #tpu.memory_space<vmem>>, %arg6: memref<128x288xf32, #tpu.memory_space<vmem>>, %arg7: memref<2x16x16x96xf32, #tpu.memory_space<vmem>>, %arg8: memref<2x18x18x288xf32, #tpu.memory_space<vmem>>) attributes {dimension_semantics = [#tpu.dimension_semantics<arbitrary>], iteration_bounds = array<i64: 1>, scalar_prefetch = 0 : i64, scratch_operands = 1 : i64, tpu.core_type = #tpu.core_type<tc>, window_params = [{pipeline_mode = #tpu.pipeline_mode<synchronous>, transform_indices = @transform_0, window_bounds = array<i64: 2, 16, 16, 64>}, {pipeline_mode = #tpu.pipeline_mode<synchronous>, transform_indices = @transform_1, window_bounds = array<i64: 1, 64>}, {pipeline_mode = #tpu.pipeline_mode<synchronous>, transform_indices = @transform_2, window_bounds = array<i64: 1, 64>}, {pipeline_mode = #tpu.pipeline_mode<synchronous>, transform_indices = @transform_3, window_bounds = array<i64: 64, 128>}, {pipeline_mode = #tpu.pipeline_mode<synchronous>, transform_indices = @transform_4, window_bounds = array<i64: 1, 128>}, {pipeline_mode = #tpu.pipeline_mode<synchronous>, transform_indices = @transform_5, window_bounds = array<i64: 128, 288>}, {pipeline_mode = #tpu.pipeline_mode<synchronous>, transform_indices = @transform_6, window_bounds = array<i64: 2, 16, 16, 96>}]} {
    %c0 = arith.constant 0 : index
    %c0_0 = arith.constant 0 : index
    %c0_1 = arith.constant 0 : index
    %c0_2 = arith.constant 0 : index
    %0 = vector.load %arg1[%c0, %c0_0, %c0_1, %c0_2] : memref<2x16x16x64xf32, #tpu.memory_space<vmem>>, vector<2x16x16x64xf32>
    %1 = vector.shape_cast %0 : vector<2x16x16x64xf32> to vector<512x64xf32>
    %c0_3 = arith.constant 0 : index
    %c0_4 = arith.constant 0 : index
    %2 = vector.load %arg2[%c0_3, %c0_4] : memref<1x64xf32, #tpu.memory_space<vmem>>, vector<1x64xf32>
    %3 = vector.broadcast %2 : vector<1x64xf32> to vector<512x64xf32>
    %4 = arith.mulf %1, %3 : vector<512x64xf32>
    %c0_5 = arith.constant 0 : index
    %c0_6 = arith.constant 0 : index
    %5 = vector.load %arg3[%c0_5, %c0_6] : memref<1x64xf32, #tpu.memory_space<vmem>>, vector<1x64xf32>
    %6 = vector.broadcast %5 : vector<1x64xf32> to vector<512x64xf32>
    %7 = arith.addf %4, %6 : vector<512x64xf32>
    %cst = arith.constant 0.000000e+00 : f32
    %8 = vector.broadcast %cst : f32 to vector<512x64xf32>
    %9 = arith.maximumf %7, %8 : vector<512x64xf32>
    %c0_7 = arith.constant 0 : index
    %c0_8 = arith.constant 0 : index
    %10 = vector.load %arg4[%c0_7, %c0_8] : memref<64x128xf32, #tpu.memory_space<vmem>>, vector<64x128xf32>
    %cst_9 = arith.constant dense<0.000000e+00> : vector<512x128xf32>
    %11 = tpu.matmul %9, %10, %cst_9 {dimension_numbers = #tpu.dot_dimension_numbers<[1], [0], [0], [1], [0, 0, 1, 1], [], []>} : vector<512x64xf32>, vector<64x128xf32>, vector<512x128xf32> -> vector<512x128xf32>
    %c0_10 = arith.constant 0 : index
    %c0_11 = arith.constant 0 : index
    %12 = vector.load %arg5[%c0_10, %c0_11] : memref<1x128xf32, #tpu.memory_space<vmem>>, vector<1x128xf32>
    %13 = vector.broadcast %12 : vector<1x128xf32> to vector<512x128xf32>
    %14 = arith.addf %11, %13 : vector<512x128xf32>
    %cst_12 = arith.constant 0.000000e+00 : f32
    %15 = vector.broadcast %cst_12 : f32 to vector<512x128xf32>
    %16 = arith.maximumf %14, %15 : vector<512x128xf32>
    %c0_13 = arith.constant 0 : index
    %c0_14 = arith.constant 0 : index
    %17 = vector.load %arg6[%c0_13, %c0_14] : memref<128x288xf32, #tpu.memory_space<vmem>>, vector<128x288xf32>
    %cst_15 = arith.constant dense<0.000000e+00> : vector<512x288xf32>
    %18 = tpu.matmul %16, %17, %cst_15 {dimension_numbers = #tpu.dot_dimension_numbers<[1], [0], [0], [1], [0, 0, 1, 1], [], []>} : vector<512x128xf32>, vector<128x288xf32>, vector<512x288xf32> -> vector<512x288xf32>
    %cst_16 = arith.constant 0.000000e+00 : f32
    %19 = vector.broadcast %cst_16 : f32 to vector<2x18x18x288xf32>
    %c0_17 = arith.constant 0 : index
    %c0_18 = arith.constant 0 : index
    %c0_19 = arith.constant 0 : index
    %c0_20 = arith.constant 0 : index
    %20 = vector.load %arg8[%c0_17, %c0_18, %c0_19, %c0_20] : memref<2x18x18x288xf32, #tpu.memory_space<vmem>>, vector<2x18x18x288xf32>
    tpu.vector_store %arg8[%c0_17, %c0_18, %c0_19, %c0_20], %19 {strides = array<i32>} : memref<2x18x18x288xf32, #tpu.memory_space<vmem>>, vector<2x18x18x288xf32>,
    %21 = vector.shape_cast %18 : vector<512x288xf32> to vector<2x16x16x288xf32>
    %c0_21 = arith.constant 0 : index
    %c1 = arith.constant 1 : index
    %c1_22 = arith.constant 1 : index
    %c0_23 = arith.constant 0 : index
    %22 = vector.load %arg8[%c0_21, %c1, %c1_22, %c0_23] : memref<2x18x18x288xf32, #tpu.memory_space<vmem>>, vector<2x16x16x288xf32>
    tpu.vector_store %arg8[%c0_21, %c1, %c1_22, %c0_23], %21 {strides = array<i32>} : memref<2x18x18x288xf32, #tpu.memory_space<vmem>>, vector<2x16x16x288xf32>,
    %c0_24 = arith.constant 0 : index
    %c0_25 = arith.constant 0 : index
    %c0_26 = arith.constant 0 : index
    %c0_27 = arith.constant 0 : index
    %23 = vector.load %arg8[%c0_24, %c0_25, %c0_26, %c0_27] : memref<2x18x18x288xf32, #tpu.memory_space<vmem>>, vector<2x16x16x32xf32>
    %c0_28 = arith.constant 0 : index
    %c0_29 = arith.constant 0 : index
    %c1_30 = arith.constant 1 : index
    %c32 = arith.constant 32 : index
    %24 = vector.load %arg8[%c0_28, %c0_29, %c1_30, %c32] : memref<2x18x18x288xf32, #tpu.memory_space<vmem>>, vector<2x16x16x32xf32>
    %c0_31 = arith.constant 0 : index
    %c0_32 = arith.constant 0 : index
    %c2 = arith.constant 2 : index
    %c64 = arith.constant 64 : index
    %25 = vector.load %arg8[%c0_31, %c0_32, %c2, %c64] : memref<2x18x18x288xf32, #tpu.memory_space<vmem>>, vector<2x16x16x32xf32>
    %c0_33 = arith.constant 0 : index
    %c1_34 = arith.constant 1 : index
    %c0_35 = arith.constant 0 : index
    %c96 = arith.constant 96 : index
    %26 = vector.load %arg8[%c0_33, %c1_34, %c0_35, %c96] : memref<2x18x18x288xf32, #tpu.memory_space<vmem>>, vector<2x16x16x32xf32>
    %c0_36 = arith.constant 0 : index
    %c1_37 = arith.constant 1 : index
    %c1_38 = arith.constant 1 : index
    %c128 = arith.constant 128 : index
    %27 = vector.load %arg8[%c0_36, %c1_37, %c1_38, %c128] : memref<2x18x18x288xf32, #tpu.memory_space<vmem>>, vector<2x16x16x32xf32>
    %c0_39 = arith.constant 0 : index
    %c1_40 = arith.constant 1 : index
    %c2_41 = arith.constant 2 : index
    %c160 = arith.constant 160 : index
    %28 = vector.load %arg8[%c0_39, %c1_40, %c2_41, %c160] : memref<2x18x18x288xf32, #tpu.memory_space<vmem>>, vector<2x16x16x32xf32>
    %c0_42 = arith.constant 0 : index
    %c2_43 = arith.constant 2 : index
    %c0_44 = arith.constant 0 : index
    %c192 = arith.constant 192 : index
    %29 = vector.load %arg8[%c0_42, %c2_43, %c0_44, %c192] : memref<2x18x18x288xf32, #tpu.memory_space<vmem>>, vector<2x16x16x32xf32>
    %c0_45 = arith.constant 0 : index
    %c2_46 = arith.constant 2 : index
    %c1_47 = arith.constant 1 : index
    %c224 = arith.constant 224 : index
    %30 = vector.load %arg8[%c0_45, %c2_46, %c1_47, %c224] : memref<2x18x18x288xf32, #tpu.memory_space<vmem>>, vector<2x16x16x32xf32>
    %c0_48 = arith.constant 0 : index
    %c2_49 = arith.constant 2 : index
    %c2_50 = arith.constant 2 : index
    %c256 = arith.constant 256 : index
    %31 = vector.load %arg8[%c0_48, %c2_49, %c2_50, %c256] : memref<2x18x18x288xf32, #tpu.memory_space<vmem>>, vector<2x16x16x32xf32>
    %32 = arith.addf %23, %24 : vector<2x16x16x32xf32>
    %33 = arith.addf %25, %26 : vector<2x16x16x32xf32>
    %34 = arith.addf %27, %28 : vector<2x16x16x32xf32>
    %35 = arith.addf %29, %30 : vector<2x16x16x32xf32>
    %36 = arith.addf %32, %33 : vector<2x16x16x32xf32>
    %37 = arith.addf %34, %35 : vector<2x16x16x32xf32>
    %38 = arith.addf %36, %37 : vector<2x16x16x32xf32>
    %39 = arith.addf %38, %31 : vector<2x16x16x32xf32>
    %c0_51 = arith.constant 0 : index
    %c0_52 = arith.constant 0 : index
    %c0_53 = arith.constant 0 : index
    %c0_54 = arith.constant 0 : index
    %40 = vector.load %arg1[%c0_51, %c0_52, %c0_53, %c0_54] : memref<2x16x16x64xf32, #tpu.memory_space<vmem>>, vector<2x16x16x64xf32>
    %41 = tpu.concatenate %40, %39 in 3 : vector<2x16x16x64xf32>, vector<2x16x16x32xf32> -> vector<2x16x16x96xf32>
    %c0_55 = arith.constant 0 : index
    %c0_56 = arith.constant 0 : index
    %c0_57 = arith.constant 0 : index
    %c0_58 = arith.constant 0 : index
    %42 = vector.load %arg7[%c0_55, %c0_56, %c0_57, %c0_58] : memref<2x16x16x96xf32, #tpu.memory_space<vmem>>, vector<2x16x16x96xf32>
    tpu.vector_store %arg7[%c0_55, %c0_56, %c0_57, %c0_58], %41 {strides = array<i32>} : memref<2x16x16x96xf32, #tpu.memory_space<vmem>>, vector<2x16x16x96xf32>,
    return
  }
  func.func @transform_0(%arg0: i32) -> (i32, i32, i32, i32) {
    %c0_i32 = arith.constant 0 : i32
    %c0_i32_0 = arith.constant 0 : i32
    %c0_i32_1 = arith.constant 0 : i32
    %c0_i32_2 = arith.constant 0 : i32
    %c0_i32_3 = arith.constant 0 : i32
    return %c0_i32, %c0_i32_0, %c0_i32_1, %c0_i32_2 : i32, i32, i32, i32
  }
  func.func @transform_1(%arg0: i32) -> (i32, i32) {
    %c0_i32 = arith.constant 0 : i32
    %c0_i32_0 = arith.constant 0 : i32
    %c0_i32_1 = arith.constant 0 : i32
    return %c0_i32, %c0_i32_0 : i32, i32
  }
  func.func @transform_2(%arg0: i32) -> (i32, i32) {
    %c0_i32 = arith.constant 0 : i32
    %c0_i32_0 = arith.constant 0 : i32
    %c0_i32_1 = arith.constant 0 : i32
    return %c0_i32, %c0_i32_0 : i32, i32
  }
  func.func @transform_3(%arg0: i32) -> (i32, i32) {
    %c0_i32 = arith.constant 0 : i32
    %c0_i32_0 = arith.constant 0 : i32
    %c0_i32_1 = arith.constant 0 : i32
    return %c0_i32, %c0_i32_0 : i32, i32
  }
  func.func @transform_4(%arg0: i32) -> (i32, i32) {
    %c0_i32 = arith.constant 0 : i32
    %c0_i32_0 = arith.constant 0 : i32
    %c0_i32_1 = arith.constant 0 : i32
    return %c0_i32, %c0_i32_0 : i32, i32
  }
  func.func @transform_5(%arg0: i32) -> (i32, i32) {
    %c0_i32 = arith.constant 0 : i32
    %c0_i32_0 = arith.constant 0 : i32
    %c0_i32_1 = arith.constant 0 : i32
    return %c0_i32, %c0_i32_0 : i32, i32
  }
  func.func @transform_6(%arg0: i32) -> (i32, i32, i32, i32) {
    %c0_i32 = arith.constant 0 : i32
    %c0_i32_0 = arith.constant 0 : i32
    %c0_i32_1 = arith.constant 0 : i32
    %c0_i32_2 = arith.constant 0 : i32
    %c0_i32_3 = arith.constant 0 : i32
    return %c0_i32, %c0_i32_0, %c0_i32_1, %c0_i32_2 : i32, i32, i32, i32
  }
}

</mosaic_0001>

<llo_original>
// kernel: dense_layer_forward.1
$region0: #{dense_layer_forward.1}
  #allocation0 [shape = 'u32[]', space=smem, size = 0x4, offset = 0x4, fixed_abs, tag = 'smem constant byte address 0x4 - core index']
  #allocation1 [shape = 'u32[72,128]{1,0:T(1,128)}', space=vmem, size = 0x9000, scoped, tag = 'internal scratch']
  #allocation2 [shape = 'f32[2,18,18,288]{3,2,1,0:T(8,128)}', space=vmem, size = 0x144000, scoped, tag = 'scratch operand']
  %s0 = inlined_call_operand.vmem [shape: f32[2,16,16,64], index: 0, kind: input, shape index: {}]
  %s1 = inlined_call_operand.vmem [shape: f32[1,64], index: 1, kind: input, shape index: {}]
  %s2 = inlined_call_operand.vmem [shape: f32[1,64], index: 2, kind: input, shape index: {}]
  %s3 = inlined_call_operand.vmem [shape: f32[64,128], index: 3, kind: input, shape index: {}]
  %s4 = inlined_call_operand.vmem [shape: f32[1,128], index: 4, kind: input, shape index: {}]
  %s5 = inlined_call_operand.vmem [shape: f32[128,288], index: 5, kind: input, shape index: {}]
  %s6 = inlined_call_operand.hbm [shape: f32[2,16,16,96], index: 6, kind: output, shape index: {}]
  %s7 = sld [smem:[#allocation0]]
  $region34: #{dense_layer_forward.1} parent=0
    _
  %s9 = ssub.s32 1, %s7
  %s10 = scalar_select 0, %s9, %s7
  $region1: #{dense_layer_forward.1} parent=0
    #allocation3 [shape = 'u8[262144]{0}', space=vmem, size = 0x40000, scoped, tag = 'output window, operand 0, single buffered']
    #allocation4 [shape = 's32[1]{0}', space=sflag, size = 0x4, scoped, tag = 'scoped memory for dense_layer_forward.1']
    %11 = vsyncpa [#allocation4], 0
    // Predicated region
    $region2: #{dense_layer_forward.1} parent=1 // pred_check
      _
    $region3: #{dense_layer_forward.1} parent=1 // pred_check_branch
      %13 = sbr.rel (0) target = $region5
    $region4: #{dense_layer_forward.1} parent=1 // pred_region
      _
    $region5: #{dense_layer_forward.1} parent=1 // pred_fallthru
      _
    // Predicated region
    $region6: #{dense_layer_forward.1} parent=1 // pred_check
      _
    $region7: #{dense_layer_forward.1} parent=1 // pred_check_branch
      %15 = sbr.rel (0) target = $region9
    $region8: #{dense_layer_forward.1} parent=1 // pred_region
      _
    $region9: #{dense_layer_forward.1} parent=1 // pred_fallthru
      _
    // Predicated region
    $region10: #{dense_layer_forward.1} parent=1 // pred_check
      _
    $region11: #{dense_layer_forward.1} parent=1 // pred_check_branch
      %17 = sbr.rel (0) target = $region13
    $region12: #{dense_layer_forward.1} parent=1 // pred_region
      _
    $region13: #{dense_layer_forward.1} parent=1 // pred_fallthru
      _
    // Predicated region
    $region14: #{dense_layer_forward.1} parent=1 // pred_check
      _
    $region15: #{dense_layer_forward.1} parent=1 // pred_check_branch
      %19 = sbr.rel (0) target = $region17
    $region16: #{dense_layer_forward.1} parent=1 // pred_region
      _
    $region17: #{dense_layer_forward.1} parent=1 // pred_fallthru
      _
    // Predicated region
    $region18: #{dense_layer_forward.1} parent=1 // pred_check
      _
    $region19: #{dense_layer_forward.1} parent=1 // pred_check_branch
      %21 = sbr.rel (0) target = $region21
    $region20: #{dense_layer_forward.1} parent=1 // pred_region
      _
    $region21: #{dense_layer_forward.1} parent=1 // pred_fallthru
      _
    // Predicated region
    $region22: #{dense_layer_forward.1} parent=1 // pred_check
      _
    $region23: #{dense_layer_forward.1} parent=1 // pred_check_branch
      %23 = sbr.rel (0) target = $region25
    $region24: #{dense_layer_forward.1} parent=1 // pred_region
      _
    $region25: #{dense_layer_forward.1} parent=1 // pred_fallthru
      _
    %v24 = vld [vmem:[%s0] sm:$0xff]
    %v25 = vld [vmem:[%s0 + $0x8] sm:$0xff]
    %v26 = vld [vmem:[%s0 + $0x10] sm:$0xff]
    %v27 = vld [vmem:[%s0 + $0x18] sm:$0xff]
    %v28 = vld [vmem:[%s0 + $0x20] sm:$0xff]
    %v29 = vld [vmem:[%s0 + $0x28] sm:$0xff]
    %v30 = vld [vmem:[%s0 + $0x30] sm:$0xff]
    %v31 = vld [vmem:[%s0 + $0x38] sm:$0xff]
    %v32 = vld [vmem:[%s0 + $0x40] sm:$0xff]
    %v33 = vld [vmem:[%s0 + $0x48] sm:$0xff]
    %v34 = vld [vmem:[%s0 + $0x50] sm:$0xff]
    %v35 = vld [vmem:[%s0 + $0x58] sm:$0xff]
    %v36 = vld [vmem:[%s0 + $0x60] sm:$0xff]
    %v37 = vld [vmem:[%s0 + $0x68] sm:$0xff]
    %v38 = vld [vmem:[%s0 + $0x70] sm:$0xff]
    %v39 = vld [vmem:[%s0 + $0x78] sm:$0xff]
    %v40 = vld [vmem:[%s0 + $0x80] sm:$0xff]
    %v41 = vld [vmem:[%s0 + $0x88] sm:$0xff]
    %v42 = vld [vmem:[%s0 + $0x90] sm:$0xff]
    %v43 = vld [vmem:[%s0 + $0x98] sm:$0xff]
    %v44 = vld [vmem:[%s0 + $0xa0] sm:$0xff]
    %v45 = vld [vmem:[%s0 + $0xa8] sm:$0xff]
    %v46 = vld [vmem:[%s0 + $0xb0] sm:$0xff]
    %v47 = vld [vmem:[%s0 + $0xb8] sm:$0xff]
    %v48 = vld [vmem:[%s0 + $0xc0] sm:$0xff]
    %v49 = vld [vmem:[%s0 + $0xc8] sm:$0xff]
    %v50 = vld [vmem:[%s0 + $0xd0] sm:$0xff]
    %v51 = vld [vmem:[%s0 + $0xd8] sm:$0xff]
    %v52 = vld [vmem:[%s0 + $0xe0] sm:$0xff]
    %v53 = vld [vmem:[%s0 + $0xe8] sm:$0xff]
    %v54 = vld [vmem:[%s0 + $0xf0] sm:$0xff]
    %v55 = vld [vmem:[%s0 + $0xf8] sm:$0xff]
    %v56 = vld [vmem:[%s0 + $0x100] sm:$0xff]
    %v57 = vld [vmem:[%s0 + $0x108] sm:$0xff]
    %v58 = vld [vmem:[%s0 + $0x110] sm:$0xff]
    %v59 = vld [vmem:[%s0 + $0x118] sm:$0xff]
    %v60 = vld [vmem:[%s0 + $0x120] sm:$0xff]
    %v61 = vld [vmem:[%s0 + $0x128] sm:$0xff]
    %v62 = vld [vmem:[%s0 + $0x130] sm:$0xff]
    %v63 = vld [vmem:[%s0 + $0x138] sm:$0xff]
    %v64 = vld [vmem:[%s0 + $0x140] sm:$0xff]
    %v65 = vld [vmem:[%s0 + $0x148] sm:$0xff]
    %v66 = vld [vmem:[%s0 + $0x150] sm:$0xff]
    %v67 = vld [vmem:[%s0 + $0x158] sm:$0xff]
    %v68 = vld [vmem:[%s0 + $0x160] sm:$0xff]
    %v69 = vld [vmem:[%s0 + $0x168] sm:$0xff]
    %v70 = vld [vmem:[%s0 + $0x170] sm:$0xff]
    %v71 = vld [vmem:[%s0 + $0x178] sm:$0xff]
    %v72 = vld [vmem:[%s0 + $0x180] sm:$0xff]
    %v73 = vld [vmem:[%s0 + $0x188] sm:$0xff]
    %v74 = vld [vmem:[%s0 + $0x190] sm:$0xff]
    %v75 = vld [vmem:[%s0 + $0x198] sm:$0xff]
    %v76 = vld [vmem:[%s0 + $0x1a0] sm:$0xff]
    %v77 = vld [vmem:[%s0 + $0x1a8] sm:$0xff]
    %v78 = vld [vmem:[%s0 + $0x1b0] sm:$0xff]
    %v79 = vld [vmem:[%s0 + $0x1b8] sm:$0xff]
    %v80 = vld [vmem:[%s0 + $0x1c0] sm:$0xff]
    %v81 = vld [vmem:[%s0 + $0x1c8] sm:$0xff]
    %v82 = vld [vmem:[%s0 + $0x1d0] sm:$0xff]
    %v83 = vld [vmem:[%s0 + $0x1d8] sm:$0xff]
    %v84 = vld [vmem:[%s0 + $0x1e0] sm:$0xff]
    %v85 = vld [vmem:[%s0 + $0x1e8] sm:$0xff]
    %v86 = vld [vmem:[%s0 + $0x1f0] sm:$0xff]
    %v87 = vld [vmem:[%s0 + $0x1f8] sm:$0xff]
    %v88 = vld [vmem:[%s1] sm:$0x1]
    %v90 = vperm.slane %v88, 0
    %v92 = vmul.f32 %v24, %v90
    %v93 = vmul.f32 %v25, %v90
    %v94 = vmul.f32 %v26, %v90
    %v95 = vmul.f32 %v27, %v90
    %v96 = vmul.f32 %v28, %v90
    %v97 = vmul.f32 %v29, %v90
    %v98 = vmul.f32 %v30, %v90
    %v99 = vmul.f32 %v31, %v90
    %v100 = vmul.f32 %v32, %v90
    %v101 = vmul.f32 %v33, %v90
    %v102 = vmul.f32 %v34, %v90
    %v103 = vmul.f32 %v35, %v90
    %v104 = vmul.f32 %v36, %v90
    %v105 = vmul.f32 %v37, %v90
    %v106 = vmul.f32 %v38, %v90
    %v107 = vmul.f32 %v39, %v90
    %v108 = vmul.f32 %v40, %v90
    %v109 = vmul.f32 %v41, %v90
    %v110 = vmul.f32 %v42, %v90
    %v111 = vmul.f32 %v43, %v90
    %v112 = vmul.f32 %v44, %v90
    %v113 = vmul.f32 %v45, %v90
    %v114 = vmul.f32 %v46, %v90
    %v115 = vmul.f32 %v47, %v90
    %v116 = vmul.f32 %v48, %v90
    %v117 = vmul.f32 %v49, %v90
    %v118 = vmul.f32 %v50, %v90
    %v119 = vmul.f32 %v51, %v90
    %v120 = vmul.f32 %v52, %v90
    %v121 = vmul.f32 %v53, %v90
    %v122 = vmul.f32 %v54, %v90
    %v123 = vmul.f32 %v55, %v90
    %v124 = vmul.f32 %v56, %v90
    %v125 = vmul.f32 %v57, %v90
    %v126 = vmul.f32 %v58, %v90
    %v127 = vmul.f32 %v59, %v90
    %v128 = vmul.f32 %v60, %v90
    %v129 = vmul.f32 %v61, %v90
    %v130 = vmul.f32 %v62, %v90
    %v131 = vmul.f32 %v63, %v90
    %v132 = vmul.f32 %v64, %v90
    %v133 = vmul.f32 %v65, %v90
    %v134 = vmul.f32 %v66, %v90
    %v135 = vmul.f32 %v67, %v90
    %v136 = vmul.f32 %v68, %v90
    %v137 = vmul.f32 %v69, %v90
    %v138 = vmul.f32 %v70, %v90
    %v139 = vmul.f32 %v71, %v90
    %v140 = vmul.f32 %v72, %v90
    %v141 = vmul.f32 %v73, %v90
    %v142 = vmul.f32 %v74, %v90
    %v143 = vmul.f32 %v75, %v90
    %v144 = vmul.f32 %v76, %v90
    %v145 = vmul.f32 %v77, %v90
    %v146 = vmul.f32 %v78, %v90
    %v147 = vmul.f32 %v79, %v90
    %v148 = vmul.f32 %v80, %v90
    %v149 = vmul.f32 %v81, %v90
    %v150 = vmul.f32 %v82, %v90
    %v151 = vmul.f32 %v83, %v90
    %v152 = vmul.f32 %v84, %v90
    %v153 = vmul.f32 %v85, %v90
    %v154 = vmul.f32 %v86, %v90
    %v155 = vmul.f32 %v87, %v90
    %v156 = vld [vmem:[%s2] sm:$0x1]
    %v158 = vperm.slane %v156, 0
    %v160 = vadd.f32 %v92, %v158
    %v161 = vadd.f32 %v93, %v158
    %v162 = vadd.f32 %v94, %v158
    %v163 = vadd.f32 %v95, %v158
    %v164 = vadd.f32 %v96, %v158
    %v165 = vadd.f32 %v97, %v158
    %v166 = vadd.f32 %v98, %v158
    %v167 = vadd.f32 %v99, %v158
    %v168 = vadd.f32 %v100, %v158
    %v169 = vadd.f32 %v101, %v158
    %v170 = vadd.f32 %v102, %v158
    %v171 = vadd.f32 %v103, %v158
    %v172 = vadd.f32 %v104, %v158
    %v173 = vadd.f32 %v105, %v158
    %v174 = vadd.f32 %v106, %v158
    %v175 = vadd.f32 %v107, %v158
    %v176 = vadd.f32 %v108, %v158
    %v177 = vadd.f32 %v109, %v158
    %v178 = vadd.f32 %v110, %v158
    %v179 = vadd.f32 %v111, %v158
    %v180 = vadd.f32 %v112, %v158
    %v181 = vadd.f32 %v113, %v158
    %v182 = vadd.f32 %v114, %v158
    %v183 = vadd.f32 %v115, %v158
    %v184 = vadd.f32 %v116, %v158
    %v185 = vadd.f32 %v117, %v158
    %v186 = vadd.f32 %v118, %v158
    %v187 = vadd.f32 %v119, %v158
    %v188 = vadd.f32 %v120, %v158
    %v189 = vadd.f32 %v121, %v158
    %v190 = vadd.f32 %v122, %v158
    %v191 = vadd.f32 %v123, %v158
    %v192 = vadd.f32 %v124, %v158
    %v193 = vadd.f32 %v125, %v158
    %v194 = vadd.f32 %v126, %v158
    %v195 = vadd.f32 %v127, %v158
    %v196 = vadd.f32 %v128, %v158
    %v197 = vadd.f32 %v129, %v158
    %v198 = vadd.f32 %v130, %v158
    %v199 = vadd.f32 %v131, %v158
    %v200 = vadd.f32 %v132, %v158
    %v201 = vadd.f32 %v133, %v158
    %v202 = vadd.f32 %v134, %v158
    %v203 = vadd.f32 %v135, %v158
    %v204 = vadd.f32 %v136, %v158
    %v205 = vadd.f32 %v137, %v158
    %v206 = vadd.f32 %v138, %v158
    %v207 = vadd.f32 %v139, %v158
    %v208 = vadd.f32 %v140, %v158
    %v209 = vadd.f32 %v141, %v158
    %v210 = vadd.f32 %v142, %v158
    %v211 = vadd.f32 %v143, %v158
    %v212 = vadd.f32 %v144, %v158
    %v213 = vadd.f32 %v145, %v158
    %v214 = vadd.f32 %v146, %v158
    %v215 = vadd.f32 %v147, %v158
    %v216 = vadd.f32 %v148, %v158
    %v217 = vadd.f32 %v149, %v158
    %v218 = vadd.f32 %v150, %v158
    %v219 = vadd.f32 %v151, %v158
    %v220 = vadd.f32 %v152, %v158
    %v221 = vadd.f32 %v153, %v158
    %v222 = vadd.f32 %v154, %v158
    %v223 = vadd.f32 %v155, %v158
    %v224 = vmax.f32 %v160, 0.0
    %v225 = vmax.f32 %v161, 0.0
    %v226 = vmax.f32 %v162, 0.0
    %v227 = vmax.f32 %v163, 0.0
    %v228 = vmax.f32 %v164, 0.0
    %v229 = vmax.f32 %v165, 0.0
    %v230 = vmax.f32 %v166, 0.0
    %v231 = vmax.f32 %v167, 0.0
    %v232 = vmax.f32 %v168, 0.0
    %v233 = vmax.f32 %v169, 0.0
    %v234 = vmax.f32 %v170, 0.0
    %v235 = vmax.f32 %v171, 0.0
    %v236 = vmax.f32 %v172, 0.0
    %v237 = vmax.f32 %v173, 0.0
    %v238 = vmax.f32 %v174, 0.0
    %v239 = vmax.f32 %v175, 0.0
    %v240 = vmax.f32 %v176, 0.0
    %v241 = vmax.f32 %v177, 0.0
    %v242 = vmax.f32 %v178, 0.0
    %v243 = vmax.f32 %v179, 0.0
    %v244 = vmax.f32 %v180, 0.0
    %v245 = vmax.f32 %v181, 0.0
    %v246 = vmax.f32 %v182, 0.0
    %v247 = vmax.f32 %v183, 0.0
    %v248 = vmax.f32 %v184, 0.0
    %v249 = vmax.f32 %v185, 0.0
    %v250 = vmax.f32 %v186, 0.0
    %v251 = vmax.f32 %v187, 0.0
    %v252 = vmax.f32 %v188, 0.0
    %v253 = vmax.f32 %v189, 0.0
    %v254 = vmax.f32 %v190, 0.0
    %v255 = vmax.f32 %v191, 0.0
    %v256 = vmax.f32 %v192, 0.0
    %v257 = vmax.f32 %v193, 0.0
    %v258 = vmax.f32 %v194, 0.0
    %v259 = vmax.f32 %v195, 0.0
    %v260 = vmax.f32 %v196, 0.0
    %v261 = vmax.f32 %v197, 0.0
    %v262 = vmax.f32 %v198, 0.0
    %v263 = vmax.f32 %v199, 0.0
    %v264 = vmax.f32 %v200, 0.0
    %v265 = vmax.f32 %v201, 0.0
    %v266 = vmax.f32 %v202, 0.0
    %v267 = vmax.f32 %v203, 0.0
    %v268 = vmax.f32 %v204, 0.0
    %v269 = vmax.f32 %v205, 0.0
    %v270 = vmax.f32 %v206, 0.0
    %v271 = vmax.f32 %v207, 0.0
    %v272 = vmax.f32 %v208, 0.0
    %v273 = vmax.f32 %v209, 0.0
    %v274 = vmax.f32 %v210, 0.0
    %v275 = vmax.f32 %v211, 0.0
    %v276 = vmax.f32 %v212, 0.0
    %v277 = vmax.f32 %v213, 0.0
    %v278 = vmax.f32 %v214, 0.0
    %v279 = vmax.f32 %v215, 0.0
    %v280 = vmax.f32 %v216, 0.0
    %v281 = vmax.f32 %v217, 0.0
    %v282 = vmax.f32 %v218, 0.0
    %v283 = vmax.f32 %v219, 0.0
    %v284 = vmax.f32 %v220, 0.0
    %v285 = vmax.f32 %v221, 0.0
    %v286 = vmax.f32 %v222, 0.0
    %v287 = vmax.f32 %v223, 0.0
    %v288 = vld [vmem:[%s3] sm:$0xff]
    %v289 = vld [vmem:[%s3 + $0x8] sm:$0xff]
    %v290 = vld [vmem:[%s3 + $0x10] sm:$0xff]
    %v291 = vld [vmem:[%s3 + $0x18] sm:$0xff]
    %v292 = vld [vmem:[%s3 + $0x20] sm:$0xff]
    %v293 = vld [vmem:[%s3 + $0x28] sm:$0xff]
    %v294 = vld [vmem:[%s3 + $0x30] sm:$0xff]
    %v295 = vld [vmem:[%s3 + $0x38] sm:$0xff]
    %v296 = vld [vmem:[%s4] sm:$0x1]
    %v298 = vperm.slane %v296, 0
    %vm300 = vcmask 523264
    %v302 = vsel %vm300, %v224, 0
    %v305 = vsel %vm300, %v225, 0
    %v308 = vsel %vm300, %v226, 0
    %v311 = vsel %vm300, %v227, 0
    %v314 = vsel %vm300, %v228, 0
    %v317 = vsel %vm300, %v229, 0
    %v320 = vsel %vm300, %v230, 0
    %v323 = vsel %vm300, %v231, 0
    %v326 = vsel %vm300, %v232, 0
    %v329 = vsel %vm300, %v233, 0
    %v332 = vsel %vm300, %v234, 0
    %v335 = vsel %vm300, %v235, 0
    %v338 = vsel %vm300, %v236, 0
    %v341 = vsel %vm300, %v237, 0
    %v344 = vsel %vm300, %v238, 0
    %v347 = vsel %vm300, %v239, 0
    %v350 = vsel %vm300, %v240, 0
    %v353 = vsel %vm300, %v241, 0
    %v356 = vsel %vm300, %v242, 0
    %v359 = vsel %vm300, %v243, 0
    %v362 = vsel %vm300, %v244, 0
    %v365 = vsel %vm300, %v245, 0
    %v368 = vsel %vm300, %v246, 0
    %v371 = vsel %vm300, %v247, 0
    %v374 = vsel %vm300, %v248, 0
    %v377 = vsel %vm300, %v249, 0
    %v380 = vsel %vm300, %v250, 0
    %v383 = vsel %vm300, %v251, 0
    %v386 = vsel %vm300, %v252, 0
    %v389 = vsel %vm300, %v253, 0
    %v392 = vsel %vm300, %v254, 0
    %v395 = vsel %vm300, %v255, 0
    %v398 = vsel %vm300, %v256, 0
    %v401 = vsel %vm300, %v257, 0
    %v404 = vsel %vm300, %v258, 0
    %v407 = vsel %vm300, %v259, 0
    %v410 = vsel %vm300, %v260, 0
    %v413 = vsel %vm300, %v261, 0
    %v416 = vsel %vm300, %v262, 0
    %v419 = vsel %vm300, %v263, 0
    %v422 = vsel %vm300, %v264, 0
    %v425 = vsel %vm300, %v265, 0
    %v428 = vsel %vm300, %v266, 0
    %v431 = vsel %vm300, %v267, 0
    %v434 = vsel %vm300, %v268, 0
    %v437 = vsel %vm300, %v269, 0
    %v440 = vsel %vm300, %v270, 0
    %v443 = vsel %vm300, %v271, 0
    %v446 = vsel %vm300, %v272, 0
    %v449 = vsel %vm300, %v273, 0
    %v452 = vsel %vm300, %v274, 0
    %v455 = vsel %vm300, %v275, 0
    %v458 = vsel %vm300, %v276, 0
    %v461 = vsel %vm300, %v277, 0
    %v464 = vsel %vm300, %v278, 0
    %v467 = vsel %vm300, %v279, 0
    %v470 = vsel %vm300, %v280, 0
    %v473 = vsel %vm300, %v281, 0
    %v476 = vsel %vm300, %v282, 0
    %v479 = vsel %vm300, %v283, 0
    %v482 = vsel %vm300, %v284, 0
    %v485 = vsel %vm300, %v285, 0
    %v488 = vsel %vm300, %v286, 0
    %v491 = vsel %vm300, %v287, 0
    %493 = vmatpush.msra.mxu0 0.0
    %494 = vmatpush.msra.mxu0 0.0
    %495 = vmatpush.msra.mxu0 0.0
    %496 = vmatpush.msra.mxu0 0.0
    %497 = vmatpush.msra.mxu0 0.0
    %498 = vmatpush.msra.mxu0 0.0
    %499 = vmatpush.msra.mxu0 0.0
    %500 = vmatpush.msra.mxu0 0.0
    %501 = vmatpush.msra.mxu0 %v295
    %502 = vmatpush.msra.mxu0 %v294
    %503 = vmatpush.msra.mxu0 %v293
    %504 = vmatpush.msra.mxu0 %v292
    %505 = vmatpush.msra.mxu0 %v291
    %506 = vmatpush.msra.mxu0 %v290
    %507 = vmatpush.msra.mxu0 %v289
    %508 = vmatpush.msra.mxu0 %v288
    %509 = vmatmul.f32.gmra.mxu0 %v302
    %v510 = vpop.f32.mrf.mxu0
    %v511 = vadd.f32 %v298, %v510
    %512 = vmatmul.f32.gmra.mxu0 %v305
    %v513 = vpop.f32.mrf.mxu0
    %v514 = vadd.f32 %v298, %v513
    %515 = vmatmul.f32.gmra.mxu0 %v308
    %v516 = vpop.f32.mrf.mxu0
    %v517 = vadd.f32 %v298, %v516
    %518 = vmatmul.f32.gmra.mxu0 %v311
    %v519 = vpop.f32.mrf.mxu0
    %v520 = vadd.f32 %v298, %v519
    %521 = vmatmul.f32.gmra.mxu0 %v314
    %v522 = vpop.f32.mrf.mxu0
    %v523 = vadd.f32 %v298, %v522
    %524 = vmatmul.f32.gmra.mxu0 %v317
    %v525 = vpop.f32.mrf.mxu0
    %v526 = vadd.f32 %v298, %v525
    %527 = vmatmul.f32.gmra.mxu0 %v320
    %v528 = vpop.f32.mrf.mxu0
    %v529 = vadd.f32 %v298, %v528
    %530 = vmatmul.f32.gmra.mxu0 %v323
    %v531 = vpop.f32.mrf.mxu0
    %v532 = vadd.f32 %v298, %v531
    %533 = vmatmul.f32.gmra.mxu0 %v326
    %v534 = vpop.f32.mrf.mxu0
    %v535 = vadd.f32 %v298, %v534
    %536 = vmatmul.f32.gmra.mxu0 %v329
    %v537 = vpop.f32.mrf.mxu0
    %v538 = vadd.f32 %v298, %v537
    %539 = vmatmul.f32.gmra.mxu0 %v332
    %v540 = vpop.f32.mrf.mxu0
    %v541 = vadd.f32 %v298, %v540
    %542 = vmatmul.f32.gmra.mxu0 %v335
    %v543 = vpop.f32.mrf.mxu0
    %v544 = vadd.f32 %v298, %v543
    %545 = vmatmul.f32.gmra.mxu0 %v338
    %v546 = vpop.f32.mrf.mxu0
    %v547 = vadd.f32 %v298, %v546
    %548 = vmatmul.f32.gmra.mxu0 %v341
    %v549 = vpop.f32.mrf.mxu0
    %v550 = vadd.f32 %v298, %v549
    %551 = vmatmul.f32.gmra.mxu0 %v344
    %v552 = vpop.f32.mrf.mxu0
    %v553 = vadd.f32 %v298, %v552
    %554 = vmatmul.f32.gmra.mxu0 %v347
    %v555 = vpop.f32.mrf.mxu0
    %v556 = vadd.f32 %v298, %v555
    %557 = vmatmul.f32.gmra.mxu0 %v350
    %v558 = vpop.f32.mrf.mxu0
    %v559 = vadd.f32 %v298, %v558
    %560 = vmatmul.f32.gmra.mxu0 %v353
    %v561 = vpop.f32.mrf.mxu0
    %v562 = vadd.f32 %v298, %v561
    %563 = vmatmul.f32.gmra.mxu0 %v356
    %v564 = vpop.f32.mrf.mxu0
    %v565 = vadd.f32 %v298, %v564
    %566 = vmatmul.f32.gmra.mxu0 %v359
    %v567 = vpop.f32.mrf.mxu0
    %v568 = vadd.f32 %v298, %v567
    %569 = vmatmul.f32.gmra.mxu0 %v362
    %v570 = vpop.f32.mrf.mxu0
    %v571 = vadd.f32 %v298, %v570
    %572 = vmatmul.f32.gmra.mxu0 %v365
    %v573 = vpop.f32.mrf.mxu0
    %v574 = vadd.f32 %v298, %v573
    %575 = vmatmul.f32.gmra.mxu0 %v368
    %v576 = vpop.f32.mrf.mxu0
    %v577 = vadd.f32 %v298, %v576
    %578 = vmatmul.f32.gmra.mxu0 %v371
    %v579 = vpop.f32.mrf.mxu0
    %v580 = vadd.f32 %v298, %v579
    %581 = vmatmul.f32.gmra.mxu0 %v374
    %v582 = vpop.f32.mrf.mxu0
    %v583 = vadd.f32 %v298, %v582
    %584 = vmatmul.f32.gmra.mxu0 %v377
    %v585 = vpop.f32.mrf.mxu0
    %v586 = vadd.f32 %v298, %v585
    %587 = vmatmul.f32.gmra.mxu0 %v380
    %v588 = vpop.f32.mrf.mxu0
    %v589 = vadd.f32 %v298, %v588
    %590 = vmatmul.f32.gmra.mxu0 %v383
    %v591 = vpop.f32.mrf.mxu0
    %v592 = vadd.f32 %v298, %v591
    %593 = vmatmul.f32.gmra.mxu0 %v386
    %v594 = vpop.f32.mrf.mxu0
    %v595 = vadd.f32 %v298, %v594
    %596 = vmatmul.f32.gmra.mxu0 %v389
    %v597 = vpop.f32.mrf.mxu0
    %v598 = vadd.f32 %v298, %v597
    %599 = vmatmul.f32.gmra.mxu0 %v392
    %v600 = vpop.f32.mrf.mxu0
    %v601 = vadd.f32 %v298, %v600
    %602 = vmatmul.f32.gmra.mxu0 %v395
    %v603 = vpop.f32.mrf.mxu0
    %v604 = vadd.f32 %v298, %v603
    %605 = vmatmul.f32.gmra.mxu0 %v398
    %v606 = vpop.f32.mrf.mxu0
    %v607 = vadd.f32 %v298, %v606
    %608 = vmatmul.f32.gmra.mxu0 %v401
    %v609 = vpop.f32.mrf.mxu0
    %v610 = vadd.f32 %v298, %v609
    %611 = vmatmul.f32.gmra.mxu0 %v404
    %v612 = vpop.f32.mrf.mxu0
    %v613 = vadd.f32 %v298, %v612
    %614 = vmatmul.f32.gmra.mxu0 %v407
    %v615 = vpop.f32.mrf.mxu0
    %v616 = vadd.f32 %v298, %v615
    %617 = vmatmul.f32.gmra.mxu0 %v410
    %v618 = vpop.f32.mrf.mxu0
    %v619 = vadd.f32 %v298, %v618
    %620 = vmatmul.f32.gmra.mxu0 %v413
    %v621 = vpop.f32.mrf.mxu0
    %v622 = vadd.f32 %v298, %v621
    %623 = vmatmul.f32.gmra.mxu0 %v416
    %v624 = vpop.f32.mrf.mxu0
    %v625 = vadd.f32 %v298, %v624
    %626 = vmatmul.f32.gmra.mxu0 %v419
    %v627 = vpop.f32.mrf.mxu0
    %v628 = vadd.f32 %v298, %v627
    %629 = vmatmul.f32.gmra.mxu0 %v422
    %v630 = vpop.f32.mrf.mxu0
    %v631 = vadd.f32 %v298, %v630
    %632 = vmatmul.f32.gmra.mxu0 %v425
    %v633 = vpop.f32.mrf.mxu0
    %v634 = vadd.f32 %v298, %v633
    %635 = vmatmul.f32.gmra.mxu0 %v428
    %v636 = vpop.f32.mrf.mxu0
    %v637 = vadd.f32 %v298, %v636
    %638 = vmatmul.f32.gmra.mxu0 %v431
    %v639 = vpop.f32.mrf.mxu0
    %v640 = vadd.f32 %v298, %v639
    %641 = vmatmul.f32.gmra.mxu0 %v434
    %v642 = vpop.f32.mrf.mxu0
    %v643 = vadd.f32 %v298, %v642
    %644 = vmatmul.f32.gmra.mxu0 %v437
    %v645 = vpop.f32.mrf.mxu0
    %v646 = vadd.f32 %v298, %v645
    %647 = vmatmul.f32.gmra.mxu0 %v440
    %v648 = vpop.f32.mrf.mxu0
    %v649 = vadd.f32 %v298, %v648
    %650 = vmatmul.f32.gmra.mxu0 %v443
    %v651 = vpop.f32.mrf.mxu0
    %v652 = vadd.f32 %v298, %v651
    %653 = vmatmul.f32.gmra.mxu0 %v446
    %v654 = vpop.f32.mrf.mxu0
    %v655 = vadd.f32 %v298, %v654
    %656 = vmatmul.f32.gmra.mxu0 %v449
    %v657 = vpop.f32.mrf.mxu0
    %v658 = vadd.f32 %v298, %v657
    %659 = vmatmul.f32.gmra.mxu0 %v452
    %v660 = vpop.f32.mrf.mxu0
    %v661 = vadd.f32 %v298, %v660
    %662 = vmatmul.f32.gmra.mxu0 %v455
    %v663 = vpop.f32.mrf.mxu0
    %v664 = vadd.f32 %v298, %v663
    %665 = vmatmul.f32.gmra.mxu0 %v458
    %v666 = vpop.f32.mrf.mxu0
    %v667 = vadd.f32 %v298, %v666
    %668 = vmatmul.f32.gmra.mxu0 %v461
    %v669 = vpop.f32.mrf.mxu0
    %v670 = vadd.f32 %v298, %v669
    %671 = vmatmul.f32.gmra.mxu0 %v464
    %v672 = vpop.f32.mrf.mxu0
    %v673 = vadd.f32 %v298, %v672
    %674 = vmatmul.f32.gmra.mxu0 %v467
    %v675 = vpop.f32.mrf.mxu0
    %v676 = vadd.f32 %v298, %v675
    %677 = vmatmul.f32.gmra.mxu0 %v470
    %v678 = vpop.f32.mrf.mxu0
    %v679 = vadd.f32 %v298, %v678
    %680 = vmatmul.f32.gmra.mxu0 %v473
    %v681 = vpop.f32.mrf.mxu0
    %v682 = vadd.f32 %v298, %v681
    %683 = vmatmul.f32.gmra.mxu0 %v476
    %v684 = vpop.f32.mrf.mxu0
    %v685 = vadd.f32 %v298, %v684
    %686 = vmatmul.f32.gmra.mxu0 %v479
    %v687 = vpop.f32.mrf.mxu0
    %v688 = vadd.f32 %v298, %v687
    %689 = vmatmul.f32.gmra.mxu0 %v482
    %v690 = vpop.f32.mrf.mxu0
    %v691 = vadd.f32 %v298, %v690
    %692 = vmatmul.f32.gmra.mxu0 %v485
    %v693 = vpop.f32.mrf.mxu0
    %v694 = vadd.f32 %v298, %v693
    %695 = vmatmul.f32.gmra.mxu0 %v488
    %v696 = vpop.f32.mrf.mxu0
    %v697 = vadd.f32 %v298, %v696
    %698 = vmatmul.f32.gmra.mxu0 %v491
    %v699 = vpop.f32.mrf.mxu0
    %v700 = vadd.f32 %v298, %v699
    %701 = vdwg.mxu0
    %v702 = vmax.f32 %v511, 0.0
    %v703 = vmax.f32 %v514, 0.0
    %v704 = vmax.f32 %v517, 0.0
    %v705 = vmax.f32 %v520, 0.0
    %v706 = vmax.f32 %v523, 0.0
    %v707 = vmax.f32 %v526, 0.0
    %v708 = vmax.f32 %v529, 0.0
    %v709 = vmax.f32 %v532, 0.0
    %v710 = vmax.f32 %v535, 0.0
    %v711 = vmax.f32 %v538, 0.0
    %v712 = vmax.f32 %v541, 0.0
    %v713 = vmax.f32 %v544, 0.0
    %v714 = vmax.f32 %v547, 0.0
    %v715 = vmax.f32 %v550, 0.0
    %v716 = vmax.f32 %v553, 0.0
    %v717 = vmax.f32 %v556, 0.0
    %v718 = vmax.f32 %v559, 0.0
    %v719 = vmax.f32 %v562, 0.0
    %v720 = vmax.f32 %v565, 0.0
    %v721 = vmax.f32 %v568, 0.0
    %v722 = vmax.f32 %v571, 0.0
    %v723 = vmax.f32 %v574, 0.0
    %v724 = vmax.f32 %v577, 0.0
    %v725 = vmax.f32 %v580, 0.0
    %v726 = vmax.f32 %v583, 0.0
    %v727 = vmax.f32 %v586, 0.0
    %v728 = vmax.f32 %v589, 0.0
    %v729 = vmax.f32 %v592, 0.0
    %v730 = vmax.f32 %v595, 0.0
    %v731 = vmax.f32 %v598, 0.0
    %v732 = vmax.f32 %v601, 0.0
    %v733 = vmax.f32 %v604, 0.0
    %v734 = vmax.f32 %v607, 0.0
    %v735 = vmax.f32 %v610, 0.0
    %v736 = vmax.f32 %v613, 0.0
    %v737 = vmax.f32 %v616, 0.0
    %v738 = vmax.f32 %v619, 0.0
    %v739 = vmax.f32 %v622, 0.0
    %v740 = vmax.f32 %v625, 0.0
    %v741 = vmax.f32 %v628, 0.0
    %v742 = vmax.f32 %v631, 0.0
    %v743 = vmax.f32 %v634, 0.0
    %v744 = vmax.f32 %v637, 0.0
    %v745 = vmax.f32 %v640, 0.0
    %v746 = vmax.f32 %v643, 0.0
    %v747 = vmax.f32 %v646, 0.0
    %v748 = vmax.f32 %v649, 0.0
    %v749 = vmax.f32 %v652, 0.0
    %v750 = vmax.f32 %v655, 0.0
    %v751 = vmax.f32 %v658, 0.0
    %v752 = vmax.f32 %v661, 0.0
    %v753 = vmax.f32 %v664, 0.0
    %v754 = vmax.f32 %v667, 0.0
    %v755 = vmax.f32 %v670, 0.0
    %v756 = vmax.f32 %v673, 0.0
    %v757 = vmax.f32 %v676, 0.0
    %v758 = vmax.f32 %v679, 0.0
    %v759 = vmax.f32 %v682, 0.0
    %v760 = vmax.f32 %v685, 0.0
    %v761 = vmax.f32 %v688, 0.0
    %v762 = vmax.f32 %v691, 0.0
    %v763 = vmax.f32 %v694, 0.0
    %v764 = vmax.f32 %v697, 0.0
    %v765 = vmax.f32 %v700, 0.0
    %v766 = vld [vmem:[%s5] sm:$0xff]
    %v767 = vld [vmem:[%s5 + $0x8] sm:$0xff]
    %v768 = vld [vmem:[%s5 + $0x10] sm:$0xff]
    %v769 = vld [vmem:[%s5 + $0x18] sm:$0xff]
    %v770 = vld [vmem:[%s5 + $0x20] sm:$0xff]
    %v771 = vld [vmem:[%s5 + $0x28] sm:$0xff]
    %v772 = vld [vmem:[%s5 + $0x30] sm:$0xff]
    %v773 = vld [vmem:[%s5 + $0x38] sm:$0xff]
    %v774 = vld [vmem:[%s5 + $0x40] sm:$0xff]
    %v775 = vld [vmem:[%s5 + $0x48] sm:$0xff]
    %v776 = vld [vmem:[%s5 + $0x50] sm:$0xff]
    %v777 = vld [vmem:[%s5 + $0x58] sm:$0xff]
    %v778 = vld [vmem:[%s5 + $0x60] sm:$0xff]
    %v779 = vld [vmem:[%s5 + $0x68] sm:$0xff]
    %v780 = vld [vmem:[%s5 + $0x70] sm:$0xff]
    %v781 = vld [vmem:[%s5 + $0x78] sm:$0xff]
    %v782 = vld [vmem:[%s5 + $0x80] sm:$0xff]
    %v783 = vld [vmem:[%s5 + $0x88] sm:$0xff]
    %v784 = vld [vmem:[%s5 + $0x90] sm:$0xff]
    %v785 = vld [vmem:[%s5 + $0x98] sm:$0xff]
    %v786 = vld [vmem:[%s5 + $0xa0] sm:$0xff]
    %v787 = vld [vmem:[%s5 + $0xa8] sm:$0xff]
    %v788 = vld [vmem:[%s5 + $0xb0] sm:$0xff]
    %v789 = vld [vmem:[%s5 + $0xb8] sm:$0xff]
    %v790 = vld [vmem:[%s5 + $0xc0] sm:$0xff]
    %v791 = vld [vmem:[%s5 + $0xc8] sm:$0xff]
    %v792 = vld [vmem:[%s5 + $0xd0] sm:$0xff]
    %v793 = vld [vmem:[%s5 + $0xd8] sm:$0xff]
    %v794 = vld [vmem:[%s5 + $0xe0] sm:$0xff]
    %v795 = vld [vmem:[%s5 + $0xe8] sm:$0xff]
    %v796 = vld [vmem:[%s5 + $0xf0] sm:$0xff]
    %v797 = vld [vmem:[%s5 + $0xf8] sm:$0xff]
    %v798 = vld [vmem:[%s5 + $0x100] sm:$0xff]
    %v799 = vld [vmem:[%s5 + $0x108] sm:$0xff]
    %v800 = vld [vmem:[%s5 + $0x110] sm:$0xff]
    %v801 = vld [vmem:[%s5 + $0x118] sm:$0xff]
    %v802 = vld [vmem:[%s5 + $0x120] sm:$0xff]
    %v803 = vld [vmem:[%s5 + $0x128] sm:$0xff]
    %v804 = vld [vmem:[%s5 + $0x130] sm:$0xff]
    %v805 = vld [vmem:[%s5 + $0x138] sm:$0xff]
    %v806 = vld [vmem:[%s5 + $0x140] sm:$0xff]
    %v807 = vld [vmem:[%s5 + $0x148] sm:$0xff]
    %v808 = vld [vmem:[%s5 + $0x150] sm:$0xff]
    %v809 = vld [vmem:[%s5 + $0x158] sm:$0xff]
    %v810 = vld [vmem:[%s5 + $0x160] sm:$0xff]
    %v811 = vld [vmem:[%s5 + $0x168] sm:$0xff]
    %v812 = vld [vmem:[%s5 + $0x170] sm:$0xff]
    %v813 = vld [vmem:[%s5 + $0x178] sm:$0xff]
    %814 = vmatpush.msra.mxu0 %v811
    %815 = vmatpush.msra.mxu0 %v808
    %816 = vmatpush.msra.mxu0 %v805
    %817 = vmatpush.msra.mxu0 %v802
    %818 = vmatpush.msra.mxu0 %v799
    %819 = vmatpush.msra.mxu0 %v796
    %820 = vmatpush.msra.mxu0 %v793
    %821 = vmatpush.msra.mxu0 %v790
    %822 = vmatpush.msra.mxu0 %v787
    %823 = vmatpush.msra.mxu0 %v784
    %824 = vmatpush.msra.mxu0 %v781
    %825 = vmatpush.msra.mxu0 %v778
    %826 = vmatpush.msra.mxu0 %v775
    %827 = vmatpush.msra.mxu0 %v772
    %828 = vmatpush.msra.mxu0 %v769
    %829 = vmatpush.msra.mxu0 %v766
    %830 = vmatmul.f32.gmra.mxu0 %v702
    %v831 = vpop.f32.mrf.mxu0
    %v832 = vadd.f32 0.0, %v831
    %833 = vmatmul.f32.gmra.mxu0 %v703
    %v834 = vpop.f32.mrf.mxu0
    %v835 = vadd.f32 0.0, %v834
    %836 = vmatmul.f32.gmra.mxu0 %v704
    %v837 = vpop.f32.mrf.mxu0
    %v838 = vadd.f32 0.0, %v837
    %839 = vmatmul.f32.gmra.mxu0 %v705
    %v840 = vpop.f32.mrf.mxu0
    %v841 = vadd.f32 0.0, %v840
    %842 = vmatmul.f32.gmra.mxu0 %v706
    %v843 = vpop.f32.mrf.mxu0
    %v844 = vadd.f32 0.0, %v843
    %845 = vmatmul.f32.gmra.mxu0 %v707
    %v846 = vpop.f32.mrf.mxu0
    %v847 = vadd.f32 0.0, %v846
    %848 = vmatmul.f32.gmra.mxu0 %v708
    %v849 = vpop.f32.mrf.mxu0
    %v850 = vadd.f32 0.0, %v849
    %851 = vmatmul.f32.gmra.mxu0 %v709
    %v852 = vpop.f32.mrf.mxu0
    %v853 = vadd.f32 0.0, %v852
    %854 = vmatmul.f32.gmra.mxu0 %v710
    %v855 = vpop.f32.mrf.mxu0
    %v856 = vadd.f32 0.0, %v855
    %857 = vmatmul.f32.gmra.mxu0 %v711
    %v858 = vpop.f32.mrf.mxu0
    %v859 = vadd.f32 0.0, %v858
    %860 = vmatmul.f32.gmra.mxu0 %v712
    %v861 = vpop.f32.mrf.mxu0
    %v862 = vadd.f32 0.0, %v861
    %863 = vmatmul.f32.gmra.mxu0 %v713
    %v864 = vpop.f32.mrf.mxu0
    %v865 = vadd.f32 0.0, %v864
    %866 = vmatmul.f32.gmra.mxu0 %v714
    %v867 = vpop.f32.mrf.mxu0
    %v868 = vadd.f32 0.0, %v867
    %869 = vmatmul.f32.gmra.mxu0 %v715
    %v870 = vpop.f32.mrf.mxu0
    %v871 = vadd.f32 0.0, %v870
    %872 = vmatmul.f32.gmra.mxu0 %v716
    %v873 = vpop.f32.mrf.mxu0
    %v874 = vadd.f32 0.0, %v873
    %875 = vmatmul.f32.gmra.mxu0 %v717
    %v876 = vpop.f32.mrf.mxu0
    %v877 = vadd.f32 0.0, %v876
    %878 = vmatmul.f32.gmra.mxu0 %v718
    %v879 = vpop.f32.mrf.mxu0
    %v880 = vadd.f32 0.0, %v879
    %881 = vmatmul.f32.gmra.mxu0 %v719
    %v882 = vpop.f32.mrf.mxu0
    %v883 = vadd.f32 0.0, %v882
    %884 = vmatmul.f32.gmra.mxu0 %v720
    %v885 = vpop.f32.mrf.mxu0
    %v886 = vadd.f32 0.0, %v885
    %887 = vmatmul.f32.gmra.mxu0 %v721
    %v888 = vpop.f32.mrf.mxu0
    %v889 = vadd.f32 0.0, %v888
    %890 = vmatmul.f32.gmra.mxu0 %v722
    %v891 = vpop.f32.mrf.mxu0
    %v892 = vadd.f32 0.0, %v891
    %893 = vmatmul.f32.gmra.mxu0 %v723
    %v894 = vpop.f32.mrf.mxu0
    %v895 = vadd.f32 0.0, %v894
    %896 = vmatmul.f32.gmra.mxu0 %v724
    %v897 = vpop.f32.mrf.mxu0
    %v898 = vadd.f32 0.0, %v897
    %899 = vmatmul.f32.gmra.mxu0 %v725
    %v900 = vpop.f32.mrf.mxu0
    %v901 = vadd.f32 0.0, %v900
    %902 = vmatmul.f32.gmra.mxu0 %v726
    %v903 = vpop.f32.mrf.mxu0
    %v904 = vadd.f32 0.0, %v903
    %905 = vmatmul.f32.gmra.mxu0 %v727
    %v906 = vpop.f32.mrf.mxu0
    %v907 = vadd.f32 0.0, %v906
    %908 = vmatmul.f32.gmra.mxu0 %v728
    %v909 = vpop.f32.mrf.mxu0
    %v910 = vadd.f32 0.0, %v909
    %911 = vmatmul.f32.gmra.mxu0 %v729
    %v912 = vpop.f32.mrf.mxu0
    %v913 = vadd.f32 0.0, %v912
    %914 = vmatmul.f32.gmra.mxu0 %v730
    %v915 = vpop.f32.mrf.mxu0
    %v916 = vadd.f32 0.0, %v915
    %917 = vmatmul.f32.gmra.mxu0 %v731
    %v918 = vpop.f32.mrf.mxu0
    %v919 = vadd.f32 0.0, %v918
    %920 = vmatmul.f32.gmra.mxu0 %v732
    %v921 = vpop.f32.mrf.mxu0
    %v922 = vadd.f32 0.0, %v921
    %923 = vmatmul.f32.gmra.mxu0 %v733
    %v924 = vpop.f32.mrf.mxu0
    %v925 = vadd.f32 0.0, %v924
    %926 = vmatmul.f32.gmra.mxu0 %v734
    %v927 = vpop.f32.mrf.mxu0
    %v928 = vadd.f32 0.0, %v927
    %929 = vmatmul.f32.gmra.mxu0 %v735
    %v930 = vpop.f32.mrf.mxu0
    %v931 = vadd.f32 0.0, %v930
    %932 = vmatmul.f32.gmra.mxu0 %v736
    %v933 = vpop.f32.mrf.mxu0
    %v934 = vadd.f32 0.0, %v933
    %935 = vmatmul.f32.gmra.mxu0 %v737
    %v936 = vpop.f32.mrf.mxu0
    %v937 = vadd.f32 0.0, %v936
    %938 = vmatmul.f32.gmra.mxu0 %v738
    %v939 = vpop.f32.mrf.mxu0
    %v940 = vadd.f32 0.0, %v939
    %941 = vmatmul.f32.gmra.mxu0 %v739
    %v942 = vpop.f32.mrf.mxu0
    %v943 = vadd.f32 0.0, %v942
    %944 = vmatmul.f32.gmra.mxu0 %v740
    %v945 = vpop.f32.mrf.mxu0
    %v946 = vadd.f32 0.0, %v945
    %947 = vmatmul.f32.gmra.mxu0 %v741
    %v948 = vpop.f32.mrf.mxu0
    %v949 = vadd.f32 0.0, %v948
    %950 = vmatmul.f32.gmra.mxu0 %v742
    %v951 = vpop.f32.mrf.mxu0
    %v952 = vadd.f32 0.0, %v951
    %953 = vmatmul.f32.gmra.mxu0 %v743
    %v954 = vpop.f32.mrf.mxu0
    %v955 = vadd.f32 0.0, %v954
    %956 = vmatmul.f32.gmra.mxu0 %v744
    %v957 = vpop.f32.mrf.mxu0
    %v958 = vadd.f32 0.0, %v957
    %959 = vmatmul.f32.gmra.mxu0 %v745
    %v960 = vpop.f32.mrf.mxu0
    %v961 = vadd.f32 0.0, %v960
    %962 = vmatmul.f32.gmra.mxu0 %v746
    %v963 = vpop.f32.mrf.mxu0
    %v964 = vadd.f32 0.0, %v963
    %965 = vmatmul.f32.gmra.mxu0 %v747
    %v966 = vpop.f32.mrf.mxu0
    %v967 = vadd.f32 0.0, %v966
    %968 = vmatmul.f32.gmra.mxu0 %v748
    %v969 = vpop.f32.mrf.mxu0
    %v970 = vadd.f32 0.0, %v969
    %971 = vmatmul.f32.gmra.mxu0 %v749
    %v972 = vpop.f32.mrf.mxu0
    %v973 = vadd.f32 0.0, %v972
    %974 = vmatmul.f32.gmra.mxu0 %v750
    %v975 = vpop.f32.mrf.mxu0
    %v976 = vadd.f32 0.0, %v975
    %977 = vmatmul.f32.gmra.mxu0 %v751
    %v978 = vpop.f32.mrf.mxu0
    %v979 = vadd.f32 0.0, %v978
    %980 = vmatmul.f32.gmra.mxu0 %v752
    %v981 = vpop.f32.mrf.mxu0
    %v982 = vadd.f32 0.0, %v981
    %983 = vmatmul.f32.gmra.mxu0 %v753
    %v984 = vpop.f32.mrf.mxu0
    %v985 = vadd.f32 0.0, %v984
    %986 = vmatmul.f32.gmra.mxu0 %v754
    %v987 = vpop.f32.mrf.mxu0
    %v988 = vadd.f32 0.0, %v987
    %989 = vmatmul.f32.gmra.mxu0 %v755
    %v990 = vpop.f32.mrf.mxu0
    %v991 = vadd.f32 0.0, %v990
    %992 = vmatmul.f32.gmra.mxu0 %v756
    %v993 = vpop.f32.mrf.mxu0
    %v994 = vadd.f32 0.0, %v993
    %995 = vmatmul.f32.gmra.mxu0 %v757
    %v996 = vpop.f32.mrf.mxu0
    %v997 = vadd.f32 0.0, %v996
    %998 = vmatmul.f32.gmra.mxu0 %v758
    %v999 = vpop.f32.mrf.mxu0
    %v1000 = vadd.f32 0.0, %v999
    %1001 = vmatmul.f32.gmra.mxu0 %v759
    %v1002 = vpop.f32.mrf.mxu0
    %v1003 = vadd.f32 0.0, %v1002
    %1004 = vmatmul.f32.gmra.mxu0 %v760
    %v1005 = vpop.f32.mrf.mxu0
    %v1006 = vadd.f32 0.0, %v1005
    %1007 = vmatmul.f32.gmra.mxu0 %v761
    %v1008 = vpop.f32.mrf.mxu0
    %v1009 = vadd.f32 0.0, %v1008
    %1010 = vmatmul.f32.gmra.mxu0 %v762
    %v1011 = vpop.f32.mrf.mxu0
    %v1012 = vadd.f32 0.0, %v1011
    %1013 = vmatmul.f32.gmra.mxu0 %v763
    %v1014 = vpop.f32.mrf.mxu0
    %v1015 = vadd.f32 0.0, %v1014
    %1016 = vmatmul.f32.gmra.mxu0 %v764
    %v1017 = vpop.f32.mrf.mxu0
    %v1018 = vadd.f32 0.0, %v1017
    %1019 = vmatmul.f32.gmra.mxu0 %v765
    %v1020 = vpop.f32.mrf.mxu0
    %v1021 = vadd.f32 0.0, %v1020
    %1022 = vdwg.mxu0
    %1023 = vmatpush.msra.mxu0 %v812
    %1024 = vmatpush.msra.mxu0 %v809
    %1025 = vmatpush.msra.mxu0 %v806
    %1026 = vmatpush.msra.mxu0 %v803
    %1027 = vmatpush.msra.mxu0 %v800
    %1028 = vmatpush.msra.mxu0 %v797
    %1029 = vmatpush.msra.mxu0 %v794
    %1030 = vmatpush.msra.mxu0 %v791
    %1031 = vmatpush.msra.mxu0 %v788
    %1032 = vmatpush.msra.mxu0 %v785
    %1033 = vmatpush.msra.mxu0 %v782
    %1034 = vmatpush.msra.mxu0 %v779
    %1035 = vmatpush.msra.mxu0 %v776
    %1036 = vmatpush.msra.mxu0 %v773
    %1037 = vmatpush.msra.mxu0 %v770
    %1038 = vmatpush.msra.mxu0 %v767
    %1039 = vmatmul.f32.gmra.mxu0 %v702
    %v1040 = vpop.f32.mrf.mxu0
    %v1041 = vadd.f32 0.0, %v1040
    %1042 = vmatmul.f32.gmra.mxu0 %v703
    %v1043 = vpop.f32.mrf.mxu0
    %v1044 = vadd.f32 0.0, %v1043
    %1045 = vmatmul.f32.gmra.mxu0 %v704
    %v1046 = vpop.f32.mrf.mxu0
    %v1047 = vadd.f32 0.0, %v1046
    %1048 = vmatmul.f32.gmra.mxu0 %v705
    %v1049 = vpop.f32.mrf.mxu0
    %v1050 = vadd.f32 0.0, %v1049
    %1051 = vmatmul.f32.gmra.mxu0 %v706
    %v1052 = vpop.f32.mrf.mxu0
    %v1053 = vadd.f32 0.0, %v1052
    %1054 = vmatmul.f32.gmra.mxu0 %v707
    %v1055 = vpop.f32.mrf.mxu0
    %v1056 = vadd.f32 0.0, %v1055
    %1057 = vmatmul.f32.gmra.mxu0 %v708
    %v1058 = vpop.f32.mrf.mxu0
    %v1059 = vadd.f32 0.0, %v1058
    %1060 = vmatmul.f32.gmra.mxu0 %v709
    %v1061 = vpop.f32.mrf.mxu0
    %v1062 = vadd.f32 0.0, %v1061
    %1063 = vmatmul.f32.gmra.mxu0 %v710
    %v1064 = vpop.f32.mrf.mxu0
    %v1065 = vadd.f32 0.0, %v1064
    %1066 = vmatmul.f32.gmra.mxu0 %v711
    %v1067 = vpop.f32.mrf.mxu0
    %v1068 = vadd.f32 0.0, %v1067
    %1069 = vmatmul.f32.gmra.mxu0 %v712
    %v1070 = vpop.f32.mrf.mxu0
    %v1071 = vadd.f32 0.0, %v1070
    %1072 = vmatmul.f32.gmra.mxu0 %v713
    %v1073 = vpop.f32.mrf.mxu0
    %v1074 = vadd.f32 0.0, %v1073
    %1075 = vmatmul.f32.gmra.mxu0 %v714
    %v1076 = vpop.f32.mrf.mxu0
    %v1077 = vadd.f32 0.0, %v1076
    %1078 = vmatmul.f32.gmra.mxu0 %v715
    %v1079 = vpop.f32.mrf.mxu0
    %v1080 = vadd.f32 0.0, %v1079
    %1081 = vmatmul.f32.gmra.mxu0 %v716
    %v1082 = vpop.f32.mrf.mxu0
    %v1083 = vadd.f32 0.0, %v1082
    %1084 = vmatmul.f32.gmra.mxu0 %v717
    %v1085 = vpop.f32.mrf.mxu0
    %v1086 = vadd.f32 0.0, %v1085
    %1087 = vmatmul.f32.gmra.mxu0 %v718
    %v1088 = vpop.f32.mrf.mxu0
    %v1089 = vadd.f32 0.0, %v1088
    %1090 = vmatmul.f32.gmra.mxu0 %v719
    %v1091 = vpop.f32.mrf.mxu0
    %v1092 = vadd.f32 0.0, %v1091
    %1093 = vmatmul.f32.gmra.mxu0 %v720
    %v1094 = vpop.f32.mrf.mxu0
    %v1095 = vadd.f32 0.0, %v1094
    %1096 = vmatmul.f32.gmra.mxu0 %v721
    %v1097 = vpop.f32.mrf.mxu0
    %v1098 = vadd.f32 0.0, %v1097
    %1099 = vmatmul.f32.gmra.mxu0 %v722
    %v1100 = vpop.f32.mrf.mxu0
    %v1101 = vadd.f32 0.0, %v1100
    %1102 = vmatmul.f32.gmra.mxu0 %v723
    %v1103 = vpop.f32.mrf.mxu0
    %v1104 = vadd.f32 0.0, %v1103
    %1105 = vmatmul.f32.gmra.mxu0 %v724
    %v1106 = vpop.f32.mrf.mxu0
    %v1107 = vadd.f32 0.0, %v1106
    %1108 = vmatmul.f32.gmra.mxu0 %v725
    %v1109 = vpop.f32.mrf.mxu0
    %v1110 = vadd.f32 0.0, %v1109
    %1111 = vmatmul.f32.gmra.mxu0 %v726
    %v1112 = vpop.f32.mrf.mxu0
    %v1113 = vadd.f32 0.0, %v1112
    %1114 = vmatmul.f32.gmra.mxu0 %v727
    %v1115 = vpop.f32.mrf.mxu0
    %v1116 = vadd.f32 0.0, %v1115
    %1117 = vmatmul.f32.gmra.mxu0 %v728
    %v1118 = vpop.f32.mrf.mxu0
    %v1119 = vadd.f32 0.0, %v1118
    %1120 = vmatmul.f32.gmra.mxu0 %v729
    %v1121 = vpop.f32.mrf.mxu0
    %v1122 = vadd.f32 0.0, %v1121
    %1123 = vmatmul.f32.gmra.mxu0 %v730
    %v1124 = vpop.f32.mrf.mxu0
    %v1125 = vadd.f32 0.0, %v1124
    %1126 = vmatmul.f32.gmra.mxu0 %v731
    %v1127 = vpop.f32.mrf.mxu0
    %v1128 = vadd.f32 0.0, %v1127
    %1129 = vmatmul.f32.gmra.mxu0 %v732
    %v1130 = vpop.f32.mrf.mxu0
    %v1131 = vadd.f32 0.0, %v1130
    %1132 = vmatmul.f32.gmra.mxu0 %v733
    %v1133 = vpop.f32.mrf.mxu0
    %v1134 = vadd.f32 0.0, %v1133
    %1135 = vmatmul.f32.gmra.mxu0 %v734
    %v1136 = vpop.f32.mrf.mxu0
    %v1137 = vadd.f32 0.0, %v1136
    %1138 = vmatmul.f32.gmra.mxu0 %v735
    %v1139 = vpop.f32.mrf.mxu0
    %v1140 = vadd.f32 0.0, %v1139
    %1141 = vmatmul.f32.gmra.mxu0 %v736
    %v1142 = vpop.f32.mrf.mxu0
    %v1143 = vadd.f32 0.0, %v1142
    %1144 = vmatmul.f32.gmra.mxu0 %v737
    %v1145 = vpop.f32.mrf.mxu0
    %v1146 = vadd.f32 0.0, %v1145
    %1147 = vmatmul.f32.gmra.mxu0 %v738
    %v1148 = vpop.f32.mrf.mxu0
    %v1149 = vadd.f32 0.0, %v1148
    %1150 = vmatmul.f32.gmra.mxu0 %v739
    %v1151 = vpop.f32.mrf.mxu0
    %v1152 = vadd.f32 0.0, %v1151
    %1153 = vmatmul.f32.gmra.mxu0 %v740
    %v1154 = vpop.f32.mrf.mxu0
    %v1155 = vadd.f32 0.0, %v1154
    %1156 = vmatmul.f32.gmra.mxu0 %v741
    %v1157 = vpop.f32.mrf.mxu0
    %v1158 = vadd.f32 0.0, %v1157
    %1159 = vmatmul.f32.gmra.mxu0 %v742
    %v1160 = vpop.f32.mrf.mxu0
    %v1161 = vadd.f32 0.0, %v1160
    %1162 = vmatmul.f32.gmra.mxu0 %v743
    %v1163 = vpop.f32.mrf.mxu0
    %v1164 = vadd.f32 0.0, %v1163
    %1165 = vmatmul.f32.gmra.mxu0 %v744
    %v1166 = vpop.f32.mrf.mxu0
    %v1167 = vadd.f32 0.0, %v1166
    %1168 = vmatmul.f32.gmra.mxu0 %v745
    %v1169 = vpop.f32.mrf.mxu0
    %v1170 = vadd.f32 0.0, %v1169
    %1171 = vmatmul.f32.gmra.mxu0 %v746
    %v1172 = vpop.f32.mrf.mxu0
    %v1173 = vadd.f32 0.0, %v1172
    %1174 = vmatmul.f32.gmra.mxu0 %v747
    %v1175 = vpop.f32.mrf.mxu0
    %v1176 = vadd.f32 0.0, %v1175
    %1177 = vmatmul.f32.gmra.mxu0 %v748
    %v1178 = vpop.f32.mrf.mxu0
    %v1179 = vadd.f32 0.0, %v1178
    %1180 = vmatmul.f32.gmra.mxu0 %v749
    %v1181 = vpop.f32.mrf.mxu0
    %v1182 = vadd.f32 0.0, %v1181
    %1183 = vmatmul.f32.gmra.mxu0 %v750
    %v1184 = vpop.f32.mrf.mxu0
    %v1185 = vadd.f32 0.0, %v1184
    %1186 = vmatmul.f32.gmra.mxu0 %v751
    %v1187 = vpop.f32.mrf.mxu0
    %v1188 = vadd.f32 0.0, %v1187
    %1189 = vmatmul.f32.gmra.mxu0 %v752
    %v1190 = vpop.f32.mrf.mxu0
    %v1191 = vadd.f32 0.0, %v1190
    %1192 = vmatmul.f32.gmra.mxu0 %v753
    %v1193 = vpop.f32.mrf.mxu0
    %v1194 = vadd.f32 0.0, %v1193
    %1195 = vmatmul.f32.gmra.mxu0 %v754
    %v1196 = vpop.f32.mrf.mxu0
    %v1197 = vadd.f32 0.0, %v1196
    %1198 = vmatmul.f32.gmra.mxu0 %v755
    %v1199 = vpop.f32.mrf.mxu0
    %v1200 = vadd.f32 0.0, %v1199
    %1201 = vmatmul.f32.gmra.mxu0 %v756
    %v1202 = vpop.f32.mrf.mxu0
    %v1203 = vadd.f32 0.0, %v1202
    %1204 = vmatmul.f32.gmra.mxu0 %v757
    %v1205 = vpop.f32.mrf.mxu0
    %v1206 = vadd.f32 0.0, %v1205
    %1207 = vmatmul.f32.gmra.mxu0 %v758
    %v1208 = vpop.f32.mrf.mxu0
    %v1209 = vadd.f32 0.0, %v1208
    %1210 = vmatmul.f32.gmra.mxu0 %v759
    %v1211 = vpop.f32.mrf.mxu0
    %v1212 = vadd.f32 0.0, %v1211
    %1213 = vmatmul.f32.gmra.mxu0 %v760
    %v1214 = vpop.f32.mrf.mxu0
    %v1215 = vadd.f32 0.0, %v1214
    %1216 = vmatmul.f32.gmra.mxu0 %v761
    %v1217 = vpop.f32.mrf.mxu0
    %v1218 = vadd.f32 0.0, %v1217
    %1219 = vmatmul.f32.gmra.mxu0 %v762
    %v1220 = vpop.f32.mrf.mxu0
    %v1221 = vadd.f32 0.0, %v1220
    %1222 = vmatmul.f32.gmra.mxu0 %v763
    %v1223 = vpop.f32.mrf.mxu0
    %v1224 = vadd.f32 0.0, %v1223
    %1225 = vmatmul.f32.gmra.mxu0 %v764
    %v1226 = vpop.f32.mrf.mxu0
    %v1227 = vadd.f32 0.0, %v1226
    %1228 = vmatmul.f32.gmra.mxu0 %v765
    %v1229 = vpop.f32.mrf.mxu0
    %v1230 = vadd.f32 0.0, %v1229
    %1231 = vdwg.mxu0
    %1232 = vmatpush.msra.mxu0 %v813
    %1233 = vmatpush.msra.mxu0 %v810
    %1234 = vmatpush.msra.mxu0 %v807
    %1235 = vmatpush.msra.mxu0 %v804
    %1236 = vmatpush.msra.mxu0 %v801
    %1237 = vmatpush.msra.mxu0 %v798
    %1238 = vmatpush.msra.mxu0 %v795
    %1239 = vmatpush.msra.mxu0 %v792
    %1240 = vmatpush.msra.mxu0 %v789
    %1241 = vmatpush.msra.mxu0 %v786
    %1242 = vmatpush.msra.mxu0 %v783
    %1243 = vmatpush.msra.mxu0 %v780
    %1244 = vmatpush.msra.mxu0 %v777
    %1245 = vmatpush.msra.mxu0 %v774
    %1246 = vmatpush.msra.mxu0 %v771
    %1247 = vmatpush.msra.mxu0 %v768
    %1248 = vmatmul.f32.gmra.mxu0 %v702
    %v1249 = vpop.f32.mrf.mxu0
    %v1250 = vadd.f32 0.0, %v1249
    %1251 = vmatmul.f32.gmra.mxu0 %v703
    %v1252 = vpop.f32.mrf.mxu0
    %v1253 = vadd.f32 0.0, %v1252
    %1254 = vmatmul.f32.gmra.mxu0 %v704
    %v1255 = vpop.f32.mrf.mxu0
    %v1256 = vadd.f32 0.0, %v1255
    %1257 = vmatmul.f32.gmra.mxu0 %v705
    %v1258 = vpop.f32.mrf.mxu0
    %v1259 = vadd.f32 0.0, %v1258
    %1260 = vmatmul.f32.gmra.mxu0 %v706
    %v1261 = vpop.f32.mrf.mxu0
    %v1262 = vadd.f32 0.0, %v1261
    %1263 = vmatmul.f32.gmra.mxu0 %v707
    %v1264 = vpop.f32.mrf.mxu0
    %v1265 = vadd.f32 0.0, %v1264
    %1266 = vmatmul.f32.gmra.mxu0 %v708
    %v1267 = vpop.f32.mrf.mxu0
    %v1268 = vadd.f32 0.0, %v1267
    %1269 = vmatmul.f32.gmra.mxu0 %v709
    %v1270 = vpop.f32.mrf.mxu0
    %v1271 = vadd.f32 0.0, %v1270
    %1272 = vmatmul.f32.gmra.mxu0 %v710
    %v1273 = vpop.f32.mrf.mxu0
    %v1274 = vadd.f32 0.0, %v1273
    %1275 = vmatmul.f32.gmra.mxu0 %v711
    %v1276 = vpop.f32.mrf.mxu0
    %v1277 = vadd.f32 0.0, %v1276
    %1278 = vmatmul.f32.gmra.mxu0 %v712
    %v1279 = vpop.f32.mrf.mxu0
    %v1280 = vadd.f32 0.0, %v1279
    %1281 = vmatmul.f32.gmra.mxu0 %v713
    %v1282 = vpop.f32.mrf.mxu0
    %v1283 = vadd.f32 0.0, %v1282
    %1284 = vmatmul.f32.gmra.mxu0 %v714
    %v1285 = vpop.f32.mrf.mxu0
    %v1286 = vadd.f32 0.0, %v1285
    %1287 = vmatmul.f32.gmra.mxu0 %v715
    %v1288 = vpop.f32.mrf.mxu0
    %v1289 = vadd.f32 0.0, %v1288
    %1290 = vmatmul.f32.gmra.mxu0 %v716
    %v1291 = vpop.f32.mrf.mxu0
    %v1292 = vadd.f32 0.0, %v1291
    %1293 = vmatmul.f32.gmra.mxu0 %v717
    %v1294 = vpop.f32.mrf.mxu0
    %v1295 = vadd.f32 0.0, %v1294
    %1296 = vmatmul.f32.gmra.mxu0 %v718
    %v1297 = vpop.f32.mrf.mxu0
    %v1298 = vadd.f32 0.0, %v1297
    %1299 = vmatmul.f32.gmra.mxu0 %v719
    %v1300 = vpop.f32.mrf.mxu0
    %v1301 = vadd.f32 0.0, %v1300
    %1302 = vmatmul.f32.gmra.mxu0 %v720
    %v1303 = vpop.f32.mrf.mxu0
    %v1304 = vadd.f32 0.0, %v1303
    %1305 = vmatmul.f32.gmra.mxu0 %v721
    %v1306 = vpop.f32.mrf.mxu0
    %v1307 = vadd.f32 0.0, %v1306
    %1308 = vmatmul.f32.gmra.mxu0 %v722
    %v1309 = vpop.f32.mrf.mxu0
    %v1310 = vadd.f32 0.0, %v1309
    %1311 = vmatmul.f32.gmra.mxu0 %v723
    %v1312 = vpop.f32.mrf.mxu0
    %v1313 = vadd.f32 0.0, %v1312
    %1314 = vmatmul.f32.gmra.mxu0 %v724
    %v1315 = vpop.f32.mrf.mxu0
    %v1316 = vadd.f32 0.0, %v1315
    %1317 = vmatmul.f32.gmra.mxu0 %v725
    %v1318 = vpop.f32.mrf.mxu0
    %v1319 = vadd.f32 0.0, %v1318
    %1320 = vmatmul.f32.gmra.mxu0 %v726
    %v1321 = vpop.f32.mrf.mxu0
    %v1322 = vadd.f32 0.0, %v1321
    %1323 = vmatmul.f32.gmra.mxu0 %v727
    %v1324 = vpop.f32.mrf.mxu0
    %v1325 = vadd.f32 0.0, %v1324
    %1326 = vmatmul.f32.gmra.mxu0 %v728
    %v1327 = vpop.f32.mrf.mxu0
    %v1328 = vadd.f32 0.0, %v1327
    %1329 = vmatmul.f32.gmra.mxu0 %v729
    %v1330 = vpop.f32.mrf.mxu0
    %v1331 = vadd.f32 0.0, %v1330
    %1332 = vmatmul.f32.gmra.mxu0 %v730
    %v1333 = vpop.f32.mrf.mxu0
    %v1334 = vadd.f32 0.0, %v1333
    %1335 = vmatmul.f32.gmra.mxu0 %v731
    %v1336 = vpop.f32.mrf.mxu0
    %v1337 = vadd.f32 0.0, %v1336
    %1338 = vmatmul.f32.gmra.mxu0 %v732
    %v1339 = vpop.f32.mrf.mxu0
    %v1340 = vadd.f32 0.0, %v1339
    %1341 = vmatmul.f32.gmra.mxu0 %v733
    %v1342 = vpop.f32.mrf.mxu0
    %v1343 = vadd.f32 0.0, %v1342
    %1344 = vmatmul.f32.gmra.mxu0 %v734
    %v1345 = vpop.f32.mrf.mxu0
    %v1346 = vadd.f32 0.0, %v1345
    %1347 = vmatmul.f32.gmra.mxu0 %v735
    %v1348 = vpop.f32.mrf.mxu0
    %v1349 = vadd.f32 0.0, %v1348
    %1350 = vmatmul.f32.gmra.mxu0 %v736
    %v1351 = vpop.f32.mrf.mxu0
    %v1352 = vadd.f32 0.0, %v1351
    %1353 = vmatmul.f32.gmra.mxu0 %v737
    %v1354 = vpop.f32.mrf.mxu0
    %v1355 = vadd.f32 0.0, %v1354
    %1356 = vmatmul.f32.gmra.mxu0 %v738
    %v1357 = vpop.f32.mrf.mxu0
    %v1358 = vadd.f32 0.0, %v1357
    %1359 = vmatmul.f32.gmra.mxu0 %v739
    %v1360 = vpop.f32.mrf.mxu0
    %v1361 = vadd.f32 0.0, %v1360
    %1362 = vmatmul.f32.gmra.mxu0 %v740
    %v1363 = vpop.f32.mrf.mxu0
    %v1364 = vadd.f32 0.0, %v1363
    %1365 = vmatmul.f32.gmra.mxu0 %v741
    %v1366 = vpop.f32.mrf.mxu0
    %v1367 = vadd.f32 0.0, %v1366
    %1368 = vmatmul.f32.gmra.mxu0 %v742
    %v1369 = vpop.f32.mrf.mxu0
    %v1370 = vadd.f32 0.0, %v1369
    %1371 = vmatmul.f32.gmra.mxu0 %v743
    %v1372 = vpop.f32.mrf.mxu0
    %v1373 = vadd.f32 0.0, %v1372
    %1374 = vmatmul.f32.gmra.mxu0 %v744
    %v1375 = vpop.f32.mrf.mxu0
    %v1376 = vadd.f32 0.0, %v1375
    %1377 = vmatmul.f32.gmra.mxu0 %v745
    %v1378 = vpop.f32.mrf.mxu0
    %v1379 = vadd.f32 0.0, %v1378
    %1380 = vmatmul.f32.gmra.mxu0 %v746
    %v1381 = vpop.f32.mrf.mxu0
    %v1382 = vadd.f32 0.0, %v1381
    %1383 = vmatmul.f32.gmra.mxu0 %v747
    %v1384 = vpop.f32.mrf.mxu0
    %v1385 = vadd.f32 0.0, %v1384
    %1386 = vmatmul.f32.gmra.mxu0 %v748
    %v1387 = vpop.f32.mrf.mxu0
    %v1388 = vadd.f32 0.0, %v1387
    %1389 = vmatmul.f32.gmra.mxu0 %v749
    %v1390 = vpop.f32.mrf.mxu0
    %v1391 = vadd.f32 0.0, %v1390
    %1392 = vmatmul.f32.gmra.mxu0 %v750
    %v1393 = vpop.f32.mrf.mxu0
    %v1394 = vadd.f32 0.0, %v1393
    %1395 = vmatmul.f32.gmra.mxu0 %v751
    %v1396 = vpop.f32.mrf.mxu0
    %v1397 = vadd.f32 0.0, %v1396
    %1398 = vmatmul.f32.gmra.mxu0 %v752
    %v1399 = vpop.f32.mrf.mxu0
    %v1400 = vadd.f32 0.0, %v1399
    %1401 = vmatmul.f32.gmra.mxu0 %v753
    %v1402 = vpop.f32.mrf.mxu0
    %v1403 = vadd.f32 0.0, %v1402
    %1404 = vmatmul.f32.gmra.mxu0 %v754
    %v1405 = vpop.f32.mrf.mxu0
    %v1406 = vadd.f32 0.0, %v1405
    %1407 = vmatmul.f32.gmra.mxu0 %v755
    %v1408 = vpop.f32.mrf.mxu0
    %v1409 = vadd.f32 0.0, %v1408
    %1410 = vmatmul.f32.gmra.mxu0 %v756
    %v1411 = vpop.f32.mrf.mxu0
    %v1412 = vadd.f32 0.0, %v1411
    %1413 = vmatmul.f32.gmra.mxu0 %v757
    %v1414 = vpop.f32.mrf.mxu0
    %v1415 = vadd.f32 0.0, %v1414
    %1416 = vmatmul.f32.gmra.mxu0 %v758
    %v1417 = vpop.f32.mrf.mxu0
    %v1418 = vadd.f32 0.0, %v1417
    %1419 = vmatmul.f32.gmra.mxu0 %v759
    %v1420 = vpop.f32.mrf.mxu0
    %v1421 = vadd.f32 0.0, %v1420
    %1422 = vmatmul.f32.gmra.mxu0 %v760
    %v1423 = vpop.f32.mrf.mxu0
    %v1424 = vadd.f32 0.0, %v1423
    %1425 = vmatmul.f32.gmra.mxu0 %v761
    %v1426 = vpop.f32.mrf.mxu0
    %v1427 = vadd.f32 0.0, %v1426
    %1428 = vmatmul.f32.gmra.mxu0 %v762
    %v1429 = vpop.f32.mrf.mxu0
    %v1430 = vadd.f32 0.0, %v1429
    %1431 = vmatmul.f32.gmra.mxu0 %v763
    %v1432 = vpop.f32.mrf.mxu0
    %v1433 = vadd.f32 0.0, %v1432
    %1434 = vmatmul.f32.gmra.mxu0 %v764
    %v1435 = vpop.f32.mrf.mxu0
    %v1436 = vadd.f32 0.0, %v1435
    %1437 = vmatmul.f32.gmra.mxu0 %v765
    %v1438 = vpop.f32.mrf.mxu0
    %v1439 = vadd.f32 0.0, %v1438
    %1440 = vdwg.mxu0
    %1441 = vst [vmem:[#allocation2] sm:$0xff] 0.0
    %1442 = vst [vmem:[#allocation2 + $0x8] sm:$0xff] 0.0
    %vm1443 = vcmask 261120
    %1444 = vst.msk [vmem:[#allocation2 + $0x10] sm:$0xff] %vm1443, 0.0
    %1445 = vst [vmem:[#allocation2 + $0x18] sm:$0xff] 0.0
    %1446 = vst [vmem:[#allocation2 + $0x20] sm:$0xff] 0.0
    %1447 = vst.msk [vmem:[#allocation2 + $0x28] sm:$0xff] %vm1443, 0.0
    %1448 = vst [vmem:[#allocation2 + $0x30] sm:$0x3] 0.0
    %1449 = vst [vmem:[#allocation2 + $0x38] sm:$0x3] 0.0
    %vm1450 = vcmask 254976
    %1451 = vst.msk [vmem:[#allocation2 + $0x40] sm:$0x3] %vm1450, 0.0
    %1452 = vst [vmem:[#allocation2 + $0x48] sm:$0xff] 0.0
    %1453 = vst [vmem:[#allocation2 + $0x50] sm:$0xff] 0.0
    %1454 = vst.msk [vmem:[#allocation2 + $0x58] sm:$0xff] %vm1443, 0.0
    %1455 = vst [vmem:[#allocation2 + $0x60] sm:$0xff] 0.0
    %1456 = vst [vmem:[#allocation2 + $0x68] sm:$0xff] 0.0
    %1457 = vst.msk [vmem:[#allocation2 + $0x70] sm:$0xff] %vm1443, 0.0
    %1458 = vst [vmem:[#allocation2 + $0x78] sm:$0x3] 0.0
    %1459 = vst [vmem:[#allocation2 + $0x80] sm:$0x3] 0.0
    %1460 = vst.msk [vmem:[#allocation2 + $0x88] sm:$0x3] %vm1450, 0.0
    %1461 = vst [vmem:[#allocation2 + $0x90] sm:$0xff] 0.0
    %1462 = vst [vmem:[#allocation2 + $0x98] sm:$0xff] 0.0
    %1463 = vst.msk [vmem:[#allocation2 + $0xa0] sm:$0xff] %vm1443, 0.0
    %1464 = vst [vmem:[#allocation2 + $0xa8] sm:$0xff] 0.0
    %1465 = vst [vmem:[#allocation2 + $0xb0] sm:$0xff] 0.0
    %1466 = vst.msk [vmem:[#allocation2 + $0xb8] sm:$0xff] %vm1443, 0.0
    %1467 = vst [vmem:[#allocation2 + $0xc0] sm:$0x3] 0.0
    %1468 = vst [vmem:[#allocation2 + $0xc8] sm:$0x3] 0.0
    %1469 = vst.msk [vmem:[#allocation2 + $0xd0] sm:$0x3] %vm1450, 0.0
    %1470 = vst [vmem:[#allocation2 + $0xd8] sm:$0xff] 0.0
    %1471 = vst [vmem:[#allocation2 + $0xe0] sm:$0xff] 0.0
    %1472 = vst.msk [vmem:[#allocation2 + $0xe8] sm:$0xff] %vm1443, 0.0
    %1473 = vst [vmem:[#allocation2 + $0xf0] sm:$0xff] 0.0
    %1474 = vst [vmem:[#allocation2 + $0xf8] sm:$0xff] 0.0
    %1475 = vst.msk [vmem:[#allocation2 + $0x100] sm:$0xff] %vm1443, 0.0
    %1476 = vst [vmem:[#allocation2 + $0x108] sm:$0x3] 0.0
    %1477 = vst [vmem:[#allocation2 + $0x110] sm:$0x3] 0.0
    %1478 = vst.msk [vmem:[#allocation2 + $0x118] sm:$0x3] %vm1450, 0.0
    %1479 = vst [vmem:[#allocation2 + $0x120] sm:$0xff] 0.0
    %1480 = vst [vmem:[#allocation2 + $0x128] sm:$0xff] 0.0
    %1481 = vst.msk [vmem:[#allocation2 + $0x130] sm:$0xff] %vm1443, 0.0
    %1482 = vst [vmem:[#allocation2 + $0x138] sm:$0xff] 0.0
    %1483 = vst [vmem:[#allocation2 + $0x140] sm:$0xff] 0.0
    %1484 = vst.msk [vmem:[#allocation2 + $0x148] sm:$0xff] %vm1443, 0.0
    %1485 = vst [vmem:[#allocation2 + $0x150] sm:$0x3] 0.0
    %1486 = vst [vmem:[#allocation2 + $0x158] sm:$0x3] 0.0
    %1487 = vst.msk [vmem:[#allocation2 + $0x160] sm:$0x3] %vm1450, 0.0
    %1488 = vst [vmem:[#allocation2 + $0x168] sm:$0xff] 0.0
    %1489 = vst [vmem:[#allocation2 + $0x170] sm:$0xff] 0.0
    %1490 = vst.msk [vmem:[#allocation2 + $0x178] sm:$0xff] %vm1443, 0.0
    %1491 = vst [vmem:[#allocation2 + $0x180] sm:$0xff] 0.0
    %1492 = vst [vmem:[#allocation2 + $0x188] sm:$0xff] 0.0
    %1493 = vst.msk [vmem:[#allocation2 + $0x190] sm:$0xff] %vm1443, 0.0
    %1494 = vst [vmem:[#allocation2 + $0x198] sm:$0x3] 0.0
    %1495 = vst [vmem:[#allocation2 + $0x1a0] sm:$0x3] 0.0
    %1496 = vst.msk [vmem:[#allocation2 + $0x1a8] sm:$0x3] %vm1450, 0.0
    %1497 = vst [vmem:[#allocation2 + $0x1b0] sm:$0xff] 0.0
    %1498 = vst [vmem:[#allocation2 + $0x1b8] sm:$0xff] 0.0
    %1499 = vst.msk [vmem:[#allocation2 + $0x1c0] sm:$0xff] %vm1443, 0.0
    %1500 = vst [vmem:[#allocation2 + $0x1c8] sm:$0xff] 0.0
    %1501 = vst [vmem:[#allocation2 + $0x1d0] sm:$0xff] 0.0
    %1502 = vst.msk [vmem:[#allocation2 + $0x1d8] sm:$0xff] %vm1443, 0.0
    %1503 = vst [vmem:[#allocation2 + $0x1e0] sm:$0x3] 0.0
    %1504 = vst [vmem:[#allocation2 + $0x1e8] sm:$0x3] 0.0
    %1505 = vst.msk [vmem:[#allocation2 + $0x1f0] sm:$0x3] %vm1450, 0.0
    %1506 = vst [vmem:[#allocation2 + $0x1f8] sm:$0xff] 0.0
    %1507 = vst [vmem:[#allocation2 + $0x200] sm:$0xff] 0.0
    %1508 = vst.msk [vmem:[#allocation2 + $0x208] sm:$0xff] %vm1443, 0.0
    %1509 = vst [vmem:[#allocation2 + $0x210] sm:$0xff] 0.0
    %1510 = vst [vmem:[#allocation2 + $0x218] sm:$0xff] 0.0
    %1511 = vst.msk [vmem:[#allocation2 + $0x220] sm:$0xff] %vm1443, 0.0
    %1512 = vst [vmem:[#allocation2 + $0x228] sm:$0x3] 0.0
    %1513 = vst [vmem:[#allocation2 + $0x230] sm:$0x3] 0.0
    %1514 = vst.msk [vmem:[#allocation2 + $0x238] sm:$0x3] %vm1450, 0.0
    %1515 = vst [vmem:[#allocation2 + $0x240] sm:$0xff] 0.0
    %1516 = vst [vmem:[#allocation2 + $0x248] sm:$0xff] 0.0
    %1517 = vst.msk [vmem:[#allocation2 + $0x250] sm:$0xff] %vm1443, 0.0
    %1518 = vst [vmem:[#allocation2 + $0x258] sm:$0xff] 0.0
    %1519 = vst [vmem:[#allocation2 + $0x260] sm:$0xff] 0.0
    %1520 = vst.msk [vmem:[#allocation2 + $0x268] sm:$0xff] %vm1443, 0.0
    %1521 = vst [vmem:[#allocation2 + $0x270] sm:$0x3] 0.0
    %1522 = vst [vmem:[#allocation2 + $0x278] sm:$0x3] 0.0
    %1523 = vst.msk [vmem:[#allocation2 + $0x280] sm:$0x3] %vm1450, 0.0
    %1524 = vst [vmem:[#allocation2 + $0x288] sm:$0xff] 0.0
    %1525 = vst [vmem:[#allocation2 + $0x290] sm:$0xff] 0.0
    %1526 = vst.msk [vmem:[#allocation2 + $0x298] sm:$0xff] %vm1443, 0.0
    %1527 = vst [vmem:[#allocation2 + $0x2a0] sm:$0xff] 0.0
    %1528 = vst [vmem:[#allocation2 + $0x2a8] sm:$0xff] 0.0
    %1529 = vst.msk [vmem:[#allocation2 + $0x2b0] sm:$0xff] %vm1443, 0.0
    %1530 = vst [vmem:[#allocation2 + $0x2b8] sm:$0x3] 0.0
    %1531 = vst [vmem:[#allocation2 + $0x2c0] sm:$0x3] 0.0
    %1532 = vst.msk [vmem:[#allocation2 + $0x2c8] sm:$0x3] %vm1450, 0.0
    %1533 = vst [vmem:[#allocation2 + $0x2d0] sm:$0xff] 0.0
    %1534 = vst [vmem:[#allocation2 + $0x2d8] sm:$0xff] 0.0
    %1535 = vst.msk [vmem:[#allocation2 + $0x2e0] sm:$0xff] %vm1443, 0.0
    %1536 = vst [vmem:[#allocation2 + $0x2e8] sm:$0xff] 0.0
    %1537 = vst [vmem:[#allocation2 + $0x2f0] sm:$0xff] 0.0
    %1538 = vst.msk [vmem:[#allocation2 + $0x2f8] sm:$0xff] %vm1443, 0.0
    %1539 = vst [vmem:[#allocation2 + $0x300] sm:$0x3] 0.0
    %1540 = vst [vmem:[#allocation2 + $0x308] sm:$0x3] 0.0
    %1541 = vst.msk [vmem:[#allocation2 + $0x310] sm:$0x3] %vm1450, 0.0
    %1542 = vst [vmem:[#allocation2 + $0x318] sm:$0xff] 0.0
    %1543 = vst [vmem:[#allocation2 + $0x320] sm:$0xff] 0.0
    %1544 = vst.msk [vmem:[#allocation2 + $0x328] sm:$0xff] %vm1443, 0.0
    %1545 = vst [vmem:[#allocation2 + $0x330] sm:$0xff] 0.0
    %1546 = vst [vmem:[#allocation2 + $0x338] sm:$0xff] 0.0
    %1547 = vst.msk [vmem:[#allocation2 + $0x340] sm:$0xff] %vm1443, 0.0
    %1548 = vst [vmem:[#allocation2 + $0x348] sm:$0x3] 0.0
    %1549 = vst [vmem:[#allocation2 + $0x350] sm:$0x3] 0.0
    %1550 = vst.msk [vmem:[#allocation2 + $0x358] sm:$0x3] %vm1450, 0.0
    %1551 = vst [vmem:[#allocation2 + $0x360] sm:$0xff] 0.0
    %1552 = vst [vmem:[#allocation2 + $0x368] sm:$0xff] 0.0
    %1553 = vst.msk [vmem:[#allocation2 + $0x370] sm:$0xff] %vm1443, 0.0
    %1554 = vst [vmem:[#allocation2 + $0x378] sm:$0xff] 0.0
    %1555 = vst [vmem:[#allocation2 + $0x380] sm:$0xff] 0.0
    %1556 = vst.msk [vmem:[#allocation2 + $0x388] sm:$0xff] %vm1443, 0.0
    %1557 = vst [vmem:[#allocation2 + $0x390] sm:$0x3] 0.0
    %1558 = vst [vmem:[#allocation2 + $0x398] sm:$0x3] 0.0
    %1559 = vst.msk [vmem:[#allocation2 + $0x3a0] sm:$0x3] %vm1450, 0.0
    %1560 = vst [vmem:[#allocation2 + $0x3a8] sm:$0xff] 0.0
    %1561 = vst [vmem:[#allocation2 + $0x3b0] sm:$0xff] 0.0
    %1562 = vst.msk [vmem:[#allocation2 + $0x3b8] sm:$0xff] %vm1443, 0.0
    %1563 = vst [vmem:[#allocation2 + $0x3c0] sm:$0xff] 0.0
    %1564 = vst [vmem:[#allocation2 + $0x3c8] sm:$0xff] 0.0
    %1565 = vst.msk [vmem:[#allocation2 + $0x3d0] sm:$0xff] %vm1443, 0.0
    %1566 = vst [vmem:[#allocation2 + $0x3d8] sm:$0x3] 0.0
    %1567 = vst [vmem:[#allocation2 + $0x3e0] sm:$0x3] 0.0
    %1568 = vst.msk [vmem:[#allocation2 + $0x3e8] sm:$0x3] %vm1450, 0.0
    %1569 = vst [vmem:[#allocation2 + $0x3f0] sm:$0xff] 0.0
    %1570 = vst [vmem:[#allocation2 + $0x3f8] sm:$0xff] 0.0
    %1571 = vst.msk [vmem:[#allocation2 + $0x400] sm:$0xff] %vm1443, 0.0
    %1572 = vst [vmem:[#allocation2 + $0x408] sm:$0xff] 0.0
    %1573 = vst [vmem:[#allocation2 + $0x410] sm:$0xff] 0.0
    %1574 = vst.msk [vmem:[#allocation2 + $0x418] sm:$0xff] %vm1443, 0.0
    %1575 = vst [vmem:[#allocation2 + $0x420] sm:$0x3] 0.0
    %1576 = vst [vmem:[#allocation2 + $0x428] sm:$0x3] 0.0
    %1577 = vst.msk [vmem:[#allocation2 + $0x430] sm:$0x3] %vm1450, 0.0
    %1578 = vst [vmem:[#allocation2 + $0x438] sm:$0xff] 0.0
    %1579 = vst [vmem:[#allocation2 + $0x440] sm:$0xff] 0.0
    %1580 = vst.msk [vmem:[#allocation2 + $0x448] sm:$0xff] %vm1443, 0.0
    %1581 = vst [vmem:[#allocation2 + $0x450] sm:$0xff] 0.0
    %1582 = vst [vmem:[#allocation2 + $0x458] sm:$0xff] 0.0
    %1583 = vst.msk [vmem:[#allocation2 + $0x460] sm:$0xff] %vm1443, 0.0
    %1584 = vst [vmem:[#allocation2 + $0x468] sm:$0x3] 0.0
    %1585 = vst [vmem:[#allocation2 + $0x470] sm:$0x3] 0.0
    %1586 = vst.msk [vmem:[#allocation2 + $0x478] sm:$0x3] %vm1450, 0.0
    %1587 = vst [vmem:[#allocation2 + $0x480] sm:$0xff] 0.0
    %1588 = vst [vmem:[#allocation2 + $0x488] sm:$0xff] 0.0
    %1589 = vst.msk [vmem:[#allocation2 + $0x490] sm:$0xff] %vm1443, 0.0
    %1590 = vst [vmem:[#allocation2 + $0x498] sm:$0xff] 0.0
    %1591 = vst [vmem:[#allocation2 + $0x4a0] sm:$0xff] 0.0
    %1592 = vst.msk [vmem:[#allocation2 + $0x4a8] sm:$0xff] %vm1443, 0.0
    %1593 = vst [vmem:[#allocation2 + $0x4b0] sm:$0x3] 0.0
    %1594 = vst [vmem:[#allocation2 + $0x4b8] sm:$0x3] 0.0
    %1595 = vst.msk [vmem:[#allocation2 + $0x4c0] sm:$0x3] %vm1450, 0.0
    %1596 = vst [vmem:[#allocation2 + $0x4c8] sm:$0xff] 0.0
    %1597 = vst [vmem:[#allocation2 + $0x4d0] sm:$0xff] 0.0
    %1598 = vst.msk [vmem:[#allocation2 + $0x4d8] sm:$0xff] %vm1443, 0.0
    %1599 = vst [vmem:[#allocation2 + $0x4e0] sm:$0xff] 0.0
    %1600 = vst [vmem:[#allocation2 + $0x4e8] sm:$0xff] 0.0
    %1601 = vst.msk [vmem:[#allocation2 + $0x4f0] sm:$0xff] %vm1443, 0.0
    %1602 = vst [vmem:[#allocation2 + $0x4f8] sm:$0x3] 0.0
    %1603 = vst [vmem:[#allocation2 + $0x500] sm:$0x3] 0.0
    %1604 = vst.msk [vmem:[#allocation2 + $0x508] sm:$0x3] %vm1450, 0.0
    %1605 = vst [vmem:[#allocation2 + $0x510] sm:$0xff] 0.0
    %1606 = vst [vmem:[#allocation2 + $0x518] sm:$0xff] 0.0
    %1607 = vst.msk [vmem:[#allocation2 + $0x520] sm:$0xff] %vm1443, 0.0
    %1608 = vst [vmem:[#allocation2 + $0x528] sm:$0xff] 0.0
    %1609 = vst [vmem:[#allocation2 + $0x530] sm:$0xff] 0.0
    %1610 = vst.msk [vmem:[#allocation2 + $0x538] sm:$0xff] %vm1443, 0.0
    %1611 = vst [vmem:[#allocation2 + $0x540] sm:$0x3] 0.0
    %1612 = vst [vmem:[#allocation2 + $0x548] sm:$0x3] 0.0
    %1613 = vst.msk [vmem:[#allocation2 + $0x550] sm:$0x3] %vm1450, 0.0
    %1614 = vst [vmem:[#allocation2 + $0x558] sm:$0xff] 0.0
    %1615 = vst [vmem:[#allocation2 + $0x560] sm:$0xff] 0.0
    %1616 = vst.msk [vmem:[#allocation2 + $0x568] sm:$0xff] %vm1443, 0.0
    %1617 = vst [vmem:[#allocation2 + $0x570] sm:$0xff] 0.0
    %1618 = vst [vmem:[#allocation2 + $0x578] sm:$0xff] 0.0
    %1619 = vst.msk [vmem:[#allocation2 + $0x580] sm:$0xff] %vm1443, 0.0
    %1620 = vst [vmem:[#allocation2 + $0x588] sm:$0x3] 0.0
    %1621 = vst [vmem:[#allocation2 + $0x590] sm:$0x3] 0.0
    %1622 = vst.msk [vmem:[#allocation2 + $0x598] sm:$0x3] %vm1450, 0.0
    %1623 = vst [vmem:[#allocation2 + $0x5a0] sm:$0xff] 0.0
    %1624 = vst [vmem:[#allocation2 + $0x5a8] sm:$0xff] 0.0
    %1625 = vst.msk [vmem:[#allocation2 + $0x5b0] sm:$0xff] %vm1443, 0.0
    %1626 = vst [vmem:[#allocation2 + $0x5b8] sm:$0xff] 0.0
    %1627 = vst [vmem:[#allocation2 + $0x5c0] sm:$0xff] 0.0
    %1628 = vst.msk [vmem:[#allocation2 + $0x5c8] sm:$0xff] %vm1443, 0.0
    %1629 = vst [vmem:[#allocation2 + $0x5d0] sm:$0x3] 0.0
    %1630 = vst [vmem:[#allocation2 + $0x5d8] sm:$0x3] 0.0
    %1631 = vst.msk [vmem:[#allocation2 + $0x5e0] sm:$0x3] %vm1450, 0.0
    %1632 = vst [vmem:[#allocation2 + $0x5e8] sm:$0xff] 0.0
    %1633 = vst [vmem:[#allocation2 + $0x5f0] sm:$0xff] 0.0
    %1634 = vst.msk [vmem:[#allocation2 + $0x5f8] sm:$0xff] %vm1443, 0.0
    %1635 = vst [vmem:[#allocation2 + $0x600] sm:$0xff] 0.0
    %1636 = vst [vmem:[#allocation2 + $0x608] sm:$0xff] 0.0
    %1637 = vst.msk [vmem:[#allocation2 + $0x610] sm:$0xff] %vm1443, 0.0
    %1638 = vst [vmem:[#allocation2 + $0x618] sm:$0x3] 0.0
    %1639 = vst [vmem:[#allocation2 + $0x620] sm:$0x3] 0.0
    %1640 = vst.msk [vmem:[#allocation2 + $0x628] sm:$0x3] %vm1450, 0.0
    %1641 = vst [vmem:[#allocation2 + $0x630] sm:$0xff] 0.0
    %1642 = vst [vmem:[#allocation2 + $0x638] sm:$0xff] 0.0
    %1643 = vst.msk [vmem:[#allocation2 + $0x640] sm:$0xff] %vm1443, 0.0
    %1644 = vst [vmem:[#allocation2 + $0x648] sm:$0xff] 0.0
    %1645 = vst [vmem:[#allocation2 + $0x650] sm:$0xff] 0.0
    %1646 = vst.msk [vmem:[#allocation2 + $0x658] sm:$0xff] %vm1443, 0.0
    %1647 = vst [vmem:[#allocation2 + $0x660] sm:$0x3] 0.0
    %1648 = vst [vmem:[#allocation2 + $0x668] sm:$0x3] 0.0
    %1649 = vst.msk [vmem:[#allocation2 + $0x670] sm:$0x3] %vm1450, 0.0
    %1650 = vst [vmem:[#allocation2 + $0x678] sm:$0xff] 0.0
    %1651 = vst [vmem:[#allocation2 + $0x680] sm:$0xff] 0.0
    %1652 = vst.msk [vmem:[#allocation2 + $0x688] sm:$0xff] %vm1443, 0.0
    %1653 = vst [vmem:[#allocation2 + $0x690] sm:$0xff] 0.0
    %1654 = vst [vmem:[#allocation2 + $0x698] sm:$0xff] 0.0
    %1655 = vst.msk [vmem:[#allocation2 + $0x6a0] sm:$0xff] %vm1443, 0.0
    %1656 = vst [vmem:[#allocation2 + $0x6a8] sm:$0x3] 0.0
    %1657 = vst [vmem:[#allocation2 + $0x6b0] sm:$0x3] 0.0
    %1658 = vst.msk [vmem:[#allocation2 + $0x6b8] sm:$0x3] %vm1450, 0.0
    %1659 = vst [vmem:[#allocation2 + $0x6c0] sm:$0xff] 0.0
    %1660 = vst [vmem:[#allocation2 + $0x6c8] sm:$0xff] 0.0
    %1661 = vst.msk [vmem:[#allocation2 + $0x6d0] sm:$0xff] %vm1443, 0.0
    %1662 = vst [vmem:[#allocation2 + $0x6d8] sm:$0xff] 0.0
    %1663 = vst [vmem:[#allocation2 + $0x6e0] sm:$0xff] 0.0
    %1664 = vst.msk [vmem:[#allocation2 + $0x6e8] sm:$0xff] %vm1443, 0.0
    %1665 = vst [vmem:[#allocation2 + $0x6f0] sm:$0x3] 0.0
    %1666 = vst [vmem:[#allocation2 + $0x6f8] sm:$0x3] 0.0
    %1667 = vst.msk [vmem:[#allocation2 + $0x700] sm:$0x3] %vm1450, 0.0
    %1668 = vst [vmem:[#allocation2 + $0x708] sm:$0xff] 0.0
    %1669 = vst [vmem:[#allocation2 + $0x710] sm:$0xff] 0.0
    %1670 = vst.msk [vmem:[#allocation2 + $0x718] sm:$0xff] %vm1443, 0.0
    %1671 = vst [vmem:[#allocation2 + $0x720] sm:$0xff] 0.0
    %1672 = vst [vmem:[#allocation2 + $0x728] sm:$0xff] 0.0
    %1673 = vst.msk [vmem:[#allocation2 + $0x730] sm:$0xff] %vm1443, 0.0
    %1674 = vst [vmem:[#allocation2 + $0x738] sm:$0x3] 0.0
    %1675 = vst [vmem:[#allocation2 + $0x740] sm:$0x3] 0.0
    %1676 = vst.msk [vmem:[#allocation2 + $0x748] sm:$0x3] %vm1450, 0.0
    %1677 = vst [vmem:[#allocation2 + $0x750] sm:$0xff] 0.0
    %1678 = vst [vmem:[#allocation2 + $0x758] sm:$0xff] 0.0
    %1679 = vst.msk [vmem:[#allocation2 + $0x760] sm:$0xff] %vm1443, 0.0
    %1680 = vst [vmem:[#allocation2 + $0x768] sm:$0xff] 0.0
    %1681 = vst [vmem:[#allocation2 + $0x770] sm:$0xff] 0.0
    %1682 = vst.msk [vmem:[#allocation2 + $0x778] sm:$0xff] %vm1443, 0.0
    %1683 = vst [vmem:[#allocation2 + $0x780] sm:$0x3] 0.0
    %1684 = vst [vmem:[#allocation2 + $0x788] sm:$0x3] 0.0
    %1685 = vst.msk [vmem:[#allocation2 + $0x790] sm:$0x3] %vm1450, 0.0
    %1686 = vst [vmem:[#allocation2 + $0x798] sm:$0xff] 0.0
    %1687 = vst [vmem:[#allocation2 + $0x7a0] sm:$0xff] 0.0
    %1688 = vst.msk [vmem:[#allocation2 + $0x7a8] sm:$0xff] %vm1443, 0.0
    %1689 = vst [vmem:[#allocation2 + $0x7b0] sm:$0xff] 0.0
    %1690 = vst [vmem:[#allocation2 + $0x7b8] sm:$0xff] 0.0
    %1691 = vst.msk [vmem:[#allocation2 + $0x7c0] sm:$0xff] %vm1443, 0.0
    %1692 = vst [vmem:[#allocation2 + $0x7c8] sm:$0x3] 0.0
    %1693 = vst [vmem:[#allocation2 + $0x7d0] sm:$0x3] 0.0
    %1694 = vst.msk [vmem:[#allocation2 + $0x7d8] sm:$0x3] %vm1450, 0.0
    %1695 = vst [vmem:[#allocation2 + $0x7e0] sm:$0xff] 0.0
    %1696 = vst [vmem:[#allocation2 + $0x7e8] sm:$0xff] 0.0
    %1697 = vst.msk [vmem:[#allocation2 + $0x7f0] sm:$0xff] %vm1443, 0.0
    %1698 = vst [vmem:[#allocation2 + $0x7f8] sm:$0xff] 0.0
    %1699 = vst [vmem:[#allocation2 + $0x800] sm:$0xff] 0.0
    %1700 = vst.msk [vmem:[#allocation2 + $0x808] sm:$0xff] %vm1443, 0.0
    %1701 = vst [vmem:[#allocation2 + $0x810] sm:$0x3] 0.0
    %1702 = vst [vmem:[#allocation2 + $0x818] sm:$0x3] 0.0
    %1703 = vst.msk [vmem:[#allocation2 + $0x820] sm:$0x3] %vm1450, 0.0
    %1704 = vst [vmem:[#allocation2 + $0x828] sm:$0xff] 0.0
    %1705 = vst [vmem:[#allocation2 + $0x830] sm:$0xff] 0.0
    %1706 = vst.msk [vmem:[#allocation2 + $0x838] sm:$0xff] %vm1443, 0.0
    %1707 = vst [vmem:[#allocation2 + $0x840] sm:$0xff] 0.0
    %1708 = vst [vmem:[#allocation2 + $0x848] sm:$0xff] 0.0
    %1709 = vst.msk [vmem:[#allocation2 + $0x850] sm:$0xff] %vm1443, 0.0
    %1710 = vst [vmem:[#allocation2 + $0x858] sm:$0x3] 0.0
    %1711 = vst [vmem:[#allocation2 + $0x860] sm:$0x3] 0.0
    %1712 = vst.msk [vmem:[#allocation2 + $0x868] sm:$0x3] %vm1450, 0.0
    %1713 = vst [vmem:[#allocation2 + $0x870] sm:$0xff] 0.0
    %1714 = vst [vmem:[#allocation2 + $0x878] sm:$0xff] 0.0
    %1715 = vst.msk [vmem:[#allocation2 + $0x880] sm:$0xff] %vm1443, 0.0
    %1716 = vst [vmem:[#allocation2 + $0x888] sm:$0xff] 0.0
    %1717 = vst [vmem:[#allocation2 + $0x890] sm:$0xff] 0.0
    %1718 = vst.msk [vmem:[#allocation2 + $0x898] sm:$0xff] %vm1443, 0.0
    %1719 = vst [vmem:[#allocation2 + $0x8a0] sm:$0x3] 0.0
    %1720 = vst [vmem:[#allocation2 + $0x8a8] sm:$0x3] 0.0
    %1721 = vst.msk [vmem:[#allocation2 + $0x8b0] sm:$0x3] %vm1450, 0.0
    %1722 = vst [vmem:[#allocation2 + $0x8b8] sm:$0xff] 0.0
    %1723 = vst [vmem:[#allocation2 + $0x8c0] sm:$0xff] 0.0
    %1724 = vst.msk [vmem:[#allocation2 + $0x8c8] sm:$0xff] %vm1443, 0.0
    %1725 = vst [vmem:[#allocation2 + $0x8d0] sm:$0xff] 0.0
    %1726 = vst [vmem:[#allocation2 + $0x8d8] sm:$0xff] 0.0
    %1727 = vst.msk [vmem:[#allocation2 + $0x8e0] sm:$0xff] %vm1443, 0.0
    %1728 = vst [vmem:[#allocation2 + $0x8e8] sm:$0x3] 0.0
    %1729 = vst [vmem:[#allocation2 + $0x8f0] sm:$0x3] 0.0
    %1730 = vst.msk [vmem:[#allocation2 + $0x8f8] sm:$0x3] %vm1450, 0.0
    %1731 = vst [vmem:[#allocation2 + $0x900] sm:$0xff] 0.0
    %1732 = vst [vmem:[#allocation2 + $0x908] sm:$0xff] 0.0
    %1733 = vst.msk [vmem:[#allocation2 + $0x910] sm:$0xff] %vm1443, 0.0
    %1734 = vst [vmem:[#allocation2 + $0x918] sm:$0xff] 0.0
    %1735 = vst [vmem:[#allocation2 + $0x920] sm:$0xff] 0.0
    %1736 = vst.msk [vmem:[#allocation2 + $0x928] sm:$0xff] %vm1443, 0.0
    %1737 = vst [vmem:[#allocation2 + $0x930] sm:$0x3] 0.0
    %1738 = vst [vmem:[#allocation2 + $0x938] sm:$0x3] 0.0
    %1739 = vst.msk [vmem:[#allocation2 + $0x940] sm:$0x3] %vm1450, 0.0
    %1740 = vst [vmem:[#allocation2 + $0x948] sm:$0xff] 0.0
    %1741 = vst [vmem:[#allocation2 + $0x950] sm:$0xff] 0.0
    %1742 = vst.msk [vmem:[#allocation2 + $0x958] sm:$0xff] %vm1443, 0.0
    %1743 = vst [vmem:[#allocation2 + $0x960] sm:$0xff] 0.0
    %1744 = vst [vmem:[#allocation2 + $0x968] sm:$0xff] 0.0
    %1745 = vst.msk [vmem:[#allocation2 + $0x970] sm:$0xff] %vm1443, 0.0
    %1746 = vst [vmem:[#allocation2 + $0x978] sm:$0x3] 0.0
    %1747 = vst [vmem:[#allocation2 + $0x980] sm:$0x3] 0.0
    %1748 = vst.msk [vmem:[#allocation2 + $0x988] sm:$0x3] %vm1450, 0.0
    %1749 = vst [vmem:[#allocation2 + $0x990] sm:$0xff] 0.0
    %1750 = vst [vmem:[#allocation2 + $0x998] sm:$0xff] 0.0
    %1751 = vst.msk [vmem:[#allocation2 + $0x9a0] sm:$0xff] %vm1443, 0.0
    %1752 = vst [vmem:[#allocation2 + $0x9a8] sm:$0xff] 0.0
    %1753 = vst [vmem:[#allocation2 + $0x9b0] sm:$0xff] 0.0
    %1754 = vst.msk [vmem:[#allocation2 + $0x9b8] sm:$0xff] %vm1443, 0.0
    %1755 = vst [vmem:[#allocation2 + $0x9c0] sm:$0x3] 0.0
    %1756 = vst [vmem:[#allocation2 + $0x9c8] sm:$0x3] 0.0
    %1757 = vst.msk [vmem:[#allocation2 + $0x9d0] sm:$0x3] %vm1450, 0.0
    %1758 = vst [vmem:[#allocation2 + $0x9d8] sm:$0xff] 0.0
    %1759 = vst [vmem:[#allocation2 + $0x9e0] sm:$0xff] 0.0
    %1760 = vst.msk [vmem:[#allocation2 + $0x9e8] sm:$0xff] %vm1443, 0.0
    %1761 = vst [vmem:[#allocation2 + $0x9f0] sm:$0xff] 0.0
    %1762 = vst [vmem:[#allocation2 + $0x9f8] sm:$0xff] 0.0
    %1763 = vst.msk [vmem:[#allocation2 + $0xa00] sm:$0xff] %vm1443, 0.0
    %1764 = vst [vmem:[#allocation2 + $0xa08] sm:$0x3] 0.0
    %1765 = vst [vmem:[#allocation2 + $0xa10] sm:$0x3] 0.0
    %1766 = vst.msk [vmem:[#allocation2 + $0xa18] sm:$0x3] %vm1450, 0.0
    %vm1959 = vcmask 1040384
    %v1960 = vrot.slane %v832, 7
    %v1961 = vrot.slane %v1041, 7
    %v1962 = vrot.slane %v1250, 7
    %v1963 = vrot.slane %v835, 7
    %v1964 = vsel %vm1959, %v1960, %v1963
    %v1965 = vrot.slane %v1044, 7
    %v1966 = vsel %vm1959, %v1961, %v1965
    %v1967 = vrot.slane %v1253, 7
    %v1968 = vsel %vm1959, %v1962, %v1967
    %v1969 = vrot.slane %v838, 7
    %v1970 = vrot.slane %v1047, 7
    %v1971 = vrot.slane %v1256, 7
    %v1972 = vrot.slane %v841, 7
    %v1973 = vsel %vm1959, %v1969, %v1972
    %v1974 = vrot.slane %v1050, 7
    %v1975 = vsel %vm1959, %v1970, %v1974
    %v1976 = vrot.slane %v1259, 7
    %v1977 = vsel %vm1959, %v1971, %v1976
    %v1978 = vrot.slane %v844, 7
    %v1979 = vrot.slane %v1053, 7
    %v1980 = vrot.slane %v1262, 7
    %v1981 = vrot.slane %v847, 7
    %v1982 = vsel %vm1959, %v1978, %v1981
    %v1983 = vrot.slane %v1056, 7
    %v1984 = vsel %vm1959, %v1979, %v1983
    %v1985 = vrot.slane %v1265, 7
    %v1986 = vsel %vm1959, %v1980, %v1985
    %v1987 = vrot.slane %v850, 7
    %v1988 = vrot.slane %v1059, 7
    %v1989 = vrot.slane %v1268, 7
    %v1990 = vrot.slane %v853, 7
    %v1991 = vsel %vm1959, %v1987, %v1990
    %v1992 = vrot.slane %v1062, 7
    %v1993 = vsel %vm1959, %v1988, %v1992
    %v1994 = vrot.slane %v1271, 7
    %v1995 = vsel %vm1959, %v1989, %v1994
    %v1996 = vrot.slane %v856, 7
    %v1997 = vrot.slane %v1065, 7
    %v1998 = vrot.slane %v1274, 7
    %v1999 = vrot.slane %v859, 7
    %v2000 = vsel %vm1959, %v1996, %v1999
    %v2001 = vrot.slane %v1068, 7
    %v2002 = vsel %vm1959, %v1997, %v2001
    %v2003 = vrot.slane %v1277, 7
    %v2004 = vsel %vm1959, %v1998, %v2003
    %v2005 = vrot.slane %v862, 7
    %v2006 = vrot.slane %v1071, 7
    %v2007 = vrot.slane %v1280, 7
    %v2008 = vrot.slane %v865, 7
    %v2009 = vsel %vm1959, %v2005, %v2008
    %v2010 = vrot.slane %v1074, 7
    %v2011 = vsel %vm1959, %v2006, %v2010
    %v2012 = vrot.slane %v1283, 7
    %v2013 = vsel %vm1959, %v2007, %v2012
    %v2014 = vrot.slane %v868, 7
    %v2015 = vrot.slane %v1077, 7
    %v2016 = vrot.slane %v1286, 7
    %v2017 = vrot.slane %v871, 7
    %v2018 = vsel %vm1959, %v2014, %v2017
    %v2019 = vrot.slane %v1080, 7
    %v2020 = vsel %vm1959, %v2015, %v2019
    %v2021 = vrot.slane %v1289, 7
    %v2022 = vsel %vm1959, %v2016, %v2021
    %v2023 = vrot.slane %v874, 7
    %v2024 = vrot.slane %v1083, 7
    %v2025 = vrot.slane %v1292, 7
    %v2026 = vrot.slane %v877, 7
    %v2027 = vsel %vm1959, %v2023, %v2026
    %v2028 = vrot.slane %v1086, 7
    %v2029 = vsel %vm1959, %v2024, %v2028
    %v2030 = vrot.slane %v1295, 7
    %v2031 = vsel %vm1959, %v2025, %v2030
    %v2032 = vrot.slane %v880, 7
    %v2033 = vrot.slane %v1089, 7
    %v2034 = vrot.slane %v1298, 7
    %v2035 = vrot.slane %v883, 7
    %v2036 = vsel %vm1959, %v2032, %v2035
    %v2037 = vrot.slane %v1092, 7
    %v2038 = vsel %vm1959, %v2033, %v2037
    %v2039 = vrot.slane %v1301, 7
    %v2040 = vsel %vm1959, %v2034, %v2039
    %v2041 = vrot.slane %v886, 7
    %v2042 = vrot.slane %v1095, 7
    %v2043 = vrot.slane %v1304, 7
    %v2044 = vrot.slane %v889, 7
    %v2045 = vsel %vm1959, %v2041, %v2044
    %v2046 = vrot.slane %v1098, 7
    %v2047 = vsel %vm1959, %v2042, %v2046
    %v2048 = vrot.slane %v1307, 7
    %v2049 = vsel %vm1959, %v2043, %v2048
    %v2050 = vrot.slane %v892, 7
    %v2051 = vrot.slane %v1101, 7
    %v2052 = vrot.slane %v1310, 7
    %v2053 = vrot.slane %v895, 7
    %v2054 = vsel %vm1959, %v2050, %v2053
    %v2055 = vrot.slane %v1104, 7
    %v2056 = vsel %vm1959, %v2051, %v2055
    %v2057 = vrot.slane %v1313, 7
    %v2058 = vsel %vm1959, %v2052, %v2057
    %v2059 = vrot.slane %v898, 7
    %v2060 = vrot.slane %v1107, 7
    %v2061 = vrot.slane %v1316, 7
    %v2062 = vrot.slane %v901, 7
    %v2063 = vsel %vm1959, %v2059, %v2062
    %v2064 = vrot.slane %v1110, 7
    %v2065 = vsel %vm1959, %v2060, %v2064
    %v2066 = vrot.slane %v1319, 7
    %v2067 = vsel %vm1959, %v2061, %v2066
    %v2068 = vrot.slane %v904, 7
    %v2069 = vrot.slane %v1113, 7
    %v2070 = vrot.slane %v1322, 7
    %v2071 = vrot.slane %v907, 7
    %v2072 = vsel %vm1959, %v2068, %v2071
    %v2073 = vrot.slane %v1116, 7
    %v2074 = vsel %vm1959, %v2069, %v2073
    %v2075 = vrot.slane %v1325, 7
    %v2076 = vsel %vm1959, %v2070, %v2075
    %v2077 = vrot.slane %v910, 7
    %v2078 = vrot.slane %v1119, 7
    %v2079 = vrot.slane %v1328, 7
    %v2080 = vrot.slane %v913, 7
    %v2081 = vsel %vm1959, %v2077, %v2080
    %v2082 = vrot.slane %v1122, 7
    %v2083 = vsel %vm1959, %v2078, %v2082
    %v2084 = vrot.slane %v1331, 7
    %v2085 = vsel %vm1959, %v2079, %v2084
    %v2086 = vrot.slane %v916, 7
    %v2087 = vrot.slane %v1125, 7
    %v2088 = vrot.slane %v1334, 7
    %v2089 = vrot.slane %v919, 7
    %v2090 = vsel %vm1959, %v2086, %v2089
    %v2091 = vrot.slane %v1128, 7
    %v2092 = vsel %vm1959, %v2087, %v2091
    %v2093 = vrot.slane %v1337, 7
    %v2094 = vsel %vm1959, %v2088, %v2093
    %v2095 = vrot.slane %v922, 7
    %v2096 = vrot.slane %v1131, 7
    %v2097 = vrot.slane %v1340, 7
    %v2098 = vrot.slane %v925, 7
    %v2099 = vsel %vm1959, %v2095, %v2098
    %v2100 = vrot.slane %v1134, 7
    %v2101 = vsel %vm1959, %v2096, %v2100
    %v2102 = vrot.slane %v1343, 7
    %v2103 = vsel %vm1959, %v2097, %v2102
    %v2104 = vrot.slane %v928, 7
    %v2105 = vrot.slane %v1137, 7
    %v2106 = vrot.slane %v1346, 7
    %v2107 = vrot.slane %v931, 7
    %v2108 = vsel %vm1959, %v2104, %v2107
    %v2109 = vrot.slane %v1140, 7
    %v2110 = vsel %vm1959, %v2105, %v2109
    %v2111 = vrot.slane %v1349, 7
    %v2112 = vsel %vm1959, %v2106, %v2111
    %v2113 = vrot.slane %v934, 7
    %v2114 = vrot.slane %v1143, 7
    %v2115 = vrot.slane %v1352, 7
    %v2116 = vrot.slane %v937, 7
    %v2117 = vsel %vm1959, %v2113, %v2116
    %v2118 = vrot.slane %v1146, 7
    %v2119 = vsel %vm1959, %v2114, %v2118
    %v2120 = vrot.slane %v1355, 7
    %v2121 = vsel %vm1959, %v2115, %v2120
    %v2122 = vrot.slane %v940, 7
    %v2123 = vrot.slane %v1149, 7
    %v2124 = vrot.slane %v1358, 7
    %v2125 = vrot.slane %v943, 7
    %v2126 = vsel %vm1959, %v2122, %v2125
    %v2127 = vrot.slane %v1152, 7
    %v2128 = vsel %vm1959, %v2123, %v2127
    %v2129 = vrot.slane %v1361, 7
    %v2130 = vsel %vm1959, %v2124, %v2129
    %v2131 = vrot.slane %v946, 7
    %v2132 = vrot.slane %v1155, 7
    %v2133 = vrot.slane %v1364, 7
    %v2134 = vrot.slane %v949, 7
    %v2135 = vsel %vm1959, %v2131, %v2134
    %v2136 = vrot.slane %v1158, 7
    %v2137 = vsel %vm1959, %v2132, %v2136
    %v2138 = vrot.slane %v1367, 7
    %v2139 = vsel %vm1959, %v2133, %v2138
    %v2140 = vrot.slane %v952, 7
    %v2141 = vrot.slane %v1161, 7
    %v2142 = vrot.slane %v1370, 7
    %v2143 = vrot.slane %v955, 7
    %v2144 = vsel %vm1959, %v2140, %v2143
    %v2145 = vrot.slane %v1164, 7
    %v2146 = vsel %vm1959, %v2141, %v2145
    %v2147 = vrot.slane %v1373, 7
    %v2148 = vsel %vm1959, %v2142, %v2147
    %v2149 = vrot.slane %v958, 7
    %v2150 = vrot.slane %v1167, 7
    %v2151 = vrot.slane %v1376, 7
    %v2152 = vrot.slane %v961, 7
    %v2153 = vsel %vm1959, %v2149, %v2152
    %v2154 = vrot.slane %v1170, 7
    %v2155 = vsel %vm1959, %v2150, %v2154
    %v2156 = vrot.slane %v1379, 7
    %v2157 = vsel %vm1959, %v2151, %v2156
    %v2158 = vrot.slane %v964, 7
    %v2159 = vrot.slane %v1173, 7
    %v2160 = vrot.slane %v1382, 7
    %v2161 = vrot.slane %v967, 7
    %v2162 = vsel %vm1959, %v2158, %v2161
    %v2163 = vrot.slane %v1176, 7
    %v2164 = vsel %vm1959, %v2159, %v2163
    %v2165 = vrot.slane %v1385, 7
    %v2166 = vsel %vm1959, %v2160, %v2165
    %v2167 = vrot.slane %v970, 7
    %v2168 = vrot.slane %v1179, 7
    %v2169 = vrot.slane %v1388, 7
    %v2170 = vrot.slane %v973, 7
    %v2171 = vsel %vm1959, %v2167, %v2170
    %v2172 = vrot.slane %v1182, 7
    %v2173 = vsel %vm1959, %v2168, %v2172
    %v2174 = vrot.slane %v1391, 7
    %v2175 = vsel %vm1959, %v2169, %v2174
    %v2176 = vrot.slane %v976, 7
    %v2177 = vrot.slane %v1185, 7
    %v2178 = vrot.slane %v1394, 7
    %v2179 = vrot.slane %v979, 7
    %v2180 = vsel %vm1959, %v2176, %v2179
    %v2181 = vrot.slane %v1188, 7
    %v2182 = vsel %vm1959, %v2177, %v2181
    %v2183 = vrot.slane %v1397, 7
    %v2184 = vsel %vm1959, %v2178, %v2183
    %v2185 = vrot.slane %v982, 7
    %v2186 = vrot.slane %v1191, 7
    %v2187 = vrot.slane %v1400, 7
    %v2188 = vrot.slane %v985, 7
    %v2189 = vsel %vm1959, %v2185, %v2188
    %v2190 = vrot.slane %v1194, 7
    %v2191 = vsel %vm1959, %v2186, %v2190
    %v2192 = vrot.slane %v1403, 7
    %v2193 = vsel %vm1959, %v2187, %v2192
    %v2194 = vrot.slane %v988, 7
    %v2195 = vrot.slane %v1197, 7
    %v2196 = vrot.slane %v1406, 7
    %v2197 = vrot.slane %v991, 7
    %v2198 = vsel %vm1959, %v2194, %v2197
    %v2199 = vrot.slane %v1200, 7
    %v2200 = vsel %vm1959, %v2195, %v2199
    %v2201 = vrot.slane %v1409, 7
    %v2202 = vsel %vm1959, %v2196, %v2201
    %v2203 = vrot.slane %v994, 7
    %v2204 = vrot.slane %v1203, 7
    %v2205 = vrot.slane %v1412, 7
    %v2206 = vrot.slane %v997, 7
    %v2207 = vsel %vm1959, %v2203, %v2206
    %v2208 = vrot.slane %v1206, 7
    %v2209 = vsel %vm1959, %v2204, %v2208
    %v2210 = vrot.slane %v1415, 7
    %v2211 = vsel %vm1959, %v2205, %v2210
    %v2212 = vrot.slane %v1000, 7
    %v2213 = vrot.slane %v1209, 7
    %v2214 = vrot.slane %v1418, 7
    %v2215 = vrot.slane %v1003, 7
    %v2216 = vsel %vm1959, %v2212, %v2215
    %v2217 = vrot.slane %v1212, 7
    %v2218 = vsel %vm1959, %v2213, %v2217
    %v2219 = vrot.slane %v1421, 7
    %v2220 = vsel %vm1959, %v2214, %v2219
    %v2221 = vrot.slane %v1006, 7
    %v2222 = vrot.slane %v1215, 7
    %v2223 = vrot.slane %v1424, 7
    %v2224 = vrot.slane %v1009, 7
    %v2225 = vsel %vm1959, %v2221, %v2224
    %v2226 = vrot.slane %v1218, 7
    %v2227 = vsel %vm1959, %v2222, %v2226
    %v2228 = vrot.slane %v1427, 7
    %v2229 = vsel %vm1959, %v2223, %v2228
    %v2230 = vrot.slane %v1012, 7
    %v2231 = vrot.slane %v1221, 7
    %v2232 = vrot.slane %v1430, 7
    %v2233 = vrot.slane %v1015, 7
    %v2234 = vsel %vm1959, %v2230, %v2233
    %v2235 = vrot.slane %v1224, 7
    %v2236 = vsel %vm1959, %v2231, %v2235
    %v2237 = vrot.slane %v1433, 7
    %v2238 = vsel %vm1959, %v2232, %v2237
    %v2239 = vrot.slane %v1018, 7
    %v2240 = vrot.slane %v1227, 7
    %v2241 = vrot.slane %v1436, 7
    %v2242 = vrot.slane %v1021, 7
    %v2243 = vsel %vm1959, %v2239, %v2242
    %v2244 = vrot.slane %v1230, 7
    %v2245 = vsel %vm1959, %v2240, %v2244
    %v2246 = vrot.slane %v1439, 7
    %v2247 = vsel %vm1959, %v2241, %v2246
    %s2536 = scalar_lea.vmem [#allocation2], 72
    %2537 = vst [vmem:[%s2536] sm:$0xfe] %v1960
    %2538 = vst [vmem:[%s2536 + $0x8] sm:$0xfe] %v1961
    %vm2539 = vcmask 261121
    %2540 = vst.msk [vmem:[%s2536 + $0x10] sm:$0xfe] %vm2539, %v1962
    %2541 = vst [vmem:[%s2536 + $0x18] sm:$0xff] %v1964
    %2542 = vst [vmem:[%s2536 + $0x20] sm:$0xff] %v1966
    %2543 = vst.msk [vmem:[%s2536 + $0x28] sm:$0xff] %vm1443, %v1968
    %2544 = vst [vmem:[%s2536 + $0x30] sm:$0x1] %v1963
    %2545 = vst [vmem:[%s2536 + $0x38] sm:$0x1] %v1965
    %vm2546 = vcmask 253952
    %2547 = vst.msk [vmem:[%s2536 + $0x40] sm:$0x1] %vm2546, %v1967
    %2548 = vst [vmem:[%s2536 + $0x48] sm:$0xfe] %v1969
    %2549 = vst [vmem:[%s2536 + $0x50] sm:$0xfe] %v1970
    %2550 = vst.msk [vmem:[%s2536 + $0x58] sm:$0xfe] %vm2539, %v1971
    %2551 = vst [vmem:[%s2536 + $0x60] sm:$0xff] %v1973
    %2552 = vst [vmem:[%s2536 + $0x68] sm:$0xff] %v1975
    %2553 = vst.msk [vmem:[%s2536 + $0x70] sm:$0xff] %vm1443, %v1977
    %2554 = vst [vmem:[%s2536 + $0x78] sm:$0x1] %v1972
    %2555 = vst [vmem:[%s2536 + $0x80] sm:$0x1] %v1974
    %2556 = vst.msk [vmem:[%s2536 + $0x88] sm:$0x1] %vm2546, %v1976
    %2557 = vst [vmem:[%s2536 + $0x90] sm:$0xfe] %v1978
    %2558 = vst [vmem:[%s2536 + $0x98] sm:$0xfe] %v1979
    %2559 = vst.msk [vmem:[%s2536 + $0xa0] sm:$0xfe] %vm2539, %v1980
    %2560 = vst [vmem:[%s2536 + $0xa8] sm:$0xff] %v1982
    %2561 = vst [vmem:[%s2536 + $0xb0] sm:$0xff] %v1984
    %2562 = vst.msk [vmem:[%s2536 + $0xb8] sm:$0xff] %vm1443, %v1986
    %2563 = vst [vmem:[%s2536 + $0xc0] sm:$0x1] %v1981
    %2564 = vst [vmem:[%s2536 + $0xc8] sm:$0x1] %v1983
    %2565 = vst.msk [vmem:[%s2536 + $0xd0] sm:$0x1] %vm2546, %v1985
    %2566 = vst [vmem:[%s2536 + $0xd8] sm:$0xfe] %v1987
    %2567 = vst [vmem:[%s2536 + $0xe0] sm:$0xfe] %v1988
    %2568 = vst.msk [vmem:[%s2536 + $0xe8] sm:$0xfe] %vm2539, %v1989
    %2569 = vst [vmem:[%s2536 + $0xf0] sm:$0xff] %v1991
    %2570 = vst [vmem:[%s2536 + $0xf8] sm:$0xff] %v1993
    %2571 = vst.msk [vmem:[%s2536 + $0x100] sm:$0xff] %vm1443, %v1995
    %2572 = vst [vmem:[%s2536 + $0x108] sm:$0x1] %v1990
    %2573 = vst [vmem:[%s2536 + $0x110] sm:$0x1] %v1992
    %2574 = vst.msk [vmem:[%s2536 + $0x118] sm:$0x1] %vm2546, %v1994
    %2575 = vst [vmem:[%s2536 + $0x120] sm:$0xfe] %v1996
    %2576 = vst [vmem:[%s2536 + $0x128] sm:$0xfe] %v1997
    %2577 = vst.msk [vmem:[%s2536 + $0x130] sm:$0xfe] %vm2539, %v1998
    %2578 = vst [vmem:[%s2536 + $0x138] sm:$0xff] %v2000
    %2579 = vst [vmem:[%s2536 + $0x140] sm:$0xff] %v2002
    %2580 = vst.msk [vmem:[%s2536 + $0x148] sm:$0xff] %vm1443, %v2004
    %2581 = vst [vmem:[%s2536 + $0x150] sm:$0x1] %v1999
    %2582 = vst [vmem:[%s2536 + $0x158] sm:$0x1] %v2001
    %2583 = vst.msk [vmem:[%s2536 + $0x160] sm:$0x1] %vm2546, %v2003
    %2584 = vst [vmem:[%s2536 + $0x168] sm:$0xfe] %v2005
    %2585 = vst [vmem:[%s2536 + $0x170] sm:$0xfe] %v2006
    %2586 = vst.msk [vmem:[%s2536 + $0x178] sm:$0xfe] %vm2539, %v2007
    %2587 = vst [vmem:[%s2536 + $0x180] sm:$0xff] %v2009
    %2588 = vst [vmem:[%s2536 + $0x188] sm:$0xff] %v2011
    %2589 = vst.msk [vmem:[%s2536 + $0x190] sm:$0xff] %vm1443, %v2013
    %2590 = vst [vmem:[%s2536 + $0x198] sm:$0x1] %v2008
    %2591 = vst [vmem:[%s2536 + $0x1a0] sm:$0x1] %v2010
    %2592 = vst.msk [vmem:[%s2536 + $0x1a8] sm:$0x1] %vm2546, %v2012
    %2593 = vst [vmem:[%s2536 + $0x1b0] sm:$0xfe] %v2014
    %2594 = vst [vmem:[%s2536 + $0x1b8] sm:$0xfe] %v2015
    %2595 = vst.msk [vmem:[%s2536 + $0x1c0] sm:$0xfe] %vm2539, %v2016
    %2596 = vst [vmem:[%s2536 + $0x1c8] sm:$0xff] %v2018
    %2597 = vst [vmem:[%s2536 + $0x1d0] sm:$0xff] %v2020
    %2598 = vst.msk [vmem:[%s2536 + $0x1d8] sm:$0xff] %vm1443, %v2022
    %2599 = vst [vmem:[%s2536 + $0x1e0] sm:$0x1] %v2017
    %2600 = vst [vmem:[%s2536 + $0x1e8] sm:$0x1] %v2019
    %2601 = vst.msk [vmem:[%s2536 + $0x1f0] sm:$0x1] %vm2546, %v2021
    %2602 = vst [vmem:[%s2536 + $0x1f8] sm:$0xfe] %v2023
    %2603 = vst [vmem:[%s2536 + $0x200] sm:$0xfe] %v2024
    %2604 = vst.msk [vmem:[%s2536 + $0x208] sm:$0xfe] %vm2539, %v2025
    %2605 = vst [vmem:[%s2536 + $0x210] sm:$0xff] %v2027
    %2606 = vst [vmem:[%s2536 + $0x218] sm:$0xff] %v2029
    %2607 = vst.msk [vmem:[%s2536 + $0x220] sm:$0xff] %vm1443, %v2031
    %2608 = vst [vmem:[%s2536 + $0x228] sm:$0x1] %v2026
    %2609 = vst [vmem:[%s2536 + $0x230] sm:$0x1] %v2028
    %2610 = vst.msk [vmem:[%s2536 + $0x238] sm:$0x1] %vm2546, %v2030
    %2611 = vst [vmem:[%s2536 + $0x240] sm:$0xfe] %v2032
    %2612 = vst [vmem:[%s2536 + $0x248] sm:$0xfe] %v2033
    %2613 = vst.msk [vmem:[%s2536 + $0x250] sm:$0xfe] %vm2539, %v2034
    %2614 = vst [vmem:[%s2536 + $0x258] sm:$0xff] %v2036
    %2615 = vst [vmem:[%s2536 + $0x260] sm:$0xff] %v2038
    %2616 = vst.msk [vmem:[%s2536 + $0x268] sm:$0xff] %vm1443, %v2040
    %2617 = vst [vmem:[%s2536 + $0x270] sm:$0x1] %v2035
    %2618 = vst [vmem:[%s2536 + $0x278] sm:$0x1] %v2037
    %2619 = vst.msk [vmem:[%s2536 + $0x280] sm:$0x1] %vm2546, %v2039
    %2620 = vst [vmem:[%s2536 + $0x288] sm:$0xfe] %v2041
    %2621 = vst [vmem:[%s2536 + $0x290] sm:$0xfe] %v2042
    %2622 = vst.msk [vmem:[%s2536 + $0x298] sm:$0xfe] %vm2539, %v2043
    %2623 = vst [vmem:[%s2536 + $0x2a0] sm:$0xff] %v2045
    %2624 = vst [vmem:[%s2536 + $0x2a8] sm:$0xff] %v2047
    %2625 = vst.msk [vmem:[%s2536 + $0x2b0] sm:$0xff] %vm1443, %v2049
    %2626 = vst [vmem:[%s2536 + $0x2b8] sm:$0x1] %v2044
    %2627 = vst [vmem:[%s2536 + $0x2c0] sm:$0x1] %v2046
    %2628 = vst.msk [vmem:[%s2536 + $0x2c8] sm:$0x1] %vm2546, %v2048
    %2629 = vst [vmem:[%s2536 + $0x2d0] sm:$0xfe] %v2050
    %2630 = vst [vmem:[%s2536 + $0x2d8] sm:$0xfe] %v2051
    %2631 = vst.msk [vmem:[%s2536 + $0x2e0] sm:$0xfe] %vm2539, %v2052
    %2632 = vst [vmem:[%s2536 + $0x2e8] sm:$0xff] %v2054
    %2633 = vst [vmem:[%s2536 + $0x2f0] sm:$0xff] %v2056
    %2634 = vst.msk [vmem:[%s2536 + $0x2f8] sm:$0xff] %vm1443, %v2058
    %2635 = vst [vmem:[%s2536 + $0x300] sm:$0x1] %v2053
    %2636 = vst [vmem:[%s2536 + $0x308] sm:$0x1] %v2055
    %2637 = vst.msk [vmem:[%s2536 + $0x310] sm:$0x1] %vm2546, %v2057
    %2638 = vst [vmem:[%s2536 + $0x318] sm:$0xfe] %v2059
    %2639 = vst [vmem:[%s2536 + $0x320] sm:$0xfe] %v2060
    %2640 = vst.msk [vmem:[%s2536 + $0x328] sm:$0xfe] %vm2539, %v2061
    %2641 = vst [vmem:[%s2536 + $0x330] sm:$0xff] %v2063
    %2642 = vst [vmem:[%s2536 + $0x338] sm:$0xff] %v2065
    %2643 = vst.msk [vmem:[%s2536 + $0x340] sm:$0xff] %vm1443, %v2067
    %2644 = vst [vmem:[%s2536 + $0x348] sm:$0x1] %v2062
    %2645 = vst [vmem:[%s2536 + $0x350] sm:$0x1] %v2064
    %2646 = vst.msk [vmem:[%s2536 + $0x358] sm:$0x1] %vm2546, %v2066
    %2647 = vst [vmem:[%s2536 + $0x360] sm:$0xfe] %v2068
    %2648 = vst [vmem:[%s2536 + $0x368] sm:$0xfe] %v2069
    %2649 = vst.msk [vmem:[%s2536 + $0x370] sm:$0xfe] %vm2539, %v2070
    %2650 = vst [vmem:[%s2536 + $0x378] sm:$0xff] %v2072
    %2651 = vst [vmem:[%s2536 + $0x380] sm:$0xff] %v2074
    %2652 = vst.msk [vmem:[%s2536 + $0x388] sm:$0xff] %vm1443, %v2076
    %2653 = vst [vmem:[%s2536 + $0x390] sm:$0x1] %v2071
    %2654 = vst [vmem:[%s2536 + $0x398] sm:$0x1] %v2073
    %2655 = vst.msk [vmem:[%s2536 + $0x3a0] sm:$0x1] %vm2546, %v2075
    %2656 = vst [vmem:[%s2536 + $0x3a8] sm:$0xfe] %v2077
    %2657 = vst [vmem:[%s2536 + $0x3b0] sm:$0xfe] %v2078
    %2658 = vst.msk [vmem:[%s2536 + $0x3b8] sm:$0xfe] %vm2539, %v2079
    %2659 = vst [vmem:[%s2536 + $0x3c0] sm:$0xff] %v2081
    %2660 = vst [vmem:[%s2536 + $0x3c8] sm:$0xff] %v2083
    %2661 = vst.msk [vmem:[%s2536 + $0x3d0] sm:$0xff] %vm1443, %v2085
    %2662 = vst [vmem:[%s2536 + $0x3d8] sm:$0x1] %v2080
    %2663 = vst [vmem:[%s2536 + $0x3e0] sm:$0x1] %v2082
    %2664 = vst.msk [vmem:[%s2536 + $0x3e8] sm:$0x1] %vm2546, %v2084
    %2665 = vst [vmem:[%s2536 + $0x3f0] sm:$0xfe] %v2086
    %2666 = vst [vmem:[%s2536 + $0x3f8] sm:$0xfe] %v2087
    %2667 = vst.msk [vmem:[%s2536 + $0x400] sm:$0xfe] %vm2539, %v2088
    %2668 = vst [vmem:[%s2536 + $0x408] sm:$0xff] %v2090
    %2669 = vst [vmem:[%s2536 + $0x410] sm:$0xff] %v2092
    %2670 = vst.msk [vmem:[%s2536 + $0x418] sm:$0xff] %vm1443, %v2094
    %2671 = vst [vmem:[%s2536 + $0x420] sm:$0x1] %v2089
    %2672 = vst [vmem:[%s2536 + $0x428] sm:$0x1] %v2091
    %2673 = vst.msk [vmem:[%s2536 + $0x430] sm:$0x1] %vm2546, %v2093
    %2674 = vst [vmem:[%s2536 + $0x438] sm:$0xfe] %v2095
    %2675 = vst [vmem:[%s2536 + $0x440] sm:$0xfe] %v2096
    %2676 = vst.msk [vmem:[%s2536 + $0x448] sm:$0xfe] %vm2539, %v2097
    %2677 = vst [vmem:[%s2536 + $0x450] sm:$0xff] %v2099
    %2678 = vst [vmem:[%s2536 + $0x458] sm:$0xff] %v2101
    %2679 = vst.msk [vmem:[%s2536 + $0x460] sm:$0xff] %vm1443, %v2103
    %2680 = vst [vmem:[%s2536 + $0x468] sm:$0x1] %v2098
    %2681 = vst [vmem:[%s2536 + $0x470] sm:$0x1] %v2100
    %2682 = vst.msk [vmem:[%s2536 + $0x478] sm:$0x1] %vm2546, %v2102
    %2683 = vst [vmem:[%s2536 + $0x510] sm:$0xfe] %v2104
    %2684 = vst [vmem:[%s2536 + $0x518] sm:$0xfe] %v2105
    %2685 = vst.msk [vmem:[%s2536 + $0x520] sm:$0xfe] %vm2539, %v2106
    %2686 = vst [vmem:[%s2536 + $0x528] sm:$0xff] %v2108
    %2687 = vst [vmem:[%s2536 + $0x530] sm:$0xff] %v2110
    %2688 = vst.msk [vmem:[%s2536 + $0x538] sm:$0xff] %vm1443, %v2112
    %2689 = vst [vmem:[%s2536 + $0x540] sm:$0x1] %v2107
    %2690 = vst [vmem:[%s2536 + $0x548] sm:$0x1] %v2109
    %2691 = vst.msk [vmem:[%s2536 + $0x550] sm:$0x1] %vm2546, %v2111
    %2692 = vst [vmem:[%s2536 + $0x558] sm:$0xfe] %v2113
    %2693 = vst [vmem:[%s2536 + $0x560] sm:$0xfe] %v2114
    %2694 = vst.msk [vmem:[%s2536 + $0x568] sm:$0xfe] %vm2539, %v2115
    %2695 = vst [vmem:[%s2536 + $0x570] sm:$0xff] %v2117
    %2696 = vst [vmem:[%s2536 + $0x578] sm:$0xff] %v2119
    %2697 = vst.msk [vmem:[%s2536 + $0x580] sm:$0xff] %vm1443, %v2121
    %2698 = vst [vmem:[%s2536 + $0x588] sm:$0x1] %v2116
    %2699 = vst [vmem:[%s2536 + $0x590] sm:$0x1] %v2118
    %2700 = vst.msk [vmem:[%s2536 + $0x598] sm:$0x1] %vm2546, %v2120
    %2701 = vst [vmem:[%s2536 + $0x5a0] sm:$0xfe] %v2122
    %2702 = vst [vmem:[%s2536 + $0x5a8] sm:$0xfe] %v2123
    %2703 = vst.msk [vmem:[%s2536 + $0x5b0] sm:$0xfe] %vm2539, %v2124
    %2704 = vst [vmem:[%s2536 + $0x5b8] sm:$0xff] %v2126
    %2705 = vst [vmem:[%s2536 + $0x5c0] sm:$0xff] %v2128
    %2706 = vst.msk [vmem:[%s2536 + $0x5c8] sm:$0xff] %vm1443, %v2130
    %2707 = vst [vmem:[%s2536 + $0x5d0] sm:$0x1] %v2125
    %2708 = vst [vmem:[%s2536 + $0x5d8] sm:$0x1] %v2127
    %2709 = vst.msk [vmem:[%s2536 + $0x5e0] sm:$0x1] %vm2546, %v2129
    %2710 = vst [vmem:[%s2536 + $0x5e8] sm:$0xfe] %v2131
    %2711 = vst [vmem:[%s2536 + $0x5f0] sm:$0xfe] %v2132
    %2712 = vst.msk [vmem:[%s2536 + $0x5f8] sm:$0xfe] %vm2539, %v2133
    %2713 = vst [vmem:[%s2536 + $0x600] sm:$0xff] %v2135
    %2714 = vst [vmem:[%s2536 + $0x608] sm:$0xff] %v2137
    %2715 = vst.msk [vmem:[%s2536 + $0x610] sm:$0xff] %vm1443, %v2139
    %2716 = vst [vmem:[%s2536 + $0x618] sm:$0x1] %v2134
    %2717 = vst [vmem:[%s2536 + $0x620] sm:$0x1] %v2136
    %2718 = vst.msk [vmem:[%s2536 + $0x628] sm:$0x1] %vm2546, %v2138
    %2719 = vst [vmem:[%s2536 + $0x630] sm:$0xfe] %v2140
    %2720 = vst [vmem:[%s2536 + $0x638] sm:$0xfe] %v2141
    %2721 = vst.msk [vmem:[%s2536 + $0x640] sm:$0xfe] %vm2539, %v2142
    %2722 = vst [vmem:[%s2536 + $0x648] sm:$0xff] %v2144
    %2723 = vst [vmem:[%s2536 + $0x650] sm:$0xff] %v2146
    %2724 = vst.msk [vmem:[%s2536 + $0x658] sm:$0xff] %vm1443, %v2148
    %2725 = vst [vmem:[%s2536 + $0x660] sm:$0x1] %v2143
    %2726 = vst [vmem:[%s2536 + $0x668] sm:$0x1] %v2145
    %2727 = vst.msk [vmem:[%s2536 + $0x670] sm:$0x1] %vm2546, %v2147
    %2728 = vst [vmem:[%s2536 + $0x678] sm:$0xfe] %v2149
    %2729 = vst [vmem:[%s2536 + $0x680] sm:$0xfe] %v2150
    %2730 = vst.msk [vmem:[%s2536 + $0x688] sm:$0xfe] %vm2539, %v2151
    %2731 = vst [vmem:[%s2536 + $0x690] sm:$0xff] %v2153
    %2732 = vst [vmem:[%s2536 + $0x698] sm:$0xff] %v2155
    %2733 = vst.msk [vmem:[%s2536 + $0x6a0] sm:$0xff] %vm1443, %v2157
    %2734 = vst [vmem:[%s2536 + $0x6a8] sm:$0x1] %v2152
    %2735 = vst [vmem:[%s2536 + $0x6b0] sm:$0x1] %v2154
    %2736 = vst.msk [vmem:[%s2536 + $0x6b8] sm:$0x1] %vm2546, %v2156
    %2737 = vst [vmem:[%s2536 + $0x6c0] sm:$0xfe] %v2158
    %2738 = vst [vmem:[%s2536 + $0x6c8] sm:$0xfe] %v2159
    %2739 = vst.msk [vmem:[%s2536 + $0x6d0] sm:$0xfe] %vm2539, %v2160
    %2740 = vst [vmem:[%s2536 + $0x6d8] sm:$0xff] %v2162
    %2741 = vst [vmem:[%s2536 + $0x6e0] sm:$0xff] %v2164
    %2742 = vst.msk [vmem:[%s2536 + $0x6e8] sm:$0xff] %vm1443, %v2166
    %2743 = vst [vmem:[%s2536 + $0x6f0] sm:$0x1] %v2161
    %2744 = vst [vmem:[%s2536 + $0x6f8] sm:$0x1] %v2163
    %2745 = vst.msk [vmem:[%s2536 + $0x700] sm:$0x1] %vm2546, %v2165
    %2746 = vst [vmem:[%s2536 + $0x708] sm:$0xfe] %v2167
    %2747 = vst [vmem:[%s2536 + $0x710] sm:$0xfe] %v2168
    %2748 = vst.msk [vmem:[%s2536 + $0x718] sm:$0xfe] %vm2539, %v2169
    %2749 = vst [vmem:[%s2536 + $0x720] sm:$0xff] %v2171
    %2750 = vst [vmem:[%s2536 + $0x728] sm:$0xff] %v2173
    %2751 = vst.msk [vmem:[%s2536 + $0x730] sm:$0xff] %vm1443, %v2175
    %2752 = vst [vmem:[%s2536 + $0x738] sm:$0x1] %v2170
    %2753 = vst [vmem:[%s2536 + $0x740] sm:$0x1] %v2172
    %2754 = vst.msk [vmem:[%s2536 + $0x748] sm:$0x1] %vm2546, %v2174
    %2755 = vst [vmem:[%s2536 + $0x750] sm:$0xfe] %v2176
    %2756 = vst [vmem:[%s2536 + $0x758] sm:$0xfe] %v2177
    %2757 = vst.msk [vmem:[%s2536 + $0x760] sm:$0xfe] %vm2539, %v2178
    %2758 = vst [vmem:[%s2536 + $0x768] sm:$0xff] %v2180
    %2759 = vst [vmem:[%s2536 + $0x770] sm:$0xff] %v2182
    %2760 = vst.msk [vmem:[%s2536 + $0x778] sm:$0xff] %vm1443, %v2184
    %2761 = vst [vmem:[%s2536 + $0x780] sm:$0x1] %v2179
    %2762 = vst [vmem:[%s2536 + $0x788] sm:$0x1] %v2181
    %2763 = vst.msk [vmem:[%s2536 + $0x790] sm:$0x1] %vm2546, %v2183
    %2764 = vst [vmem:[%s2536 + $0x798] sm:$0xfe] %v2185
    %2765 = vst [vmem:[%s2536 + $0x7a0] sm:$0xfe] %v2186
    %2766 = vst.msk [vmem:[%s2536 + $0x7a8] sm:$0xfe] %vm2539, %v2187
    %2767 = vst [vmem:[%s2536 + $0x7b0] sm:$0xff] %v2189
    %2768 = vst [vmem:[%s2536 + $0x7b8] sm:$0xff] %v2191
    %2769 = vst.msk [vmem:[%s2536 + $0x7c0] sm:$0xff] %vm1443, %v2193
    %2770 = vst [vmem:[%s2536 + $0x7c8] sm:$0x1] %v2188
    %2771 = vst [vmem:[%s2536 + $0x7d0] sm:$0x1] %v2190
    %2772 = vst.msk [vmem:[%s2536 + $0x7d8] sm:$0x1] %vm2546, %v2192
    %2773 = vst [vmem:[%s2536 + $0x7e0] sm:$0xfe] %v2194
    %2774 = vst [vmem:[%s2536 + $0x7e8] sm:$0xfe] %v2195
    %2775 = vst.msk [vmem:[%s2536 + $0x7f0] sm:$0xfe] %vm2539, %v2196
    %2776 = vst [vmem:[%s2536 + $0x7f8] sm:$0xff] %v2198
    %2777 = vst [vmem:[%s2536 + $0x800] sm:$0xff] %v2200
    %2778 = vst.msk [vmem:[%s2536 + $0x808] sm:$0xff] %vm1443, %v2202
    %2779 = vst [vmem:[%s2536 + $0x810] sm:$0x1] %v2197
    %2780 = vst [vmem:[%s2536 + $0x818] sm:$0x1] %v2199
    %2781 = vst.msk [vmem:[%s2536 + $0x820] sm:$0x1] %vm2546, %v2201
    %2782 = vst [vmem:[%s2536 + $0x828] sm:$0xfe] %v2203
    %2783 = vst [vmem:[%s2536 + $0x830] sm:$0xfe] %v2204
    %2784 = vst.msk [vmem:[%s2536 + $0x838] sm:$0xfe] %vm2539, %v2205
    %2785 = vst [vmem:[%s2536 + $0x840] sm:$0xff] %v2207
    %2786 = vst [vmem:[%s2536 + $0x848] sm:$0xff] %v2209
    %2787 = vst.msk [vmem:[%s2536 + $0x850] sm:$0xff] %vm1443, %v2211
    %2788 = vst [vmem:[%s2536 + $0x858] sm:$0x1] %v2206
    %2789 = vst [vmem:[%s2536 + $0x860] sm:$0x1] %v2208
    %2790 = vst.msk [vmem:[%s2536 + $0x868] sm:$0x1] %vm2546, %v2210
    %2791 = vst [vmem:[%s2536 + $0x870] sm:$0xfe] %v2212
    %2792 = vst [vmem:[%s2536 + $0x878] sm:$0xfe] %v2213
    %2793 = vst.msk [vmem:[%s2536 + $0x880] sm:$0xfe] %vm2539, %v2214
    %2794 = vst [vmem:[%s2536 + $0x888] sm:$0xff] %v2216
    %2795 = vst [vmem:[%s2536 + $0x890] sm:$0xff] %v2218
    %2796 = vst.msk [vmem:[%s2536 + $0x898] sm:$0xff] %vm1443, %v2220
    %2797 = vst [vmem:[%s2536 + $0x8a0] sm:$0x1] %v2215
    %2798 = vst [vmem:[%s2536 + $0x8a8] sm:$0x1] %v2217
    %2799 = vst.msk [vmem:[%s2536 + $0x8b0] sm:$0x1] %vm2546, %v2219
    %2800 = vst [vmem:[%s2536 + $0x8b8] sm:$0xfe] %v2221
    %2801 = vst [vmem:[%s2536 + $0x8c0] sm:$0xfe] %v2222
    %2802 = vst.msk [vmem:[%s2536 + $0x8c8] sm:$0xfe] %vm2539, %v2223
    %2803 = vst [vmem:[%s2536 + $0x8d0] sm:$0xff] %v2225
    %2804 = vst [vmem:[%s2536 + $0x8d8] sm:$0xff] %v2227
    %2805 = vst.msk [vmem:[%s2536 + $0x8e0] sm:$0xff] %vm1443, %v2229
    %2806 = vst [vmem:[%s2536 + $0x8e8] sm:$0x1] %v2224
    %2807 = vst [vmem:[%s2536 + $0x8f0] sm:$0x1] %v2226
    %2808 = vst.msk [vmem:[%s2536 + $0x8f8] sm:$0x1] %vm2546, %v2228
    %2809 = vst [vmem:[%s2536 + $0x900] sm:$0xfe] %v2230
    %2810 = vst [vmem:[%s2536 + $0x908] sm:$0xfe] %v2231
    %2811 = vst.msk [vmem:[%s2536 + $0x910] sm:$0xfe] %vm2539, %v2232
    %2812 = vst [vmem:[%s2536 + $0x918] sm:$0xff] %v2234
    %2813 = vst [vmem:[%s2536 + $0x920] sm:$0xff] %v2236
    %2814 = vst.msk [vmem:[%s2536 + $0x928] sm:$0xff] %vm1443, %v2238
    %2815 = vst [vmem:[%s2536 + $0x930] sm:$0x1] %v2233
    %2816 = vst [vmem:[%s2536 + $0x938] sm:$0x1] %v2235
    %2817 = vst.msk [vmem:[%s2536 + $0x940] sm:$0x1] %vm2546, %v2237
    %2818 = vst [vmem:[%s2536 + $0x948] sm:$0xfe] %v2239
    %2819 = vst [vmem:[%s2536 + $0x950] sm:$0xfe] %v2240
    %2820 = vst.msk [vmem:[%s2536 + $0x958] sm:$0xfe] %vm2539, %v2241
    %2821 = vst [vmem:[%s2536 + $0x960] sm:$0xff] %v2243
    %2822 = vst [vmem:[%s2536 + $0x968] sm:$0xff] %v2245
    %2823 = vst.msk [vmem:[%s2536 + $0x970] sm:$0xff] %vm1443, %v2247
    %2824 = vst [vmem:[%s2536 + $0x978] sm:$0x1] %v2242
    %2825 = vst [vmem:[%s2536 + $0x980] sm:$0x1] %v2244
    %2826 = vst.msk [vmem:[%s2536 + $0x988] sm:$0x1] %vm2546, %v2246
    %v2827 = vld [vmem:[#allocation2] sm:$0xff]
    %v2828 = vld [vmem:[#allocation2 + $0x18] sm:$0xff]
    %v2829 = vld [vmem:[#allocation2 + $0x48] sm:$0xff]
    %v2830 = vld [vmem:[#allocation2 + $0x60] sm:$0xff]
    %v2831 = vld [vmem:[#allocation2 + $0x90] sm:$0xff]
    %v2832 = vld [vmem:[#allocation2 + $0xa8] sm:$0xff]
    %v2833 = vld [vmem:[#allocation2 + $0xd8] sm:$0xff]
    %v2834 = vld [vmem:[#allocation2 + $0xf0] sm:$0xff]
    %v2835 = vld [vmem:[#allocation2 + $0x120] sm:$0xff]
    %v2836 = vld [vmem:[#allocation2 + $0x138] sm:$0xff]
    %v2837 = vld [vmem:[#allocation2 + $0x168] sm:$0xff]
    %v2838 = vld [vmem:[#allocation2 + $0x180] sm:$0xff]
    %v2839 = vld [vmem:[#allocation2 + $0x1b0] sm:$0xff]
    %v2840 = vld [vmem:[#allocation2 + $0x1c8] sm:$0xff]
    %v2841 = vld [vmem:[#allocation2 + $0x1f8] sm:$0xff]
    %v2842 = vld [vmem:[#allocation2 + $0x210] sm:$0xff]
    %v2843 = vld [vmem:[#allocation2 + $0x240] sm:$0xff]
    %v2844 = vld [vmem:[#allocation2 + $0x258] sm:$0xff]
    %v2845 = vld [vmem:[#allocation2 + $0x288] sm:$0xff]
    %v2846 = vld [vmem:[#allocation2 + $0x2a0] sm:$0xff]
    %v2847 = vld [vmem:[#allocation2 + $0x2d0] sm:$0xff]
    %v2848 = vld [vmem:[#allocation2 + $0x2e8] sm:$0xff]
    %v2849 = vld [vmem:[#allocation2 + $0x318] sm:$0xff]
    %v2850 = vld [vmem:[#allocation2 + $0x330] sm:$0xff]
    %v2851 = vld [vmem:[#allocation2 + $0x360] sm:$0xff]
    %v2852 = vld [vmem:[#allocation2 + $0x378] sm:$0xff]
    %v2853 = vld [vmem:[#allocation2 + $0x3a8] sm:$0xff]
    %v2854 = vld [vmem:[#allocation2 + $0x3c0] sm:$0xff]
    %v2855 = vld [vmem:[#allocation2 + $0x3f0] sm:$0xff]
    %v2856 = vld [vmem:[#allocation2 + $0x408] sm:$0xff]
    %v2857 = vld [vmem:[#allocation2 + $0x438] sm:$0xff]
    %v2858 = vld [vmem:[#allocation2 + $0x450] sm:$0xff]
    %v2859 = vld [vmem:[#allocation2 + $0x510] sm:$0xff]
    %v2860 = vld [vmem:[#allocation2 + $0x528] sm:$0xff]
    %v2861 = vld [vmem:[#allocation2 + $0x558] sm:$0xff]
    %v2862 = vld [vmem:[#allocation2 + $0x570] sm:$0xff]
    %v2863 = vld [vmem:[#allocation2 + $0x5a0] sm:$0xff]
    %v2864 = vld [vmem:[#allocation2 + $0x5b8] sm:$0xff]
    %v2865 = vld [vmem:[#allocation2 + $0x5e8] sm:$0xff]
    %v2866 = vld [vmem:[#allocation2 + $0x600] sm:$0xff]
    %v2867 = vld [vmem:[#allocation2 + $0x630] sm:$0xff]
    %v2868 = vld [vmem:[#allocation2 + $0x648] sm:$0xff]
    %v2869 = vld [vmem:[#allocation2 + $0x678] sm:$0xff]
    %v2870 = vld [vmem:[#allocation2 + $0x690] sm:$0xff]
    %v2871 = vld [vmem:[#allocation2 + $0x6c0] sm:$0xff]
    %v2872 = vld [vmem:[#allocation2 + $0x6d8] sm:$0xff]
    %v2873 = vld [vmem:[#allocation2 + $0x708] sm:$0xff]
    %v2874 = vld [vmem:[#allocation2 + $0x720] sm:$0xff]
    %v2875 = vld [vmem:[#allocation2 + $0x750] sm:$0xff]
    %v2876 = vld [vmem:[#allocation2 + $0x768] sm:$0xff]
    %v2877 = vld [vmem:[#allocation2 + $0x798] sm:$0xff]
    %v2878 = vld [vmem:[#allocation2 + $0x7b0] sm:$0xff]
    %v2879 = vld [vmem:[#allocation2 + $0x7e0] sm:$0xff]
    %v2880 = vld [vmem:[#allocation2 + $0x7f8] sm:$0xff]
    %v2881 = vld [vmem:[#allocation2 + $0x828] sm:$0xff]
    %v2882 = vld [vmem:[#allocation2 + $0x840] sm:$0xff]
    %v2883 = vld [vmem:[#allocation2 + $0x870] sm:$0xff]
    %v2884 = vld [vmem:[#allocation2 + $0x888] sm:$0xff]
    %v2885 = vld [vmem:[#allocation2 + $0x8b8] sm:$0xff]
    %v2886 = vld [vmem:[#allocation2 + $0x8d0] sm:$0xff]
    %v2887 = vld [vmem:[#allocation2 + $0x900] sm:$0xff]
    %v2888 = vld [vmem:[#allocation2 + $0x918] sm:$0xff]
    %v2889 = vld [vmem:[#allocation2 + $0x948] sm:$0xff]
    %v2890 = vld [vmem:[#allocation2 + $0x960] sm:$0xff]
    %v2891 = vld [vmem:[#allocation2] sm:$0xfe]
    %v2892 = vld [vmem:[#allocation2 + $0x30] sm:$0x1]
    %v2893 = vld [vmem:[#allocation2 + $0x48] sm:$0xfe]
    %v2894 = vld [vmem:[#allocation2 + $0x78] sm:$0x1]
    %v2895 = vld [vmem:[#allocation2 + $0x90] sm:$0xfe]
    %v2896 = vld [vmem:[#allocation2 + $0xc0] sm:$0x1]
    %v2897 = vld [vmem:[#allocation2 + $0xd8] sm:$0xfe]
    %v2898 = vld [vmem:[#allocation2 + $0x108] sm:$0x1]
    %v2899 = vld [vmem:[#allocation2 + $0x120] sm:$0xfe]
    %v2900 = vld [vmem:[#allocation2 + $0x150] sm:$0x1]
    %v2901 = vld [vmem:[#allocation2 + $0x168] sm:$0xfe]
    %v2902 = vld [vmem:[#allocation2 + $0x198] sm:$0x1]
    %v2903 = vld [vmem:[#allocation2 + $0x1b0] sm:$0xfe]
    %v2904 = vld [vmem:[#allocation2 + $0x1e0] sm:$0x1]
    %v2905 = vld [vmem:[#allocation2 + $0x1f8] sm:$0xfe]
    %v2906 = vld [vmem:[#allocation2 + $0x228] sm:$0x1]
    %v2907 = vld [vmem:[#allocation2 + $0x240] sm:$0xfe]
    %v2908 = vld [vmem:[#allocation2 + $0x270] sm:$0x1]
    %v2909 = vld [vmem:[#allocation2 + $0x288] sm:$0xfe]
    %v2910 = vld [vmem:[#allocation2 + $0x2b8] sm:$0x1]
    %v2911 = vld [vmem:[#allocation2 + $0x2d0] sm:$0xfe]
    %v2912 = vld [vmem:[#allocation2 + $0x300] sm:$0x1]
    %v2913 = vld [vmem:[#allocation2 + $0x318] sm:$0xfe]
    %v2914 = vld [vmem:[#allocation2 + $0x348] sm:$0x1]
    %v2915 = vld [vmem:[#allocation2 + $0x360] sm:$0xfe]
    %v2916 = vld [vmem:[#allocation2 + $0x390] sm:$0x1]
    %v2917 = vld [vmem:[#allocation2 + $0x3a8] sm:$0xfe]
    %v2918 = vld [vmem:[#allocation2 + $0x3d8] sm:$0x1]
    %v2919 = vld [vmem:[#allocation2 + $0x3f0] sm:$0xfe]
    %v2920 = vld [vmem:[#allocation2 + $0x420] sm:$0x1]
    %v2921 = vld [vmem:[#allocation2 + $0x438] sm:$0xfe]
    %v2922 = vld [vmem:[#allocation2 + $0x468] sm:$0x1]
    %v2923 = vld [vmem:[#allocation2 + $0x510] sm:$0xfe]
    %v2924 = vld [vmem:[#allocation2 + $0x540] sm:$0x1]
    %v2925 = vld [vmem:[#allocation2 + $0x558] sm:$0xfe]
    %v2926 = vld [vmem:[#allocation2 + $0x588] sm:$0x1]
    %v2927 = vld [vmem:[#allocation2 + $0x5a0] sm:$0xfe]
    %v2928 = vld [vmem:[#allocation2 + $0x5d0] sm:$0x1]
    %v2929 = vld [vmem:[#allocation2 + $0x5e8] sm:$0xfe]
    %v2930 = vld [vmem:[#allocation2 + $0x618] sm:$0x1]
    %v2931 = vld [vmem:[#allocation2 + $0x630] sm:$0xfe]
    %v2932 = vld [vmem:[#allocation2 + $0x660] sm:$0x1]
    %v2933 = vld [vmem:[#allocation2 + $0x678] sm:$0xfe]
    %v2934 = vld [vmem:[#allocation2 + $0x6a8] sm:$0x1]
    %v2935 = vld [vmem:[#allocation2 + $0x6c0] sm:$0xfe]
    %v2936 = vld [vmem:[#allocation2 + $0x6f0] sm:$0x1]
    %v2937 = vld [vmem:[#allocation2 + $0x708] sm:$0xfe]
    %v2938 = vld [vmem:[#allocation2 + $0x738] sm:$0x1]
    %v2939 = vld [vmem:[#allocation2 + $0x750] sm:$0xfe]
    %v2940 = vld [vmem:[#allocation2 + $0x780] sm:$0x1]
    %v2941 = vld [vmem:[#allocation2 + $0x798] sm:$0xfe]
    %v2942 = vld [vmem:[#allocation2 + $0x7c8] sm:$0x1]
    %v2943 = vld [vmem:[#allocation2 + $0x7e0] sm:$0xfe]
    %v2944 = vld [vmem:[#allocation2 + $0x810] sm:$0x1]
    %v2945 = vld [vmem:[#allocation2 + $0x828] sm:$0xfe]
    %v2946 = vld [vmem:[#allocation2 + $0x858] sm:$0x1]
    %v2947 = vld [vmem:[#allocation2 + $0x870] sm:$0xfe]
    %v2948 = vld [vmem:[#allocation2 + $0x8a0] sm:$0x1]
    %v2949 = vld [vmem:[#allocation2 + $0x8b8] sm:$0xfe]
    %v2950 = vld [vmem:[#allocation2 + $0x8e8] sm:$0x1]
    %v2951 = vld [vmem:[#allocation2 + $0x900] sm:$0xfe]
    %v2952 = vld [vmem:[#allocation2 + $0x930] sm:$0x1]
    %v2953 = vld [vmem:[#allocation2 + $0x948] sm:$0xfe]
    %v2954 = vld [vmem:[#allocation2 + $0x978] sm:$0x1]
    %v2955 = vld [vmem:[#allocation2] sm:$0xfc]
    %v2956 = vld [vmem:[#allocation2 + $0x30] sm:$0x3]
    %v2957 = vld [vmem:[#allocation2 + $0x48] sm:$0xfc]
    %v2958 = vld [vmem:[#allocation2 + $0x78] sm:$0x3]
    %v2959 = vld [vmem:[#allocation2 + $0x90] sm:$0xfc]
    %v2960 = vld [vmem:[#allocation2 + $0xc0] sm:$0x3]
    %v2961 = vld [vmem:[#allocation2 + $0xd8] sm:$0xfc]
    %v2962 = vld [vmem:[#allocation2 + $0x108] sm:$0x3]
    %v2963 = vld [vmem:[#allocation2 + $0x120] sm:$0xfc]
    %v2964 = vld [vmem:[#allocation2 + $0x150] sm:$0x3]
    %v2965 = vld [vmem:[#allocation2 + $0x168] sm:$0xfc]
    %v2966 = vld [vmem:[#allocation2 + $0x198] sm:$0x3]
    %v2967 = vld [vmem:[#allocation2 + $0x1b0] sm:$0xfc]
    %v2968 = vld [vmem:[#allocation2 + $0x1e0] sm:$0x3]
    %v2969 = vld [vmem:[#allocation2 + $0x1f8] sm:$0xfc]
    %v2970 = vld [vmem:[#allocation2 + $0x228] sm:$0x3]
    %v2971 = vld [vmem:[#allocation2 + $0x240] sm:$0xfc]
    %v2972 = vld [vmem:[#allocation2 + $0x270] sm:$0x3]
    %v2973 = vld [vmem:[#allocation2 + $0x288] sm:$0xfc]
    %v2974 = vld [vmem:[#allocation2 + $0x2b8] sm:$0x3]
    %v2975 = vld [vmem:[#allocation2 + $0x2d0] sm:$0xfc]
    %v2976 = vld [vmem:[#allocation2 + $0x300] sm:$0x3]
    %v2977 = vld [vmem:[#allocation2 + $0x318] sm:$0xfc]
    %v2978 = vld [vmem:[#allocation2 + $0x348] sm:$0x3]
    %v2979 = vld [vmem:[#allocation2 + $0x360] sm:$0xfc]
    %v2980 = vld [vmem:[#allocation2 + $0x390] sm:$0x3]
    %v2981 = vld [vmem:[#allocation2 + $0x3a8] sm:$0xfc]
    %v2982 = vld [vmem:[#allocation2 + $0x3d8] sm:$0x3]
    %v2983 = vld [vmem:[#allocation2 + $0x3f0] sm:$0xfc]
    %v2984 = vld [vmem:[#allocation2 + $0x420] sm:$0x3]
    %v2985 = vld [vmem:[#allocation2 + $0x438] sm:$0xfc]
    %v2986 = vld [vmem:[#allocation2 + $0x468] sm:$0x3]
    %v2987 = vld [vmem:[#allocation2 + $0x510] sm:$0xfc]
    %v2988 = vld [vmem:[#allocation2 + $0x540] sm:$0x3]
    %v2989 = vld [vmem:[#allocation2 + $0x558] sm:$0xfc]
    %v2990 = vld [vmem:[#allocation2 + $0x588] sm:$0x3]
    %v2991 = vld [vmem:[#allocation2 + $0x5a0] sm:$0xfc]
    %v2992 = vld [vmem:[#allocation2 + $0x5d0] sm:$0x3]
    %v2993 = vld [vmem:[#allocation2 + $0x5e8] sm:$0xfc]
    %v2994 = vld [vmem:[#allocation2 + $0x618] sm:$0x3]
    %v2995 = vld [vmem:[#allocation2 + $0x630] sm:$0xfc]
    %v2996 = vld [vmem:[#allocation2 + $0x660] sm:$0x3]
    %v2997 = vld [vmem:[#allocation2 + $0x678] sm:$0xfc]
    %v2998 = vld [vmem:[#allocation2 + $0x6a8] sm:$0x3]
    %v2999 = vld [vmem:[#allocation2 + $0x6c0] sm:$0xfc]
    %v3000 = vld [vmem:[#allocation2 + $0x6f0] sm:$0x3]
    %v3001 = vld [vmem:[#allocation2 + $0x708] sm:$0xfc]
    %v3002 = vld [vmem:[#allocation2 + $0x738] sm:$0x3]
    %v3003 = vld [vmem:[#allocation2 + $0x750] sm:$0xfc]
    %v3004 = vld [vmem:[#allocation2 + $0x780] sm:$0x3]
    %v3005 = vld [vmem:[#allocation2 + $0x798] sm:$0xfc]
    %v3006 = vld [vmem:[#allocation2 + $0x7c8] sm:$0x3]
    %v3007 = vld [vmem:[#allocation2 + $0x7e0] sm:$0xfc]
    %v3008 = vld [vmem:[#allocation2 + $0x810] sm:$0x3]
    %v3009 = vld [vmem:[#allocation2 + $0x828] sm:$0xfc]
    %v3010 = vld [vmem:[#allocation2 + $0x858] sm:$0x3]
    %v3011 = vld [vmem:[#allocation2 + $0x870] sm:$0xfc]
    %v3012 = vld [vmem:[#allocation2 + $0x8a0] sm:$0x3]
    %v3013 = vld [vmem:[#allocation2 + $0x8b8] sm:$0xfc]
    %v3014 = vld [vmem:[#allocation2 + $0x8e8] sm:$0x3]
    %v3015 = vld [vmem:[#allocation2 + $0x900] sm:$0xfc]
    %v3016 = vld [vmem:[#allocation2 + $0x930] sm:$0x3]
    %v3017 = vld [vmem:[#allocation2 + $0x948] sm:$0xfc]
    %v3018 = vld [vmem:[#allocation2 + $0x978] sm:$0x3]
    %v3019 = vld [vmem:[%s2536] sm:$0xff]
    %v3020 = vld [vmem:[%s2536 + $0x18] sm:$0xff]
    %v3021 = vld [vmem:[%s2536 + $0x48] sm:$0xff]
    %v3022 = vld [vmem:[%s2536 + $0x60] sm:$0xff]
    %v3023 = vld [vmem:[%s2536 + $0x90] sm:$0xff]
    %v3024 = vld [vmem:[%s2536 + $0xa8] sm:$0xff]
    %v3025 = vld [vmem:[%s2536 + $0xd8] sm:$0xff]
    %v3026 = vld [vmem:[%s2536 + $0xf0] sm:$0xff]
    %v3027 = vld [vmem:[%s2536 + $0x120] sm:$0xff]
    %v3028 = vld [vmem:[%s2536 + $0x138] sm:$0xff]
    %v3029 = vld [vmem:[%s2536 + $0x168] sm:$0xff]
    %v3030 = vld [vmem:[%s2536 + $0x180] sm:$0xff]
    %v3031 = vld [vmem:[%s2536 + $0x1b0] sm:$0xff]
    %v3032 = vld [vmem:[%s2536 + $0x1c8] sm:$0xff]
    %v3033 = vld [vmem:[%s2536 + $0x1f8] sm:$0xff]
    %v3034 = vld [vmem:[%s2536 + $0x210] sm:$0xff]
    %v3035 = vld [vmem:[%s2536 + $0x240] sm:$0xff]
    %v3036 = vld [vmem:[%s2536 + $0x258] sm:$0xff]
    %v3037 = vld [vmem:[%s2536 + $0x288] sm:$0xff]
    %v3038 = vld [vmem:[%s2536 + $0x2a0] sm:$0xff]
    %v3039 = vld [vmem:[%s2536 + $0x2d0] sm:$0xff]
    %v3040 = vld [vmem:[%s2536 + $0x2e8] sm:$0xff]
    %v3041 = vld [vmem:[%s2536 + $0x318] sm:$0xff]
    %v3042 = vld [vmem:[%s2536 + $0x330] sm:$0xff]
    %v3043 = vld [vmem:[%s2536 + $0x360] sm:$0xff]
    %v3044 = vld [vmem:[%s2536 + $0x378] sm:$0xff]
    %v3045 = vld [vmem:[%s2536 + $0x3a8] sm:$0xff]
    %v3046 = vld [vmem:[%s2536 + $0x3c0] sm:$0xff]
    %v3047 = vld [vmem:[%s2536 + $0x3f0] sm:$0xff]
    %v3048 = vld [vmem:[%s2536 + $0x408] sm:$0xff]
    %v3049 = vld [vmem:[%s2536 + $0x438] sm:$0xff]
    %v3050 = vld [vmem:[%s2536 + $0x450] sm:$0xff]
    %v3051 = vld [vmem:[%s2536 + $0x510] sm:$0xff]
    %v3052 = vld [vmem:[%s2536 + $0x528] sm:$0xff]
    %v3053 = vld [vmem:[%s2536 + $0x558] sm:$0xff]
    %v3054 = vld [vmem:[%s2536 + $0x570] sm:$0xff]
    %v3055 = vld [vmem:[%s2536 + $0x5a0] sm:$0xff]
    %v3056 = vld [vmem:[%s2536 + $0x5b8] sm:$0xff]
    %v3057 = vld [vmem:[%s2536 + $0x5e8] sm:$0xff]
    %v3058 = vld [vmem:[%s2536 + $0x600] sm:$0xff]
    %v3059 = vld [vmem:[%s2536 + $0x630] sm:$0xff]
    %v3060 = vld [vmem:[%s2536 + $0x648] sm:$0xff]
    %v3061 = vld [vmem:[%s2536 + $0x678] sm:$0xff]
    %v3062 = vld [vmem:[%s2536 + $0x690] sm:$0xff]
    %v3063 = vld [vmem:[%s2536 + $0x6c0] sm:$0xff]
    %v3064 = vld [vmem:[%s2536 + $0x6d8] sm:$0xff]
    %v3065 = vld [vmem:[%s2536 + $0x708] sm:$0xff]
    %v3066 = vld [vmem:[%s2536 + $0x720] sm:$0xff]
    %v3067 = vld [vmem:[%s2536 + $0x750] sm:$0xff]
    %v3068 = vld [vmem:[%s2536 + $0x768] sm:$0xff]
    %v3069 = vld [vmem:[%s2536 + $0x798] sm:$0xff]
    %v3070 = vld [vmem:[%s2536 + $0x7b0] sm:$0xff]
    %v3071 = vld [vmem:[%s2536 + $0x7e0] sm:$0xff]
    %v3072 = vld [vmem:[%s2536 + $0x7f8] sm:$0xff]
    %v3073 = vld [vmem:[%s2536 + $0x828] sm:$0xff]
    %v3074 = vld [vmem:[%s2536 + $0x840] sm:$0xff]
    %v3075 = vld [vmem:[%s2536 + $0x870] sm:$0xff]
    %v3076 = vld [vmem:[%s2536 + $0x888] sm:$0xff]
    %v3077 = vld [vmem:[%s2536 + $0x8b8] sm:$0xff]
    %v3078 = vld [vmem:[%s2536 + $0x8d0] sm:$0xff]
    %v3079 = vld [vmem:[%s2536 + $0x900] sm:$0xff]
    %v3080 = vld [vmem:[%s2536 + $0x918] sm:$0xff]
    %v3081 = vld [vmem:[%s2536 + $0x948] sm:$0xff]
    %v3082 = vld [vmem:[%s2536 + $0x960] sm:$0xff]
    %v3083 = vld [vmem:[%s2536 + $0x8] sm:$0xfe]
    %v3084 = vld [vmem:[%s2536 + $0x20] sm:$0xff]
    %v3085 = vld [vmem:[%s2536 + $0x38] sm:$0x1]
    %v3086 = vld [vmem:[%s2536 + $0x50] sm:$0xfe]
    %v3087 = vld [vmem:[%s2536 + $0x68] sm:$0xff]
    %v3088 = vld [vmem:[%s2536 + $0x80] sm:$0x1]
    %v3089 = vld [vmem:[%s2536 + $0x98] sm:$0xfe]
    %v3090 = vld [vmem:[%s2536 + $0xb0] sm:$0xff]
    %v3091 = vld [vmem:[%s2536 + $0xc8] sm:$0x1]
    %v3092 = vld [vmem:[%s2536 + $0xe0] sm:$0xfe]
    %v3093 = vld [vmem:[%s2536 + $0xf8] sm:$0xff]
    %v3094 = vld [vmem:[%s2536 + $0x110] sm:$0x1]
    %v3095 = vld [vmem:[%s2536 + $0x128] sm:$0xfe]
    %v3096 = vld [vmem:[%s2536 + $0x140] sm:$0xff]
    %v3097 = vld [vmem:[%s2536 + $0x158] sm:$0x1]
    %v3098 = vld [vmem:[%s2536 + $0x170] sm:$0xfe]
    %v3099 = vld [vmem:[%s2536 + $0x188] sm:$0xff]
    %v3100 = vld [vmem:[%s2536 + $0x1a0] sm:$0x1]
    %v3101 = vld [vmem:[%s2536 + $0x1b8] sm:$0xfe]
    %v3102 = vld [vmem:[%s2536 + $0x1d0] sm:$0xff]
    %v3103 = vld [vmem:[%s2536 + $0x1e8] sm:$0x1]
    %v3104 = vld [vmem:[%s2536 + $0x200] sm:$0xfe]
    %v3105 = vld [vmem:[%s2536 + $0x218] sm:$0xff]
    %v3106 = vld [vmem:[%s2536 + $0x230] sm:$0x1]
    %v3107 = vld [vmem:[%s2536 + $0x248] sm:$0xfe]
    %v3108 = vld [vmem:[%s2536 + $0x260] sm:$0xff]
    %v3109 = vld [vmem:[%s2536 + $0x278] sm:$0x1]
    %v3110 = vld [vmem:[%s2536 + $0x290] sm:$0xfe]
    %v3111 = vld [vmem:[%s2536 + $0x2a8] sm:$0xff]
    %v3112 = vld [vmem:[%s2536 + $0x2c0] sm:$0x1]
    %v3113 = vld [vmem:[%s2536 + $0x2d8] sm:$0xfe]
    %v3114 = vld [vmem:[%s2536 + $0x2f0] sm:$0xff]
    %v3115 = vld [vmem:[%s2536 + $0x308] sm:$0x1]
    %v3116 = vld [vmem:[%s2536 + $0x320] sm:$0xfe]
    %v3117 = vld [vmem:[%s2536 + $0x338] sm:$0xff]
    %v3118 = vld [vmem:[%s2536 + $0x350] sm:$0x1]
    %v3119 = vld [vmem:[%s2536 + $0x368] sm:$0xfe]
    %v3120 = vld [vmem:[%s2536 + $0x380] sm:$0xff]
    %v3121 = vld [vmem:[%s2536 + $0x398] sm:$0x1]
    %v3122 = vld [vmem:[%s2536 + $0x3b0] sm:$0xfe]
    %v3123 = vld [vmem:[%s2536 + $0x3c8] sm:$0xff]
    %v3124 = vld [vmem:[%s2536 + $0x3e0] sm:$0x1]
    %v3125 = vld [vmem:[%s2536 + $0x3f8] sm:$0xfe]
    %v3126 = vld [vmem:[%s2536 + $0x410] sm:$0xff]
    %v3127 = vld [vmem:[%s2536 + $0x428] sm:$0x1]
    %v3128 = vld [vmem:[%s2536 + $0x440] sm:$0xfe]
    %v3129 = vld [vmem:[%s2536 + $0x458] sm:$0xff]
    %v3130 = vld [vmem:[%s2536 + $0x470] sm:$0x1]
    %v3131 = vld [vmem:[%s2536 + $0x518] sm:$0xfe]
    %v3132 = vld [vmem:[%s2536 + $0x530] sm:$0xff]
    %v3133 = vld [vmem:[%s2536 + $0x548] sm:$0x1]
    %v3134 = vld [vmem:[%s2536 + $0x560] sm:$0xfe]
    %v3135 = vld [vmem:[%s2536 + $0x578] sm:$0xff]
    %v3136 = vld [vmem:[%s2536 + $0x590] sm:$0x1]
    %v3137 = vld [vmem:[%s2536 + $0x5a8] sm:$0xfe]
    %v3138 = vld [vmem:[%s2536 + $0x5c0] sm:$0xff]
    %v3139 = vld [vmem:[%s2536 + $0x5d8] sm:$0x1]
    %v3140 = vld [vmem:[%s2536 + $0x5f0] sm:$0xfe]
    %v3141 = vld [vmem:[%s2536 + $0x608] sm:$0xff]
    %v3142 = vld [vmem:[%s2536 + $0x620] sm:$0x1]
    %v3143 = vld [vmem:[%s2536 + $0x638] sm:$0xfe]
    %v3144 = vld [vmem:[%s2536 + $0x650] sm:$0xff]
    %v3145 = vld [vmem:[%s2536 + $0x668] sm:$0x1]
    %v3146 = vld [vmem:[%s2536 + $0x680] sm:$0xfe]
    %v3147 = vld [vmem:[%s2536 + $0x698] sm:$0xff]
    %v3148 = vld [vmem:[%s2536 + $0x6b0] sm:$0x1]
    %v3149 = vld [vmem:[%s2536 + $0x6c8] sm:$0xfe]
    %v3150 = vld [vmem:[%s2536 + $0x6e0] sm:$0xff]
    %v3151 = vld [vmem:[%s2536 + $0x6f8] sm:$0x1]
    %v3152 = vld [vmem:[%s2536 + $0x710] sm:$0xfe]
    %v3153 = vld [vmem:[%s2536 + $0x728] sm:$0xff]
    %v3154 = vld [vmem:[%s2536 + $0x740] sm:$0x1]
    %v3155 = vld [vmem:[%s2536 + $0x758] sm:$0xfe]
    %v3156 = vld [vmem:[%s2536 + $0x770] sm:$0xff]
    %v3157 = vld [vmem:[%s2536 + $0x788] sm:$0x1]
    %v3158 = vld [vmem:[%s2536 + $0x7a0] sm:$0xfe]
    %v3159 = vld [vmem:[%s2536 + $0x7b8] sm:$0xff]
    %v3160 = vld [vmem:[%s2536 + $0x7d0] sm:$0x1]
    %v3161 = vld [vmem:[%s2536 + $0x7e8] sm:$0xfe]
    %v3162 = vld [vmem:[%s2536 + $0x800] sm:$0xff]
    %v3163 = vld [vmem:[%s2536 + $0x818] sm:$0x1]
    %v3164 = vld [vmem:[%s2536 + $0x830] sm:$0xfe]
    %v3165 = vld [vmem:[%s2536 + $0x848] sm:$0xff]
    %v3166 = vld [vmem:[%s2536 + $0x860] sm:$0x1]
    %v3167 = vld [vmem:[%s2536 + $0x878] sm:$0xfe]
    %v3168 = vld [vmem:[%s2536 + $0x890] sm:$0xff]
    %v3169 = vld [vmem:[%s2536 + $0x8a8] sm:$0x1]
    %v3170 = vld [vmem:[%s2536 + $0x8c0] sm:$0xfe]
    %v3171 = vld [vmem:[%s2536 + $0x8d8] sm:$0xff]
    %v3172 = vld [vmem:[%s2536 + $0x8f0] sm:$0x1]
    %v3173 = vld [vmem:[%s2536 + $0x908] sm:$0xfe]
    %v3174 = vld [vmem:[%s2536 + $0x920] sm:$0xff]
    %v3175 = vld [vmem:[%s2536 + $0x938] sm:$0x1]
    %v3176 = vld [vmem:[%s2536 + $0x950] sm:$0xfe]
    %v3177 = vld [vmem:[%s2536 + $0x968] sm:$0xff]
    %v3178 = vld [vmem:[%s2536 + $0x980] sm:$0x1]
    %v3179 = vld [vmem:[%s2536 + $0x8] sm:$0xfc]
    %v3180 = vld [vmem:[%s2536 + $0x38] sm:$0x3]
    %v3181 = vld [vmem:[%s2536 + $0x50] sm:$0xfc]
    %v3182 = vld [vmem:[%s2536 + $0x80] sm:$0x3]
    %v3183 = vld [vmem:[%s2536 + $0x98] sm:$0xfc]
    %v3184 = vld [vmem:[%s2536 + $0xc8] sm:$0x3]
    %v3185 = vld [vmem:[%s2536 + $0xe0] sm:$0xfc]
    %v3186 = vld [vmem:[%s2536 + $0x110] sm:$0x3]
    %v3187 = vld [vmem:[%s2536 + $0x128] sm:$0xfc]
    %v3188 = vld [vmem:[%s2536 + $0x158] sm:$0x3]
    %v3189 = vld [vmem:[%s2536 + $0x170] sm:$0xfc]
    %v3190 = vld [vmem:[%s2536 + $0x1a0] sm:$0x3]
    %v3191 = vld [vmem:[%s2536 + $0x1b8] sm:$0xfc]
    %v3192 = vld [vmem:[%s2536 + $0x1e8] sm:$0x3]
    %v3193 = vld [vmem:[%s2536 + $0x200] sm:$0xfc]
    %v3194 = vld [vmem:[%s2536 + $0x230] sm:$0x3]
    %v3195 = vld [vmem:[%s2536 + $0x248] sm:$0xfc]
    %v3196 = vld [vmem:[%s2536 + $0x278] sm:$0x3]
    %v3197 = vld [vmem:[%s2536 + $0x290] sm:$0xfc]
    %v3198 = vld [vmem:[%s2536 + $0x2c0] sm:$0x3]
    %v3199 = vld [vmem:[%s2536 + $0x2d8] sm:$0xfc]
    %v3200 = vld [vmem:[%s2536 + $0x308] sm:$0x3]
    %v3201 = vld [vmem:[%s2536 + $0x320] sm:$0xfc]
    %v3202 = vld [vmem:[%s2536 + $0x350] sm:$0x3]
    %v3203 = vld [vmem:[%s2536 + $0x368] sm:$0xfc]
    %v3204 = vld [vmem:[%s2536 + $0x398] sm:$0x3]
    %v3205 = vld [vmem:[%s2536 + $0x3b0] sm:$0xfc]
    %v3206 = vld [vmem:[%s2536 + $0x3e0] sm:$0x3]
    %v3207 = vld [vmem:[%s2536 + $0x3f8] sm:$0xfc]
    %v3208 = vld [vmem:[%s2536 + $0x428] sm:$0x3]
    %v3209 = vld [vmem:[%s2536 + $0x440] sm:$0xfc]
    %v3210 = vld [vmem:[%s2536 + $0x470] sm:$0x3]
    %v3211 = vld [vmem:[%s2536 + $0x518] sm:$0xfc]
    %v3212 = vld [vmem:[%s2536 + $0x548] sm:$0x3]
    %v3213 = vld [vmem:[%s2536 + $0x560] sm:$0xfc]
    %v3214 = vld [vmem:[%s2536 + $0x590] sm:$0x3]
    %v3215 = vld [vmem:[%s2536 + $0x5a8] sm:$0xfc]
    %v3216 = vld [vmem:[%s2536 + $0x5d8] sm:$0x3]
    %v3217 = vld [vmem:[%s2536 + $0x5f0] sm:$0xfc]
    %v3218 = vld [vmem:[%s2536 + $0x620] sm:$0x3]
    %v3219 = vld [vmem:[%s2536 + $0x638] sm:$0xfc]
    %v3220 = vld [vmem:[%s2536 + $0x668] sm:$0x3]
    %v3221 = vld [vmem:[%s2536 + $0x680] sm:$0xfc]
    %v3222 = vld [vmem:[%s2536 + $0x6b0] sm:$0x3]
    %v3223 = vld [vmem:[%s2536 + $0x6c8] sm:$0xfc]
    %v3224 = vld [vmem:[%s2536 + $0x6f8] sm:$0x3]
    %v3225 = vld [vmem:[%s2536 + $0x710] sm:$0xfc]
    %v3226 = vld [vmem:[%s2536 + $0x740] sm:$0x3]
    %v3227 = vld [vmem:[%s2536 + $0x758] sm:$0xfc]
    %v3228 = vld [vmem:[%s2536 + $0x788] sm:$0x3]
    %v3229 = vld [vmem:[%s2536 + $0x7a0] sm:$0xfc]
    %v3230 = vld [vmem:[%s2536 + $0x7d0] sm:$0x3]
    %v3231 = vld [vmem:[%s2536 + $0x7e8] sm:$0xfc]
    %v3232 = vld [vmem:[%s2536 + $0x818] sm:$0x3]
    %v3233 = vld [vmem:[%s2536 + $0x830] sm:$0xfc]
    %v3234 = vld [vmem:[%s2536 + $0x860] sm:$0x3]
    %v3235 = vld [vmem:[%s2536 + $0x878] sm:$0xfc]
    %v3236 = vld [vmem:[%s2536 + $0x8a8] sm:$0x3]
    %v3237 = vld [vmem:[%s2536 + $0x8c0] sm:$0xfc]
    %v3238 = vld [vmem:[%s2536 + $0x8f0] sm:$0x3]
    %v3239 = vld [vmem:[%s2536 + $0x908] sm:$0xfc]
    %v3240 = vld [vmem:[%s2536 + $0x938] sm:$0x3]
    %v3241 = vld [vmem:[%s2536 + $0x950] sm:$0xfc]
    %v3242 = vld [vmem:[%s2536 + $0x980] sm:$0x3]
    %s3243 = scalar_lea.vmem [#allocation2], 144
    %v3244 = vld [vmem:[%s3243 + $0x8] sm:$0xff]
    %v3245 = vld [vmem:[%s3243 + $0x20] sm:$0xff]
    %v3246 = vld [vmem:[%s3243 + $0x50] sm:$0xff]
    %v3247 = vld [vmem:[%s3243 + $0x68] sm:$0xff]
    %v3248 = vld [vmem:[%s3243 + $0x98] sm:$0xff]
    %v3249 = vld [vmem:[%s3243 + $0xb0] sm:$0xff]
    %v3250 = vld [vmem:[%s3243 + $0xe0] sm:$0xff]
    %v3251 = vld [vmem:[%s3243 + $0xf8] sm:$0xff]
    %v3252 = vld [vmem:[%s3243 + $0x128] sm:$0xff]
    %v3253 = vld [vmem:[%s3243 + $0x140] sm:$0xff]
    %v3254 = vld [vmem:[%s3243 + $0x170] sm:$0xff]
    %v3255 = vld [vmem:[%s3243 + $0x188] sm:$0xff]
    %v3256 = vld [vmem:[%s3243 + $0x1b8] sm:$0xff]
    %v3257 = vld [vmem:[%s3243 + $0x1d0] sm:$0xff]
    %v3258 = vld [vmem:[%s3243 + $0x200] sm:$0xff]
    %v3259 = vld [vmem:[%s3243 + $0x218] sm:$0xff]
    %v3260 = vld [vmem:[%s3243 + $0x248] sm:$0xff]
    %v3261 = vld [vmem:[%s3243 + $0x260] sm:$0xff]
    %v3262 = vld [vmem:[%s3243 + $0x290] sm:$0xff]
    %v3263 = vld [vmem:[%s3243 + $0x2a8] sm:$0xff]
    %v3264 = vld [vmem:[%s3243 + $0x2d8] sm:$0xff]
    %v3265 = vld [vmem:[%s3243 + $0x2f0] sm:$0xff]
    %v3266 = vld [vmem:[%s3243 + $0x320] sm:$0xff]
    %v3267 = vld [vmem:[%s3243 + $0x338] sm:$0xff]
    %v3268 = vld [vmem:[%s3243 + $0x368] sm:$0xff]
    %v3269 = vld [vmem:[%s3243 + $0x380] sm:$0xff]
    %v3270 = vld [vmem:[%s3243 + $0x3b0] sm:$0xff]
    %v3271 = vld [vmem:[%s3243 + $0x3c8] sm:$0xff]
    %v3272 = vld [vmem:[%s3243 + $0x3f8] sm:$0xff]
    %v3273 = vld [vmem:[%s3243 + $0x410] sm:$0xff]
    %v3274 = vld [vmem:[%s3243 + $0x440] sm:$0xff]
    %v3275 = vld [vmem:[%s3243 + $0x458] sm:$0xff]
    %v3276 = vld [vmem:[%s3243 + $0x518] sm:$0xff]
    %v3277 = vld [vmem:[%s3243 + $0x530] sm:$0xff]
    %v3278 = vld [vmem:[%s3243 + $0x560] sm:$0xff]
    %v3279 = vld [vmem:[%s3243 + $0x578] sm:$0xff]
    %v3280 = vld [vmem:[%s3243 + $0x5a8] sm:$0xff]
    %v3281 = vld [vmem:[%s3243 + $0x5c0] sm:$0xff]
    %v3282 = vld [vmem:[%s3243 + $0x5f0] sm:$0xff]
    %v3283 = vld [vmem:[%s3243 + $0x608] sm:$0xff]
    %v3284 = vld [vmem:[%s3243 + $0x638] sm:$0xff]
    %v3285 = vld [vmem:[%s3243 + $0x650] sm:$0xff]
    %v3286 = vld [vmem:[%s3243 + $0x680] sm:$0xff]
    %v3287 = vld [vmem:[%s3243 + $0x698] sm:$0xff]
    %v3288 = vld [vmem:[%s3243 + $0x6c8] sm:$0xff]
    %v3289 = vld [vmem:[%s3243 + $0x6e0] sm:$0xff]
    %v3290 = vld [vmem:[%s3243 + $0x710] sm:$0xff]
    %v3291 = vld [vmem:[%s3243 + $0x728] sm:$0xff]
    %v3292 = vld [vmem:[%s3243 + $0x758] sm:$0xff]
    %v3293 = vld [vmem:[%s3243 + $0x770] sm:$0xff]
    %v3294 = vld [vmem:[%s3243 + $0x7a0] sm:$0xff]
    %v3295 = vld [vmem:[%s3243 + $0x7b8] sm:$0xff]
    %v3296 = vld [vmem:[%s3243 + $0x7e8] sm:$0xff]
    %v3297 = vld [vmem:[%s3243 + $0x800] sm:$0xff]
    %v3298 = vld [vmem:[%s3243 + $0x830] sm:$0xff]
    %v3299 = vld [vmem:[%s3243 + $0x848] sm:$0xff]
    %v3300 = vld [vmem:[%s3243 + $0x878] sm:$0xff]
    %v3301 = vld [vmem:[%s3243 + $0x890] sm:$0xff]
    %v3302 = vld [vmem:[%s3243 + $0x8c0] sm:$0xff]
    %v3303 = vld [vmem:[%s3243 + $0x8d8] sm:$0xff]
    %v3304 = vld [vmem:[%s3243 + $0x908] sm:$0xff]
    %v3305 = vld [vmem:[%s3243 + $0x920] sm:$0xff]
    %v3306 = vld [vmem:[%s3243 + $0x950] sm:$0xff]
    %v3307 = vld [vmem:[%s3243 + $0x968] sm:$0xff]
    %v3308 = vld [vmem:[%s3243 + $0x8] sm:$0xfe]
    %v3309 = vld [vmem:[%s3243 + $0x38] sm:$0x1]
    %v3310 = vld [vmem:[%s3243 + $0x50] sm:$0xfe]
    %v3311 = vld [vmem:[%s3243 + $0x80] sm:$0x1]
    %v3312 = vld [vmem:[%s3243 + $0x98] sm:$0xfe]
    %v3313 = vld [vmem:[%s3243 + $0xc8] sm:$0x1]
    %v3314 = vld [vmem:[%s3243 + $0xe0] sm:$0xfe]
    %v3315 = vld [vmem:[%s3243 + $0x110] sm:$0x1]
    %v3316 = vld [vmem:[%s3243 + $0x128] sm:$0xfe]
    %v3317 = vld [vmem:[%s3243 + $0x158] sm:$0x1]
    %v3318 = vld [vmem:[%s3243 + $0x170] sm:$0xfe]
    %v3319 = vld [vmem:[%s3243 + $0x1a0] sm:$0x1]
    %v3320 = vld [vmem:[%s3243 + $0x1b8] sm:$0xfe]
    %v3321 = vld [vmem:[%s3243 + $0x1e8] sm:$0x1]
    %v3322 = vld [vmem:[%s3243 + $0x200] sm:$0xfe]
    %v3323 = vld [vmem:[%s3243 + $0x230] sm:$0x1]
    %v3324 = vld [vmem:[%s3243 + $0x248] sm:$0xfe]
    %v3325 = vld [vmem:[%s3243 + $0x278] sm:$0x1]
    %v3326 = vld [vmem:[%s3243 + $0x290] sm:$0xfe]
    %v3327 = vld [vmem:[%s3243 + $0x2c0] sm:$0x1]
    %v3328 = vld [vmem:[%s3243 + $0x2d8] sm:$0xfe]
    %v3329 = vld [vmem:[%s3243 + $0x308] sm:$0x1]
    %v3330 = vld [vmem:[%s3243 + $0x320] sm:$0xfe]
    %v3331 = vld [vmem:[%s3243 + $0x350] sm:$0x1]
    %v3332 = vld [vmem:[%s3243 + $0x368] sm:$0xfe]
    %v3333 = vld [vmem:[%s3243 + $0x398] sm:$0x1]
    %v3334 = vld [vmem:[%s3243 + $0x3b0] sm:$0xfe]
    %v3335 = vld [vmem:[%s3243 + $0x3e0] sm:$0x1]
    %v3336 = vld [vmem:[%s3243 + $0x3f8] sm:$0xfe]
    %v3337 = vld [vmem:[%s3243 + $0x428] sm:$0x1]
    %v3338 = vld [vmem:[%s3243 + $0x440] sm:$0xfe]
    %v3339 = vld [vmem:[%s3243 + $0x470] sm:$0x1]
    %v3340 = vld [vmem:[%s3243 + $0x518] sm:$0xfe]
    %v3341 = vld [vmem:[%s3243 + $0x548] sm:$0x1]
    %v3342 = vld [vmem:[%s3243 + $0x560] sm:$0xfe]
    %v3343 = vld [vmem:[%s3243 + $0x590] sm:$0x1]
    %v3344 = vld [vmem:[%s3243 + $0x5a8] sm:$0xfe]
    %v3345 = vld [vmem:[%s3243 + $0x5d8] sm:$0x1]
    %v3346 = vld [vmem:[%s3243 + $0x5f0] sm:$0xfe]
    %v3347 = vld [vmem:[%s3243 + $0x620] sm:$0x1]
    %v3348 = vld [vmem:[%s3243 + $0x638] sm:$0xfe]
    %v3349 = vld [vmem:[%s3243 + $0x668] sm:$0x1]
    %v3350 = vld [vmem:[%s3243 + $0x680] sm:$0xfe]
    %v3351 = vld [vmem:[%s3243 + $0x6b0] sm:$0x1]
    %v3352 = vld [vmem:[%s3243 + $0x6c8] sm:$0xfe]
    %v3353 = vld [vmem:[%s3243 + $0x6f8] sm:$0x1]
    %v3354 = vld [vmem:[%s3243 + $0x710] sm:$0xfe]
    %v3355 = vld [vmem:[%s3243 + $0x740] sm:$0x1]
    %v3356 = vld [vmem:[%s3243 + $0x758] sm:$0xfe]
    %v3357 = vld [vmem:[%s3243 + $0x788] sm:$0x1]
    %v3358 = vld [vmem:[%s3243 + $0x7a0] sm:$0xfe]
    %v3359 = vld [vmem:[%s3243 + $0x7d0] sm:$0x1]
    %v3360 = vld [vmem:[%s3243 + $0x7e8] sm:$0xfe]
    %v3361 = vld [vmem:[%s3243 + $0x818] sm:$0x1]
    %v3362 = vld [vmem:[%s3243 + $0x830] sm:$0xfe]
    %v3363 = vld [vmem:[%s3243 + $0x860] sm:$0x1]
    %v3364 = vld [vmem:[%s3243 + $0x878] sm:$0xfe]
    %v3365 = vld [vmem:[%s3243 + $0x8a8] sm:$0x1]
    %v3366 = vld [vmem:[%s3243 + $0x8c0] sm:$0xfe]
    %v3367 = vld [vmem:[%s3243 + $0x8f0] sm:$0x1]
    %v3368 = vld [vmem:[%s3243 + $0x908] sm:$0xfe]
    %v3369 = vld [vmem:[%s3243 + $0x938] sm:$0x1]
    %v3370 = vld [vmem:[%s3243 + $0x950] sm:$0xfe]
    %v3371 = vld [vmem:[%s3243 + $0x980] sm:$0x1]
    %v3372 = vld [vmem:[%s3243 + $0x10] sm:$0xfc]
    %v3373 = vld [vmem:[%s3243 + $0x28] sm:$0xff]
    %v3374 = vld [vmem:[%s3243 + $0x40] sm:$0x3]
    %v3375 = vld [vmem:[%s3243 + $0x58] sm:$0xfc]
    %v3376 = vld [vmem:[%s3243 + $0x70] sm:$0xff]
    %v3377 = vld [vmem:[%s3243 + $0x88] sm:$0x3]
    %v3378 = vld [vmem:[%s3243 + $0xa0] sm:$0xfc]
    %v3379 = vld [vmem:[%s3243 + $0xb8] sm:$0xff]
    %v3380 = vld [vmem:[%s3243 + $0xd0] sm:$0x3]
    %v3381 = vld [vmem:[%s3243 + $0xe8] sm:$0xfc]
    %v3382 = vld [vmem:[%s3243 + $0x100] sm:$0xff]
    %v3383 = vld [vmem:[%s3243 + $0x118] sm:$0x3]
    %v3384 = vld [vmem:[%s3243 + $0x130] sm:$0xfc]
    %v3385 = vld [vmem:[%s3243 + $0x148] sm:$0xff]
    %v3386 = vld [vmem:[%s3243 + $0x160] sm:$0x3]
    %v3387 = vld [vmem:[%s3243 + $0x178] sm:$0xfc]
    %v3388 = vld [vmem:[%s3243 + $0x190] sm:$0xff]
    %v3389 = vld [vmem:[%s3243 + $0x1a8] sm:$0x3]
    %v3390 = vld [vmem:[%s3243 + $0x1c0] sm:$0xfc]
    %v3391 = vld [vmem:[%s3243 + $0x1d8] sm:$0xff]
    %v3392 = vld [vmem:[%s3243 + $0x1f0] sm:$0x3]
    %v3393 = vld [vmem:[%s3243 + $0x208] sm:$0xfc]
    %v3394 = vld [vmem:[%s3243 + $0x220] sm:$0xff]
    %v3395 = vld [vmem:[%s3243 + $0x238] sm:$0x3]
    %v3396 = vld [vmem:[%s3243 + $0x250] sm:$0xfc]
    %v3397 = vld [vmem:[%s3243 + $0x268] sm:$0xff]
    %v3398 = vld [vmem:[%s3243 + $0x280] sm:$0x3]
    %v3399 = vld [vmem:[%s3243 + $0x298] sm:$0xfc]
    %v3400 = vld [vmem:[%s3243 + $0x2b0] sm:$0xff]
    %v3401 = vld [vmem:[%s3243 + $0x2c8] sm:$0x3]
    %v3402 = vld [vmem:[%s3243 + $0x2e0] sm:$0xfc]
    %v3403 = vld [vmem:[%s3243 + $0x2f8] sm:$0xff]
    %v3404 = vld [vmem:[%s3243 + $0x310] sm:$0x3]
    %v3405 = vld [vmem:[%s3243 + $0x328] sm:$0xfc]
    %v3406 = vld [vmem:[%s3243 + $0x340] sm:$0xff]
    %v3407 = vld [vmem:[%s3243 + $0x358] sm:$0x3]
    %v3408 = vld [vmem:[%s3243 + $0x370] sm:$0xfc]
    %v3409 = vld [vmem:[%s3243 + $0x388] sm:$0xff]
    %v3410 = vld [vmem:[%s3243 + $0x3a0] sm:$0x3]
    %v3411 = vld [vmem:[%s3243 + $0x3b8] sm:$0xfc]
    %v3412 = vld [vmem:[%s3243 + $0x3d0] sm:$0xff]
    %v3413 = vld [vmem:[%s3243 + $0x3e8] sm:$0x3]
    %v3414 = vld [vmem:[%s3243 + $0x400] sm:$0xfc]
    %v3415 = vld [vmem:[%s3243 + $0x418] sm:$0xff]
    %v3416 = vld [vmem:[%s3243 + $0x430] sm:$0x3]
    %v3417 = vld [vmem:[%s3243 + $0x448] sm:$0xfc]
    %v3418 = vld [vmem:[%s3243 + $0x460] sm:$0xff]
    %v3419 = vld [vmem:[%s3243 + $0x478] sm:$0x3]
    %v3420 = vld [vmem:[%s3243 + $0x520] sm:$0xfc]
    %v3421 = vld [vmem:[%s3243 + $0x538] sm:$0xff]
    %v3422 = vld [vmem:[%s3243 + $0x550] sm:$0x3]
    %v3423 = vld [vmem:[%s3243 + $0x568] sm:$0xfc]
    %v3424 = vld [vmem:[%s3243 + $0x580] sm:$0xff]
    %v3425 = vld [vmem:[%s3243 + $0x598] sm:$0x3]
    %v3426 = vld [vmem:[%s3243 + $0x5b0] sm:$0xfc]
    %v3427 = vld [vmem:[%s3243 + $0x5c8] sm:$0xff]
    %v3428 = vld [vmem:[%s3243 + $0x5e0] sm:$0x3]
    %v3429 = vld [vmem:[%s3243 + $0x5f8] sm:$0xfc]
    %v3430 = vld [vmem:[%s3243 + $0x610] sm:$0xff]
    %v3431 = vld [vmem:[%s3243 + $0x628] sm:$0x3]
    %v3432 = vld [vmem:[%s3243 + $0x640] sm:$0xfc]
    %v3433 = vld [vmem:[%s3243 + $0x658] sm:$0xff]
    %v3434 = vld [vmem:[%s3243 + $0x670] sm:$0x3]
    %v3435 = vld [vmem:[%s3243 + $0x688] sm:$0xfc]
    %v3436 = vld [vmem:[%s3243 + $0x6a0] sm:$0xff]
    %v3437 = vld [vmem:[%s3243 + $0x6b8] sm:$0x3]
    %v3438 = vld [vmem:[%s3243 + $0x6d0] sm:$0xfc]
    %v3439 = vld [vmem:[%s3243 + $0x6e8] sm:$0xff]
    %v3440 = vld [vmem:[%s3243 + $0x700] sm:$0x3]
    %v3441 = vld [vmem:[%s3243 + $0x718] sm:$0xfc]
    %v3442 = vld [vmem:[%s3243 + $0x730] sm:$0xff]
    %v3443 = vld [vmem:[%s3243 + $0x748] sm:$0x3]
    %v3444 = vld [vmem:[%s3243 + $0x760] sm:$0xfc]
    %v3445 = vld [vmem:[%s3243 + $0x778] sm:$0xff]
    %v3446 = vld [vmem:[%s3243 + $0x790] sm:$0x3]
    %v3447 = vld [vmem:[%s3243 + $0x7a8] sm:$0xfc]
    %v3448 = vld [vmem:[%s3243 + $0x7c0] sm:$0xff]
    %v3449 = vld [vmem:[%s3243 + $0x7d8] sm:$0x3]
    %v3450 = vld [vmem:[%s3243 + $0x7f0] sm:$0xfc]
    %v3451 = vld [vmem:[%s3243 + $0x808] sm:$0xff]
    %v3452 = vld [vmem:[%s3243 + $0x820] sm:$0x3]
    %v3453 = vld [vmem:[%s3243 + $0x838] sm:$0xfc]
    %v3454 = vld [vmem:[%s3243 + $0x850] sm:$0xff]
    %v3455 = vld [vmem:[%s3243 + $0x868] sm:$0x3]
    %v3456 = vld [vmem:[%s3243 + $0x880] sm:$0xfc]
    %v3457 = vld [vmem:[%s3243 + $0x898] sm:$0xff]
    %v3458 = vld [vmem:[%s3243 + $0x8b0] sm:$0x3]
    %v3459 = vld [vmem:[%s3243 + $0x8c8] sm:$0xfc]
    %v3460 = vld [vmem:[%s3243 + $0x8e0] sm:$0xff]
    %v3461 = vld [vmem:[%s3243 + $0x8f8] sm:$0x3]
    %v3462 = vld [vmem:[%s3243 + $0x910] sm:$0xfc]
    %v3463 = vld [vmem:[%s3243 + $0x928] sm:$0xff]
    %v3464 = vld [vmem:[%s3243 + $0x940] sm:$0x3]
    %v3465 = vld [vmem:[%s3243 + $0x958] sm:$0xfc]
    %v3466 = vld [vmem:[%s3243 + $0x970] sm:$0xff]
    %v3467 = vld [vmem:[%s3243 + $0x988] sm:$0x3]
    %vm3564 = vcmask 1046528
    %v3565 = vrot.slane %v2891, 1
    %v3566 = vrot.slane %v2828, 1
    %v3567 = vsel %vm3564, %v3565, %v3566
    %v3568 = vrot.slane %v2892, 1
    %v3569 = vsel %vm3564, %v3566, %v3568
    %v3570 = vrot.slane %v2893, 1
    %v3571 = vrot.slane %v2830, 1
    %v3572 = vsel %vm3564, %v3570, %v3571
    %v3573 = vrot.slane %v2894, 1
    %v3574 = vsel %vm3564, %v3571, %v3573
    %v3575 = vrot.slane %v2895, 1
    %v3576 = vrot.slane %v2832, 1
    %v3577 = vsel %vm3564, %v3575, %v3576
    %v3578 = vrot.slane %v2896, 1
    %v3579 = vsel %vm3564, %v3576, %v3578
    %v3580 = vrot.slane %v2897, 1
    %v3581 = vrot.slane %v2834, 1
    %v3582 = vsel %vm3564, %v3580, %v3581
    %v3583 = vrot.slane %v2898, 1
    %v3584 = vsel %vm3564, %v3581, %v3583
    %v3585 = vrot.slane %v2899, 1
    %v3586 = vrot.slane %v2836, 1
    %v3587 = vsel %vm3564, %v3585, %v3586
    %v3588 = vrot.slane %v2900, 1
    %v3589 = vsel %vm3564, %v3586, %v3588
    %v3590 = vrot.slane %v2901, 1
    %v3591 = vrot.slane %v2838, 1
    %v3592 = vsel %vm3564, %v3590, %v3591
    %v3593 = vrot.slane %v2902, 1
    %v3594 = vsel %vm3564, %v3591, %v3593
    %v3595 = vrot.slane %v2903, 1
    %v3596 = vrot.slane %v2840, 1
    %v3597 = vsel %vm3564, %v3595, %v3596
    %v3598 = vrot.slane %v2904, 1
    %v3599 = vsel %vm3564, %v3596, %v3598
    %v3600 = vrot.slane %v2905, 1
    %v3601 = vrot.slane %v2842, 1
    %v3602 = vsel %vm3564, %v3600, %v3601
    %v3603 = vrot.slane %v2906, 1
    %v3604 = vsel %vm3564, %v3601, %v3603
    %v3605 = vrot.slane %v2907, 1
    %v3606 = vrot.slane %v2844, 1
    %v3607 = vsel %vm3564, %v3605, %v3606
    %v3608 = vrot.slane %v2908, 1
    %v3609 = vsel %vm3564, %v3606, %v3608
    %v3610 = vrot.slane %v2909, 1
    %v3611 = vrot.slane %v2846, 1
    %v3612 = vsel %vm3564, %v3610, %v3611
    %v3613 = vrot.slane %v2910, 1
    %v3614 = vsel %vm3564, %v3611, %v3613
    %v3615 = vrot.slane %v2911, 1
    %v3616 = vrot.slane %v2848, 1
    %v3617 = vsel %vm3564, %v3615, %v3616
    %v3618 = vrot.slane %v2912, 1
    %v3619 = vsel %vm3564, %v3616, %v3618
    %v3620 = vrot.slane %v2913, 1
    %v3621 = vrot.slane %v2850, 1
    %v3622 = vsel %vm3564, %v3620, %v3621
    %v3623 = vrot.slane %v2914, 1
    %v3624 = vsel %vm3564, %v3621, %v3623
    %v3625 = vrot.slane %v2915, 1
    %v3626 = vrot.slane %v2852, 1
    %v3627 = vsel %vm3564, %v3625, %v3626
    %v3628 = vrot.slane %v2916, 1
    %v3629 = vsel %vm3564, %v3626, %v3628
    %v3630 = vrot.slane %v2917, 1
    %v3631 = vrot.slane %v2854, 1
    %v3632 = vsel %vm3564, %v3630, %v3631
    %v3633 = vrot.slane %v2918, 1
    %v3634 = vsel %vm3564, %v3631, %v3633
    %v3635 = vrot.slane %v2919, 1
    %v3636 = vrot.slane %v2856, 1
    %v3637 = vsel %vm3564, %v3635, %v3636
    %v3638 = vrot.slane %v2920, 1
    %v3639 = vsel %vm3564, %v3636, %v3638
    %v3640 = vrot.slane %v2921, 1
    %v3641 = vrot.slane %v2858, 1
    %v3642 = vsel %vm3564, %v3640, %v3641
    %v3643 = vrot.slane %v2922, 1
    %v3644 = vsel %vm3564, %v3641, %v3643
    %v3645 = vrot.slane %v2923, 1
    %v3646 = vrot.slane %v2860, 1
    %v3647 = vsel %vm3564, %v3645, %v3646
    %v3648 = vrot.slane %v2924, 1
    %v3649 = vsel %vm3564, %v3646, %v3648
    %v3650 = vrot.slane %v2925, 1
    %v3651 = vrot.slane %v2862, 1
    %v3652 = vsel %vm3564, %v3650, %v3651
    %v3653 = vrot.slane %v2926, 1
    %v3654 = vsel %vm3564, %v3651, %v3653
    %v3655 = vrot.slane %v2927, 1
    %v3656 = vrot.slane %v2864, 1
    %v3657 = vsel %vm3564, %v3655, %v3656
    %v3658 = vrot.slane %v2928, 1
    %v3659 = vsel %vm3564, %v3656, %v3658
    %v3660 = vrot.slane %v2929, 1
    %v3661 = vrot.slane %v2866, 1
    %v3662 = vsel %vm3564, %v3660, %v3661
    %v3663 = vrot.slane %v2930, 1
    %v3664 = vsel %vm3564, %v3661, %v3663
    %v3665 = vrot.slane %v2931, 1
    %v3666 = vrot.slane %v2868, 1
    %v3667 = vsel %vm3564, %v3665, %v3666
    %v3668 = vrot.slane %v2932, 1
    %v3669 = vsel %vm3564, %v3666, %v3668
    %v3670 = vrot.slane %v2933, 1
    %v3671 = vrot.slane %v2870, 1
    %v3672 = vsel %vm3564, %v3670, %v3671
    %v3673 = vrot.slane %v2934, 1
    %v3674 = vsel %vm3564, %v3671, %v3673
    %v3675 = vrot.slane %v2935, 1
    %v3676 = vrot.slane %v2872, 1
    %v3677 = vsel %vm3564, %v3675, %v3676
    %v3678 = vrot.slane %v2936, 1
    %v3679 = vsel %vm3564, %v3676, %v3678
    %v3680 = vrot.slane %v2937, 1
    %v3681 = vrot.slane %v2874, 1
    %v3682 = vsel %vm3564, %v3680, %v3681
    %v3683 = vrot.slane %v2938, 1
    %v3684 = vsel %vm3564, %v3681, %v3683
    %v3685 = vrot.slane %v2939, 1
    %v3686 = vrot.slane %v2876, 1
    %v3687 = vsel %vm3564, %v3685, %v3686
    %v3688 = vrot.slane %v2940, 1
    %v3689 = vsel %vm3564, %v3686, %v3688
    %v3690 = vrot.slane %v2941, 1
    %v3691 = vrot.slane %v2878, 1
    %v3692 = vsel %vm3564, %v3690, %v3691
    %v3693 = vrot.slane %v2942, 1
    %v3694 = vsel %vm3564, %v3691, %v3693
    %v3695 = vrot.slane %v2943, 1
    %v3696 = vrot.slane %v2880, 1
    %v3697 = vsel %vm3564, %v3695, %v3696
    %v3698 = vrot.slane %v2944, 1
    %v3699 = vsel %vm3564, %v3696, %v3698
    %v3700 = vrot.slane %v2945, 1
    %v3701 = vrot.slane %v2882, 1
    %v3702 = vsel %vm3564, %v3700, %v3701
    %v3703 = vrot.slane %v2946, 1
    %v3704 = vsel %vm3564, %v3701, %v3703
    %v3705 = vrot.slane %v2947, 1
    %v3706 = vrot.slane %v2884, 1
    %v3707 = vsel %vm3564, %v3705, %v3706
    %v3708 = vrot.slane %v2948, 1
    %v3709 = vsel %vm3564, %v3706, %v3708
    %v3710 = vrot.slane %v2949, 1
    %v3711 = vrot.slane %v2886, 1
    %v3712 = vsel %vm3564, %v3710, %v3711
    %v3713 = vrot.slane %v2950, 1
    %v3714 = vsel %vm3564, %v3711, %v3713
    %v3715 = vrot.slane %v2951, 1
    %v3716 = vrot.slane %v2888, 1
    %v3717 = vsel %vm3564, %v3715, %v3716
    %v3718 = vrot.slane %v2952, 1
    %v3719 = vsel %vm3564, %v3716, %v3718
    %v3720 = vrot.slane %v2953, 1
    %v3721 = vrot.slane %v2890, 1
    %v3722 = vsel %vm3564, %v3720, %v3721
    %v3723 = vrot.slane %v2954, 1
    %v3724 = vsel %vm3564, %v3721, %v3723
    %3725 = vrot.lane.b32.xlu0 %v3567, 96
    %v3726 = vpop.permute.xlu0 %3725
    %3727 = vrot.lane.b32.xlu0 %v3569, 96
    %v3728 = vpop.permute.xlu0 %3727
    %3729 = vrot.lane.b32.xlu0 %v3572, 96
    %v3730 = vpop.permute.xlu0 %3729
    %3731 = vrot.lane.b32.xlu0 %v3574, 96
    %v3732 = vpop.permute.xlu0 %3731
    %3733 = vrot.lane.b32.xlu0 %v3577, 96
    %v3734 = vpop.permute.xlu0 %3733
    %3735 = vrot.lane.b32.xlu0 %v3579, 96
    %v3736 = vpop.permute.xlu0 %3735
    %3737 = vrot.lane.b32.xlu0 %v3582, 96
    %v3738 = vpop.permute.xlu0 %3737
    %3739 = vrot.lane.b32.xlu0 %v3584, 96
    %v3740 = vpop.permute.xlu0 %3739
    %3741 = vrot.lane.b32.xlu0 %v3587, 96
    %v3742 = vpop.permute.xlu0 %3741
    %3743 = vrot.lane.b32.xlu0 %v3589, 96
    %v3744 = vpop.permute.xlu0 %3743
    %3745 = vrot.lane.b32.xlu0 %v3592, 96
    %v3746 = vpop.permute.xlu0 %3745
    %3747 = vrot.lane.b32.xlu0 %v3594, 96
    %v3748 = vpop.permute.xlu0 %3747
    %3749 = vrot.lane.b32.xlu0 %v3597, 96
    %v3750 = vpop.permute.xlu0 %3749
    %3751 = vrot.lane.b32.xlu0 %v3599, 96
    %v3752 = vpop.permute.xlu0 %3751
    %3753 = vrot.lane.b32.xlu0 %v3602, 96
    %v3754 = vpop.permute.xlu0 %3753
    %3755 = vrot.lane.b32.xlu0 %v3604, 96
    %v3756 = vpop.permute.xlu0 %3755
    %3757 = vrot.lane.b32.xlu0 %v3607, 96
    %v3758 = vpop.permute.xlu0 %3757
    %3759 = vrot.lane.b32.xlu0 %v3609, 96
    %v3760 = vpop.permute.xlu0 %3759
    %3761 = vrot.lane.b32.xlu0 %v3612, 96
    %v3762 = vpop.permute.xlu0 %3761
    %3763 = vrot.lane.b32.xlu0 %v3614, 96
    %v3764 = vpop.permute.xlu0 %3763
    %3765 = vrot.lane.b32.xlu0 %v3617, 96
    %v3766 = vpop.permute.xlu0 %3765
    %3767 = vrot.lane.b32.xlu0 %v3619, 96
    %v3768 = vpop.permute.xlu0 %3767
    %3769 = vrot.lane.b32.xlu0 %v3622, 96
    %v3770 = vpop.permute.xlu0 %3769
    %3771 = vrot.lane.b32.xlu0 %v3624, 96
    %v3772 = vpop.permute.xlu0 %3771
    %3773 = vrot.lane.b32.xlu0 %v3627, 96
    %v3774 = vpop.permute.xlu0 %3773
    %3775 = vrot.lane.b32.xlu0 %v3629, 96
    %v3776 = vpop.permute.xlu0 %3775
    %3777 = vrot.lane.b32.xlu0 %v3632, 96
    %v3778 = vpop.permute.xlu0 %3777
    %3779 = vrot.lane.b32.xlu0 %v3634, 96
    %v3780 = vpop.permute.xlu0 %3779
    %3781 = vrot.lane.b32.xlu0 %v3637, 96
    %v3782 = vpop.permute.xlu0 %3781
    %3783 = vrot.lane.b32.xlu0 %v3639, 96
    %v3784 = vpop.permute.xlu0 %3783
    %3785 = vrot.lane.b32.xlu0 %v3642, 96
    %v3786 = vpop.permute.xlu0 %3785
    %3787 = vrot.lane.b32.xlu0 %v3644, 96
    %v3788 = vpop.permute.xlu0 %3787
    %3789 = vrot.lane.b32.xlu0 %v3647, 96
    %v3790 = vpop.permute.xlu0 %3789
    %3791 = vrot.lane.b32.xlu0 %v3649, 96
    %v3792 = vpop.permute.xlu0 %3791
    %3793 = vrot.lane.b32.xlu0 %v3652, 96
    %v3794 = vpop.permute.xlu0 %3793
    %3795 = vrot.lane.b32.xlu0 %v3654, 96
    %v3796 = vpop.permute.xlu0 %3795
    %3797 = vrot.lane.b32.xlu0 %v3657, 96
    %v3798 = vpop.permute.xlu0 %3797
    %3799 = vrot.lane.b32.xlu0 %v3659, 96
    %v3800 = vpop.permute.xlu0 %3799
    %3801 = vrot.lane.b32.xlu0 %v3662, 96
    %v3802 = vpop.permute.xlu0 %3801
    %3803 = vrot.lane.b32.xlu0 %v3664, 96
    %v3804 = vpop.permute.xlu0 %3803
    %3805 = vrot.lane.b32.xlu0 %v3667, 96
    %v3806 = vpop.permute.xlu0 %3805
    %3807 = vrot.lane.b32.xlu0 %v3669, 96
    %v3808 = vpop.permute.xlu0 %3807
    %3809 = vrot.lane.b32.xlu0 %v3672, 96
    %v3810 = vpop.permute.xlu0 %3809
    %3811 = vrot.lane.b32.xlu0 %v3674, 96
    %v3812 = vpop.permute.xlu0 %3811
    %3813 = vrot.lane.b32.xlu0 %v3677, 96
    %v3814 = vpop.permute.xlu0 %3813
    %3815 = vrot.lane.b32.xlu0 %v3679, 96
    %v3816 = vpop.permute.xlu0 %3815
    %3817 = vrot.lane.b32.xlu0 %v3682, 96
    %v3818 = vpop.permute.xlu0 %3817
    %3819 = vrot.lane.b32.xlu0 %v3684, 96
    %v3820 = vpop.permute.xlu0 %3819
    %3821 = vrot.lane.b32.xlu0 %v3687, 96
    %v3822 = vpop.permute.xlu0 %3821
    %3823 = vrot.lane.b32.xlu0 %v3689, 96
    %v3824 = vpop.permute.xlu0 %3823
    %3825 = vrot.lane.b32.xlu0 %v3692, 96
    %v3826 = vpop.permute.xlu0 %3825
    %3827 = vrot.lane.b32.xlu0 %v3694, 96
    %v3828 = vpop.permute.xlu0 %3827
    %3829 = vrot.lane.b32.xlu0 %v3697, 96
    %v3830 = vpop.permute.xlu0 %3829
    %3831 = vrot.lane.b32.xlu0 %v3699, 96
    %v3832 = vpop.permute.xlu0 %3831
    %3833 = vrot.lane.b32.xlu0 %v3702, 96
    %v3834 = vpop.permute.xlu0 %3833
    %3835 = vrot.lane.b32.xlu0 %v3704, 96
    %v3836 = vpop.permute.xlu0 %3835
    %3837 = vrot.lane.b32.xlu0 %v3707, 96
    %v3838 = vpop.permute.xlu0 %3837
    %3839 = vrot.lane.b32.xlu0 %v3709, 96
    %v3840 = vpop.permute.xlu0 %3839
    %3841 = vrot.lane.b32.xlu0 %v3712, 96
    %v3842 = vpop.permute.xlu0 %3841
    %3843 = vrot.lane.b32.xlu0 %v3714, 96
    %v3844 = vpop.permute.xlu0 %3843
    %3845 = vrot.lane.b32.xlu0 %v3717, 96
    %v3846 = vpop.permute.xlu0 %3845
    %3847 = vrot.lane.b32.xlu0 %v3719, 96
    %v3848 = vpop.permute.xlu0 %3847
    %3849 = vrot.lane.b32.xlu0 %v3722, 96
    %v3850 = vpop.permute.xlu0 %3849
    %3851 = vrot.lane.b32.xlu0 %v3724, 96
    %v3852 = vpop.permute.xlu0 %3851
    %v3917 = vadd.f32 %v2827, %v3726
    %v3918 = vadd.f32 %v2828, %v3728
    %v3919 = vadd.f32 %v2829, %v3730
    %v3920 = vadd.f32 %v2830, %v3732
    %v3921 = vadd.f32 %v2831, %v3734
    %v3922 = vadd.f32 %v2832, %v3736
    %v3923 = vadd.f32 %v2833, %v3738
    %v3924 = vadd.f32 %v2834, %v3740
    %v3925 = vadd.f32 %v2835, %v3742
    %v3926 = vadd.f32 %v2836, %v3744
    %v3927 = vadd.f32 %v2837, %v3746
    %v3928 = vadd.f32 %v2838, %v3748
    %v3929 = vadd.f32 %v2839, %v3750
    %v3930 = vadd.f32 %v2840, %v3752
    %v3931 = vadd.f32 %v2841, %v3754
    %v3932 = vadd.f32 %v2842, %v3756
    %v3933 = vadd.f32 %v2843, %v3758
    %v3934 = vadd.f32 %v2844, %v3760
    %v3935 = vadd.f32 %v2845, %v3762
    %v3936 = vadd.f32 %v2846, %v3764
    %v3937 = vadd.f32 %v2847, %v3766
    %v3938 = vadd.f32 %v2848, %v3768
    %v3939 = vadd.f32 %v2849, %v3770
    %v3940 = vadd.f32 %v2850, %v3772
    %v3941 = vadd.f32 %v2851, %v3774
    %v3942 = vadd.f32 %v2852, %v3776
    %v3943 = vadd.f32 %v2853, %v3778
    %v3944 = vadd.f32 %v2854, %v3780
    %v3945 = vadd.f32 %v2855, %v3782
    %v3946 = vadd.f32 %v2856, %v3784
    %v3947 = vadd.f32 %v2857, %v3786
    %v3948 = vadd.f32 %v2858, %v3788
    %v3949 = vadd.f32 %v2859, %v3790
    %v3950 = vadd.f32 %v2860, %v3792
    %v3951 = vadd.f32 %v2861, %v3794
    %v3952 = vadd.f32 %v2862, %v3796
    %v3953 = vadd.f32 %v2863, %v3798
    %v3954 = vadd.f32 %v2864, %v3800
    %v3955 = vadd.f32 %v2865, %v3802
    %v3956 = vadd.f32 %v2866, %v3804
    %v3957 = vadd.f32 %v2867, %v3806
    %v3958 = vadd.f32 %v2868, %v3808
    %v3959 = vadd.f32 %v2869, %v3810
    %v3960 = vadd.f32 %v2870, %v3812
    %v3961 = vadd.f32 %v2871, %v3814
    %v3962 = vadd.f32 %v2872, %v3816
    %v3963 = vadd.f32 %v2873, %v3818
    %v3964 = vadd.f32 %v2874, %v3820
    %v3965 = vadd.f32 %v2875, %v3822
    %v3966 = vadd.f32 %v2876, %v3824
    %v3967 = vadd.f32 %v2877, %v3826
    %v3968 = vadd.f32 %v2878, %v3828
    %v3969 = vadd.f32 %v2879, %v3830
    %v3970 = vadd.f32 %v2880, %v3832
    %v3971 = vadd.f32 %v2881, %v3834
    %v3972 = vadd.f32 %v2882, %v3836
    %v3973 = vadd.f32 %v2883, %v3838
    %v3974 = vadd.f32 %v2884, %v3840
    %v3975 = vadd.f32 %v2885, %v3842
    %v3976 = vadd.f32 %v2886, %v3844
    %v3977 = vadd.f32 %v2887, %v3846
    %v3978 = vadd.f32 %v2888, %v3848
    %v3979 = vadd.f32 %v2889, %v3850
    %v3980 = vadd.f32 %v2890, %v3852
    %vm4045 = vcmask 1041408
    %v4046 = vrot.slane %v3019, 6
    %v4047 = vrot.slane %v3020, 6
    %v4048 = vsel %vm4045, %v4046, %v4047
    %v4049 = vrot.slane %v3021, 6
    %v4050 = vrot.slane %v3022, 6
    %v4051 = vsel %vm4045, %v4049, %v4050
    %v4052 = vrot.slane %v3023, 6
    %v4053 = vrot.slane %v3024, 6
    %v4054 = vsel %vm4045, %v4052, %v4053
    %v4055 = vrot.slane %v3025, 6
    %v4056 = vrot.slane %v3026, 6
    %v4057 = vsel %vm4045, %v4055, %v4056
    %v4058 = vrot.slane %v3027, 6
    %v4059 = vrot.slane %v3028, 6
    %v4060 = vsel %vm4045, %v4058, %v4059
    %v4061 = vrot.slane %v3029, 6
    %v4062 = vrot.slane %v3030, 6
    %v4063 = vsel %vm4045, %v4061, %v4062
    %v4064 = vrot.slane %v3031, 6
    %v4065 = vrot.slane %v3032, 6
    %v4066 = vsel %vm4045, %v4064, %v4065
    %v4067 = vrot.slane %v3033, 6
    %v4068 = vrot.slane %v3034, 6
    %v4069 = vsel %vm4045, %v4067, %v4068
    %v4070 = vrot.slane %v3035, 6
    %v4071 = vrot.slane %v3036, 6
    %v4072 = vsel %vm4045, %v4070, %v4071
    %v4073 = vrot.slane %v3037, 6
    %v4074 = vrot.slane %v3038, 6
    %v4075 = vsel %vm4045, %v4073, %v4074
    %v4076 = vrot.slane %v3039, 6
    %v4077 = vrot.slane %v3040, 6
    %v4078 = vsel %vm4045, %v4076, %v4077
    %v4079 = vrot.slane %v3041, 6
    %v4080 = vrot.slane %v3042, 6
    %v4081 = vsel %vm4045, %v4079, %v4080
    %v4082 = vrot.slane %v3043, 6
    %v4083 = vrot.slane %v3044, 6
    %v4084 = vsel %vm4045, %v4082, %v4083
    %v4085 = vrot.slane %v3045, 6
    %v4086 = vrot.slane %v3046, 6
    %v4087 = vsel %vm4045, %v4085, %v4086
    %v4088 = vrot.slane %v3047, 6
    %v4089 = vrot.slane %v3048, 6
    %v4090 = vsel %vm4045, %v4088, %v4089
    %v4091 = vrot.slane %v3049, 6
    %v4092 = vrot.slane %v3050, 6
    %v4093 = vsel %vm4045, %v4091, %v4092
    %v4094 = vrot.slane %v3051, 6
    %v4095 = vrot.slane %v3052, 6
    %v4096 = vsel %vm4045, %v4094, %v4095
    %v4097 = vrot.slane %v3053, 6
    %v4098 = vrot.slane %v3054, 6
    %v4099 = vsel %vm4045, %v4097, %v4098
    %v4100 = vrot.slane %v3055, 6
    %v4101 = vrot.slane %v3056, 6
    %v4102 = vsel %vm4045, %v4100, %v4101
    %v4103 = vrot.slane %v3057, 6
    %v4104 = vrot.slane %v3058, 6
    %v4105 = vsel %vm4045, %v4103, %v4104
    %v4106 = vrot.slane %v3059, 6
    %v4107 = vrot.slane %v3060, 6
    %v4108 = vsel %vm4045, %v4106, %v4107
    %v4109 = vrot.slane %v3061, 6
    %v4110 = vrot.slane %v3062, 6
    %v4111 = vsel %vm4045, %v4109, %v4110
    %v4112 = vrot.slane %v3063, 6
    %v4113 = vrot.slane %v3064, 6
    %v4114 = vsel %vm4045, %v4112, %v4113
    %v4115 = vrot.slane %v3065, 6
    %v4116 = vrot.slane %v3066, 6
    %v4117 = vsel %vm4045, %v4115, %v4116
    %v4118 = vrot.slane %v3067, 6
    %v4119 = vrot.slane %v3068, 6
    %v4120 = vsel %vm4045, %v4118, %v4119
    %v4121 = vrot.slane %v3069, 6
    %v4122 = vrot.slane %v3070, 6
    %v4123 = vsel %vm4045, %v4121, %v4122
    %v4124 = vrot.slane %v3071, 6
    %v4125 = vrot.slane %v3072, 6
    %v4126 = vsel %vm4045, %v4124, %v4125
    %v4127 = vrot.slane %v3073, 6
    %v4128 = vrot.slane %v3074, 6
    %v4129 = vsel %vm4045, %v4127, %v4128
    %v4130 = vrot.slane %v3075, 6
    %v4131 = vrot.slane %v3076, 6
    %v4132 = vsel %vm4045, %v4130, %v4131
    %v4133 = vrot.slane %v3077, 6
    %v4134 = vrot.slane %v3078, 6
    %v4135 = vsel %vm4045, %v4133, %v4134
    %v4136 = vrot.slane %v3079, 6
    %v4137 = vrot.slane %v3080, 6
    %v4138 = vsel %vm4045, %v4136, %v4137
    %v4139 = vrot.slane %v3081, 6
    %v4140 = vrot.slane %v3082, 6
    %v4141 = vsel %vm4045, %v4139, %v4140
    %4142 = vrot.lane.b32.xlu0 %v4046, 96
    %v4143 = vpop.permute.xlu0 %4142
    %4144 = vrot.lane.b32.xlu0 %v4048, 96
    %v4145 = vpop.permute.xlu0 %4144
    %4146 = vrot.lane.b32.xlu0 %v4047, 96
    %v4147 = vpop.permute.xlu0 %4146
    %4148 = vrot.lane.b32.xlu0 %v4049, 96
    %v4149 = vpop.permute.xlu0 %4148
    %4150 = vrot.lane.b32.xlu0 %v4051, 96
    %v4151 = vpop.permute.xlu0 %4150
    %4152 = vrot.lane.b32.xlu0 %v4050, 96
    %v4153 = vpop.permute.xlu0 %4152
    %4154 = vrot.lane.b32.xlu0 %v4052, 96
    %v4155 = vpop.permute.xlu0 %4154
    %4156 = vrot.lane.b32.xlu0 %v4054, 96
    %v4157 = vpop.permute.xlu0 %4156
    %4158 = vrot.lane.b32.xlu0 %v4053, 96
    %v4159 = vpop.permute.xlu0 %4158
    %4160 = vrot.lane.b32.xlu0 %v4055, 96
    %v4161 = vpop.permute.xlu0 %4160
    %4162 = vrot.lane.b32.xlu0 %v4057, 96
    %v4163 = vpop.permute.xlu0 %4162
    %4164 = vrot.lane.b32.xlu0 %v4056, 96
    %v4165 = vpop.permute.xlu0 %4164
    %4166 = vrot.lane.b32.xlu0 %v4058, 96
    %v4167 = vpop.permute.xlu0 %4166
    %4168 = vrot.lane.b32.xlu0 %v4060, 96
    %v4169 = vpop.permute.xlu0 %4168
    %4170 = vrot.lane.b32.xlu0 %v4059, 96
    %v4171 = vpop.permute.xlu0 %4170
    %4172 = vrot.lane.b32.xlu0 %v4061, 96
    %v4173 = vpop.permute.xlu0 %4172
    %4174 = vrot.lane.b32.xlu0 %v4063, 96
    %v4175 = vpop.permute.xlu0 %4174
    %4176 = vrot.lane.b32.xlu0 %v4062, 96
    %v4177 = vpop.permute.xlu0 %4176
    %4178 = vrot.lane.b32.xlu0 %v4064, 96
    %v4179 = vpop.permute.xlu0 %4178
    %4180 = vrot.lane.b32.xlu0 %v4066, 96
    %v4181 = vpop.permute.xlu0 %4180
    %4182 = vrot.lane.b32.xlu0 %v4065, 96
    %v4183 = vpop.permute.xlu0 %4182
    %4184 = vrot.lane.b32.xlu0 %v4067, 96
    %v4185 = vpop.permute.xlu0 %4184
    %4186 = vrot.lane.b32.xlu0 %v4069, 96
    %v4187 = vpop.permute.xlu0 %4186
    %4188 = vrot.lane.b32.xlu0 %v4068, 96
    %v4189 = vpop.permute.xlu0 %4188
    %4190 = vrot.lane.b32.xlu0 %v4070, 96
    %v4191 = vpop.permute.xlu0 %4190
    %4192 = vrot.lane.b32.xlu0 %v4072, 96
    %v4193 = vpop.permute.xlu0 %4192
    %4194 = vrot.lane.b32.xlu0 %v4071, 96
    %v4195 = vpop.permute.xlu0 %4194
    %4196 = vrot.lane.b32.xlu0 %v4073, 96
    %v4197 = vpop.permute.xlu0 %4196
    %4198 = vrot.lane.b32.xlu0 %v4075, 96
    %v4199 = vpop.permute.xlu0 %4198
    %4200 = vrot.lane.b32.xlu0 %v4074, 96
    %v4201 = vpop.permute.xlu0 %4200
    %4202 = vrot.lane.b32.xlu0 %v4076, 96
    %v4203 = vpop.permute.xlu0 %4202
    %4204 = vrot.lane.b32.xlu0 %v4078, 96
    %v4205 = vpop.permute.xlu0 %4204
    %4206 = vrot.lane.b32.xlu0 %v4077, 96
    %v4207 = vpop.permute.xlu0 %4206
    %4208 = vrot.lane.b32.xlu0 %v4079, 96
    %v4209 = vpop.permute.xlu0 %4208
    %4210 = vrot.lane.b32.xlu0 %v4081, 96
    %v4211 = vpop.permute.xlu0 %4210
    %4212 = vrot.lane.b32.xlu0 %v4080, 96
    %v4213 = vpop.permute.xlu0 %4212
    %4214 = vrot.lane.b32.xlu0 %v4082, 96
    %v4215 = vpop.permute.xlu0 %4214
    %4216 = vrot.lane.b32.xlu0 %v4084, 96
    %v4217 = vpop.permute.xlu0 %4216
    %4218 = vrot.lane.b32.xlu0 %v4083, 96
    %v4219 = vpop.permute.xlu0 %4218
    %4220 = vrot.lane.b32.xlu0 %v4085, 96
    %v4221 = vpop.permute.xlu0 %4220
    %4222 = vrot.lane.b32.xlu0 %v4087, 96
    %v4223 = vpop.permute.xlu0 %4222
    %4224 = vrot.lane.b32.xlu0 %v4086, 96
    %v4225 = vpop.permute.xlu0 %4224
    %4226 = vrot.lane.b32.xlu0 %v4088, 96
    %v4227 = vpop.permute.xlu0 %4226
    %4228 = vrot.lane.b32.xlu0 %v4090, 96
    %v4229 = vpop.permute.xlu0 %4228
    %4230 = vrot.lane.b32.xlu0 %v4089, 96
    %v4231 = vpop.permute.xlu0 %4230
    %4232 = vrot.lane.b32.xlu0 %v4091, 96
    %v4233 = vpop.permute.xlu0 %4232
    %4234 = vrot.lane.b32.xlu0 %v4093, 96
    %v4235 = vpop.permute.xlu0 %4234
    %4236 = vrot.lane.b32.xlu0 %v4092, 96
    %v4237 = vpop.permute.xlu0 %4236
    %4238 = vrot.lane.b32.xlu0 %v4094, 96
    %v4239 = vpop.permute.xlu0 %4238
    %4240 = vrot.lane.b32.xlu0 %v4096, 96
    %v4241 = vpop.permute.xlu0 %4240
    %4242 = vrot.lane.b32.xlu0 %v4095, 96
    %v4243 = vpop.permute.xlu0 %4242
    %4244 = vrot.lane.b32.xlu0 %v4097, 96
    %v4245 = vpop.permute.xlu0 %4244
    %4246 = vrot.lane.b32.xlu0 %v4099, 96
    %v4247 = vpop.permute.xlu0 %4246
    %4248 = vrot.lane.b32.xlu0 %v4098, 96
    %v4249 = vpop.permute.xlu0 %4248
    %4250 = vrot.lane.b32.xlu0 %v4100, 96
    %v4251 = vpop.permute.xlu0 %4250
    %4252 = vrot.lane.b32.xlu0 %v4102, 96
    %v4253 = vpop.permute.xlu0 %4252
    %4254 = vrot.lane.b32.xlu0 %v4101, 96
    %v4255 = vpop.permute.xlu0 %4254
    %4256 = vrot.lane.b32.xlu0 %v4103, 96
    %v4257 = vpop.permute.xlu0 %4256
    %4258 = vrot.lane.b32.xlu0 %v4105, 96
    %v4259 = vpop.permute.xlu0 %4258
    %4260 = vrot.lane.b32.xlu0 %v4104, 96
    %v4261 = vpop.permute.xlu0 %4260
    %4262 = vrot.lane.b32.xlu0 %v4106, 96
    %v4263 = vpop.permute.xlu0 %4262
    %4264 = vrot.lane.b32.xlu0 %v4108, 96
    %v4265 = vpop.permute.xlu0 %4264
    %4266 = vrot.lane.b32.xlu0 %v4107, 96
    %v4267 = vpop.permute.xlu0 %4266
    %4268 = vrot.lane.b32.xlu0 %v4109, 96
    %v4269 = vpop.permute.xlu0 %4268
    %4270 = vrot.lane.b32.xlu0 %v4111, 96
    %v4271 = vpop.permute.xlu0 %4270
    %4272 = vrot.lane.b32.xlu0 %v4110, 96
    %v4273 = vpop.permute.xlu0 %4272
    %4274 = vrot.lane.b32.xlu0 %v4112, 96
    %v4275 = vpop.permute.xlu0 %4274
    %4276 = vrot.lane.b32.xlu0 %v4114, 96
    %v4277 = vpop.permute.xlu0 %4276
    %4278 = vrot.lane.b32.xlu0 %v4113, 96
    %v4279 = vpop.permute.xlu0 %4278
    %4280 = vrot.lane.b32.xlu0 %v4115, 96
    %v4281 = vpop.permute.xlu0 %4280
    %4282 = vrot.lane.b32.xlu0 %v4117, 96
    %v4283 = vpop.permute.xlu0 %4282
    %4284 = vrot.lane.b32.xlu0 %v4116, 96
    %v4285 = vpop.permute.xlu0 %4284
    %4286 = vrot.lane.b32.xlu0 %v4118, 96
    %v4287 = vpop.permute.xlu0 %4286
    %4288 = vrot.lane.b32.xlu0 %v4120, 96
    %v4289 = vpop.permute.xlu0 %4288
    %4290 = vrot.lane.b32.xlu0 %v4119, 96
    %v4291 = vpop.permute.xlu0 %4290
    %4292 = vrot.lane.b32.xlu0 %v4121, 96
    %v4293 = vpop.permute.xlu0 %4292
    %4294 = vrot.lane.b32.xlu0 %v4123, 96
    %v4295 = vpop.permute.xlu0 %4294
    %4296 = vrot.lane.b32.xlu0 %v4122, 96
    %v4297 = vpop.permute.xlu0 %4296
    %4298 = vrot.lane.b32.xlu0 %v4124, 96
    %v4299 = vpop.permute.xlu0 %4298
    %4300 = vrot.lane.b32.xlu0 %v4126, 96
    %v4301 = vpop.permute.xlu0 %4300
    %4302 = vrot.lane.b32.xlu0 %v4125, 96
    %v4303 = vpop.permute.xlu0 %4302
    %4304 = vrot.lane.b32.xlu0 %v4127, 96
    %v4305 = vpop.permute.xlu0 %4304
    %4306 = vrot.lane.b32.xlu0 %v4129, 96
    %v4307 = vpop.permute.xlu0 %4306
    %4308 = vrot.lane.b32.xlu0 %v4128, 96
    %v4309 = vpop.permute.xlu0 %4308
    %4310 = vrot.lane.b32.xlu0 %v4130, 96
    %v4311 = vpop.permute.xlu0 %4310
    %4312 = vrot.lane.b32.xlu0 %v4132, 96
    %v4313 = vpop.permute.xlu0 %4312
    %4314 = vrot.lane.b32.xlu0 %v4131, 96
    %v4315 = vpop.permute.xlu0 %4314
    %4316 = vrot.lane.b32.xlu0 %v4133, 96
    %v4317 = vpop.permute.xlu0 %4316
    %4318 = vrot.lane.b32.xlu0 %v4135, 96
    %v4319 = vpop.permute.xlu0 %4318
    %4320 = vrot.lane.b32.xlu0 %v4134, 96
    %v4321 = vpop.permute.xlu0 %4320
    %4322 = vrot.lane.b32.xlu0 %v4136, 96
    %v4323 = vpop.permute.xlu0 %4322
    %4324 = vrot.lane.b32.xlu0 %v4138, 96
    %v4325 = vpop.permute.xlu0 %4324
    %4326 = vrot.lane.b32.xlu0 %v4137, 96
    %v4327 = vpop.permute.xlu0 %4326
    %4328 = vrot.lane.b32.xlu0 %v4139, 96
    %v4329 = vpop.permute.xlu0 %4328
    %4330 = vrot.lane.b32.xlu0 %v4141, 96
    %v4331 = vpop.permute.xlu0 %4330
    %4332 = vrot.lane.b32.xlu0 %v4140, 96
    %v4333 = vpop.permute.xlu0 %4332
    %v4430 = vadd.f32 %v2955, %v4143
    %v4431 = vadd.f32 %v2828, %v4145
    %v4432 = vadd.f32 %v2956, %v4147
    %v4433 = vadd.f32 %v2957, %v4149
    %v4434 = vadd.f32 %v2830, %v4151
    %v4435 = vadd.f32 %v2958, %v4153
    %v4436 = vadd.f32 %v2959, %v4155
    %v4437 = vadd.f32 %v2832, %v4157
    %v4438 = vadd.f32 %v2960, %v4159
    %v4439 = vadd.f32 %v2961, %v4161
    %v4440 = vadd.f32 %v2834, %v4163
    %v4441 = vadd.f32 %v2962, %v4165
    %v4442 = vadd.f32 %v2963, %v4167
    %v4443 = vadd.f32 %v2836, %v4169
    %v4444 = vadd.f32 %v2964, %v4171
    %v4445 = vadd.f32 %v2965, %v4173
    %v4446 = vadd.f32 %v2838, %v4175
    %v4447 = vadd.f32 %v2966, %v4177
    %v4448 = vadd.f32 %v2967, %v4179
    %v4449 = vadd.f32 %v2840, %v4181
    %v4450 = vadd.f32 %v2968, %v4183
    %v4451 = vadd.f32 %v2969, %v4185
    %v4452 = vadd.f32 %v2842, %v4187
    %v4453 = vadd.f32 %v2970, %v4189
    %v4454 = vadd.f32 %v2971, %v4191
    %v4455 = vadd.f32 %v2844, %v4193
    %v4456 = vadd.f32 %v2972, %v4195
    %v4457 = vadd.f32 %v2973, %v4197
    %v4458 = vadd.f32 %v2846, %v4199
    %v4459 = vadd.f32 %v2974, %v4201
    %v4460 = vadd.f32 %v2975, %v4203
    %v4461 = vadd.f32 %v2848, %v4205
    %v4462 = vadd.f32 %v2976, %v4207
    %v4463 = vadd.f32 %v2977, %v4209
    %v4464 = vadd.f32 %v2850, %v4211
    %v4465 = vadd.f32 %v2978, %v4213
    %v4466 = vadd.f32 %v2979, %v4215
    %v4467 = vadd.f32 %v2852, %v4217
    %v4468 = vadd.f32 %v2980, %v4219
    %v4469 = vadd.f32 %v2981, %v4221
    %v4470 = vadd.f32 %v2854, %v4223
    %v4471 = vadd.f32 %v2982, %v4225
    %v4472 = vadd.f32 %v2983, %v4227
    %v4473 = vadd.f32 %v2856, %v4229
    %v4474 = vadd.f32 %v2984, %v4231
    %v4475 = vadd.f32 %v2985, %v4233
    %v4476 = vadd.f32 %v2858, %v4235
    %v4477 = vadd.f32 %v2986, %v4237
    %v4478 = vadd.f32 %v2987, %v4239
    %v4479 = vadd.f32 %v2860, %v4241
    %v4480 = vadd.f32 %v2988, %v4243
    %v4481 = vadd.f32 %v2989, %v4245
    %v4482 = vadd.f32 %v2862, %v4247
    %v4483 = vadd.f32 %v2990, %v4249
    %v4484 = vadd.f32 %v2991, %v4251
    %v4485 = vadd.f32 %v2864, %v4253
    %v4486 = vadd.f32 %v2992, %v4255
    %v4487 = vadd.f32 %v2993, %v4257
    %v4488 = vadd.f32 %v2866, %v4259
    %v4489 = vadd.f32 %v2994, %v4261
    %v4490 = vadd.f32 %v2995, %v4263
    %v4491 = vadd.f32 %v2868, %v4265
    %v4492 = vadd.f32 %v2996, %v4267
    %v4493 = vadd.f32 %v2997, %v4269
    %v4494 = vadd.f32 %v2870, %v4271
    %v4495 = vadd.f32 %v2998, %v4273
    %v4496 = vadd.f32 %v2999, %v4275
    %v4497 = vadd.f32 %v2872, %v4277
    %v4498 = vadd.f32 %v3000, %v4279
    %v4499 = vadd.f32 %v3001, %v4281
    %v4500 = vadd.f32 %v2874, %v4283
    %v4501 = vadd.f32 %v3002, %v4285
    %v4502 = vadd.f32 %v3003, %v4287
    %v4503 = vadd.f32 %v2876, %v4289
    %v4504 = vadd.f32 %v3004, %v4291
    %v4505 = vadd.f32 %v3005, %v4293
    %v4506 = vadd.f32 %v2878, %v4295
    %v4507 = vadd.f32 %v3006, %v4297
    %v4508 = vadd.f32 %v3007, %v4299
    %v4509 = vadd.f32 %v2880, %v4301
    %v4510 = vadd.f32 %v3008, %v4303
    %v4511 = vadd.f32 %v3009, %v4305
    %v4512 = vadd.f32 %v2882, %v4307
    %v4513 = vadd.f32 %v3010, %v4309
    %v4514 = vadd.f32 %v3011, %v4311
    %v4515 = vadd.f32 %v2884, %v4313
    %v4516 = vadd.f32 %v3012, %v4315
    %v4517 = vadd.f32 %v3013, %v4317
    %v4518 = vadd.f32 %v2886, %v4319
    %v4519 = vadd.f32 %v3014, %v4321
    %v4520 = vadd.f32 %v3015, %v4323
    %v4521 = vadd.f32 %v2888, %v4325
    %v4522 = vadd.f32 %v3016, %v4327
    %v4523 = vadd.f32 %v3017, %v4329
    %v4524 = vadd.f32 %v2890, %v4331
    %v4525 = vadd.f32 %v3018, %v4333
    %v4622 = vrot.slane %v3179, 1
    %v4623 = vrot.slane %v3084, 1
    %v4624 = vsel %vm3564, %v4622, %v4623
    %v4625 = vrot.slane %v3180, 1
    %v4626 = vsel %vm3564, %v4623, %v4625
    %v4627 = vrot.slane %v3181, 1
    %v4628 = vrot.slane %v3087, 1
    %v4629 = vsel %vm3564, %v4627, %v4628
    %v4630 = vrot.slane %v3182, 1
    %v4631 = vsel %vm3564, %v4628, %v4630
    %v4632 = vrot.slane %v3183, 1
    %v4633 = vrot.slane %v3090, 1
    %v4634 = vsel %vm3564, %v4632, %v4633
    %v4635 = vrot.slane %v3184, 1
    %v4636 = vsel %vm3564, %v4633, %v4635
    %v4637 = vrot.slane %v3185, 1
    %v4638 = vrot.slane %v3093, 1
    %v4639 = vsel %vm3564, %v4637, %v4638
    %v4640 = vrot.slane %v3186, 1
    %v4641 = vsel %vm3564, %v4638, %v4640
    %v4642 = vrot.slane %v3187, 1
    %v4643 = vrot.slane %v3096, 1
    %v4644 = vsel %vm3564, %v4642, %v4643
    %v4645 = vrot.slane %v3188, 1
    %v4646 = vsel %vm3564, %v4643, %v4645
    %v4647 = vrot.slane %v3189, 1
    %v4648 = vrot.slane %v3099, 1
    %v4649 = vsel %vm3564, %v4647, %v4648
    %v4650 = vrot.slane %v3190, 1
    %v4651 = vsel %vm3564, %v4648, %v4650
    %v4652 = vrot.slane %v3191, 1
    %v4653 = vrot.slane %v3102, 1
    %v4654 = vsel %vm3564, %v4652, %v4653
    %v4655 = vrot.slane %v3192, 1
    %v4656 = vsel %vm3564, %v4653, %v4655
    %v4657 = vrot.slane %v3193, 1
    %v4658 = vrot.slane %v3105, 1
    %v4659 = vsel %vm3564, %v4657, %v4658
    %v4660 = vrot.slane %v3194, 1
    %v4661 = vsel %vm3564, %v4658, %v4660
    %v4662 = vrot.slane %v3195, 1
    %v4663 = vrot.slane %v3108, 1
    %v4664 = vsel %vm3564, %v4662, %v4663
    %v4665 = vrot.slane %v3196, 1
    %v4666 = vsel %vm3564, %v4663, %v4665
    %v4667 = vrot.slane %v3197, 1
    %v4668 = vrot.slane %v3111, 1
    %v4669 = vsel %vm3564, %v4667, %v4668
    %v4670 = vrot.slane %v3198, 1
    %v4671 = vsel %vm3564, %v4668, %v4670
    %v4672 = vrot.slane %v3199, 1
    %v4673 = vrot.slane %v3114, 1
    %v4674 = vsel %vm3564, %v4672, %v4673
    %v4675 = vrot.slane %v3200, 1
    %v4676 = vsel %vm3564, %v4673, %v4675
    %v4677 = vrot.slane %v3201, 1
    %v4678 = vrot.slane %v3117, 1
    %v4679 = vsel %vm3564, %v4677, %v4678
    %v4680 = vrot.slane %v3202, 1
    %v4681 = vsel %vm3564, %v4678, %v4680
    %v4682 = vrot.slane %v3203, 1
    %v4683 = vrot.slane %v3120, 1
    %v4684 = vsel %vm3564, %v4682, %v4683
    %v4685 = vrot.slane %v3204, 1
    %v4686 = vsel %vm3564, %v4683, %v4685
    %v4687 = vrot.slane %v3205, 1
    %v4688 = vrot.slane %v3123, 1
    %v4689 = vsel %vm3564, %v4687, %v4688
    %v4690 = vrot.slane %v3206, 1
    %v4691 = vsel %vm3564, %v4688, %v4690
    %v4692 = vrot.slane %v3207, 1
    %v4693 = vrot.slane %v3126, 1
    %v4694 = vsel %vm3564, %v4692, %v4693
    %v4695 = vrot.slane %v3208, 1
    %v4696 = vsel %vm3564, %v4693, %v4695
    %v4697 = vrot.slane %v3209, 1
    %v4698 = vrot.slane %v3129, 1
    %v4699 = vsel %vm3564, %v4697, %v4698
    %v4700 = vrot.slane %v3210, 1
    %v4701 = vsel %vm3564, %v4698, %v4700
    %v4702 = vrot.slane %v3211, 1
    %v4703 = vrot.slane %v3132, 1
    %v4704 = vsel %vm3564, %v4702, %v4703
    %v4705 = vrot.slane %v3212, 1
    %v4706 = vsel %vm3564, %v4703, %v4705
    %v4707 = vrot.slane %v3213, 1
    %v4708 = vrot.slane %v3135, 1
    %v4709 = vsel %vm3564, %v4707, %v4708
    %v4710 = vrot.slane %v3214, 1
    %v4711 = vsel %vm3564, %v4708, %v4710
    %v4712 = vrot.slane %v3215, 1
    %v4713 = vrot.slane %v3138, 1
    %v4714 = vsel %vm3564, %v4712, %v4713
    %v4715 = vrot.slane %v3216, 1
    %v4716 = vsel %vm3564, %v4713, %v4715
    %v4717 = vrot.slane %v3217, 1
    %v4718 = vrot.slane %v3141, 1
    %v4719 = vsel %vm3564, %v4717, %v4718
    %v4720 = vrot.slane %v3218, 1
    %v4721 = vsel %vm3564, %v4718, %v4720
    %v4722 = vrot.slane %v3219, 1
    %v4723 = vrot.slane %v3144, 1
    %v4724 = vsel %vm3564, %v4722, %v4723
    %v4725 = vrot.slane %v3220, 1
    %v4726 = vsel %vm3564, %v4723, %v4725
    %v4727 = vrot.slane %v3221, 1
    %v4728 = vrot.slane %v3147, 1
    %v4729 = vsel %vm3564, %v4727, %v4728
    %v4730 = vrot.slane %v3222, 1
    %v4731 = vsel %vm3564, %v4728, %v4730
    %v4732 = vrot.slane %v3223, 1
    %v4733 = vrot.slane %v3150, 1
    %v4734 = vsel %vm3564, %v4732, %v4733
    %v4735 = vrot.slane %v3224, 1
    %v4736 = vsel %vm3564, %v4733, %v4735
    %v4737 = vrot.slane %v3225, 1
    %v4738 = vrot.slane %v3153, 1
    %v4739 = vsel %vm3564, %v4737, %v4738
    %v4740 = vrot.slane %v3226, 1
    %v4741 = vsel %vm3564, %v4738, %v4740
    %v4742 = vrot.slane %v3227, 1
    %v4743 = vrot.slane %v3156, 1
    %v4744 = vsel %vm3564, %v4742, %v4743
    %v4745 = vrot.slane %v3228, 1
    %v4746 = vsel %vm3564, %v4743, %v4745
    %v4747 = vrot.slane %v3229, 1
    %v4748 = vrot.slane %v3159, 1
    %v4749 = vsel %vm3564, %v4747, %v4748
    %v4750 = vrot.slane %v3230, 1
    %v4751 = vsel %vm3564, %v4748, %v4750
    %v4752 = vrot.slane %v3231, 1
    %v4753 = vrot.slane %v3162, 1
    %v4754 = vsel %vm3564, %v4752, %v4753
    %v4755 = vrot.slane %v3232, 1
    %v4756 = vsel %vm3564, %v4753, %v4755
    %v4757 = vrot.slane %v3233, 1
    %v4758 = vrot.slane %v3165, 1
    %v4759 = vsel %vm3564, %v4757, %v4758
    %v4760 = vrot.slane %v3234, 1
    %v4761 = vsel %vm3564, %v4758, %v4760
    %v4762 = vrot.slane %v3235, 1
    %v4763 = vrot.slane %v3168, 1
    %v4764 = vsel %vm3564, %v4762, %v4763
    %v4765 = vrot.slane %v3236, 1
    %v4766 = vsel %vm3564, %v4763, %v4765
    %v4767 = vrot.slane %v3237, 1
    %v4768 = vrot.slane %v3171, 1
    %v4769 = vsel %vm3564, %v4767, %v4768
    %v4770 = vrot.slane %v3238, 1
    %v4771 = vsel %vm3564, %v4768, %v4770
    %v4772 = vrot.slane %v3239, 1
    %v4773 = vrot.slane %v3174, 1
    %v4774 = vsel %vm3564, %v4772, %v4773
    %v4775 = vrot.slane %v3240, 1
    %v4776 = vsel %vm3564, %v4773, %v4775
    %v4777 = vrot.slane %v3241, 1
    %v4778 = vrot.slane %v3177, 1
    %v4779 = vsel %vm3564, %v4777, %v4778
    %v4780 = vrot.slane %v3242, 1
    %v4781 = vsel %vm3564, %v4778, %v4780
    %4782 = vrot.lane.b32.xlu0 %v4624, 96
    %v4783 = vpop.permute.xlu0 %4782
    %4784 = vrot.lane.b32.xlu0 %v4626, 96
    %v4785 = vpop.permute.xlu0 %4784
    %4786 = vrot.lane.b32.xlu0 %v4625, 96
    %v4787 = vpop.permute.xlu0 %4786
    %4788 = vrot.lane.b32.xlu0 %v4629, 96
    %v4789 = vpop.permute.xlu0 %4788
    %4790 = vrot.lane.b32.xlu0 %v4631, 96
    %v4791 = vpop.permute.xlu0 %4790
    %4792 = vrot.lane.b32.xlu0 %v4630, 96
    %v4793 = vpop.permute.xlu0 %4792
    %4794 = vrot.lane.b32.xlu0 %v4634, 96
    %v4795 = vpop.permute.xlu0 %4794
    %4796 = vrot.lane.b32.xlu0 %v4636, 96
    %v4797 = vpop.permute.xlu0 %4796
    %4798 = vrot.lane.b32.xlu0 %v4635, 96
    %v4799 = vpop.permute.xlu0 %4798
    %4800 = vrot.lane.b32.xlu0 %v4639, 96
    %v4801 = vpop.permute.xlu0 %4800
    %4802 = vrot.lane.b32.xlu0 %v4641, 96
    %v4803 = vpop.permute.xlu0 %4802
    %4804 = vrot.lane.b32.xlu0 %v4640, 96
    %v4805 = vpop.permute.xlu0 %4804
    %4806 = vrot.lane.b32.xlu0 %v4644, 96
    %v4807 = vpop.permute.xlu0 %4806
    %4808 = vrot.lane.b32.xlu0 %v4646, 96
    %v4809 = vpop.permute.xlu0 %4808
    %4810 = vrot.lane.b32.xlu0 %v4645, 96
    %v4811 = vpop.permute.xlu0 %4810
    %4812 = vrot.lane.b32.xlu0 %v4649, 96
    %v4813 = vpop.permute.xlu0 %4812
    %4814 = vrot.lane.b32.xlu0 %v4651, 96
    %v4815 = vpop.permute.xlu0 %4814
    %4816 = vrot.lane.b32.xlu0 %v4650, 96
    %v4817 = vpop.permute.xlu0 %4816
    %4818 = vrot.lane.b32.xlu0 %v4654, 96
    %v4819 = vpop.permute.xlu0 %4818
    %4820 = vrot.lane.b32.xlu0 %v4656, 96
    %v4821 = vpop.permute.xlu0 %4820
    %4822 = vrot.lane.b32.xlu0 %v4655, 96
    %v4823 = vpop.permute.xlu0 %4822
    %4824 = vrot.lane.b32.xlu0 %v4659, 96
    %v4825 = vpop.permute.xlu0 %4824
    %4826 = vrot.lane.b32.xlu0 %v4661, 96
    %v4827 = vpop.permute.xlu0 %4826
    %4828 = vrot.lane.b32.xlu0 %v4660, 96
    %v4829 = vpop.permute.xlu0 %4828
    %4830 = vrot.lane.b32.xlu0 %v4664, 96
    %v4831 = vpop.permute.xlu0 %4830
    %4832 = vrot.lane.b32.xlu0 %v4666, 96
    %v4833 = vpop.permute.xlu0 %4832
    %4834 = vrot.lane.b32.xlu0 %v4665, 96
    %v4835 = vpop.permute.xlu0 %4834
    %4836 = vrot.lane.b32.xlu0 %v4669, 96
    %v4837 = vpop.permute.xlu0 %4836
    %4838 = vrot.lane.b32.xlu0 %v4671, 96
    %v4839 = vpop.permute.xlu0 %4838
    %4840 = vrot.lane.b32.xlu0 %v4670, 96
    %v4841 = vpop.permute.xlu0 %4840
    %4842 = vrot.lane.b32.xlu0 %v4674, 96
    %v4843 = vpop.permute.xlu0 %4842
    %4844 = vrot.lane.b32.xlu0 %v4676, 96
    %v4845 = vpop.permute.xlu0 %4844
    %4846 = vrot.lane.b32.xlu0 %v4675, 96
    %v4847 = vpop.permute.xlu0 %4846
    %4848 = vrot.lane.b32.xlu0 %v4679, 96
    %v4849 = vpop.permute.xlu0 %4848
    %4850 = vrot.lane.b32.xlu0 %v4681, 96
    %v4851 = vpop.permute.xlu0 %4850
    %4852 = vrot.lane.b32.xlu0 %v4680, 96
    %v4853 = vpop.permute.xlu0 %4852
    %4854 = vrot.lane.b32.xlu0 %v4684, 96
    %v4855 = vpop.permute.xlu0 %4854
    %4856 = vrot.lane.b32.xlu0 %v4686, 96
    %v4857 = vpop.permute.xlu0 %4856
    %4858 = vrot.lane.b32.xlu0 %v4685, 96
    %v4859 = vpop.permute.xlu0 %4858
    %4860 = vrot.lane.b32.xlu0 %v4689, 96
    %v4861 = vpop.permute.xlu0 %4860
    %4862 = vrot.lane.b32.xlu0 %v4691, 96
    %v4863 = vpop.permute.xlu0 %4862
    %4864 = vrot.lane.b32.xlu0 %v4690, 96
    %v4865 = vpop.permute.xlu0 %4864
    %4866 = vrot.lane.b32.xlu0 %v4694, 96
    %v4867 = vpop.permute.xlu0 %4866
    %4868 = vrot.lane.b32.xlu0 %v4696, 96
    %v4869 = vpop.permute.xlu0 %4868
    %4870 = vrot.lane.b32.xlu0 %v4695, 96
    %v4871 = vpop.permute.xlu0 %4870
    %4872 = vrot.lane.b32.xlu0 %v4699, 96
    %v4873 = vpop.permute.xlu0 %4872
    %4874 = vrot.lane.b32.xlu0 %v4701, 96
    %v4875 = vpop.permute.xlu0 %4874
    %4876 = vrot.lane.b32.xlu0 %v4700, 96
    %v4877 = vpop.permute.xlu0 %4876
    %4878 = vrot.lane.b32.xlu0 %v4704, 96
    %v4879 = vpop.permute.xlu0 %4878
    %4880 = vrot.lane.b32.xlu0 %v4706, 96
    %v4881 = vpop.permute.xlu0 %4880
    %4882 = vrot.lane.b32.xlu0 %v4705, 96
    %v4883 = vpop.permute.xlu0 %4882
    %4884 = vrot.lane.b32.xlu0 %v4709, 96
    %v4885 = vpop.permute.xlu0 %4884
    %4886 = vrot.lane.b32.xlu0 %v4711, 96
    %v4887 = vpop.permute.xlu0 %4886
    %4888 = vrot.lane.b32.xlu0 %v4710, 96
    %v4889 = vpop.permute.xlu0 %4888
    %4890 = vrot.lane.b32.xlu0 %v4714, 96
    %v4891 = vpop.permute.xlu0 %4890
    %4892 = vrot.lane.b32.xlu0 %v4716, 96
    %v4893 = vpop.permute.xlu0 %4892
    %4894 = vrot.lane.b32.xlu0 %v4715, 96
    %v4895 = vpop.permute.xlu0 %4894
    %4896 = vrot.lane.b32.xlu0 %v4719, 96
    %v4897 = vpop.permute.xlu0 %4896
    %4898 = vrot.lane.b32.xlu0 %v4721, 96
    %v4899 = vpop.permute.xlu0 %4898
    %4900 = vrot.lane.b32.xlu0 %v4720, 96
    %v4901 = vpop.permute.xlu0 %4900
    %4902 = vrot.lane.b32.xlu0 %v4724, 96
    %v4903 = vpop.permute.xlu0 %4902
    %4904 = vrot.lane.b32.xlu0 %v4726, 96
    %v4905 = vpop.permute.xlu0 %4904
    %4906 = vrot.lane.b32.xlu0 %v4725, 96
    %v4907 = vpop.permute.xlu0 %4906
    %4908 = vrot.lane.b32.xlu0 %v4729, 96
    %v4909 = vpop.permute.xlu0 %4908
    %4910 = vrot.lane.b32.xlu0 %v4731, 96
    %v4911 = vpop.permute.xlu0 %4910
    %4912 = vrot.lane.b32.xlu0 %v4730, 96
    %v4913 = vpop.permute.xlu0 %4912
    %4914 = vrot.lane.b32.xlu0 %v4734, 96
    %v4915 = vpop.permute.xlu0 %4914
    %4916 = vrot.lane.b32.xlu0 %v4736, 96
    %v4917 = vpop.permute.xlu0 %4916
    %4918 = vrot.lane.b32.xlu0 %v4735, 96
    %v4919 = vpop.permute.xlu0 %4918
    %4920 = vrot.lane.b32.xlu0 %v4739, 96
    %v4921 = vpop.permute.xlu0 %4920
    %4922 = vrot.lane.b32.xlu0 %v4741, 96
    %v4923 = vpop.permute.xlu0 %4922
    %4924 = vrot.lane.b32.xlu0 %v4740, 96
    %v4925 = vpop.permute.xlu0 %4924
    %4926 = vrot.lane.b32.xlu0 %v4744, 96
    %v4927 = vpop.permute.xlu0 %4926
    %4928 = vrot.lane.b32.xlu0 %v4746, 96
    %v4929 = vpop.permute.xlu0 %4928
    %4930 = vrot.lane.b32.xlu0 %v4745, 96
    %v4931 = vpop.permute.xlu0 %4930
    %4932 = vrot.lane.b32.xlu0 %v4749, 96
    %v4933 = vpop.permute.xlu0 %4932
    %4934 = vrot.lane.b32.xlu0 %v4751, 96
    %v4935 = vpop.permute.xlu0 %4934
    %4936 = vrot.lane.b32.xlu0 %v4750, 96
    %v4937 = vpop.permute.xlu0 %4936
    %4938 = vrot.lane.b32.xlu0 %v4754, 96
    %v4939 = vpop.permute.xlu0 %4938
    %4940 = vrot.lane.b32.xlu0 %v4756, 96
    %v4941 = vpop.permute.xlu0 %4940
    %4942 = vrot.lane.b32.xlu0 %v4755, 96
    %v4943 = vpop.permute.xlu0 %4942
    %4944 = vrot.lane.b32.xlu0 %v4759, 96
    %v4945 = vpop.permute.xlu0 %4944
    %4946 = vrot.lane.b32.xlu0 %v4761, 96
    %v4947 = vpop.permute.xlu0 %4946
    %4948 = vrot.lane.b32.xlu0 %v4760, 96
    %v4949 = vpop.permute.xlu0 %4948
    %4950 = vrot.lane.b32.xlu0 %v4764, 96
    %v4951 = vpop.permute.xlu0 %4950
    %4952 = vrot.lane.b32.xlu0 %v4766, 96
    %v4953 = vpop.permute.xlu0 %4952
    %4954 = vrot.lane.b32.xlu0 %v4765, 96
    %v4955 = vpop.permute.xlu0 %4954
    %4956 = vrot.lane.b32.xlu0 %v4769, 96
    %v4957 = vpop.permute.xlu0 %4956
    %4958 = vrot.lane.b32.xlu0 %v4771, 96
    %v4959 = vpop.permute.xlu0 %4958
    %4960 = vrot.lane.b32.xlu0 %v4770, 96
    %v4961 = vpop.permute.xlu0 %4960
    %4962 = vrot.lane.b32.xlu0 %v4774, 96
    %v4963 = vpop.permute.xlu0 %4962
    %4964 = vrot.lane.b32.xlu0 %v4776, 96
    %v4965 = vpop.permute.xlu0 %4964
    %4966 = vrot.lane.b32.xlu0 %v4775, 96
    %v4967 = vpop.permute.xlu0 %4966
    %4968 = vrot.lane.b32.xlu0 %v4779, 96
    %v4969 = vpop.permute.xlu0 %4968
    %4970 = vrot.lane.b32.xlu0 %v4781, 96
    %v4971 = vpop.permute.xlu0 %4970
    %4972 = vrot.lane.b32.xlu0 %v4780, 96
    %v4973 = vpop.permute.xlu0 %4972
    %v5070 = vadd.f32 %v3083, %v4783
    %v5071 = vadd.f32 %v3084, %v4785
    %v5072 = vadd.f32 %v3085, %v4787
    %v5073 = vadd.f32 %v3086, %v4789
    %v5074 = vadd.f32 %v3087, %v4791
    %v5075 = vadd.f32 %v3088, %v4793
    %v5076 = vadd.f32 %v3089, %v4795
    %v5077 = vadd.f32 %v3090, %v4797
    %v5078 = vadd.f32 %v3091, %v4799
    %v5079 = vadd.f32 %v3092, %v4801
    %v5080 = vadd.f32 %v3093, %v4803
    %v5081 = vadd.f32 %v3094, %v4805
    %v5082 = vadd.f32 %v3095, %v4807
    %v5083 = vadd.f32 %v3096, %v4809
    %v5084 = vadd.f32 %v3097, %v4811
    %v5085 = vadd.f32 %v3098, %v4813
    %v5086 = vadd.f32 %v3099, %v4815
    %v5087 = vadd.f32 %v3100, %v4817
    %v5088 = vadd.f32 %v3101, %v4819
    %v5089 = vadd.f32 %v3102, %v4821
    %v5090 = vadd.f32 %v3103, %v4823
    %v5091 = vadd.f32 %v3104, %v4825
    %v5092 = vadd.f32 %v3105, %v4827
    %v5093 = vadd.f32 %v3106, %v4829
    %v5094 = vadd.f32 %v3107, %v4831
    %v5095 = vadd.f32 %v3108, %v4833
    %v5096 = vadd.f32 %v3109, %v4835
    %v5097 = vadd.f32 %v3110, %v4837
    %v5098 = vadd.f32 %v3111, %v4839
    %v5099 = vadd.f32 %v3112, %v4841
    %v5100 = vadd.f32 %v3113, %v4843
    %v5101 = vadd.f32 %v3114, %v4845
    %v5102 = vadd.f32 %v3115, %v4847
    %v5103 = vadd.f32 %v3116, %v4849
    %v5104 = vadd.f32 %v3117, %v4851
    %v5105 = vadd.f32 %v3118, %v4853
    %v5106 = vadd.f32 %v3119, %v4855
    %v5107 = vadd.f32 %v3120, %v4857
    %v5108 = vadd.f32 %v3121, %v4859
    %v5109 = vadd.f32 %v3122, %v4861
    %v5110 = vadd.f32 %v3123, %v4863
    %v5111 = vadd.f32 %v3124, %v4865
    %v5112 = vadd.f32 %v3125, %v4867
    %v5113 = vadd.f32 %v3126, %v4869
    %v5114 = vadd.f32 %v3127, %v4871
    %v5115 = vadd.f32 %v3128, %v4873
    %v5116 = vadd.f32 %v3129, %v4875
    %v5117 = vadd.f32 %v3130, %v4877
    %v5118 = vadd.f32 %v3131, %v4879
    %v5119 = vadd.f32 %v3132, %v4881
    %v5120 = vadd.f32 %v3133, %v4883
    %v5121 = vadd.f32 %v3134, %v4885
    %v5122 = vadd.f32 %v3135, %v4887
    %v5123 = vadd.f32 %v3136, %v4889
    %v5124 = vadd.f32 %v3137, %v4891
    %v5125 = vadd.f32 %v3138, %v4893
    %v5126 = vadd.f32 %v3139, %v4895
    %v5127 = vadd.f32 %v3140, %v4897
    %v5128 = vadd.f32 %v3141, %v4899
    %v5129 = vadd.f32 %v3142, %v4901
    %v5130 = vadd.f32 %v3143, %v4903
    %v5131 = vadd.f32 %v3144, %v4905
    %v5132 = vadd.f32 %v3145, %v4907
    %v5133 = vadd.f32 %v3146, %v4909
    %v5134 = vadd.f32 %v3147, %v4911
    %v5135 = vadd.f32 %v3148, %v4913
    %v5136 = vadd.f32 %v3149, %v4915
    %v5137 = vadd.f32 %v3150, %v4917
    %v5138 = vadd.f32 %v3151, %v4919
    %v5139 = vadd.f32 %v3152, %v4921
    %v5140 = vadd.f32 %v3153, %v4923
    %v5141 = vadd.f32 %v3154, %v4925
    %v5142 = vadd.f32 %v3155, %v4927
    %v5143 = vadd.f32 %v3156, %v4929
    %v5144 = vadd.f32 %v3157, %v4931
    %v5145 = vadd.f32 %v3158, %v4933
    %v5146 = vadd.f32 %v3159, %v4935
    %v5147 = vadd.f32 %v3160, %v4937
    %v5148 = vadd.f32 %v3161, %v4939
    %v5149 = vadd.f32 %v3162, %v4941
    %v5150 = vadd.f32 %v3163, %v4943
    %v5151 = vadd.f32 %v3164, %v4945
    %v5152 = vadd.f32 %v3165, %v4947
    %v5153 = vadd.f32 %v3166, %v4949
    %v5154 = vadd.f32 %v3167, %v4951
    %v5155 = vadd.f32 %v3168, %v4953
    %v5156 = vadd.f32 %v3169, %v4955
    %v5157 = vadd.f32 %v3170, %v4957
    %v5158 = vadd.f32 %v3171, %v4959
    %v5159 = vadd.f32 %v3172, %v4961
    %v5160 = vadd.f32 %v3173, %v4963
    %v5161 = vadd.f32 %v3174, %v4965
    %v5162 = vadd.f32 %v3175, %v4967
    %v5163 = vadd.f32 %v3176, %v4969
    %v5164 = vadd.f32 %v3177, %v4971
    %v5165 = vadd.f32 %v3178, %v4973
    %v5262 = vrot.slane %v3308, 1
    %v5263 = vrot.slane %v3245, 1
    %v5264 = vsel %vm3564, %v5262, %v5263
    %v5265 = vrot.slane %v3309, 1
    %v5266 = vsel %vm3564, %v5263, %v5265
    %v5267 = vrot.slane %v3310, 1
    %v5268 = vrot.slane %v3247, 1
    %v5269 = vsel %vm3564, %v5267, %v5268
    %v5270 = vrot.slane %v3311, 1
    %v5271 = vsel %vm3564, %v5268, %v5270
    %v5272 = vrot.slane %v3312, 1
    %v5273 = vrot.slane %v3249, 1
    %v5274 = vsel %vm3564, %v5272, %v5273
    %v5275 = vrot.slane %v3313, 1
    %v5276 = vsel %vm3564, %v5273, %v5275
    %v5277 = vrot.slane %v3314, 1
    %v5278 = vrot.slane %v3251, 1
    %v5279 = vsel %vm3564, %v5277, %v5278
    %v5280 = vrot.slane %v3315, 1
    %v5281 = vsel %vm3564, %v5278, %v5280
    %v5282 = vrot.slane %v3316, 1
    %v5283 = vrot.slane %v3253, 1
    %v5284 = vsel %vm3564, %v5282, %v5283
    %v5285 = vrot.slane %v3317, 1
    %v5286 = vsel %vm3564, %v5283, %v5285
    %v5287 = vrot.slane %v3318, 1
    %v5288 = vrot.slane %v3255, 1
    %v5289 = vsel %vm3564, %v5287, %v5288
    %v5290 = vrot.slane %v3319, 1
    %v5291 = vsel %vm3564, %v5288, %v5290
    %v5292 = vrot.slane %v3320, 1
    %v5293 = vrot.slane %v3257, 1
    %v5294 = vsel %vm3564, %v5292, %v5293
    %v5295 = vrot.slane %v3321, 1
    %v5296 = vsel %vm3564, %v5293, %v5295
    %v5297 = vrot.slane %v3322, 1
    %v5298 = vrot.slane %v3259, 1
    %v5299 = vsel %vm3564, %v5297, %v5298
    %v5300 = vrot.slane %v3323, 1
    %v5301 = vsel %vm3564, %v5298, %v5300
    %v5302 = vrot.slane %v3324, 1
    %v5303 = vrot.slane %v3261, 1
    %v5304 = vsel %vm3564, %v5302, %v5303
    %v5305 = vrot.slane %v3325, 1
    %v5306 = vsel %vm3564, %v5303, %v5305
    %v5307 = vrot.slane %v3326, 1
    %v5308 = vrot.slane %v3263, 1
    %v5309 = vsel %vm3564, %v5307, %v5308
    %v5310 = vrot.slane %v3327, 1
    %v5311 = vsel %vm3564, %v5308, %v5310
    %v5312 = vrot.slane %v3328, 1
    %v5313 = vrot.slane %v3265, 1
    %v5314 = vsel %vm3564, %v5312, %v5313
    %v5315 = vrot.slane %v3329, 1
    %v5316 = vsel %vm3564, %v5313, %v5315
    %v5317 = vrot.slane %v3330, 1
    %v5318 = vrot.slane %v3267, 1
    %v5319 = vsel %vm3564, %v5317, %v5318
    %v5320 = vrot.slane %v3331, 1
    %v5321 = vsel %vm3564, %v5318, %v5320
    %v5322 = vrot.slane %v3332, 1
    %v5323 = vrot.slane %v3269, 1
    %v5324 = vsel %vm3564, %v5322, %v5323
    %v5325 = vrot.slane %v3333, 1
    %v5326 = vsel %vm3564, %v5323, %v5325
    %v5327 = vrot.slane %v3334, 1
    %v5328 = vrot.slane %v3271, 1
    %v5329 = vsel %vm3564, %v5327, %v5328
    %v5330 = vrot.slane %v3335, 1
    %v5331 = vsel %vm3564, %v5328, %v5330
    %v5332 = vrot.slane %v3336, 1
    %v5333 = vrot.slane %v3273, 1
    %v5334 = vsel %vm3564, %v5332, %v5333
    %v5335 = vrot.slane %v3337, 1
    %v5336 = vsel %vm3564, %v5333, %v5335
    %v5337 = vrot.slane %v3338, 1
    %v5338 = vrot.slane %v3275, 1
    %v5339 = vsel %vm3564, %v5337, %v5338
    %v5340 = vrot.slane %v3339, 1
    %v5341 = vsel %vm3564, %v5338, %v5340
    %v5342 = vrot.slane %v3340, 1
    %v5343 = vrot.slane %v3277, 1
    %v5344 = vsel %vm3564, %v5342, %v5343
    %v5345 = vrot.slane %v3341, 1
    %v5346 = vsel %vm3564, %v5343, %v5345
    %v5347 = vrot.slane %v3342, 1
    %v5348 = vrot.slane %v3279, 1
    %v5349 = vsel %vm3564, %v5347, %v5348
    %v5350 = vrot.slane %v3343, 1
    %v5351 = vsel %vm3564, %v5348, %v5350
    %v5352 = vrot.slane %v3344, 1
    %v5353 = vrot.slane %v3281, 1
    %v5354 = vsel %vm3564, %v5352, %v5353
    %v5355 = vrot.slane %v3345, 1
    %v5356 = vsel %vm3564, %v5353, %v5355
    %v5357 = vrot.slane %v3346, 1
    %v5358 = vrot.slane %v3283, 1
    %v5359 = vsel %vm3564, %v5357, %v5358
    %v5360 = vrot.slane %v3347, 1
    %v5361 = vsel %vm3564, %v5358, %v5360
    %v5362 = vrot.slane %v3348, 1
    %v5363 = vrot.slane %v3285, 1
    %v5364 = vsel %vm3564, %v5362, %v5363
    %v5365 = vrot.slane %v3349, 1
    %v5366 = vsel %vm3564, %v5363, %v5365
    %v5367 = vrot.slane %v3350, 1
    %v5368 = vrot.slane %v3287, 1
    %v5369 = vsel %vm3564, %v5367, %v5368
    %v5370 = vrot.slane %v3351, 1
    %v5371 = vsel %vm3564, %v5368, %v5370
    %v5372 = vrot.slane %v3352, 1
    %v5373 = vrot.slane %v3289, 1
    %v5374 = vsel %vm3564, %v5372, %v5373
    %v5375 = vrot.slane %v3353, 1
    %v5376 = vsel %vm3564, %v5373, %v5375
    %v5377 = vrot.slane %v3354, 1
    %v5378 = vrot.slane %v3291, 1
    %v5379 = vsel %vm3564, %v5377, %v5378
    %v5380 = vrot.slane %v3355, 1
    %v5381 = vsel %vm3564, %v5378, %v5380
    %v5382 = vrot.slane %v3356, 1
    %v5383 = vrot.slane %v3293, 1
    %v5384 = vsel %vm3564, %v5382, %v5383
    %v5385 = vrot.slane %v3357, 1
    %v5386 = vsel %vm3564, %v5383, %v5385
    %v5387 = vrot.slane %v3358, 1
    %v5388 = vrot.slane %v3295, 1
    %v5389 = vsel %vm3564, %v5387, %v5388
    %v5390 = vrot.slane %v3359, 1
    %v5391 = vsel %vm3564, %v5388, %v5390
    %v5392 = vrot.slane %v3360, 1
    %v5393 = vrot.slane %v3297, 1
    %v5394 = vsel %vm3564, %v5392, %v5393
    %v5395 = vrot.slane %v3361, 1
    %v5396 = vsel %vm3564, %v5393, %v5395
    %v5397 = vrot.slane %v3362, 1
    %v5398 = vrot.slane %v3299, 1
    %v5399 = vsel %vm3564, %v5397, %v5398
    %v5400 = vrot.slane %v3363, 1
    %v5401 = vsel %vm3564, %v5398, %v5400
    %v5402 = vrot.slane %v3364, 1
    %v5403 = vrot.slane %v3301, 1
    %v5404 = vsel %vm3564, %v5402, %v5403
    %v5405 = vrot.slane %v3365, 1
    %v5406 = vsel %vm3564, %v5403, %v5405
    %v5407 = vrot.slane %v3366, 1
    %v5408 = vrot.slane %v3303, 1
    %v5409 = vsel %vm3564, %v5407, %v5408
    %v5410 = vrot.slane %v3367, 1
    %v5411 = vsel %vm3564, %v5408, %v5410
    %v5412 = vrot.slane %v3368, 1
    %v5413 = vrot.slane %v3305, 1
    %v5414 = vsel %vm3564, %v5412, %v5413
    %v5415 = vrot.slane %v3369, 1
    %v5416 = vsel %vm3564, %v5413, %v5415
    %v5417 = vrot.slane %v3370, 1
    %v5418 = vrot.slane %v3307, 1
    %v5419 = vsel %vm3564, %v5417, %v5418
    %v5420 = vrot.slane %v3371, 1
    %v5421 = vsel %vm3564, %v5418, %v5420
    %5422 = vrot.lane.b32.xlu0 %v5264, 96
    %v5423 = vpop.permute.xlu0 %5422
    %5424 = vrot.lane.b32.xlu0 %v5266, 96
    %v5425 = vpop.permute.xlu0 %5424
    %5426 = vrot.lane.b32.xlu0 %v5269, 96
    %v5427 = vpop.permute.xlu0 %5426
    %5428 = vrot.lane.b32.xlu0 %v5271, 96
    %v5429 = vpop.permute.xlu0 %5428
    %5430 = vrot.lane.b32.xlu0 %v5274, 96
    %v5431 = vpop.permute.xlu0 %5430
    %5432 = vrot.lane.b32.xlu0 %v5276, 96
    %v5433 = vpop.permute.xlu0 %5432
    %5434 = vrot.lane.b32.xlu0 %v5279, 96
    %v5435 = vpop.permute.xlu0 %5434
    %5436 = vrot.lane.b32.xlu0 %v5281, 96
    %v5437 = vpop.permute.xlu0 %5436
    %5438 = vrot.lane.b32.xlu0 %v5284, 96
    %v5439 = vpop.permute.xlu0 %5438
    %5440 = vrot.lane.b32.xlu0 %v5286, 96
    %v5441 = vpop.permute.xlu0 %5440
    %5442 = vrot.lane.b32.xlu0 %v5289, 96
    %v5443 = vpop.permute.xlu0 %5442
    %5444 = vrot.lane.b32.xlu0 %v5291, 96
    %v5445 = vpop.permute.xlu0 %5444
    %5446 = vrot.lane.b32.xlu0 %v5294, 96
    %v5447 = vpop.permute.xlu0 %5446
    %5448 = vrot.lane.b32.xlu0 %v5296, 96
    %v5449 = vpop.permute.xlu0 %5448
    %5450 = vrot.lane.b32.xlu0 %v5299, 96
    %v5451 = vpop.permute.xlu0 %5450
    %5452 = vrot.lane.b32.xlu0 %v5301, 96
    %v5453 = vpop.permute.xlu0 %5452
    %5454 = vrot.lane.b32.xlu0 %v5304, 96
    %v5455 = vpop.permute.xlu0 %5454
    %5456 = vrot.lane.b32.xlu0 %v5306, 96
    %v5457 = vpop.permute.xlu0 %5456
    %5458 = vrot.lane.b32.xlu0 %v5309, 96
    %v5459 = vpop.permute.xlu0 %5458
    %5460 = vrot.lane.b32.xlu0 %v5311, 96
    %v5461 = vpop.permute.xlu0 %5460
    %5462 = vrot.lane.b32.xlu0 %v5314, 96
    %v5463 = vpop.permute.xlu0 %5462
    %5464 = vrot.lane.b32.xlu0 %v5316, 96
    %v5465 = vpop.permute.xlu0 %5464
    %5466 = vrot.lane.b32.xlu0 %v5319, 96
    %v5467 = vpop.permute.xlu0 %5466
    %5468 = vrot.lane.b32.xlu0 %v5321, 96
    %v5469 = vpop.permute.xlu0 %5468
    %5470 = vrot.lane.b32.xlu0 %v5324, 96
    %v5471 = vpop.permute.xlu0 %5470
    %5472 = vrot.lane.b32.xlu0 %v5326, 96
    %v5473 = vpop.permute.xlu0 %5472
    %5474 = vrot.lane.b32.xlu0 %v5329, 96
    %v5475 = vpop.permute.xlu0 %5474
    %5476 = vrot.lane.b32.xlu0 %v5331, 96
    %v5477 = vpop.permute.xlu0 %5476
    %5478 = vrot.lane.b32.xlu0 %v5334, 96
    %v5479 = vpop.permute.xlu0 %5478
    %5480 = vrot.lane.b32.xlu0 %v5336, 96
    %v5481 = vpop.permute.xlu0 %5480
    %5482 = vrot.lane.b32.xlu0 %v5339, 96
    %v5483 = vpop.permute.xlu0 %5482
    %5484 = vrot.lane.b32.xlu0 %v5341, 96
    %v5485 = vpop.permute.xlu0 %5484
    %5486 = vrot.lane.b32.xlu0 %v5344, 96
    %v5487 = vpop.permute.xlu0 %5486
    %5488 = vrot.lane.b32.xlu0 %v5346, 96
    %v5489 = vpop.permute.xlu0 %5488
    %5490 = vrot.lane.b32.xlu0 %v5349, 96
    %v5491 = vpop.permute.xlu0 %5490
    %5492 = vrot.lane.b32.xlu0 %v5351, 96
    %v5493 = vpop.permute.xlu0 %5492
    %5494 = vrot.lane.b32.xlu0 %v5354, 96
    %v5495 = vpop.permute.xlu0 %5494
    %5496 = vrot.lane.b32.xlu0 %v5356, 96
    %v5497 = vpop.permute.xlu0 %5496
    %5498 = vrot.lane.b32.xlu0 %v5359, 96
    %v5499 = vpop.permute.xlu0 %5498
    %5500 = vrot.lane.b32.xlu0 %v5361, 96
    %v5501 = vpop.permute.xlu0 %5500
    %5502 = vrot.lane.b32.xlu0 %v5364, 96
    %v5503 = vpop.permute.xlu0 %5502
    %5504 = vrot.lane.b32.xlu0 %v5366, 96
    %v5505 = vpop.permute.xlu0 %5504
    %5506 = vrot.lane.b32.xlu0 %v5369, 96
    %v5507 = vpop.permute.xlu0 %5506
    %5508 = vrot.lane.b32.xlu0 %v5371, 96
    %v5509 = vpop.permute.xlu0 %5508
    %5510 = vrot.lane.b32.xlu0 %v5374, 96
    %v5511 = vpop.permute.xlu0 %5510
    %5512 = vrot.lane.b32.xlu0 %v5376, 96
    %v5513 = vpop.permute.xlu0 %5512
    %5514 = vrot.lane.b32.xlu0 %v5379, 96
    %v5515 = vpop.permute.xlu0 %5514
    %5516 = vrot.lane.b32.xlu0 %v5381, 96
    %v5517 = vpop.permute.xlu0 %5516
    %5518 = vrot.lane.b32.xlu0 %v5384, 96
    %v5519 = vpop.permute.xlu0 %5518
    %5520 = vrot.lane.b32.xlu0 %v5386, 96
    %v5521 = vpop.permute.xlu0 %5520
    %5522 = vrot.lane.b32.xlu0 %v5389, 96
    %v5523 = vpop.permute.xlu0 %5522
    %5524 = vrot.lane.b32.xlu0 %v5391, 96
    %v5525 = vpop.permute.xlu0 %5524
    %5526 = vrot.lane.b32.xlu0 %v5394, 96
    %v5527 = vpop.permute.xlu0 %5526
    %5528 = vrot.lane.b32.xlu0 %v5396, 96
    %v5529 = vpop.permute.xlu0 %5528
    %5530 = vrot.lane.b32.xlu0 %v5399, 96
    %v5531 = vpop.permute.xlu0 %5530
    %5532 = vrot.lane.b32.xlu0 %v5401, 96
    %v5533 = vpop.permute.xlu0 %5532
    %5534 = vrot.lane.b32.xlu0 %v5404, 96
    %v5535 = vpop.permute.xlu0 %5534
    %5536 = vrot.lane.b32.xlu0 %v5406, 96
    %v5537 = vpop.permute.xlu0 %5536
    %5538 = vrot.lane.b32.xlu0 %v5409, 96
    %v5539 = vpop.permute.xlu0 %5538
    %5540 = vrot.lane.b32.xlu0 %v5411, 96
    %v5541 = vpop.permute.xlu0 %5540
    %5542 = vrot.lane.b32.xlu0 %v5414, 96
    %v5543 = vpop.permute.xlu0 %5542
    %5544 = vrot.lane.b32.xlu0 %v5416, 96
    %v5545 = vpop.permute.xlu0 %5544
    %5546 = vrot.lane.b32.xlu0 %v5419, 96
    %v5547 = vpop.permute.xlu0 %5546
    %5548 = vrot.lane.b32.xlu0 %v5421, 96
    %v5549 = vpop.permute.xlu0 %5548
    %v5614 = vadd.f32 %v3244, %v5423
    %v5615 = vadd.f32 %v3245, %v5425
    %v5616 = vadd.f32 %v3246, %v5427
    %v5617 = vadd.f32 %v3247, %v5429
    %v5618 = vadd.f32 %v3248, %v5431
    %v5619 = vadd.f32 %v3249, %v5433
    %v5620 = vadd.f32 %v3250, %v5435
    %v5621 = vadd.f32 %v3251, %v5437
    %v5622 = vadd.f32 %v3252, %v5439
    %v5623 = vadd.f32 %v3253, %v5441
    %v5624 = vadd.f32 %v3254, %v5443
    %v5625 = vadd.f32 %v3255, %v5445
    %v5626 = vadd.f32 %v3256, %v5447
    %v5627 = vadd.f32 %v3257, %v5449
    %v5628 = vadd.f32 %v3258, %v5451
    %v5629 = vadd.f32 %v3259, %v5453
    %v5630 = vadd.f32 %v3260, %v5455
    %v5631 = vadd.f32 %v3261, %v5457
    %v5632 = vadd.f32 %v3262, %v5459
    %v5633 = vadd.f32 %v3263, %v5461
    %v5634 = vadd.f32 %v3264, %v5463
    %v5635 = vadd.f32 %v3265, %v5465
    %v5636 = vadd.f32 %v3266, %v5467
    %v5637 = vadd.f32 %v3267, %v5469
    %v5638 = vadd.f32 %v3268, %v5471
    %v5639 = vadd.f32 %v3269, %v5473
    %v5640 = vadd.f32 %v3270, %v5475
    %v5641 = vadd.f32 %v3271, %v5477
    %v5642 = vadd.f32 %v3272, %v5479
    %v5643 = vadd.f32 %v3273, %v5481
    %v5644 = vadd.f32 %v3274, %v5483
    %v5645 = vadd.f32 %v3275, %v5485
    %v5646 = vadd.f32 %v3276, %v5487
    %v5647 = vadd.f32 %v3277, %v5489
    %v5648 = vadd.f32 %v3278, %v5491
    %v5649 = vadd.f32 %v3279, %v5493
    %v5650 = vadd.f32 %v3280, %v5495
    %v5651 = vadd.f32 %v3281, %v5497
    %v5652 = vadd.f32 %v3282, %v5499
    %v5653 = vadd.f32 %v3283, %v5501
    %v5654 = vadd.f32 %v3284, %v5503
    %v5655 = vadd.f32 %v3285, %v5505
    %v5656 = vadd.f32 %v3286, %v5507
    %v5657 = vadd.f32 %v3287, %v5509
    %v5658 = vadd.f32 %v3288, %v5511
    %v5659 = vadd.f32 %v3289, %v5513
    %v5660 = vadd.f32 %v3290, %v5515
    %v5661 = vadd.f32 %v3291, %v5517
    %v5662 = vadd.f32 %v3292, %v5519
    %v5663 = vadd.f32 %v3293, %v5521
    %v5664 = vadd.f32 %v3294, %v5523
    %v5665 = vadd.f32 %v3295, %v5525
    %v5666 = vadd.f32 %v3296, %v5527
    %v5667 = vadd.f32 %v3297, %v5529
    %v5668 = vadd.f32 %v3298, %v5531
    %v5669 = vadd.f32 %v3299, %v5533
    %v5670 = vadd.f32 %v3300, %v5535
    %v5671 = vadd.f32 %v3301, %v5537
    %v5672 = vadd.f32 %v3302, %v5539
    %v5673 = vadd.f32 %v3303, %v5541
    %v5674 = vadd.f32 %v3304, %v5543
    %v5675 = vadd.f32 %v3305, %v5545
    %v5676 = vadd.f32 %v3306, %v5547
    %v5677 = vadd.f32 %v3307, %v5549
    %vm5774 = vcmask 1045504
    %v5775 = vrot.slane %v4430, 2
    %v5776 = vrot.slane %v4431, 2
    %v5777 = vsel %vm5774, %v5775, %v5776
    %v5778 = vrot.slane %v4432, 2
    %v5779 = vsel %vm5774, %v5776, %v5778
    %v5780 = vrot.slane %v4433, 2
    %v5781 = vrot.slane %v4434, 2
    %v5782 = vsel %vm5774, %v5780, %v5781
    %v5783 = vrot.slane %v4435, 2
    %v5784 = vsel %vm5774, %v5781, %v5783
    %v5785 = vrot.slane %v4436, 2
    %v5786 = vrot.slane %v4437, 2
    %v5787 = vsel %vm5774, %v5785, %v5786
    %v5788 = vrot.slane %v4438, 2
    %v5789 = vsel %vm5774, %v5786, %v5788
    %v5790 = vrot.slane %v4439, 2
    %v5791 = vrot.slane %v4440, 2
    %v5792 = vsel %vm5774, %v5790, %v5791
    %v5793 = vrot.slane %v4441, 2
    %v5794 = vsel %vm5774, %v5791, %v5793
    %v5795 = vrot.slane %v4442, 2
    %v5796 = vrot.slane %v4443, 2
    %v5797 = vsel %vm5774, %v5795, %v5796
    %v5798 = vrot.slane %v4444, 2
    %v5799 = vsel %vm5774, %v5796, %v5798
    %v5800 = vrot.slane %v4445, 2
    %v5801 = vrot.slane %v4446, 2
    %v5802 = vsel %vm5774, %v5800, %v5801
    %v5803 = vrot.slane %v4447, 2
    %v5804 = vsel %vm5774, %v5801, %v5803
    %v5805 = vrot.slane %v4448, 2
    %v5806 = vrot.slane %v4449, 2
    %v5807 = vsel %vm5774, %v5805, %v5806
    %v5808 = vrot.slane %v4450, 2
    %v5809 = vsel %vm5774, %v5806, %v5808
    %v5810 = vrot.slane %v4451, 2
    %v5811 = vrot.slane %v4452, 2
    %v5812 = vsel %vm5774, %v5810, %v5811
    %v5813 = vrot.slane %v4453, 2
    %v5814 = vsel %vm5774, %v5811, %v5813
    %v5815 = vrot.slane %v4454, 2
    %v5816 = vrot.slane %v4455, 2
    %v5817 = vsel %vm5774, %v5815, %v5816
    %v5818 = vrot.slane %v4456, 2
    %v5819 = vsel %vm5774, %v5816, %v5818
    %v5820 = vrot.slane %v4457, 2
    %v5821 = vrot.slane %v4458, 2
    %v5822 = vsel %vm5774, %v5820, %v5821
    %v5823 = vrot.slane %v4459, 2
    %v5824 = vsel %vm5774, %v5821, %v5823
    %v5825 = vrot.slane %v4460, 2
    %v5826 = vrot.slane %v4461, 2
    %v5827 = vsel %vm5774, %v5825, %v5826
    %v5828 = vrot.slane %v4462, 2
    %v5829 = vsel %vm5774, %v5826, %v5828
    %v5830 = vrot.slane %v4463, 2
    %v5831 = vrot.slane %v4464, 2
    %v5832 = vsel %vm5774, %v5830, %v5831
    %v5833 = vrot.slane %v4465, 2
    %v5834 = vsel %vm5774, %v5831, %v5833
    %v5835 = vrot.slane %v4466, 2
    %v5836 = vrot.slane %v4467, 2
    %v5837 = vsel %vm5774, %v5835, %v5836
    %v5838 = vrot.slane %v4468, 2
    %v5839 = vsel %vm5774, %v5836, %v5838
    %v5840 = vrot.slane %v4469, 2
    %v5841 = vrot.slane %v4470, 2
    %v5842 = vsel %vm5774, %v5840, %v5841
    %v5843 = vrot.slane %v4471, 2
    %v5844 = vsel %vm5774, %v5841, %v5843
    %v5845 = vrot.slane %v4472, 2
    %v5846 = vrot.slane %v4473, 2
    %v5847 = vsel %vm5774, %v5845, %v5846
    %v5848 = vrot.slane %v4474, 2
    %v5849 = vsel %vm5774, %v5846, %v5848
    %v5850 = vrot.slane %v4475, 2
    %v5851 = vrot.slane %v4476, 2
    %v5852 = vsel %vm5774, %v5850, %v5851
    %v5853 = vrot.slane %v4477, 2
    %v5854 = vsel %vm5774, %v5851, %v5853
    %v5855 = vrot.slane %v4478, 2
    %v5856 = vrot.slane %v4479, 2
    %v5857 = vsel %vm5774, %v5855, %v5856
    %v5858 = vrot.slane %v4480, 2
    %v5859 = vsel %vm5774, %v5856, %v5858
    %v5860 = vrot.slane %v4481, 2
    %v5861 = vrot.slane %v4482, 2
    %v5862 = vsel %vm5774, %v5860, %v5861
    %v5863 = vrot.slane %v4483, 2
    %v5864 = vsel %vm5774, %v5861, %v5863
    %v5865 = vrot.slane %v4484, 2
    %v5866 = vrot.slane %v4485, 2
    %v5867 = vsel %vm5774, %v5865, %v5866
    %v5868 = vrot.slane %v4486, 2
    %v5869 = vsel %vm5774, %v5866, %v5868
    %v5870 = vrot.slane %v4487, 2
    %v5871 = vrot.slane %v4488, 2
    %v5872 = vsel %vm5774, %v5870, %v5871
    %v5873 = vrot.slane %v4489, 2
    %v5874 = vsel %vm5774, %v5871, %v5873
    %v5875 = vrot.slane %v4490, 2
    %v5876 = vrot.slane %v4491, 2
    %v5877 = vsel %vm5774, %v5875, %v5876
    %v5878 = vrot.slane %v4492, 2
    %v5879 = vsel %vm5774, %v5876, %v5878
    %v5880 = vrot.slane %v4493, 2
    %v5881 = vrot.slane %v4494, 2
    %v5882 = vsel %vm5774, %v5880, %v5881
    %v5883 = vrot.slane %v4495, 2
    %v5884 = vsel %vm5774, %v5881, %v5883
    %v5885 = vrot.slane %v4496, 2
    %v5886 = vrot.slane %v4497, 2
    %v5887 = vsel %vm5774, %v5885, %v5886
    %v5888 = vrot.slane %v4498, 2
    %v5889 = vsel %vm5774, %v5886, %v5888
    %v5890 = vrot.slane %v4499, 2
    %v5891 = vrot.slane %v4500, 2
    %v5892 = vsel %vm5774, %v5890, %v5891
    %v5893 = vrot.slane %v4501, 2
    %v5894 = vsel %vm5774, %v5891, %v5893
    %v5895 = vrot.slane %v4502, 2
    %v5896 = vrot.slane %v4503, 2
    %v5897 = vsel %vm5774, %v5895, %v5896
    %v5898 = vrot.slane %v4504, 2
    %v5899 = vsel %vm5774, %v5896, %v5898
    %v5900 = vrot.slane %v4505, 2
    %v5901 = vrot.slane %v4506, 2
    %v5902 = vsel %vm5774, %v5900, %v5901
    %v5903 = vrot.slane %v4507, 2
    %v5904 = vsel %vm5774, %v5901, %v5903
    %v5905 = vrot.slane %v4508, 2
    %v5906 = vrot.slane %v4509, 2
    %v5907 = vsel %vm5774, %v5905, %v5906
    %v5908 = vrot.slane %v4510, 2
    %v5909 = vsel %vm5774, %v5906, %v5908
    %v5910 = vrot.slane %v4511, 2
    %v5911 = vrot.slane %v4512, 2
    %v5912 = vsel %vm5774, %v5910, %v5911
    %v5913 = vrot.slane %v4513, 2
    %v5914 = vsel %vm5774, %v5911, %v5913
    %v5915 = vrot.slane %v4514, 2
    %v5916 = vrot.slane %v4515, 2
    %v5917 = vsel %vm5774, %v5915, %v5916
    %v5918 = vrot.slane %v4516, 2
    %v5919 = vsel %vm5774, %v5916, %v5918
    %v5920 = vrot.slane %v4517, 2
    %v5921 = vrot.slane %v4518, 2
    %v5922 = vsel %vm5774, %v5920, %v5921
    %v5923 = vrot.slane %v4519, 2
    %v5924 = vsel %vm5774, %v5921, %v5923
    %v5925 = vrot.slane %v4520, 2
    %v5926 = vrot.slane %v4521, 2
    %v5927 = vsel %vm5774, %v5925, %v5926
    %v5928 = vrot.slane %v4522, 2
    %v5929 = vsel %vm5774, %v5926, %v5928
    %v5930 = vrot.slane %v4523, 2
    %v5931 = vrot.slane %v4524, 2
    %v5932 = vsel %vm5774, %v5930, %v5931
    %v5933 = vrot.slane %v4525, 2
    %v5934 = vsel %vm5774, %v5931, %v5933
    %5935 = vrot.lane.b32.xlu0 %v5777, 64
    %v5936 = vpop.permute.xlu0 %5935
    %5937 = vrot.lane.b32.xlu0 %v5779, 64
    %v5938 = vpop.permute.xlu0 %5937
    %5939 = vrot.lane.b32.xlu0 %v5782, 64
    %v5940 = vpop.permute.xlu0 %5939
    %5941 = vrot.lane.b32.xlu0 %v5784, 64
    %v5942 = vpop.permute.xlu0 %5941
    %5943 = vrot.lane.b32.xlu0 %v5787, 64
    %v5944 = vpop.permute.xlu0 %5943
    %5945 = vrot.lane.b32.xlu0 %v5789, 64
    %v5946 = vpop.permute.xlu0 %5945
    %5947 = vrot.lane.b32.xlu0 %v5792, 64
    %v5948 = vpop.permute.xlu0 %5947
    %5949 = vrot.lane.b32.xlu0 %v5794, 64
    %v5950 = vpop.permute.xlu0 %5949
    %5951 = vrot.lane.b32.xlu0 %v5797, 64
    %v5952 = vpop.permute.xlu0 %5951
    %5953 = vrot.lane.b32.xlu0 %v5799, 64
    %v5954 = vpop.permute.xlu0 %5953
    %5955 = vrot.lane.b32.xlu0 %v5802, 64
    %v5956 = vpop.permute.xlu0 %5955
    %5957 = vrot.lane.b32.xlu0 %v5804, 64
    %v5958 = vpop.permute.xlu0 %5957
    %5959 = vrot.lane.b32.xlu0 %v5807, 64
    %v5960 = vpop.permute.xlu0 %5959
    %5961 = vrot.lane.b32.xlu0 %v5809, 64
    %v5962 = vpop.permute.xlu0 %5961
    %5963 = vrot.lane.b32.xlu0 %v5812, 64
    %v5964 = vpop.permute.xlu0 %5963
    %5965 = vrot.lane.b32.xlu0 %v5814, 64
    %v5966 = vpop.permute.xlu0 %5965
    %5967 = vrot.lane.b32.xlu0 %v5817, 64
    %v5968 = vpop.permute.xlu0 %5967
    %5969 = vrot.lane.b32.xlu0 %v5819, 64
    %v5970 = vpop.permute.xlu0 %5969
    %5971 = vrot.lane.b32.xlu0 %v5822, 64
    %v5972 = vpop.permute.xlu0 %5971
    %5973 = vrot.lane.b32.xlu0 %v5824, 64
    %v5974 = vpop.permute.xlu0 %5973
    %5975 = vrot.lane.b32.xlu0 %v5827, 64
    %v5976 = vpop.permute.xlu0 %5975
    %5977 = vrot.lane.b32.xlu0 %v5829, 64
    %v5978 = vpop.permute.xlu0 %5977
    %5979 = vrot.lane.b32.xlu0 %v5832, 64
    %v5980 = vpop.permute.xlu0 %5979
    %5981 = vrot.lane.b32.xlu0 %v5834, 64
    %v5982 = vpop.permute.xlu0 %5981
    %5983 = vrot.lane.b32.xlu0 %v5837, 64
    %v5984 = vpop.permute.xlu0 %5983
    %5985 = vrot.lane.b32.xlu0 %v5839, 64
    %v5986 = vpop.permute.xlu0 %5985
    %5987 = vrot.lane.b32.xlu0 %v5842, 64
    %v5988 = vpop.permute.xlu0 %5987
    %5989 = vrot.lane.b32.xlu0 %v5844, 64
    %v5990 = vpop.permute.xlu0 %5989
    %5991 = vrot.lane.b32.xlu0 %v5847, 64
    %v5992 = vpop.permute.xlu0 %5991
    %5993 = vrot.lane.b32.xlu0 %v5849, 64
    %v5994 = vpop.permute.xlu0 %5993
    %5995 = vrot.lane.b32.xlu0 %v5852, 64
    %v5996 = vpop.permute.xlu0 %5995
    %5997 = vrot.lane.b32.xlu0 %v5854, 64
    %v5998 = vpop.permute.xlu0 %5997
    %5999 = vrot.lane.b32.xlu0 %v5857, 64
    %v6000 = vpop.permute.xlu0 %5999
    %6001 = vrot.lane.b32.xlu0 %v5859, 64
    %v6002 = vpop.permute.xlu0 %6001
    %6003 = vrot.lane.b32.xlu0 %v5862, 64
    %v6004 = vpop.permute.xlu0 %6003
    %6005 = vrot.lane.b32.xlu0 %v5864, 64
    %v6006 = vpop.permute.xlu0 %6005
    %6007 = vrot.lane.b32.xlu0 %v5867, 64
    %v6008 = vpop.permute.xlu0 %6007
    %6009 = vrot.lane.b32.xlu0 %v5869, 64
    %v6010 = vpop.permute.xlu0 %6009
    %6011 = vrot.lane.b32.xlu0 %v5872, 64
    %v6012 = vpop.permute.xlu0 %6011
    %6013 = vrot.lane.b32.xlu0 %v5874, 64
    %v6014 = vpop.permute.xlu0 %6013
    %6015 = vrot.lane.b32.xlu0 %v5877, 64
    %v6016 = vpop.permute.xlu0 %6015
    %6017 = vrot.lane.b32.xlu0 %v5879, 64
    %v6018 = vpop.permute.xlu0 %6017
    %6019 = vrot.lane.b32.xlu0 %v5882, 64
    %v6020 = vpop.permute.xlu0 %6019
    %6021 = vrot.lane.b32.xlu0 %v5884, 64
    %v6022 = vpop.permute.xlu0 %6021
    %6023 = vrot.lane.b32.xlu0 %v5887, 64
    %v6024 = vpop.permute.xlu0 %6023
    %6025 = vrot.lane.b32.xlu0 %v5889, 64
    %v6026 = vpop.permute.xlu0 %6025
    %6027 = vrot.lane.b32.xlu0 %v5892, 64
    %v6028 = vpop.permute.xlu0 %6027
    %6029 = vrot.lane.b32.xlu0 %v5894, 64
    %v6030 = vpop.permute.xlu0 %6029
    %6031 = vrot.lane.b32.xlu0 %v5897, 64
    %v6032 = vpop.permute.xlu0 %6031
    %6033 = vrot.lane.b32.xlu0 %v5899, 64
    %v6034 = vpop.permute.xlu0 %6033
    %6035 = vrot.lane.b32.xlu0 %v5902, 64
    %v6036 = vpop.permute.xlu0 %6035
    %6037 = vrot.lane.b32.xlu0 %v5904, 64
    %v6038 = vpop.permute.xlu0 %6037
    %6039 = vrot.lane.b32.xlu0 %v5907, 64
    %v6040 = vpop.permute.xlu0 %6039
    %6041 = vrot.lane.b32.xlu0 %v5909, 64
    %v6042 = vpop.permute.xlu0 %6041
    %6043 = vrot.lane.b32.xlu0 %v5912, 64
    %v6044 = vpop.permute.xlu0 %6043
    %6045 = vrot.lane.b32.xlu0 %v5914, 64
    %v6046 = vpop.permute.xlu0 %6045
    %6047 = vrot.lane.b32.xlu0 %v5917, 64
    %v6048 = vpop.permute.xlu0 %6047
    %6049 = vrot.lane.b32.xlu0 %v5919, 64
    %v6050 = vpop.permute.xlu0 %6049
    %6051 = vrot.lane.b32.xlu0 %v5922, 64
    %v6052 = vpop.permute.xlu0 %6051
    %6053 = vrot.lane.b32.xlu0 %v5924, 64
    %v6054 = vpop.permute.xlu0 %6053
    %6055 = vrot.lane.b32.xlu0 %v5927, 64
    %v6056 = vpop.permute.xlu0 %6055
    %6057 = vrot.lane.b32.xlu0 %v5929, 64
    %v6058 = vpop.permute.xlu0 %6057
    %6059 = vrot.lane.b32.xlu0 %v5932, 64
    %v6060 = vpop.permute.xlu0 %6059
    %6061 = vrot.lane.b32.xlu0 %v5934, 64
    %v6062 = vpop.permute.xlu0 %6061
    %v6127 = vadd.f32 %v3917, %v5936
    %v6128 = vadd.f32 %v3918, %v5938
    %v6129 = vadd.f32 %v3919, %v5940
    %v6130 = vadd.f32 %v3920, %v5942
    %v6131 = vadd.f32 %v3921, %v5944
    %v6132 = vadd.f32 %v3922, %v5946
    %v6133 = vadd.f32 %v3923, %v5948
    %v6134 = vadd.f32 %v3924, %v5950
    %v6135 = vadd.f32 %v3925, %v5952
    %v6136 = vadd.f32 %v3926, %v5954
    %v6137 = vadd.f32 %v3927, %v5956
    %v6138 = vadd.f32 %v3928, %v5958
    %v6139 = vadd.f32 %v3929, %v5960
    %v6140 = vadd.f32 %v3930, %v5962
    %v6141 = vadd.f32 %v3931, %v5964
    %v6142 = vadd.f32 %v3932, %v5966
    %v6143 = vadd.f32 %v3933, %v5968
    %v6144 = vadd.f32 %v3934, %v5970
    %v6145 = vadd.f32 %v3935, %v5972
    %v6146 = vadd.f32 %v3936, %v5974
    %v6147 = vadd.f32 %v3937, %v5976
    %v6148 = vadd.f32 %v3938, %v5978
    %v6149 = vadd.f32 %v3939, %v5980
    %v6150 = vadd.f32 %v3940, %v5982
    %v6151 = vadd.f32 %v3941, %v5984
    %v6152 = vadd.f32 %v3942, %v5986
    %v6153 = vadd.f32 %v3943, %v5988
    %v6154 = vadd.f32 %v3944, %v5990
    %v6155 = vadd.f32 %v3945, %v5992
    %v6156 = vadd.f32 %v3946, %v5994
    %v6157 = vadd.f32 %v3947, %v5996
    %v6158 = vadd.f32 %v3948, %v5998
    %v6159 = vadd.f32 %v3949, %v6000
    %v6160 = vadd.f32 %v3950, %v6002
    %v6161 = vadd.f32 %v3951, %v6004
    %v6162 = vadd.f32 %v3952, %v6006
    %v6163 = vadd.f32 %v3953, %v6008
    %v6164 = vadd.f32 %v3954, %v6010
    %v6165 = vadd.f32 %v3955, %v6012
    %v6166 = vadd.f32 %v3956, %v6014
    %v6167 = vadd.f32 %v3957, %v6016
    %v6168 = vadd.f32 %v3958, %v6018
    %v6169 = vadd.f32 %v3959, %v6020
    %v6170 = vadd.f32 %v3960, %v6022
    %v6171 = vadd.f32 %v3961, %v6024
    %v6172 = vadd.f32 %v3962, %v6026
    %v6173 = vadd.f32 %v3963, %v6028
    %v6174 = vadd.f32 %v3964, %v6030
    %v6175 = vadd.f32 %v3965, %v6032
    %v6176 = vadd.f32 %v3966, %v6034
    %v6177 = vadd.f32 %v3967, %v6036
    %v6178 = vadd.f32 %v3968, %v6038
    %v6179 = vadd.f32 %v3969, %v6040
    %v6180 = vadd.f32 %v3970, %v6042
    %v6181 = vadd.f32 %v3971, %v6044
    %v6182 = vadd.f32 %v3972, %v6046
    %v6183 = vadd.f32 %v3973, %v6048
    %v6184 = vadd.f32 %v3974, %v6050
    %v6185 = vadd.f32 %v3975, %v6052
    %v6186 = vadd.f32 %v3976, %v6054
    %v6187 = vadd.f32 %v3977, %v6056
    %v6188 = vadd.f32 %v3978, %v6058
    %v6189 = vadd.f32 %v3979, %v6060
    %v6190 = vadd.f32 %v3980, %v6062
    %v6255 = vrot.slane %v5614, 7
    %v6256 = vrot.slane %v5615, 7
    %v6257 = vsel %vm1959, %v6255, %v6256
    %v6258 = vrot.slane %v5616, 7
    %v6259 = vrot.slane %v5617, 7
    %v6260 = vsel %vm1959, %v6258, %v6259
    %v6261 = vrot.slane %v5618, 7
    %v6262 = vrot.slane %v5619, 7
    %v6263 = vsel %vm1959, %v6261, %v6262
    %v6264 = vrot.slane %v5620, 7
    %v6265 = vrot.slane %v5621, 7
    %v6266 = vsel %vm1959, %v6264, %v6265
    %v6267 = vrot.slane %v5622, 7
    %v6268 = vrot.slane %v5623, 7
    %v6269 = vsel %vm1959, %v6267, %v6268
    %v6270 = vrot.slane %v5624, 7
    %v6271 = vrot.slane %v5625, 7
    %v6272 = vsel %vm1959, %v6270, %v6271
    %v6273 = vrot.slane %v5626, 7
    %v6274 = vrot.slane %v5627, 7
    %v6275 = vsel %vm1959, %v6273, %v6274
    %v6276 = vrot.slane %v5628, 7
    %v6277 = vrot.slane %v5629, 7
    %v6278 = vsel %vm1959, %v6276, %v6277
    %v6279 = vrot.slane %v5630, 7
    %v6280 = vrot.slane %v5631, 7
    %v6281 = vsel %vm1959, %v6279, %v6280
    %v6282 = vrot.slane %v5632, 7
    %v6283 = vrot.slane %v5633, 7
    %v6284 = vsel %vm1959, %v6282, %v6283
    %v6285 = vrot.slane %v5634, 7
    %v6286 = vrot.slane %v5635, 7
    %v6287 = vsel %vm1959, %v6285, %v6286
    %v6288 = vrot.slane %v5636, 7
    %v6289 = vrot.slane %v5637, 7
    %v6290 = vsel %vm1959, %v6288, %v6289
    %v6291 = vrot.slane %v5638, 7
    %v6292 = vrot.slane %v5639, 7
    %v6293 = vsel %vm1959, %v6291, %v6292
    %v6294 = vrot.slane %v5640, 7
    %v6295 = vrot.slane %v5641, 7
    %v6296 = vsel %vm1959, %v6294, %v6295
    %v6297 = vrot.slane %v5642, 7
    %v6298 = vrot.slane %v5643, 7
    %v6299 = vsel %vm1959, %v6297, %v6298
    %v6300 = vrot.slane %v5644, 7
    %v6301 = vrot.slane %v5645, 7
    %v6302 = vsel %vm1959, %v6300, %v6301
    %v6303 = vrot.slane %v5646, 7
    %v6304 = vrot.slane %v5647, 7
    %v6305 = vsel %vm1959, %v6303, %v6304
    %v6306 = vrot.slane %v5648, 7
    %v6307 = vrot.slane %v5649, 7
    %v6308 = vsel %vm1959, %v6306, %v6307
    %v6309 = vrot.slane %v5650, 7
    %v6310 = vrot.slane %v5651, 7
    %v6311 = vsel %vm1959, %v6309, %v6310
    %v6312 = vrot.slane %v5652, 7
    %v6313 = vrot.slane %v5653, 7
    %v6314 = vsel %vm1959, %v6312, %v6313
    %v6315 = vrot.slane %v5654, 7
    %v6316 = vrot.slane %v5655, 7
    %v6317 = vsel %vm1959, %v6315, %v6316
    %v6318 = vrot.slane %v5656, 7
    %v6319 = vrot.slane %v5657, 7
    %v6320 = vsel %vm1959, %v6318, %v6319
    %v6321 = vrot.slane %v5658, 7
    %v6322 = vrot.slane %v5659, 7
    %v6323 = vsel %vm1959, %v6321, %v6322
    %v6324 = vrot.slane %v5660, 7
    %v6325 = vrot.slane %v5661, 7
    %v6326 = vsel %vm1959, %v6324, %v6325
    %v6327 = vrot.slane %v5662, 7
    %v6328 = vrot.slane %v5663, 7
    %v6329 = vsel %vm1959, %v6327, %v6328
    %v6330 = vrot.slane %v5664, 7
    %v6331 = vrot.slane %v5665, 7
    %v6332 = vsel %vm1959, %v6330, %v6331
    %v6333 = vrot.slane %v5666, 7
    %v6334 = vrot.slane %v5667, 7
    %v6335 = vsel %vm1959, %v6333, %v6334
    %v6336 = vrot.slane %v5668, 7
    %v6337 = vrot.slane %v5669, 7
    %v6338 = vsel %vm1959, %v6336, %v6337
    %v6339 = vrot.slane %v5670, 7
    %v6340 = vrot.slane %v5671, 7
    %v6341 = vsel %vm1959, %v6339, %v6340
    %v6342 = vrot.slane %v5672, 7
    %v6343 = vrot.slane %v5673, 7
    %v6344 = vsel %vm1959, %v6342, %v6343
    %v6345 = vrot.slane %v5674, 7
    %v6346 = vrot.slane %v5675, 7
    %v6347 = vsel %vm1959, %v6345, %v6346
    %v6348 = vrot.slane %v5676, 7
    %v6349 = vrot.slane %v5677, 7
    %v6350 = vsel %vm1959, %v6348, %v6349
    %6351 = vrot.lane.b32.xlu0 %v6255, 64
    %v6352 = vpop.permute.xlu0 %6351
    %6353 = vrot.lane.b32.xlu0 %v6257, 64
    %v6354 = vpop.permute.xlu0 %6353
    %6355 = vrot.lane.b32.xlu0 %v6256, 64
    %v6356 = vpop.permute.xlu0 %6355
    %6357 = vrot.lane.b32.xlu0 %v6258, 64
    %v6358 = vpop.permute.xlu0 %6357
    %6359 = vrot.lane.b32.xlu0 %v6260, 64
    %v6360 = vpop.permute.xlu0 %6359
    %6361 = vrot.lane.b32.xlu0 %v6259, 64
    %v6362 = vpop.permute.xlu0 %6361
    %6363 = vrot.lane.b32.xlu0 %v6261, 64
    %v6364 = vpop.permute.xlu0 %6363
    %6365 = vrot.lane.b32.xlu0 %v6263, 64
    %v6366 = vpop.permute.xlu0 %6365
    %6367 = vrot.lane.b32.xlu0 %v6262, 64
    %v6368 = vpop.permute.xlu0 %6367
    %6369 = vrot.lane.b32.xlu0 %v6264, 64
    %v6370 = vpop.permute.xlu0 %6369
    %6371 = vrot.lane.b32.xlu0 %v6266, 64
    %v6372 = vpop.permute.xlu0 %6371
    %6373 = vrot.lane.b32.xlu0 %v6265, 64
    %v6374 = vpop.permute.xlu0 %6373
    %6375 = vrot.lane.b32.xlu0 %v6267, 64
    %v6376 = vpop.permute.xlu0 %6375
    %6377 = vrot.lane.b32.xlu0 %v6269, 64
    %v6378 = vpop.permute.xlu0 %6377
    %6379 = vrot.lane.b32.xlu0 %v6268, 64
    %v6380 = vpop.permute.xlu0 %6379
    %6381 = vrot.lane.b32.xlu0 %v6270, 64
    %v6382 = vpop.permute.xlu0 %6381
    %6383 = vrot.lane.b32.xlu0 %v6272, 64
    %v6384 = vpop.permute.xlu0 %6383
    %6385 = vrot.lane.b32.xlu0 %v6271, 64
    %v6386 = vpop.permute.xlu0 %6385
    %6387 = vrot.lane.b32.xlu0 %v6273, 64
    %v6388 = vpop.permute.xlu0 %6387
    %6389 = vrot.lane.b32.xlu0 %v6275, 64
    %v6390 = vpop.permute.xlu0 %6389
    %6391 = vrot.lane.b32.xlu0 %v6274, 64
    %v6392 = vpop.permute.xlu0 %6391
    %6393 = vrot.lane.b32.xlu0 %v6276, 64
    %v6394 = vpop.permute.xlu0 %6393
    %6395 = vrot.lane.b32.xlu0 %v6278, 64
    %v6396 = vpop.permute.xlu0 %6395
    %6397 = vrot.lane.b32.xlu0 %v6277, 64
    %v6398 = vpop.permute.xlu0 %6397
    %6399 = vrot.lane.b32.xlu0 %v6279, 64
    %v6400 = vpop.permute.xlu0 %6399
    %6401 = vrot.lane.b32.xlu0 %v6281, 64
    %v6402 = vpop.permute.xlu0 %6401
    %6403 = vrot.lane.b32.xlu0 %v6280, 64
    %v6404 = vpop.permute.xlu0 %6403
    %6405 = vrot.lane.b32.xlu0 %v6282, 64
    %v6406 = vpop.permute.xlu0 %6405
    %6407 = vrot.lane.b32.xlu0 %v6284, 64
    %v6408 = vpop.permute.xlu0 %6407
    %6409 = vrot.lane.b32.xlu0 %v6283, 64
    %v6410 = vpop.permute.xlu0 %6409
    %6411 = vrot.lane.b32.xlu0 %v6285, 64
    %v6412 = vpop.permute.xlu0 %6411
    %6413 = vrot.lane.b32.xlu0 %v6287, 64
    %v6414 = vpop.permute.xlu0 %6413
    %6415 = vrot.lane.b32.xlu0 %v6286, 64
    %v6416 = vpop.permute.xlu0 %6415
    %6417 = vrot.lane.b32.xlu0 %v6288, 64
    %v6418 = vpop.permute.xlu0 %6417
    %6419 = vrot.lane.b32.xlu0 %v6290, 64
    %v6420 = vpop.permute.xlu0 %6419
    %6421 = vrot.lane.b32.xlu0 %v6289, 64
    %v6422 = vpop.permute.xlu0 %6421
    %6423 = vrot.lane.b32.xlu0 %v6291, 64
    %v6424 = vpop.permute.xlu0 %6423
    %6425 = vrot.lane.b32.xlu0 %v6293, 64
    %v6426 = vpop.permute.xlu0 %6425
    %6427 = vrot.lane.b32.xlu0 %v6292, 64
    %v6428 = vpop.permute.xlu0 %6427
    %6429 = vrot.lane.b32.xlu0 %v6294, 64
    %v6430 = vpop.permute.xlu0 %6429
    %6431 = vrot.lane.b32.xlu0 %v6296, 64
    %v6432 = vpop.permute.xlu0 %6431
    %6433 = vrot.lane.b32.xlu0 %v6295, 64
    %v6434 = vpop.permute.xlu0 %6433
    %6435 = vrot.lane.b32.xlu0 %v6297, 64
    %v6436 = vpop.permute.xlu0 %6435
    %6437 = vrot.lane.b32.xlu0 %v6299, 64
    %v6438 = vpop.permute.xlu0 %6437
    %6439 = vrot.lane.b32.xlu0 %v6298, 64
    %v6440 = vpop.permute.xlu0 %6439
    %6441 = vrot.lane.b32.xlu0 %v6300, 64
    %v6442 = vpop.permute.xlu0 %6441
    %6443 = vrot.lane.b32.xlu0 %v6302, 64
    %v6444 = vpop.permute.xlu0 %6443
    %6445 = vrot.lane.b32.xlu0 %v6301, 64
    %v6446 = vpop.permute.xlu0 %6445
    %6447 = vrot.lane.b32.xlu0 %v6303, 64
    %v6448 = vpop.permute.xlu0 %6447
    %6449 = vrot.lane.b32.xlu0 %v6305, 64
    %v6450 = vpop.permute.xlu0 %6449
    %6451 = vrot.lane.b32.xlu0 %v6304, 64
    %v6452 = vpop.permute.xlu0 %6451
    %6453 = vrot.lane.b32.xlu0 %v6306, 64
    %v6454 = vpop.permute.xlu0 %6453
    %6455 = vrot.lane.b32.xlu0 %v6308, 64
    %v6456 = vpop.permute.xlu0 %6455
    %6457 = vrot.lane.b32.xlu0 %v6307, 64
    %v6458 = vpop.permute.xlu0 %6457
    %6459 = vrot.lane.b32.xlu0 %v6309, 64
    %v6460 = vpop.permute.xlu0 %6459
    %6461 = vrot.lane.b32.xlu0 %v6311, 64
    %v6462 = vpop.permute.xlu0 %6461
    %6463 = vrot.lane.b32.xlu0 %v6310, 64
    %v6464 = vpop.permute.xlu0 %6463
    %6465 = vrot.lane.b32.xlu0 %v6312, 64
    %v6466 = vpop.permute.xlu0 %6465
    %6467 = vrot.lane.b32.xlu0 %v6314, 64
    %v6468 = vpop.permute.xlu0 %6467
    %6469 = vrot.lane.b32.xlu0 %v6313, 64
    %v6470 = vpop.permute.xlu0 %6469
    %6471 = vrot.lane.b32.xlu0 %v6315, 64
    %v6472 = vpop.permute.xlu0 %6471
    %6473 = vrot.lane.b32.xlu0 %v6317, 64
    %v6474 = vpop.permute.xlu0 %6473
    %6475 = vrot.lane.b32.xlu0 %v6316, 64
    %v6476 = vpop.permute.xlu0 %6475
    %6477 = vrot.lane.b32.xlu0 %v6318, 64
    %v6478 = vpop.permute.xlu0 %6477
    %6479 = vrot.lane.b32.xlu0 %v6320, 64
    %v6480 = vpop.permute.xlu0 %6479
    %6481 = vrot.lane.b32.xlu0 %v6319, 64
    %v6482 = vpop.permute.xlu0 %6481
    %6483 = vrot.lane.b32.xlu0 %v6321, 64
    %v6484 = vpop.permute.xlu0 %6483
    %6485 = vrot.lane.b32.xlu0 %v6323, 64
    %v6486 = vpop.permute.xlu0 %6485
    %6487 = vrot.lane.b32.xlu0 %v6322, 64
    %v6488 = vpop.permute.xlu0 %6487
    %6489 = vrot.lane.b32.xlu0 %v6324, 64
    %v6490 = vpop.permute.xlu0 %6489
    %6491 = vrot.lane.b32.xlu0 %v6326, 64
    %v6492 = vpop.permute.xlu0 %6491
    %6493 = vrot.lane.b32.xlu0 %v6325, 64
    %v6494 = vpop.permute.xlu0 %6493
    %6495 = vrot.lane.b32.xlu0 %v6327, 64
    %v6496 = vpop.permute.xlu0 %6495
    %6497 = vrot.lane.b32.xlu0 %v6329, 64
    %v6498 = vpop.permute.xlu0 %6497
    %6499 = vrot.lane.b32.xlu0 %v6328, 64
    %v6500 = vpop.permute.xlu0 %6499
    %6501 = vrot.lane.b32.xlu0 %v6330, 64
    %v6502 = vpop.permute.xlu0 %6501
    %6503 = vrot.lane.b32.xlu0 %v6332, 64
    %v6504 = vpop.permute.xlu0 %6503
    %6505 = vrot.lane.b32.xlu0 %v6331, 64
    %v6506 = vpop.permute.xlu0 %6505
    %6507 = vrot.lane.b32.xlu0 %v6333, 64
    %v6508 = vpop.permute.xlu0 %6507
    %6509 = vrot.lane.b32.xlu0 %v6335, 64
    %v6510 = vpop.permute.xlu0 %6509
    %6511 = vrot.lane.b32.xlu0 %v6334, 64
    %v6512 = vpop.permute.xlu0 %6511
    %6513 = vrot.lane.b32.xlu0 %v6336, 64
    %v6514 = vpop.permute.xlu0 %6513
    %6515 = vrot.lane.b32.xlu0 %v6338, 64
    %v6516 = vpop.permute.xlu0 %6515
    %6517 = vrot.lane.b32.xlu0 %v6337, 64
    %v6518 = vpop.permute.xlu0 %6517
    %6519 = vrot.lane.b32.xlu0 %v6339, 64
    %v6520 = vpop.permute.xlu0 %6519
    %6521 = vrot.lane.b32.xlu0 %v6341, 64
    %v6522 = vpop.permute.xlu0 %6521
    %6523 = vrot.lane.b32.xlu0 %v6340, 64
    %v6524 = vpop.permute.xlu0 %6523
    %6525 = vrot.lane.b32.xlu0 %v6342, 64
    %v6526 = vpop.permute.xlu0 %6525
    %6527 = vrot.lane.b32.xlu0 %v6344, 64
    %v6528 = vpop.permute.xlu0 %6527
    %6529 = vrot.lane.b32.xlu0 %v6343, 64
    %v6530 = vpop.permute.xlu0 %6529
    %6531 = vrot.lane.b32.xlu0 %v6345, 64
    %v6532 = vpop.permute.xlu0 %6531
    %6533 = vrot.lane.b32.xlu0 %v6347, 64
    %v6534 = vpop.permute.xlu0 %6533
    %6535 = vrot.lane.b32.xlu0 %v6346, 64
    %v6536 = vpop.permute.xlu0 %6535
    %6537 = vrot.lane.b32.xlu0 %v6348, 64
    %v6538 = vpop.permute.xlu0 %6537
    %6539 = vrot.lane.b32.xlu0 %v6350, 64
    %v6540 = vpop.permute.xlu0 %6539
    %6541 = vrot.lane.b32.xlu0 %v6349, 64
    %v6542 = vpop.permute.xlu0 %6541
    %v6639 = vadd.f32 %v5070, %v6352
    %v6640 = vadd.f32 %v5071, %v6354
    %v6641 = vadd.f32 %v5072, %v6356
    %v6642 = vadd.f32 %v5073, %v6358
    %v6643 = vadd.f32 %v5074, %v6360
    %v6644 = vadd.f32 %v5075, %v6362
    %v6645 = vadd.f32 %v5076, %v6364
    %v6646 = vadd.f32 %v5077, %v6366
    %v6647 = vadd.f32 %v5078, %v6368
    %v6648 = vadd.f32 %v5079, %v6370
    %v6649 = vadd.f32 %v5080, %v6372
    %v6650 = vadd.f32 %v5081, %v6374
    %v6651 = vadd.f32 %v5082, %v6376
    %v6652 = vadd.f32 %v5083, %v6378
    %v6653 = vadd.f32 %v5084, %v6380
    %v6654 = vadd.f32 %v5085, %v6382
    %v6655 = vadd.f32 %v5086, %v6384
    %v6656 = vadd.f32 %v5087, %v6386
    %v6657 = vadd.f32 %v5088, %v6388
    %v6658 = vadd.f32 %v5089, %v6390
    %v6659 = vadd.f32 %v5090, %v6392
    %v6660 = vadd.f32 %v5091, %v6394
    %v6661 = vadd.f32 %v5092, %v6396
    %v6662 = vadd.f32 %v5093, %v6398
    %v6663 = vadd.f32 %v5094, %v6400
    %v6664 = vadd.f32 %v5095, %v6402
    %v6665 = vadd.f32 %v5096, %v6404
    %v6666 = vadd.f32 %v5097, %v6406
    %v6667 = vadd.f32 %v5098, %v6408
    %v6668 = vadd.f32 %v5099, %v6410
    %v6669 = vadd.f32 %v5100, %v6412
    %v6670 = vadd.f32 %v5101, %v6414
    %v6671 = vadd.f32 %v5102, %v6416
    %v6672 = vadd.f32 %v5103, %v6418
    %v6673 = vadd.f32 %v5104, %v6420
    %v6674 = vadd.f32 %v5105, %v6422
    %v6675 = vadd.f32 %v5106, %v6424
    %v6676 = vadd.f32 %v5107, %v6426
    %v6677 = vadd.f32 %v5108, %v6428
    %v6678 = vadd.f32 %v5109, %v6430
    %v6679 = vadd.f32 %v5110, %v6432
    %v6680 = vadd.f32 %v5111, %v6434
    %v6681 = vadd.f32 %v5112, %v6436
    %v6682 = vadd.f32 %v5113, %v6438
    %v6683 = vadd.f32 %v5114, %v6440
    %v6684 = vadd.f32 %v5115, %v6442
    %v6685 = vadd.f32 %v5116, %v6444
    %v6686 = vadd.f32 %v5117, %v6446
    %v6687 = vadd.f32 %v5118, %v6448
    %v6688 = vadd.f32 %v5119, %v6450
    %v6689 = vadd.f32 %v5120, %v6452
    %v6690 = vadd.f32 %v5121, %v6454
    %v6691 = vadd.f32 %v5122, %v6456
    %v6692 = vadd.f32 %v5123, %v6458
    %v6693 = vadd.f32 %v5124, %v6460
    %v6694 = vadd.f32 %v5125, %v6462
    %v6695 = vadd.f32 %v5126, %v6464
    %v6696 = vadd.f32 %v5127, %v6466
    %v6697 = vadd.f32 %v5128, %v6468
    %v6698 = vadd.f32 %v5129, %v6470
    %v6699 = vadd.f32 %v5130, %v6472
    %v6700 = vadd.f32 %v5131, %v6474
    %v6701 = vadd.f32 %v5132, %v6476
    %v6702 = vadd.f32 %v5133, %v6478
    %v6703 = vadd.f32 %v5134, %v6480
    %v6704 = vadd.f32 %v5135, %v6482
    %v6705 = vadd.f32 %v5136, %v6484
    %v6706 = vadd.f32 %v5137, %v6486
    %v6707 = vadd.f32 %v5138, %v6488
    %v6708 = vadd.f32 %v5139, %v6490
    %v6709 = vadd.f32 %v5140, %v6492
    %v6710 = vadd.f32 %v5141, %v6494
    %v6711 = vadd.f32 %v5142, %v6496
    %v6712 = vadd.f32 %v5143, %v6498
    %v6713 = vadd.f32 %v5144, %v6500
    %v6714 = vadd.f32 %v5145, %v6502
    %v6715 = vadd.f32 %v5146, %v6504
    %v6716 = vadd.f32 %v5147, %v6506
    %v6717 = vadd.f32 %v5148, %v6508
    %v6718 = vadd.f32 %v5149, %v6510
    %v6719 = vadd.f32 %v5150, %v6512
    %v6720 = vadd.f32 %v5151, %v6514
    %v6721 = vadd.f32 %v5152, %v6516
    %v6722 = vadd.f32 %v5153, %v6518
    %v6723 = vadd.f32 %v5154, %v6520
    %v6724 = vadd.f32 %v5155, %v6522
    %v6725 = vadd.f32 %v5156, %v6524
    %v6726 = vadd.f32 %v5157, %v6526
    %v6727 = vadd.f32 %v5158, %v6528
    %v6728 = vadd.f32 %v5159, %v6530
    %v6729 = vadd.f32 %v5160, %v6532
    %v6730 = vadd.f32 %v5161, %v6534
    %v6731 = vadd.f32 %v5162, %v6536
    %v6732 = vadd.f32 %v5163, %v6538
    %v6733 = vadd.f32 %v5164, %v6540
    %v6734 = vadd.f32 %v5165, %v6542
    %v6831 = vrot.slane %v6639, 1
    %v6832 = vrot.slane %v6640, 1
    %v6833 = vsel %vm3564, %v6831, %v6832
    %v6834 = vrot.slane %v6641, 1
    %v6835 = vsel %vm3564, %v6832, %v6834
    %v6836 = vrot.slane %v6642, 1
    %v6837 = vrot.slane %v6643, 1
    %v6838 = vsel %vm3564, %v6836, %v6837
    %v6839 = vrot.slane %v6644, 1
    %v6840 = vsel %vm3564, %v6837, %v6839
    %v6841 = vrot.slane %v6645, 1
    %v6842 = vrot.slane %v6646, 1
    %v6843 = vsel %vm3564, %v6841, %v6842
    %v6844 = vrot.slane %v6647, 1
    %v6845 = vsel %vm3564, %v6842, %v6844
    %v6846 = vrot.slane %v6648, 1
    %v6847 = vrot.slane %v6649, 1
    %v6848 = vsel %vm3564, %v6846, %v6847
    %v6849 = vrot.slane %v6650, 1
    %v6850 = vsel %vm3564, %v6847, %v6849
    %v6851 = vrot.slane %v6651, 1
    %v6852 = vrot.slane %v6652, 1
    %v6853 = vsel %vm3564, %v6851, %v6852
    %v6854 = vrot.slane %v6653, 1
    %v6855 = vsel %vm3564, %v6852, %v6854
    %v6856 = vrot.slane %v6654, 1
    %v6857 = vrot.slane %v6655, 1
    %v6858 = vsel %vm3564, %v6856, %v6857
    %v6859 = vrot.slane %v6656, 1
    %v6860 = vsel %vm3564, %v6857, %v6859
    %v6861 = vrot.slane %v6657, 1
    %v6862 = vrot.slane %v6658, 1
    %v6863 = vsel %vm3564, %v6861, %v6862
    %v6864 = vrot.slane %v6659, 1
    %v6865 = vsel %vm3564, %v6862, %v6864
    %v6866 = vrot.slane %v6660, 1
    %v6867 = vrot.slane %v6661, 1
    %v6868 = vsel %vm3564, %v6866, %v6867
    %v6869 = vrot.slane %v6662, 1
    %v6870 = vsel %vm3564, %v6867, %v6869
    %v6871 = vrot.slane %v6663, 1
    %v6872 = vrot.slane %v6664, 1
    %v6873 = vsel %vm3564, %v6871, %v6872
    %v6874 = vrot.slane %v6665, 1
    %v6875 = vsel %vm3564, %v6872, %v6874
    %v6876 = vrot.slane %v6666, 1
    %v6877 = vrot.slane %v6667, 1
    %v6878 = vsel %vm3564, %v6876, %v6877
    %v6879 = vrot.slane %v6668, 1
    %v6880 = vsel %vm3564, %v6877, %v6879
    %v6881 = vrot.slane %v6669, 1
    %v6882 = vrot.slane %v6670, 1
    %v6883 = vsel %vm3564, %v6881, %v6882
    %v6884 = vrot.slane %v6671, 1
    %v6885 = vsel %vm3564, %v6882, %v6884
    %v6886 = vrot.slane %v6672, 1
    %v6887 = vrot.slane %v6673, 1
    %v6888 = vsel %vm3564, %v6886, %v6887
    %v6889 = vrot.slane %v6674, 1
    %v6890 = vsel %vm3564, %v6887, %v6889
    %v6891 = vrot.slane %v6675, 1
    %v6892 = vrot.slane %v6676, 1
    %v6893 = vsel %vm3564, %v6891, %v6892
    %v6894 = vrot.slane %v6677, 1
    %v6895 = vsel %vm3564, %v6892, %v6894
    %v6896 = vrot.slane %v6678, 1
    %v6897 = vrot.slane %v6679, 1
    %v6898 = vsel %vm3564, %v6896, %v6897
    %v6899 = vrot.slane %v6680, 1
    %v6900 = vsel %vm3564, %v6897, %v6899
    %v6901 = vrot.slane %v6681, 1
    %v6902 = vrot.slane %v6682, 1
    %v6903 = vsel %vm3564, %v6901, %v6902
    %v6904 = vrot.slane %v6683, 1
    %v6905 = vsel %vm3564, %v6902, %v6904
    %v6906 = vrot.slane %v6684, 1
    %v6907 = vrot.slane %v6685, 1
    %v6908 = vsel %vm3564, %v6906, %v6907
    %v6909 = vrot.slane %v6686, 1
    %v6910 = vsel %vm3564, %v6907, %v6909
    %v6911 = vrot.slane %v6687, 1
    %v6912 = vrot.slane %v6688, 1
    %v6913 = vsel %vm3564, %v6911, %v6912
    %v6914 = vrot.slane %v6689, 1
    %v6915 = vsel %vm3564, %v6912, %v6914
    %v6916 = vrot.slane %v6690, 1
    %v6917 = vrot.slane %v6691, 1
    %v6918 = vsel %vm3564, %v6916, %v6917
    %v6919 = vrot.slane %v6692, 1
    %v6920 = vsel %vm3564, %v6917, %v6919
    %v6921 = vrot.slane %v6693, 1
    %v6922 = vrot.slane %v6694, 1
    %v6923 = vsel %vm3564, %v6921, %v6922
    %v6924 = vrot.slane %v6695, 1
    %v6925 = vsel %vm3564, %v6922, %v6924
    %v6926 = vrot.slane %v6696, 1
    %v6927 = vrot.slane %v6697, 1
    %v6928 = vsel %vm3564, %v6926, %v6927
    %v6929 = vrot.slane %v6698, 1
    %v6930 = vsel %vm3564, %v6927, %v6929
    %v6931 = vrot.slane %v6699, 1
    %v6932 = vrot.slane %v6700, 1
    %v6933 = vsel %vm3564, %v6931, %v6932
    %v6934 = vrot.slane %v6701, 1
    %v6935 = vsel %vm3564, %v6932, %v6934
    %v6936 = vrot.slane %v6702, 1
    %v6937 = vrot.slane %v6703, 1
    %v6938 = vsel %vm3564, %v6936, %v6937
    %v6939 = vrot.slane %v6704, 1
    %v6940 = vsel %vm3564, %v6937, %v6939
    %v6941 = vrot.slane %v6705, 1
    %v6942 = vrot.slane %v6706, 1
    %v6943 = vsel %vm3564, %v6941, %v6942
    %v6944 = vrot.slane %v6707, 1
    %v6945 = vsel %vm3564, %v6942, %v6944
    %v6946 = vrot.slane %v6708, 1
    %v6947 = vrot.slane %v6709, 1
    %v6948 = vsel %vm3564, %v6946, %v6947
    %v6949 = vrot.slane %v6710, 1
    %v6950 = vsel %vm3564, %v6947, %v6949
    %v6951 = vrot.slane %v6711, 1
    %v6952 = vrot.slane %v6712, 1
    %v6953 = vsel %vm3564, %v6951, %v6952
    %v6954 = vrot.slane %v6713, 1
    %v6955 = vsel %vm3564, %v6952, %v6954
    %v6956 = vrot.slane %v6714, 1
    %v6957 = vrot.slane %v6715, 1
    %v6958 = vsel %vm3564, %v6956, %v6957
    %v6959 = vrot.slane %v6716, 1
    %v6960 = vsel %vm3564, %v6957, %v6959
    %v6961 = vrot.slane %v6717, 1
    %v6962 = vrot.slane %v6718, 1
    %v6963 = vsel %vm3564, %v6961, %v6962
    %v6964 = vrot.slane %v6719, 1
    %v6965 = vsel %vm3564, %v6962, %v6964
    %v6966 = vrot.slane %v6720, 1
    %v6967 = vrot.slane %v6721, 1
    %v6968 = vsel %vm3564, %v6966, %v6967
    %v6969 = vrot.slane %v6722, 1
    %v6970 = vsel %vm3564, %v6967, %v6969
    %v6971 = vrot.slane %v6723, 1
    %v6972 = vrot.slane %v6724, 1
    %v6973 = vsel %vm3564, %v6971, %v6972
    %v6974 = vrot.slane %v6725, 1
    %v6975 = vsel %vm3564, %v6972, %v6974
    %v6976 = vrot.slane %v6726, 1
    %v6977 = vrot.slane %v6727, 1
    %v6978 = vsel %vm3564, %v6976, %v6977
    %v6979 = vrot.slane %v6728, 1
    %v6980 = vsel %vm3564, %v6977, %v6979
    %v6981 = vrot.slane %v6729, 1
    %v6982 = vrot.slane %v6730, 1
    %v6983 = vsel %vm3564, %v6981, %v6982
    %v6984 = vrot.slane %v6731, 1
    %v6985 = vsel %vm3564, %v6982, %v6984
    %v6986 = vrot.slane %v6732, 1
    %v6987 = vrot.slane %v6733, 1
    %v6988 = vsel %vm3564, %v6986, %v6987
    %v6989 = vrot.slane %v6734, 1
    %v6990 = vsel %vm3564, %v6987, %v6989
    %v7055 = vadd.f32 %v6127, %v6833
    %v7056 = vadd.f32 %v6128, %v6835
    %v7057 = vadd.f32 %v6129, %v6838
    %v7058 = vadd.f32 %v6130, %v6840
    %v7059 = vadd.f32 %v6131, %v6843
    %v7060 = vadd.f32 %v6132, %v6845
    %v7061 = vadd.f32 %v6133, %v6848
    %v7062 = vadd.f32 %v6134, %v6850
    %v7063 = vadd.f32 %v6135, %v6853
    %v7064 = vadd.f32 %v6136, %v6855
    %v7065 = vadd.f32 %v6137, %v6858
    %v7066 = vadd.f32 %v6138, %v6860
    %v7067 = vadd.f32 %v6139, %v6863
    %v7068 = vadd.f32 %v6140, %v6865
    %v7069 = vadd.f32 %v6141, %v6868
    %v7070 = vadd.f32 %v6142, %v6870
    %v7071 = vadd.f32 %v6143, %v6873
    %v7072 = vadd.f32 %v6144, %v6875
    %v7073 = vadd.f32 %v6145, %v6878
    %v7074 = vadd.f32 %v6146, %v6880
    %v7075 = vadd.f32 %v6147, %v6883
    %v7076 = vadd.f32 %v6148, %v6885
    %v7077 = vadd.f32 %v6149, %v6888
    %v7078 = vadd.f32 %v6150, %v6890
    %v7079 = vadd.f32 %v6151, %v6893
    %v7080 = vadd.f32 %v6152, %v6895
    %v7081 = vadd.f32 %v6153, %v6898
    %v7082 = vadd.f32 %v6154, %v6900
    %v7083 = vadd.f32 %v6155, %v6903
    %v7084 = vadd.f32 %v6156, %v6905
    %v7085 = vadd.f32 %v6157, %v6908
    %v7086 = vadd.f32 %v6158, %v6910
    %v7087 = vadd.f32 %v6159, %v6913
    %v7088 = vadd.f32 %v6160, %v6915
    %v7089 = vadd.f32 %v6161, %v6918
    %v7090 = vadd.f32 %v6162, %v6920
    %v7091 = vadd.f32 %v6163, %v6923
    %v7092 = vadd.f32 %v6164, %v6925
    %v7093 = vadd.f32 %v6165, %v6928
    %v7094 = vadd.f32 %v6166, %v6930
    %v7095 = vadd.f32 %v6167, %v6933
    %v7096 = vadd.f32 %v6168, %v6935
    %v7097 = vadd.f32 %v6169, %v6938
    %v7098 = vadd.f32 %v6170, %v6940
    %v7099 = vadd.f32 %v6171, %v6943
    %v7100 = vadd.f32 %v6172, %v6945
    %v7101 = vadd.f32 %v6173, %v6948
    %v7102 = vadd.f32 %v6174, %v6950
    %v7103 = vadd.f32 %v6175, %v6953
    %v7104 = vadd.f32 %v6176, %v6955
    %v7105 = vadd.f32 %v6177, %v6958
    %v7106 = vadd.f32 %v6178, %v6960
    %v7107 = vadd.f32 %v6179, %v6963
    %v7108 = vadd.f32 %v6180, %v6965
    %v7109 = vadd.f32 %v6181, %v6968
    %v7110 = vadd.f32 %v6182, %v6970
    %v7111 = vadd.f32 %v6183, %v6973
    %v7112 = vadd.f32 %v6184, %v6975
    %v7113 = vadd.f32 %v6185, %v6978
    %v7114 = vadd.f32 %v6186, %v6980
    %v7115 = vadd.f32 %v6187, %v6983
    %v7116 = vadd.f32 %v6188, %v6985
    %v7117 = vadd.f32 %v6189, %v6988
    %v7118 = vadd.f32 %v6190, %v6990
    %v7215 = vrot.slane %v3372, 2
    %v7216 = vrot.slane %v3373, 2
    %v7217 = vsel %vm5774, %v7215, %v7216
    %v7218 = vrot.slane %v3374, 2
    %v7219 = vsel %vm5774, %v7216, %v7218
    %v7220 = vrot.slane %v3375, 2
    %v7221 = vrot.slane %v3376, 2
    %v7222 = vsel %vm5774, %v7220, %v7221
    %v7223 = vrot.slane %v3377, 2
    %v7224 = vsel %vm5774, %v7221, %v7223
    %v7225 = vrot.slane %v3378, 2
    %v7226 = vrot.slane %v3379, 2
    %v7227 = vsel %vm5774, %v7225, %v7226
    %v7228 = vrot.slane %v3380, 2
    %v7229 = vsel %vm5774, %v7226, %v7228
    %v7230 = vrot.slane %v3381, 2
    %v7231 = vrot.slane %v3382, 2
    %v7232 = vsel %vm5774, %v7230, %v7231
    %v7233 = vrot.slane %v3383, 2
    %v7234 = vsel %vm5774, %v7231, %v7233
    %v7235 = vrot.slane %v3384, 2
    %v7236 = vrot.slane %v3385, 2
    %v7237 = vsel %vm5774, %v7235, %v7236
    %v7238 = vrot.slane %v3386, 2
    %v7239 = vsel %vm5774, %v7236, %v7238
    %v7240 = vrot.slane %v3387, 2
    %v7241 = vrot.slane %v3388, 2
    %v7242 = vsel %vm5774, %v7240, %v7241
    %v7243 = vrot.slane %v3389, 2
    %v7244 = vsel %vm5774, %v7241, %v7243
    %v7245 = vrot.slane %v3390, 2
    %v7246 = vrot.slane %v3391, 2
    %v7247 = vsel %vm5774, %v7245, %v7246
    %v7248 = vrot.slane %v3392, 2
    %v7249 = vsel %vm5774, %v7246, %v7248
    %v7250 = vrot.slane %v3393, 2
    %v7251 = vrot.slane %v3394, 2
    %v7252 = vsel %vm5774, %v7250, %v7251
    %v7253 = vrot.slane %v3395, 2
    %v7254 = vsel %vm5774, %v7251, %v7253
    %v7255 = vrot.slane %v3396, 2
    %v7256 = vrot.slane %v3397, 2
    %v7257 = vsel %vm5774, %v7255, %v7256
    %v7258 = vrot.slane %v3398, 2
    %v7259 = vsel %vm5774, %v7256, %v7258
    %v7260 = vrot.slane %v3399, 2
    %v7261 = vrot.slane %v3400, 2
    %v7262 = vsel %vm5774, %v7260, %v7261
    %v7263 = vrot.slane %v3401, 2
    %v7264 = vsel %vm5774, %v7261, %v7263
    %v7265 = vrot.slane %v3402, 2
    %v7266 = vrot.slane %v3403, 2
    %v7267 = vsel %vm5774, %v7265, %v7266
    %v7268 = vrot.slane %v3404, 2
    %v7269 = vsel %vm5774, %v7266, %v7268
    %v7270 = vrot.slane %v3405, 2
    %v7271 = vrot.slane %v3406, 2
    %v7272 = vsel %vm5774, %v7270, %v7271
    %v7273 = vrot.slane %v3407, 2
    %v7274 = vsel %vm5774, %v7271, %v7273
    %v7275 = vrot.slane %v3408, 2
    %v7276 = vrot.slane %v3409, 2
    %v7277 = vsel %vm5774, %v7275, %v7276
    %v7278 = vrot.slane %v3410, 2
    %v7279 = vsel %vm5774, %v7276, %v7278
    %v7280 = vrot.slane %v3411, 2
    %v7281 = vrot.slane %v3412, 2
    %v7282 = vsel %vm5774, %v7280, %v7281
    %v7283 = vrot.slane %v3413, 2
    %v7284 = vsel %vm5774, %v7281, %v7283
    %v7285 = vrot.slane %v3414, 2
    %v7286 = vrot.slane %v3415, 2
    %v7287 = vsel %vm5774, %v7285, %v7286
    %v7288 = vrot.slane %v3416, 2
    %v7289 = vsel %vm5774, %v7286, %v7288
    %v7290 = vrot.slane %v3417, 2
    %v7291 = vrot.slane %v3418, 2
    %v7292 = vsel %vm5774, %v7290, %v7291
    %v7293 = vrot.slane %v3419, 2
    %v7294 = vsel %vm5774, %v7291, %v7293
    %v7295 = vrot.slane %v3420, 2
    %v7296 = vrot.slane %v3421, 2
    %v7297 = vsel %vm5774, %v7295, %v7296
    %v7298 = vrot.slane %v3422, 2
    %v7299 = vsel %vm5774, %v7296, %v7298
    %v7300 = vrot.slane %v3423, 2
    %v7301 = vrot.slane %v3424, 2
    %v7302 = vsel %vm5774, %v7300, %v7301
    %v7303 = vrot.slane %v3425, 2
    %v7304 = vsel %vm5774, %v7301, %v7303
    %v7305 = vrot.slane %v3426, 2
    %v7306 = vrot.slane %v3427, 2
    %v7307 = vsel %vm5774, %v7305, %v7306
    %v7308 = vrot.slane %v3428, 2
    %v7309 = vsel %vm5774, %v7306, %v7308
    %v7310 = vrot.slane %v3429, 2
    %v7311 = vrot.slane %v3430, 2
    %v7312 = vsel %vm5774, %v7310, %v7311
    %v7313 = vrot.slane %v3431, 2
    %v7314 = vsel %vm5774, %v7311, %v7313
    %v7315 = vrot.slane %v3432, 2
    %v7316 = vrot.slane %v3433, 2
    %v7317 = vsel %vm5774, %v7315, %v7316
    %v7318 = vrot.slane %v3434, 2
    %v7319 = vsel %vm5774, %v7316, %v7318
    %v7320 = vrot.slane %v3435, 2
    %v7321 = vrot.slane %v3436, 2
    %v7322 = vsel %vm5774, %v7320, %v7321
    %v7323 = vrot.slane %v3437, 2
    %v7324 = vsel %vm5774, %v7321, %v7323
    %v7325 = vrot.slane %v3438, 2
    %v7326 = vrot.slane %v3439, 2
    %v7327 = vsel %vm5774, %v7325, %v7326
    %v7328 = vrot.slane %v3440, 2
    %v7329 = vsel %vm5774, %v7326, %v7328
    %v7330 = vrot.slane %v3441, 2
    %v7331 = vrot.slane %v3442, 2
    %v7332 = vsel %vm5774, %v7330, %v7331
    %v7333 = vrot.slane %v3443, 2
    %v7334 = vsel %vm5774, %v7331, %v7333
    %v7335 = vrot.slane %v3444, 2
    %v7336 = vrot.slane %v3445, 2
    %v7337 = vsel %vm5774, %v7335, %v7336
    %v7338 = vrot.slane %v3446, 2
    %v7339 = vsel %vm5774, %v7336, %v7338
    %v7340 = vrot.slane %v3447, 2
    %v7341 = vrot.slane %v3448, 2
    %v7342 = vsel %vm5774, %v7340, %v7341
    %v7343 = vrot.slane %v3449, 2
    %v7344 = vsel %vm5774, %v7341, %v7343
    %v7345 = vrot.slane %v3450, 2
    %v7346 = vrot.slane %v3451, 2
    %v7347 = vsel %vm5774, %v7345, %v7346
    %v7348 = vrot.slane %v3452, 2
    %v7349 = vsel %vm5774, %v7346, %v7348
    %v7350 = vrot.slane %v3453, 2
    %v7351 = vrot.slane %v3454, 2
    %v7352 = vsel %vm5774, %v7350, %v7351
    %v7353 = vrot.slane %v3455, 2
    %v7354 = vsel %vm5774, %v7351, %v7353
    %v7355 = vrot.slane %v3456, 2
    %v7356 = vrot.slane %v3457, 2
    %v7357 = vsel %vm5774, %v7355, %v7356
    %v7358 = vrot.slane %v3458, 2
    %v7359 = vsel %vm5774, %v7356, %v7358
    %v7360 = vrot.slane %v3459, 2
    %v7361 = vrot.slane %v3460, 2
    %v7362 = vsel %vm5774, %v7360, %v7361
    %v7363 = vrot.slane %v3461, 2
    %v7364 = vsel %vm5774, %v7361, %v7363
    %v7365 = vrot.slane %v3462, 2
    %v7366 = vrot.slane %v3463, 2
    %v7367 = vsel %vm5774, %v7365, %v7366
    %v7368 = vrot.slane %v3464, 2
    %v7369 = vsel %vm5774, %v7366, %v7368
    %v7370 = vrot.slane %v3465, 2
    %v7371 = vrot.slane %v3466, 2
    %v7372 = vsel %vm5774, %v7370, %v7371
    %v7373 = vrot.slane %v3467, 2
    %v7374 = vsel %vm5774, %v7371, %v7373
    %v7439 = vadd.f32 %v7055, %v7217
    %v7440 = vadd.f32 %v7056, %v7219
    %v7441 = vadd.f32 %v7057, %v7222
    %v7442 = vadd.f32 %v7058, %v7224
    %v7443 = vadd.f32 %v7059, %v7227
    %v7444 = vadd.f32 %v7060, %v7229
    %v7445 = vadd.f32 %v7061, %v7232
    %v7446 = vadd.f32 %v7062, %v7234
    %v7447 = vadd.f32 %v7063, %v7237
    %v7448 = vadd.f32 %v7064, %v7239
    %v7449 = vadd.f32 %v7065, %v7242
    %v7450 = vadd.f32 %v7066, %v7244
    %v7451 = vadd.f32 %v7067, %v7247
    %v7452 = vadd.f32 %v7068, %v7249
    %v7453 = vadd.f32 %v7069, %v7252
    %v7454 = vadd.f32 %v7070, %v7254
    %v7455 = vadd.f32 %v7071, %v7257
    %v7456 = vadd.f32 %v7072, %v7259
    %v7457 = vadd.f32 %v7073, %v7262
    %v7458 = vadd.f32 %v7074, %v7264
    %v7459 = vadd.f32 %v7075, %v7267
    %v7460 = vadd.f32 %v7076, %v7269
    %v7461 = vadd.f32 %v7077, %v7272
    %v7462 = vadd.f32 %v7078, %v7274
    %v7463 = vadd.f32 %v7079, %v7277
    %v7464 = vadd.f32 %v7080, %v7279
    %v7465 = vadd.f32 %v7081, %v7282
    %v7466 = vadd.f32 %v7082, %v7284
    %v7467 = vadd.f32 %v7083, %v7287
    %v7468 = vadd.f32 %v7084, %v7289
    %v7469 = vadd.f32 %v7085, %v7292
    %v7470 = vadd.f32 %v7086, %v7294
    %v7471 = vadd.f32 %v7087, %v7297
    %v7472 = vadd.f32 %v7088, %v7299
    %v7473 = vadd.f32 %v7089, %v7302
    %v7474 = vadd.f32 %v7090, %v7304
    %v7475 = vadd.f32 %v7091, %v7307
    %v7476 = vadd.f32 %v7092, %v7309
    %v7477 = vadd.f32 %v7093, %v7312
    %v7478 = vadd.f32 %v7094, %v7314
    %v7479 = vadd.f32 %v7095, %v7317
    %v7480 = vadd.f32 %v7096, %v7319
    %v7481 = vadd.f32 %v7097, %v7322
    %v7482 = vadd.f32 %v7098, %v7324
    %v7483 = vadd.f32 %v7099, %v7327
    %v7484 = vadd.f32 %v7100, %v7329
    %v7485 = vadd.f32 %v7101, %v7332
    %v7486 = vadd.f32 %v7102, %v7334
    %v7487 = vadd.f32 %v7103, %v7337
    %v7488 = vadd.f32 %v7104, %v7339
    %v7489 = vadd.f32 %v7105, %v7342
    %v7490 = vadd.f32 %v7106, %v7344
    %v7491 = vadd.f32 %v7107, %v7347
    %v7492 = vadd.f32 %v7108, %v7349
    %v7493 = vadd.f32 %v7109, %v7352
    %v7494 = vadd.f32 %v7110, %v7354
    %v7495 = vadd.f32 %v7111, %v7357
    %v7496 = vadd.f32 %v7112, %v7359
    %v7497 = vadd.f32 %v7113, %v7362
    %v7498 = vadd.f32 %v7114, %v7364
    %v7499 = vadd.f32 %v7115, %v7367
    %v7500 = vadd.f32 %v7116, %v7369
    %v7501 = vadd.f32 %v7117, %v7372
    %v7502 = vadd.f32 %v7118, %v7374
    %v7503 = vld [vmem:[%s0] sm:$0xff]
    %v7504 = vld [vmem:[%s0 + $0x8] sm:$0xff]
    %v7505 = vld [vmem:[%s0 + $0x10] sm:$0xff]
    %v7506 = vld [vmem:[%s0 + $0x18] sm:$0xff]
    %v7507 = vld [vmem:[%s0 + $0x20] sm:$0xff]
    %v7508 = vld [vmem:[%s0 + $0x28] sm:$0xff]
    %v7509 = vld [vmem:[%s0 + $0x30] sm:$0xff]
    %v7510 = vld [vmem:[%s0 + $0x38] sm:$0xff]
    %v7511 = vld [vmem:[%s0 + $0x40] sm:$0xff]
    %v7512 = vld [vmem:[%s0 + $0x48] sm:$0xff]
    %v7513 = vld [vmem:[%s0 + $0x50] sm:$0xff]
    %v7514 = vld [vmem:[%s0 + $0x58] sm:$0xff]
    %v7515 = vld [vmem:[%s0 + $0x60] sm:$0xff]
    %v7516 = vld [vmem:[%s0 + $0x68] sm:$0xff]
    %v7517 = vld [vmem:[%s0 + $0x70] sm:$0xff]
    %v7518 = vld [vmem:[%s0 + $0x78] sm:$0xff]
    %v7519 = vld [vmem:[%s0 + $0x80] sm:$0xff]
    %v7520 = vld [vmem:[%s0 + $0x88] sm:$0xff]
    %v7521 = vld [vmem:[%s0 + $0x90] sm:$0xff]
    %v7522 = vld [vmem:[%s0 + $0x98] sm:$0xff]
    %v7523 = vld [vmem:[%s0 + $0xa0] sm:$0xff]
    %v7524 = vld [vmem:[%s0 + $0xa8] sm:$0xff]
    %v7525 = vld [vmem:[%s0 + $0xb0] sm:$0xff]
    %v7526 = vld [vmem:[%s0 + $0xb8] sm:$0xff]
    %v7527 = vld [vmem:[%s0 + $0xc0] sm:$0xff]
    %v7528 = vld [vmem:[%s0 + $0xc8] sm:$0xff]
    %v7529 = vld [vmem:[%s0 + $0xd0] sm:$0xff]
    %v7530 = vld [vmem:[%s0 + $0xd8] sm:$0xff]
    %v7531 = vld [vmem:[%s0 + $0xe0] sm:$0xff]
    %v7532 = vld [vmem:[%s0 + $0xe8] sm:$0xff]
    %v7533 = vld [vmem:[%s0 + $0xf0] sm:$0xff]
    %v7534 = vld [vmem:[%s0 + $0xf8] sm:$0xff]
    %v7535 = vld [vmem:[%s0 + $0x100] sm:$0xff]
    %v7536 = vld [vmem:[%s0 + $0x108] sm:$0xff]
    %v7537 = vld [vmem:[%s0 + $0x110] sm:$0xff]
    %v7538 = vld [vmem:[%s0 + $0x118] sm:$0xff]
    %v7539 = vld [vmem:[%s0 + $0x120] sm:$0xff]
    %v7540 = vld [vmem:[%s0 + $0x128] sm:$0xff]
    %v7541 = vld [vmem:[%s0 + $0x130] sm:$0xff]
    %v7542 = vld [vmem:[%s0 + $0x138] sm:$0xff]
    %v7543 = vld [vmem:[%s0 + $0x140] sm:$0xff]
    %v7544 = vld [vmem:[%s0 + $0x148] sm:$0xff]
    %v7545 = vld [vmem:[%s0 + $0x150] sm:$0xff]
    %v7546 = vld [vmem:[%s0 + $0x158] sm:$0xff]
    %v7547 = vld [vmem:[%s0 + $0x160] sm:$0xff]
    %v7548 = vld [vmem:[%s0 + $0x168] sm:$0xff]
    %v7549 = vld [vmem:[%s0 + $0x170] sm:$0xff]
    %v7550 = vld [vmem:[%s0 + $0x178] sm:$0xff]
    %v7551 = vld [vmem:[%s0 + $0x180] sm:$0xff]
    %v7552 = vld [vmem:[%s0 + $0x188] sm:$0xff]
    %v7553 = vld [vmem:[%s0 + $0x190] sm:$0xff]
    %v7554 = vld [vmem:[%s0 + $0x198] sm:$0xff]
    %v7555 = vld [vmem:[%s0 + $0x1a0] sm:$0xff]
    %v7556 = vld [vmem:[%s0 + $0x1a8] sm:$0xff]
    %v7557 = vld [vmem:[%s0 + $0x1b0] sm:$0xff]
    %v7558 = vld [vmem:[%s0 + $0x1b8] sm:$0xff]
    %v7559 = vld [vmem:[%s0 + $0x1c0] sm:$0xff]
    %v7560 = vld [vmem:[%s0 + $0x1c8] sm:$0xff]
    %v7561 = vld [vmem:[%s0 + $0x1d0] sm:$0xff]
    %v7562 = vld [vmem:[%s0 + $0x1d8] sm:$0xff]
    %v7563 = vld [vmem:[%s0 + $0x1e0] sm:$0xff]
    %v7564 = vld [vmem:[%s0 + $0x1e8] sm:$0xff]
    %v7565 = vld [vmem:[%s0 + $0x1f0] sm:$0xff]
    %v7566 = vld [vmem:[%s0 + $0x1f8] sm:$0xff]
    %7631 = vrot.lane.b32.xlu0 %v7439, 64
    %v7632 = vpop.permute.xlu0 %7631
    %7633 = vrot.lane.b32.xlu0 %v7440, 64
    %v7634 = vpop.permute.xlu0 %7633
    %7635 = vrot.lane.b32.xlu0 %v7441, 64
    %v7636 = vpop.permute.xlu0 %7635
    %7637 = vrot.lane.b32.xlu0 %v7442, 64
    %v7638 = vpop.permute.xlu0 %7637
    %7639 = vrot.lane.b32.xlu0 %v7443, 64
    %v7640 = vpop.permute.xlu0 %7639
    %7641 = vrot.lane.b32.xlu0 %v7444, 64
    %v7642 = vpop.permute.xlu0 %7641
    %7643 = vrot.lane.b32.xlu0 %v7445, 64
    %v7644 = vpop.permute.xlu0 %7643
    %7645 = vrot.lane.b32.xlu0 %v7446, 64
    %v7646 = vpop.permute.xlu0 %7645
    %7647 = vrot.lane.b32.xlu0 %v7447, 64
    %v7648 = vpop.permute.xlu0 %7647
    %7649 = vrot.lane.b32.xlu0 %v7448, 64
    %v7650 = vpop.permute.xlu0 %7649
    %7651 = vrot.lane.b32.xlu0 %v7449, 64
    %v7652 = vpop.permute.xlu0 %7651
    %7653 = vrot.lane.b32.xlu0 %v7450, 64
    %v7654 = vpop.permute.xlu0 %7653
    %7655 = vrot.lane.b32.xlu0 %v7451, 64
    %v7656 = vpop.permute.xlu0 %7655
    %7657 = vrot.lane.b32.xlu0 %v7452, 64
    %v7658 = vpop.permute.xlu0 %7657
    %7659 = vrot.lane.b32.xlu0 %v7453, 64
    %v7660 = vpop.permute.xlu0 %7659
    %7661 = vrot.lane.b32.xlu0 %v7454, 64
    %v7662 = vpop.permute.xlu0 %7661
    %7663 = vrot.lane.b32.xlu0 %v7455, 64
    %v7664 = vpop.permute.xlu0 %7663
    %7665 = vrot.lane.b32.xlu0 %v7456, 64
    %v7666 = vpop.permute.xlu0 %7665
    %7667 = vrot.lane.b32.xlu0 %v7457, 64
    %v7668 = vpop.permute.xlu0 %7667
    %7669 = vrot.lane.b32.xlu0 %v7458, 64
    %v7670 = vpop.permute.xlu0 %7669
    %7671 = vrot.lane.b32.xlu0 %v7459, 64
    %v7672 = vpop.permute.xlu0 %7671
    %7673 = vrot.lane.b32.xlu0 %v7460, 64
    %v7674 = vpop.permute.xlu0 %7673
    %7675 = vrot.lane.b32.xlu0 %v7461, 64
    %v7676 = vpop.permute.xlu0 %7675
    %7677 = vrot.lane.b32.xlu0 %v7462, 64
    %v7678 = vpop.permute.xlu0 %7677
    %7679 = vrot.lane.b32.xlu0 %v7463, 64
    %v7680 = vpop.permute.xlu0 %7679
    %7681 = vrot.lane.b32.xlu0 %v7464, 64
    %v7682 = vpop.permute.xlu0 %7681
    %7683 = vrot.lane.b32.xlu0 %v7465, 64
    %v7684 = vpop.permute.xlu0 %7683
    %7685 = vrot.lane.b32.xlu0 %v7466, 64
    %v7686 = vpop.permute.xlu0 %7685
    %7687 = vrot.lane.b32.xlu0 %v7467, 64
    %v7688 = vpop.permute.xlu0 %7687
    %7689 = vrot.lane.b32.xlu0 %v7468, 64
    %v7690 = vpop.permute.xlu0 %7689
    %7691 = vrot.lane.b32.xlu0 %v7469, 64
    %v7692 = vpop.permute.xlu0 %7691
    %7693 = vrot.lane.b32.xlu0 %v7470, 64
    %v7694 = vpop.permute.xlu0 %7693
    %7695 = vrot.lane.b32.xlu0 %v7471, 64
    %v7696 = vpop.permute.xlu0 %7695
    %7697 = vrot.lane.b32.xlu0 %v7472, 64
    %v7698 = vpop.permute.xlu0 %7697
    %7699 = vrot.lane.b32.xlu0 %v7473, 64
    %v7700 = vpop.permute.xlu0 %7699
    %7701 = vrot.lane.b32.xlu0 %v7474, 64
    %v7702 = vpop.permute.xlu0 %7701
    %7703 = vrot.lane.b32.xlu0 %v7475, 64
    %v7704 = vpop.permute.xlu0 %7703
    %7705 = vrot.lane.b32.xlu0 %v7476, 64
    %v7706 = vpop.permute.xlu0 %7705
    %7707 = vrot.lane.b32.xlu0 %v7477, 64
    %v7708 = vpop.permute.xlu0 %7707
    %7709 = vrot.lane.b32.xlu0 %v7478, 64
    %v7710 = vpop.permute.xlu0 %7709
    %7711 = vrot.lane.b32.xlu0 %v7479, 64
    %v7712 = vpop.permute.xlu0 %7711
    %7713 = vrot.lane.b32.xlu0 %v7480, 64
    %v7714 = vpop.permute.xlu0 %7713
    %7715 = vrot.lane.b32.xlu0 %v7481, 64
    %v7716 = vpop.permute.xlu0 %7715
    %7717 = vrot.lane.b32.xlu0 %v7482, 64
    %v7718 = vpop.permute.xlu0 %7717
    %7719 = vrot.lane.b32.xlu0 %v7483, 64
    %v7720 = vpop.permute.xlu0 %7719
    %7721 = vrot.lane.b32.xlu0 %v7484, 64
    %v7722 = vpop.permute.xlu0 %7721
    %7723 = vrot.lane.b32.xlu0 %v7485, 64
    %v7724 = vpop.permute.xlu0 %7723
    %7725 = vrot.lane.b32.xlu0 %v7486, 64
    %v7726 = vpop.permute.xlu0 %7725
    %7727 = vrot.lane.b32.xlu0 %v7487, 64
    %v7728 = vpop.permute.xlu0 %7727
    %7729 = vrot.lane.b32.xlu0 %v7488, 64
    %v7730 = vpop.permute.xlu0 %7729
    %7731 = vrot.lane.b32.xlu0 %v7489, 64
    %v7732 = vpop.permute.xlu0 %7731
    %7733 = vrot.lane.b32.xlu0 %v7490, 64
    %v7734 = vpop.permute.xlu0 %7733
    %7735 = vrot.lane.b32.xlu0 %v7491, 64
    %v7736 = vpop.permute.xlu0 %7735
    %7737 = vrot.lane.b32.xlu0 %v7492, 64
    %v7738 = vpop.permute.xlu0 %7737
    %7739 = vrot.lane.b32.xlu0 %v7493, 64
    %v7740 = vpop.permute.xlu0 %7739
    %7741 = vrot.lane.b32.xlu0 %v7494, 64
    %v7742 = vpop.permute.xlu0 %7741
    %7743 = vrot.lane.b32.xlu0 %v7495, 64
    %v7744 = vpop.permute.xlu0 %7743
    %7745 = vrot.lane.b32.xlu0 %v7496, 64
    %v7746 = vpop.permute.xlu0 %7745
    %7747 = vrot.lane.b32.xlu0 %v7497, 64
    %v7748 = vpop.permute.xlu0 %7747
    %7749 = vrot.lane.b32.xlu0 %v7498, 64
    %v7750 = vpop.permute.xlu0 %7749
    %7751 = vrot.lane.b32.xlu0 %v7499, 64
    %v7752 = vpop.permute.xlu0 %7751
    %7753 = vrot.lane.b32.xlu0 %v7500, 64
    %v7754 = vpop.permute.xlu0 %7753
    %7755 = vrot.lane.b32.xlu0 %v7501, 64
    %v7756 = vpop.permute.xlu0 %7755
    %7757 = vrot.lane.b32.xlu0 %v7502, 64
    %v7758 = vpop.permute.xlu0 %7757
    %v7823 = vsel %vm300, %v7503, %v7632
    %v7824 = vsel %vm300, %v7504, %v7634
    %v7825 = vsel %vm300, %v7505, %v7636
    %v7826 = vsel %vm300, %v7506, %v7638
    %v7827 = vsel %vm300, %v7507, %v7640
    %v7828 = vsel %vm300, %v7508, %v7642
    %v7829 = vsel %vm300, %v7509, %v7644
    %v7830 = vsel %vm300, %v7510, %v7646
    %v7831 = vsel %vm300, %v7511, %v7648
    %v7832 = vsel %vm300, %v7512, %v7650
    %v7833 = vsel %vm300, %v7513, %v7652
    %v7834 = vsel %vm300, %v7514, %v7654
    %v7835 = vsel %vm300, %v7515, %v7656
    %v7836 = vsel %vm300, %v7516, %v7658
    %v7837 = vsel %vm300, %v7517, %v7660
    %v7838 = vsel %vm300, %v7518, %v7662
    %v7839 = vsel %vm300, %v7519, %v7664
    %v7840 = vsel %vm300, %v7520, %v7666
    %v7841 = vsel %vm300, %v7521, %v7668
    %v7842 = vsel %vm300, %v7522, %v7670
    %v7843 = vsel %vm300, %v7523, %v7672
    %v7844 = vsel %vm300, %v7524, %v7674
    %v7845 = vsel %vm300, %v7525, %v7676
    %v7846 = vsel %vm300, %v7526, %v7678
    %v7847 = vsel %vm300, %v7527, %v7680
    %v7848 = vsel %vm300, %v7528, %v7682
    %v7849 = vsel %vm300, %v7529, %v7684
    %v7850 = vsel %vm300, %v7530, %v7686
    %v7851 = vsel %vm300, %v7531, %v7688
    %v7852 = vsel %vm300, %v7532, %v7690
    %v7853 = vsel %vm300, %v7533, %v7692
    %v7854 = vsel %vm300, %v7534, %v7694
    %v7855 = vsel %vm300, %v7535, %v7696
    %v7856 = vsel %vm300, %v7536, %v7698
    %v7857 = vsel %vm300, %v7537, %v7700
    %v7858 = vsel %vm300, %v7538, %v7702
    %v7859 = vsel %vm300, %v7539, %v7704
    %v7860 = vsel %vm300, %v7540, %v7706
    %v7861 = vsel %vm300, %v7541, %v7708
    %v7862 = vsel %vm300, %v7542, %v7710
    %v7863 = vsel %vm300, %v7543, %v7712
    %v7864 = vsel %vm300, %v7544, %v7714
    %v7865 = vsel %vm300, %v7545, %v7716
    %v7866 = vsel %vm300, %v7546, %v7718
    %v7867 = vsel %vm300, %v7547, %v7720
    %v7868 = vsel %vm300, %v7548, %v7722
    %v7869 = vsel %vm300, %v7549, %v7724
    %v7870 = vsel %vm300, %v7550, %v7726
    %v7871 = vsel %vm300, %v7551, %v7728
    %v7872 = vsel %vm300, %v7552, %v7730
    %v7873 = vsel %vm300, %v7553, %v7732
    %v7874 = vsel %vm300, %v7554, %v7734
    %v7875 = vsel %vm300, %v7555, %v7736
    %v7876 = vsel %vm300, %v7556, %v7738
    %v7877 = vsel %vm300, %v7557, %v7740
    %v7878 = vsel %vm300, %v7558, %v7742
    %v7879 = vsel %vm300, %v7559, %v7744
    %v7880 = vsel %vm300, %v7560, %v7746
    %v7881 = vsel %vm300, %v7561, %v7748
    %v7882 = vsel %vm300, %v7562, %v7750
    %v7883 = vsel %vm300, %v7563, %v7752
    %v7884 = vsel %vm300, %v7564, %v7754
    %v7885 = vsel %vm300, %v7565, %v7756
    %v7886 = vsel %vm300, %v7566, %v7758
    %vm7887 = vcmask 785408
    %7888 = vst.msk [vmem:[#allocation3] sm:$0xff] %vm7887, %v7823
    %7889 = vst.msk [vmem:[#allocation3 + $0x8] sm:$0xff] %vm7887, %v7824
    %7890 = vst.msk [vmem:[#allocation3 + $0x10] sm:$0xff] %vm7887, %v7825
    %7891 = vst.msk [vmem:[#allocation3 + $0x18] sm:$0xff] %vm7887, %v7826
    %7892 = vst.msk [vmem:[#allocation3 + $0x20] sm:$0xff] %vm7887, %v7827
    %7893 = vst.msk [vmem:[#allocation3 + $0x28] sm:$0xff] %vm7887, %v7828
    %7894 = vst.msk [vmem:[#allocation3 + $0x30] sm:$0xff] %vm7887, %v7829
    %7895 = vst.msk [vmem:[#allocation3 + $0x38] sm:$0xff] %vm7887, %v7830
    %7896 = vst.msk [vmem:[#allocation3 + $0x40] sm:$0xff] %vm7887, %v7831
    %7897 = vst.msk [vmem:[#allocation3 + $0x48] sm:$0xff] %vm7887, %v7832
    %7898 = vst.msk [vmem:[#allocation3 + $0x50] sm:$0xff] %vm7887, %v7833
    %7899 = vst.msk [vmem:[#allocation3 + $0x58] sm:$0xff] %vm7887, %v7834
    %7900 = vst.msk [vmem:[#allocation3 + $0x60] sm:$0xff] %vm7887, %v7835
    %7901 = vst.msk [vmem:[#allocation3 + $0x68] sm:$0xff] %vm7887, %v7836
    %7902 = vst.msk [vmem:[#allocation3 + $0x70] sm:$0xff] %vm7887, %v7837
    %7903 = vst.msk [vmem:[#allocation3 + $0x78] sm:$0xff] %vm7887, %v7838
    %7904 = vst.msk [vmem:[#allocation3 + $0x80] sm:$0xff] %vm7887, %v7839
    %7905 = vst.msk [vmem:[#allocation3 + $0x88] sm:$0xff] %vm7887, %v7840
    %7906 = vst.msk [vmem:[#allocation3 + $0x90] sm:$0xff] %vm7887, %v7841
    %7907 = vst.msk [vmem:[#allocation3 + $0x98] sm:$0xff] %vm7887, %v7842
    %7908 = vst.msk [vmem:[#allocation3 + $0xa0] sm:$0xff] %vm7887, %v7843
    %7909 = vst.msk [vmem:[#allocation3 + $0xa8] sm:$0xff] %vm7887, %v7844
    %7910 = vst.msk [vmem:[#allocation3 + $0xb0] sm:$0xff] %vm7887, %v7845
    %7911 = vst.msk [vmem:[#allocation3 + $0xb8] sm:$0xff] %vm7887, %v7846
    %7912 = vst.msk [vmem:[#allocation3 + $0xc0] sm:$0xff] %vm7887, %v7847
    %7913 = vst.msk [vmem:[#allocation3 + $0xc8] sm:$0xff] %vm7887, %v7848
    %7914 = vst.msk [vmem:[#allocation3 + $0xd0] sm:$0xff] %vm7887, %v7849
    %7915 = vst.msk [vmem:[#allocation3 + $0xd8] sm:$0xff] %vm7887, %v7850
    %7916 = vst.msk [vmem:[#allocation3 + $0xe0] sm:$0xff] %vm7887, %v7851
    %7917 = vst.msk [vmem:[#allocation3 + $0xe8] sm:$0xff] %vm7887, %v7852
    %7918 = vst.msk [vmem:[#allocation3 + $0xf0] sm:$0xff] %vm7887, %v7853
    %7919 = vst.msk [vmem:[#allocation3 + $0xf8] sm:$0xff] %vm7887, %v7854
    %7920 = vst.msk [vmem:[#allocation3 + $0x100] sm:$0xff] %vm7887, %v7855
    %7921 = vst.msk [vmem:[#allocation3 + $0x108] sm:$0xff] %vm7887, %v7856
    %7922 = vst.msk [vmem:[#allocation3 + $0x110] sm:$0xff] %vm7887, %v7857
    %7923 = vst.msk [vmem:[#allocation3 + $0x118] sm:$0xff] %vm7887, %v7858
    %7924 = vst.msk [vmem:[#allocation3 + $0x120] sm:$0xff] %vm7887, %v7859
    %7925 = vst.msk [vmem:[#allocation3 + $0x128] sm:$0xff] %vm7887, %v7860
    %7926 = vst.msk [vmem:[#allocation3 + $0x130] sm:$0xff] %vm7887, %v7861
    %7927 = vst.msk [vmem:[#allocation3 + $0x138] sm:$0xff] %vm7887, %v7862
    %7928 = vst.msk [vmem:[#allocation3 + $0x140] sm:$0xff] %vm7887, %v7863
    %7929 = vst.msk [vmem:[#allocation3 + $0x148] sm:$0xff] %vm7887, %v7864
    %7930 = vst.msk [vmem:[#allocation3 + $0x150] sm:$0xff] %vm7887, %v7865
    %7931 = vst.msk [vmem:[#allocation3 + $0x158] sm:$0xff] %vm7887, %v7866
    %7932 = vst.msk [vmem:[#allocation3 + $0x160] sm:$0xff] %vm7887, %v7867
    %7933 = vst.msk [vmem:[#allocation3 + $0x168] sm:$0xff] %vm7887, %v7868
    %7934 = vst.msk [vmem:[#allocation3 + $0x170] sm:$0xff] %vm7887, %v7869
    %7935 = vst.msk [vmem:[#allocation3 + $0x178] sm:$0xff] %vm7887, %v7870
    %7936 = vst.msk [vmem:[#allocation3 + $0x180] sm:$0xff] %vm7887, %v7871
    %7937 = vst.msk [vmem:[#allocation3 + $0x188] sm:$0xff] %vm7887, %v7872
    %7938 = vst.msk [vmem:[#allocation3 + $0x190] sm:$0xff] %vm7887, %v7873
    %7939 = vst.msk [vmem:[#allocation3 + $0x198] sm:$0xff] %vm7887, %v7874
    %7940 = vst.msk [vmem:[#allocation3 + $0x1a0] sm:$0xff] %vm7887, %v7875
    %7941 = vst.msk [vmem:[#allocation3 + $0x1a8] sm:$0xff] %vm7887, %v7876
    %7942 = vst.msk [vmem:[#allocation3 + $0x1b0] sm:$0xff] %vm7887, %v7877
    %7943 = vst.msk [vmem:[#allocation3 + $0x1b8] sm:$0xff] %vm7887, %v7878
    %7944 = vst.msk [vmem:[#allocation3 + $0x1c0] sm:$0xff] %vm7887, %v7879
    %7945 = vst.msk [vmem:[#allocation3 + $0x1c8] sm:$0xff] %vm7887, %v7880
    %7946 = vst.msk [vmem:[#allocation3 + $0x1d0] sm:$0xff] %vm7887, %v7881
    %7947 = vst.msk [vmem:[#allocation3 + $0x1d8] sm:$0xff] %vm7887, %v7882
    %7948 = vst.msk [vmem:[#allocation3 + $0x1e0] sm:$0xff] %vm7887, %v7883
    %7949 = vst.msk [vmem:[#allocation3 + $0x1e8] sm:$0xff] %vm7887, %v7884
    %7950 = vst.msk [vmem:[#allocation3 + $0x1f0] sm:$0xff] %vm7887, %v7885
    %7951 = vst.msk [vmem:[#allocation3 + $0x1f8] sm:$0xff] %vm7887, %v7886
    // Predicated region
    $region26: #{dense_layer_forward.1} parent=1 // pred_check
      _
    $region27: #{dense_layer_forward.1} parent=1 // pred_check_branch
      %7953 = sbr.rel (0) target = $region29
    $region28: #{dense_layer_forward.1} parent=1 // pred_region
      %7955 = vsyncadd [#allocation4], 0
      %s7956 = sshll.u32 [#allocation3], 4
      %s7957 = int_to_ptr.vmem [resolvable:$true] %s7956
      %s7958 = sshll.u32 %s6, 4
      %s7959 = int_to_ptr.hbm [resolvable:$true] %s7958
      %7964 = dma.vmem_to_hbm [thread:$0]  %s7957, 8192, %s7959, [#allocation4], 128, 128, 8
    $region29: #{dense_layer_forward.1} parent=1 // pred_fallthru
      _
    // Predicated region
    $region30: #{dense_layer_forward.1} parent=1 // pred_check
      _
    $region31: #{dense_layer_forward.1} parent=1 // pred_check_branch
      %7966 = sbr.rel (0) target = $region33
    $region32: #{dense_layer_forward.1} parent=1 // pred_region
      %7968 = dma.done [#allocation4], 8192
    $region33: #{dense_layer_forward.1} parent=1 // pred_fallthru
      _
    %7969 = vsyncpa [#allocation4], 1

</llo_original>
